<compile_context>
chip_gen: v7x
topology: tpu7x:2x2x1
jax: 0.10.0
libtpu: 0.0.40
codegen_flags: <defaults>
</compile_context>

<pallas_src>
import functools
import numpy as np
import jax
import jax.numpy as jnp
from jax import lax
from jax.experimental import pallas as pl
from jax.experimental.pallas import tpu as pltpu


def _encoder_layer_kernel(
    x_ref, wqkv_ref, wh_ref, bh_ref,
    w1_ref, b1_ref, w2_ref, b2_ref,
    ln1w_ref, ln1b_ref, ln2w_ref, ln2b_ref,
    out_ref,
    *, num_heads, d_k, d_model, seq, eps,
):
    f32 = jnp.float32
    xb = x_ref[...]                                   # (Bb, S, D) block of sequences
    bb = xb.shape[0]
    m = bb * seq
    x = xb.reshape(m, d_model)                        # flat (M, D) slab: dense sublanes

    # --- MultiHeadAttention --------------------------------------------------
    # Single fused QKV projection (1/sqrt(d_k) already folded into the Q slab).
    qkv = jnp.dot(x, wqkv_ref[...], preferred_element_type=f32)   # (M, 3D)
    q = qkv[:, :d_model].reshape(bb, seq, d_model)
    k = qkv[:, d_model:2 * d_model].reshape(bb, seq, d_model)
    v = qkv[:, 2 * d_model:].reshape(bb, seq, d_model)

    # Per-head loop is static (H small); each iteration is batched over ALL
    # sequences in the block via 3-D einsums (as in the flash-attention pattern).
    head_outs = []
    for h in range(num_heads):                        # static unroll over heads only
        lo = h * d_k
        qh = q[:, :, lo:lo + d_k]                     # (Bb, S, d_k)
        kh = k[:, :, lo:lo + d_k]
        vh = v[:, :, lo:lo + d_k]
        s = jnp.einsum("bqd,bkd->bqk", qh, kh,
                       preferred_element_type=f32)    # (Bb, S, S), no explicit kh.T
        s = s - jnp.max(s, axis=-1, keepdims=True)
        p = jnp.exp(s)
        p = p * pl.reciprocal(jnp.sum(p, axis=-1, keepdims=True), approx=True)
        head_outs.append(jnp.einsum("bqk,bkd->bqd", p, vh,
                                    preferred_element_type=f32))  # (Bb, S, d_k)

    # Re-flatten heads and do the output projection as ONE (M, D)@(D, D) matmul.
    heads = jnp.concatenate(head_outs, axis=-1).reshape(m, d_model)
    attn = jnp.dot(heads, wh_ref[...], preferred_element_type=f32) + bh_ref[...]

    # --- residual + LayerNorm ------------------------------------------------
    def layernorm(z, w, b):
        mu = jnp.mean(z, axis=-1, keepdims=True)
        zc = z - mu
        var = jnp.mean(zc * zc, axis=-1, keepdims=True)
        return zc * lax.rsqrt(var + eps) * w + b

    out1 = layernorm(x + attn, ln1w_ref[...], ln1b_ref[...])      # (M, D)

    # --- FFN (Linear -> ReLU -> Linear) --------------------------------------
    h1 = jnp.dot(out1, w1_ref[...], preferred_element_type=f32) + b1_ref[...]
    h1 = jnp.maximum(h1, 0.0)
    ffn = jnp.dot(h1, w2_ref[...], preferred_element_type=f32) + b2_ref[...]

    out2 = layernorm(out1 + ffn, ln2w_ref[...], ln2b_ref[...])
    out_ref[...] = out2.reshape(bb, seq, d_model).astype(out_ref.dtype)


def prepare_kernel_params(params, *, num_heads):
    """One-time (init) fusion: QKV weights concatenated, attention scale folded in."""
    d_model = params["wq"].shape[0]
    d_k = d_model // num_heads
    scale = jnp.float32(1.0 / np.sqrt(d_k))
    kp = dict(params)
    kp["wqkv"] = jnp.concatenate(
        [params["wq"] * scale, params["wk"], params["wv"]], axis=1)   # (D, 3D)
    return kp


def _replicated_spec(shape):
    ndim = len(shape)
    return pl.BlockSpec(shape, lambda b, _n=ndim: (0,) * _n)


def encoder_layer(x, kp, *, num_heads, eps=1e-6, block_b=8):
    """Forward of the PyTorch EncoderLayer (eval mode).

    x: (B, S, D) batch of sequences, or (S, D) like the original module.
    kp: params from prepare_kernel_params().
    """
    squeeze = False
    if x.ndim == 2:
        x = x[None]
        squeeze = True
    B, S, D = x.shape
    d_k = D // num_heads
    hidden = kp["w1"].shape[1]

    block_b = min(block_b, B)
    assert B % block_b == 0, "batch must be divisible by block_b"
    nb = B // block_b
    M = block_b * S

    kernel = functools.partial(
        _encoder_layer_kernel,
        num_heads=num_heads, d_k=d_k, d_model=D, seq=S, eps=eps,
    )

    # Advisory cost estimate (lets XLA schedule neighbouring ops around the call).
    flops_per_block = (
        2 * M * D * (3 * D)                          # fused QKV projection
        + 4 * block_b * num_heads * S * S * d_k      # scores + p@v
        + 2 * M * D * D                              # output projection
        + 4 * M * D * hidden                         # FFN (two matmuls)
    )
    transcendentals_per_block = block_b * num_heads * S * S + 3 * M
    weight_names = ("wqkv", "wh", "bh", "w1", "b1", "w2", "b2",
                    "ln1_w", "ln1_b", "ln2_w", "ln2_b")
    weight_bytes = sum(int(np.prod(kp[n].shape)) for n in weight_names) * 4
    cost = pl.CostEstimate(
        flops=int(nb * flops_per_block),
        transcendentals=int(nb * transcendentals_per_block),
        bytes_accessed=int(2 * B * S * D * 4 + weight_bytes),
    )

    out = pl.pallas_call(
        kernel,
        out_shape=jax.ShapeDtypeStruct((B, S, D), x.dtype),
        grid=(nb,),
        in_specs=[
            pl.BlockSpec((block_b, S, D), lambda b: (b, 0, 0)),
            _replicated_spec(kp["wqkv"].shape),
            _replicated_spec(kp["wh"].shape),
            _replicated_spec(kp["bh"].shape),
            _replicated_spec(kp["w1"].shape),
            _replicated_spec(kp["b1"].shape),
            _replicated_spec(kp["w2"].shape),
            _replicated_spec(kp["b2"].shape),
            _replicated_spec(kp["ln1_w"].shape),
            _replicated_spec(kp["ln1_b"].shape),
            _replicated_spec(kp["ln2_w"].shape),
            _replicated_spec(kp["ln2_b"].shape),
        ],
        out_specs=pl.BlockSpec((block_b, S, D), lambda b: (b, 0, 0)),
        compiler_params=pltpu.CompilerParams(
            dimension_semantics=("parallel",),      # v7x: split batch across 2 TCs
            vmem_limit_bytes=32 * 1024 * 1024,      # explicit, v7x(64 MiB)-safe
        ),
        cost_estimate=cost,
    )(x, kp["wqkv"], kp["wh"], kp["bh"], kp["w1"], kp["b1"], kp["w2"], kp["b2"],
      kp["ln1_w"], kp["ln1_b"], kp["ln2_w"], kp["ln2_b"])

    return out[0] if squeeze else out


def _ref_encoder_layer(x, params, *, num_heads, eps=1e-6):
    """Pure-JAX reference mirroring the PyTorch forward (eval mode), batched."""
    B, S, D = x.shape
    d_k = D // num_heads
    q = x @ params["wq"]
    k = x @ params["wk"]
    v = x @ params["wv"]

    def split(t):  # (B, S, D) -> (B, H, S, d_k)
        return t.reshape(B, S, num_heads, d_k).transpose(0, 2, 1, 3)

    Q, K, V = split(q), split(k), split(v)
    A = jnp.einsum("bhqd,bhkd->bhqk", Q, K) / np.sqrt(d_k)
    A = jax.nn.softmax(A, axis=-1)
    Hh = jnp.einsum("bhqk,bhkd->bhqd", A, V)
    Hh = Hh.transpose(0, 2, 1, 3).reshape(B, S, D)
    attn = Hh @ params["wh"] + params["bh"][0]

    def ln(z, w, b):
        mu = z.mean(-1, keepdims=True)
        var = ((z - mu) ** 2).mean(-1, keepdims=True)
        return (z - mu) / jnp.sqrt(var + eps) * w[0] + b[0]

    out1 = ln(x + attn, params["ln1_w"], params["ln1_b"])
    h1 = jnp.maximum(out1 @ params["w1"] + params["b1"][0], 0.0)
    ffn = h1 @ params["w2"] + params["b2"][0]
    return ln(out1 + ffn, params["ln2_w"], params["ln2_b"])


def init_params(key, d_model, num_heads, hidden_dim):
    ks = jax.random.split(key, 8)
    scale = 0.1
    return {
        # Linear weights stored pre-transposed as (in, out).
        "wq": scale * jax.random.normal(ks[0], (d_model, d_model), jnp.float32),
        "wk": scale * jax.random.normal(ks[1], (d_model, d_model), jnp.float32),
        "wv": scale * jax.random.normal(ks[2], (d_model, d_model), jnp.float32),
        "wh": scale * jax.random.normal(ks[3], (d_model, d_model), jnp.float32),
        "bh": scale * jax.random.normal(ks[4], (1, d_model), jnp.float32),
        "w1": scale * jax.random.normal(ks[5], (d_model, hidden_dim), jnp.float32),
        "b1": scale * jax.random.normal(ks[6], (1, hidden_dim), jnp.float32),
        "w2": scale * jax.random.normal(ks[7], (hidden_dim, d_model), jnp.float32),
        "b2": jnp.zeros((1, d_model), jnp.float32),
        "ln1_w": jnp.ones((1, d_model), jnp.float32),
        "ln1_b": jnp.zeros((1, d_model), jnp.float32),
        "ln2_w": jnp.ones((1, d_model), jnp.float32),
        "ln2_b": jnp.zeros((1, d_model), jnp.float32),
    }


if __name__ == "__main__":
    d_model, num_heads, hidden_dim, p_drop = 32, 4, 64, 0.1   # p_drop unused (eval)
    seq, batch = 8, 16

    key = jax.random.PRNGKey(0)
    kx, kpk = jax.random.split(key)
    x = jax.random.normal(kx, (batch, seq, d_model), jnp.float32)
    params = init_params(kpk, d_model, num_heads, hidden_dim)
    kparams = prepare_kernel_params(params, num_heads=num_heads)   # hoisted QKV fusion

    # Batched path: grid of 2 blocks x 8 sequences, "parallel" batch axis.
    out = encoder_layer(x, kparams, num_heads=num_heads, block_b=8)
    out = jax.block_until_ready(out)

    ref = _ref_encoder_layer(x, params, num_heads=num_heads)
    # Tolerance allows for the EUP approx-reciprocal in the softmax normalization.
    np.testing.assert_allclose(np.asarray(out), np.asarray(ref), atol=2e-3, rtol=2e-3)

    # Un-batched (S, D) path matching the original module's 2-D interface.
    out2d = encoder_layer(x[0], kparams, num_heads=num_heads)
    out2d = jax.block_until_ready(out2d)
    np.testing.assert_allclose(np.asarray(out2d), np.asarray(ref[0]),
                               atol=2e-3, rtol=2e-3)

    print("KERNEL_OK")
</pallas_src>

<mosaic_0001>
module attributes {stable_mosaic.version = 11 : i64} {
  func.func @_encoder_layer_kernel(%arg0: i32, %arg1: memref<8x8x32xf32, #tpu.memory_space<vmem>>, %arg2: memref<32x96xf32, #tpu.memory_space<vmem>>, %arg3: memref<32x32xf32, #tpu.memory_space<vmem>>, %arg4: memref<1x32xf32, #tpu.memory_space<vmem>>, %arg5: memref<32x64xf32, #tpu.memory_space<vmem>>, %arg6: memref<1x64xf32, #tpu.memory_space<vmem>>, %arg7: memref<64x32xf32, #tpu.memory_space<vmem>>, %arg8: memref<1x32xf32, #tpu.memory_space<vmem>>, %arg9: memref<1x32xf32, #tpu.memory_space<vmem>>, %arg10: memref<1x32xf32, #tpu.memory_space<vmem>>, %arg11: memref<1x32xf32, #tpu.memory_space<vmem>>, %arg12: memref<1x32xf32, #tpu.memory_space<vmem>>, %arg13: memref<8x8x32xf32, #tpu.memory_space<vmem>>) attributes {dimension_semantics = [#tpu.dimension_semantics<parallel>], iteration_bounds = array<i64: 2>, scalar_prefetch = 0 : i64, scratch_operands = 0 : i64, tpu.core_type = #tpu.core_type<tc>, window_params = [{transform_indices = @transform_0, window_bounds = array<i64: 8, 8, 32>}, {pipeline_mode = #tpu.pipeline_mode<synchronous>, transform_indices = @transform_1, window_bounds = array<i64: 32, 96>}, {pipeline_mode = #tpu.pipeline_mode<synchronous>, transform_indices = @transform_2, window_bounds = array<i64: 32, 32>}, {pipeline_mode = #tpu.pipeline_mode<synchronous>, transform_indices = @transform_3, window_bounds = array<i64: 1, 32>}, {pipeline_mode = #tpu.pipeline_mode<synchronous>, transform_indices = @transform_4, window_bounds = array<i64: 32, 64>}, {pipeline_mode = #tpu.pipeline_mode<synchronous>, transform_indices = @transform_5, window_bounds = array<i64: 1, 64>}, {pipeline_mode = #tpu.pipeline_mode<synchronous>, transform_indices = @transform_6, window_bounds = array<i64: 64, 32>}, {pipeline_mode = #tpu.pipeline_mode<synchronous>, transform_indices = @transform_7, window_bounds = array<i64: 1, 32>}, {pipeline_mode = #tpu.pipeline_mode<synchronous>, transform_indices = @transform_8, window_bounds = array<i64: 1, 32>}, {pipeline_mode = #tpu.pipeline_mode<synchronous>, transform_indices = @transform_9, window_bounds = array<i64: 1, 32>}, {pipeline_mode = #tpu.pipeline_mode<synchronous>, transform_indices = @transform_10, window_bounds = array<i64: 1, 32>}, {pipeline_mode = #tpu.pipeline_mode<synchronous>, transform_indices = @transform_11, window_bounds = array<i64: 1, 32>}, {transform_indices = @transform_12, window_bounds = array<i64: 8, 8, 32>}]} {
    %c0 = arith.constant 0 : index
    %c0_0 = arith.constant 0 : index
    %c0_1 = arith.constant 0 : index
    %0 = vector.load %arg1[%c0, %c0_0, %c0_1] : memref<8x8x32xf32, #tpu.memory_space<vmem>>, vector<8x8x32xf32>
    %1 = vector.shape_cast %0 : vector<8x8x32xf32> to vector<64x32xf32>
    %c0_2 = arith.constant 0 : index
    %c0_3 = arith.constant 0 : index
    %2 = vector.load %arg2[%c0_2, %c0_3] : memref<32x96xf32, #tpu.memory_space<vmem>>, vector<32x96xf32>
    %cst = arith.constant dense<0.000000e+00> : vector<64x96xf32>
    %3 = tpu.matmul %1, %2, %cst {dimension_numbers = #tpu.dot_dimension_numbers<[1], [0], [0], [1], [0, 0, 1, 1], [], []>} : vector<64x32xf32>, vector<32x96xf32>, vector<64x96xf32> -> vector<64x96xf32>
    %4 = vector.extract_strided_slice %3 {offsets = [0, 0], sizes = [64, 32], strides = [1, 1]} : vector<64x96xf32> to vector<64x32xf32>
    %5 = vector.shape_cast %4 : vector<64x32xf32> to vector<8x8x32xf32>
    %6 = vector.extract_strided_slice %3 {offsets = [0, 32], sizes = [64, 32], strides = [1, 1]} : vector<64x96xf32> to vector<64x32xf32>
    %7 = vector.shape_cast %6 : vector<64x32xf32> to vector<8x8x32xf32>
    %8 = vector.extract_strided_slice %3 {offsets = [0, 64], sizes = [64, 32], strides = [1, 1]} : vector<64x96xf32> to vector<64x32xf32>
    %9 = vector.shape_cast %8 : vector<64x32xf32> to vector<8x8x32xf32>
    %10 = vector.extract_strided_slice %5 {offsets = [0, 0, 0], sizes = [8, 8, 8], strides = [1, 1, 1]} : vector<8x8x32xf32> to vector<8x8x8xf32>
    %11 = vector.extract_strided_slice %7 {offsets = [0, 0, 0], sizes = [8, 8, 8], strides = [1, 1, 1]} : vector<8x8x32xf32> to vector<8x8x8xf32>
    %12 = vector.extract_strided_slice %9 {offsets = [0, 0, 0], sizes = [8, 8, 8], strides = [1, 1, 1]} : vector<8x8x32xf32> to vector<8x8x8xf32>
    "tpu.trace_start"() <{level = 10 : i32, message = "bqd,bkd->bqk"}> : () -> ()
    %cst_4 = arith.constant dense<0.000000e+00> : vector<8x8x8xf32>
    %13 = tpu.matmul %10, %11, %cst_4 {dimension_numbers = #tpu.dot_dimension_numbers<[2], [2], [1], [1], [0, 0, 0, 1, 1, 1], [0], [0]>} : vector<8x8x8xf32>, vector<8x8x8xf32>, vector<8x8x8xf32> -> vector<8x8x8xf32>
    "tpu.trace_stop"() : () -> ()
    %cst_5 = arith.constant dense<0xFF800000> : vector<8x8xf32>
    %14 = vector.multi_reduction <maximumf>, %13, %cst_5 [2] : vector<8x8x8xf32> to vector<8x8xf32>
    %15 = vector.shape_cast %14 : vector<8x8xf32> to vector<8x8x1xf32>
    %16 = vector.broadcast %15 : vector<8x8x1xf32> to vector<8x8x8xf32>
    %17 = arith.subf %13, %16 : vector<8x8x8xf32>
    %18 = math.exp %17 : vector<8x8x8xf32>
    %cst_6 = arith.constant dense<0.000000e+00> : vector<8x8xf32>
    %19 = vector.multi_reduction <add>, %18, %cst_6 [2] : vector<8x8x8xf32> to vector<8x8xf32>
    %20 = vector.shape_cast %19 : vector<8x8xf32> to vector<8x8x1xf32>
    %21 = tpu.reciprocal %20 {approx = true} : vector<8x8x1xf32> -> vector<8x8x1xf32>
    %22 = vector.broadcast %21 : vector<8x8x1xf32> to vector<8x8x8xf32>
    %23 = arith.mulf %18, %22 : vector<8x8x8xf32>
    "tpu.trace_start"() <{level = 10 : i32, message = "bqk,bkd->bqd"}> : () -> ()
    %cst_7 = arith.constant dense<0.000000e+00> : vector<8x8x8xf32>
    %24 = tpu.matmul %23, %12, %cst_7 {dimension_numbers = #tpu.dot_dimension_numbers<[2], [1], [1], [2], [0, 0, 0, 1, 1, 2], [0], [0]>} : vector<8x8x8xf32>, vector<8x8x8xf32>, vector<8x8x8xf32> -> vector<8x8x8xf32>
    "tpu.trace_stop"() : () -> ()
    %25 = vector.extract_strided_slice %5 {offsets = [0, 0, 8], sizes = [8, 8, 8], strides = [1, 1, 1]} : vector<8x8x32xf32> to vector<8x8x8xf32>
    %26 = vector.extract_strided_slice %7 {offsets = [0, 0, 8], sizes = [8, 8, 8], strides = [1, 1, 1]} : vector<8x8x32xf32> to vector<8x8x8xf32>
    %27 = vector.extract_strided_slice %9 {offsets = [0, 0, 8], sizes = [8, 8, 8], strides = [1, 1, 1]} : vector<8x8x32xf32> to vector<8x8x8xf32>
    "tpu.trace_start"() <{level = 10 : i32, message = "bqd,bkd->bqk"}> : () -> ()
    %cst_8 = arith.constant dense<0.000000e+00> : vector<8x8x8xf32>
    %28 = tpu.matmul %25, %26, %cst_8 {dimension_numbers = #tpu.dot_dimension_numbers<[2], [2], [1], [1], [0, 0, 0, 1, 1, 1], [0], [0]>} : vector<8x8x8xf32>, vector<8x8x8xf32>, vector<8x8x8xf32> -> vector<8x8x8xf32>
    "tpu.trace_stop"() : () -> ()
    %cst_9 = arith.constant dense<0xFF800000> : vector<8x8xf32>
    %29 = vector.multi_reduction <maximumf>, %28, %cst_9 [2] : vector<8x8x8xf32> to vector<8x8xf32>
    %30 = vector.shape_cast %29 : vector<8x8xf32> to vector<8x8x1xf32>
    %31 = vector.broadcast %30 : vector<8x8x1xf32> to vector<8x8x8xf32>
    %32 = arith.subf %28, %31 : vector<8x8x8xf32>
    %33 = math.exp %32 : vector<8x8x8xf32>
    %cst_10 = arith.constant dense<0.000000e+00> : vector<8x8xf32>
    %34 = vector.multi_reduction <add>, %33, %cst_10 [2] : vector<8x8x8xf32> to vector<8x8xf32>
    %35 = vector.shape_cast %34 : vector<8x8xf32> to vector<8x8x1xf32>
    %36 = tpu.reciprocal %35 {approx = true} : vector<8x8x1xf32> -> vector<8x8x1xf32>
    %37 = vector.broadcast %36 : vector<8x8x1xf32> to vector<8x8x8xf32>
    %38 = arith.mulf %33, %37 : vector<8x8x8xf32>
    "tpu.trace_start"() <{level = 10 : i32, message = "bqk,bkd->bqd"}> : () -> ()
    %cst_11 = arith.constant dense<0.000000e+00> : vector<8x8x8xf32>
    %39 = tpu.matmul %38, %27, %cst_11 {dimension_numbers = #tpu.dot_dimension_numbers<[2], [1], [1], [2], [0, 0, 0, 1, 1, 2], [0], [0]>} : vector<8x8x8xf32>, vector<8x8x8xf32>, vector<8x8x8xf32> -> vector<8x8x8xf32>
    "tpu.trace_stop"() : () -> ()
    %40 = vector.extract_strided_slice %5 {offsets = [0, 0, 16], sizes = [8, 8, 8], strides = [1, 1, 1]} : vector<8x8x32xf32> to vector<8x8x8xf32>
    %41 = vector.extract_strided_slice %7 {offsets = [0, 0, 16], sizes = [8, 8, 8], strides = [1, 1, 1]} : vector<8x8x32xf32> to vector<8x8x8xf32>
    %42 = vector.extract_strided_slice %9 {offsets = [0, 0, 16], sizes = [8, 8, 8], strides = [1, 1, 1]} : vector<8x8x32xf32> to vector<8x8x8xf32>
    "tpu.trace_start"() <{level = 10 : i32, message = "bqd,bkd->bqk"}> : () -> ()
    %cst_12 = arith.constant dense<0.000000e+00> : vector<8x8x8xf32>
    %43 = tpu.matmul %40, %41, %cst_12 {dimension_numbers = #tpu.dot_dimension_numbers<[2], [2], [1], [1], [0, 0, 0, 1, 1, 1], [0], [0]>} : vector<8x8x8xf32>, vector<8x8x8xf32>, vector<8x8x8xf32> -> vector<8x8x8xf32>
    "tpu.trace_stop"() : () -> ()
    %cst_13 = arith.constant dense<0xFF800000> : vector<8x8xf32>
    %44 = vector.multi_reduction <maximumf>, %43, %cst_13 [2] : vector<8x8x8xf32> to vector<8x8xf32>
    %45 = vector.shape_cast %44 : vector<8x8xf32> to vector<8x8x1xf32>
    %46 = vector.broadcast %45 : vector<8x8x1xf32> to vector<8x8x8xf32>
    %47 = arith.subf %43, %46 : vector<8x8x8xf32>
    %48 = math.exp %47 : vector<8x8x8xf32>
    %cst_14 = arith.constant dense<0.000000e+00> : vector<8x8xf32>
    %49 = vector.multi_reduction <add>, %48, %cst_14 [2] : vector<8x8x8xf32> to vector<8x8xf32>
    %50 = vector.shape_cast %49 : vector<8x8xf32> to vector<8x8x1xf32>
    %51 = tpu.reciprocal %50 {approx = true} : vector<8x8x1xf32> -> vector<8x8x1xf32>
    %52 = vector.broadcast %51 : vector<8x8x1xf32> to vector<8x8x8xf32>
    %53 = arith.mulf %48, %52 : vector<8x8x8xf32>
    "tpu.trace_start"() <{level = 10 : i32, message = "bqk,bkd->bqd"}> : () -> ()
    %cst_15 = arith.constant dense<0.000000e+00> : vector<8x8x8xf32>
    %54 = tpu.matmul %53, %42, %cst_15 {dimension_numbers = #tpu.dot_dimension_numbers<[2], [1], [1], [2], [0, 0, 0, 1, 1, 2], [0], [0]>} : vector<8x8x8xf32>, vector<8x8x8xf32>, vector<8x8x8xf32> -> vector<8x8x8xf32>
    "tpu.trace_stop"() : () -> ()
    %55 = vector.extract_strided_slice %5 {offsets = [0, 0, 24], sizes = [8, 8, 8], strides = [1, 1, 1]} : vector<8x8x32xf32> to vector<8x8x8xf32>
    %56 = vector.extract_strided_slice %7 {offsets = [0, 0, 24], sizes = [8, 8, 8], strides = [1, 1, 1]} : vector<8x8x32xf32> to vector<8x8x8xf32>
    %57 = vector.extract_strided_slice %9 {offsets = [0, 0, 24], sizes = [8, 8, 8], strides = [1, 1, 1]} : vector<8x8x32xf32> to vector<8x8x8xf32>
    "tpu.trace_start"() <{level = 10 : i32, message = "bqd,bkd->bqk"}> : () -> ()
    %cst_16 = arith.constant dense<0.000000e+00> : vector<8x8x8xf32>
    %58 = tpu.matmul %55, %56, %cst_16 {dimension_numbers = #tpu.dot_dimension_numbers<[2], [2], [1], [1], [0, 0, 0, 1, 1, 1], [0], [0]>} : vector<8x8x8xf32>, vector<8x8x8xf32>, vector<8x8x8xf32> -> vector<8x8x8xf32>
    "tpu.trace_stop"() : () -> ()
    %cst_17 = arith.constant dense<0xFF800000> : vector<8x8xf32>
    %59 = vector.multi_reduction <maximumf>, %58, %cst_17 [2] : vector<8x8x8xf32> to vector<8x8xf32>
    %60 = vector.shape_cast %59 : vector<8x8xf32> to vector<8x8x1xf32>
    %61 = vector.broadcast %60 : vector<8x8x1xf32> to vector<8x8x8xf32>
    %62 = arith.subf %58, %61 : vector<8x8x8xf32>
    %63 = math.exp %62 : vector<8x8x8xf32>
    %cst_18 = arith.constant dense<0.000000e+00> : vector<8x8xf32>
    %64 = vector.multi_reduction <add>, %63, %cst_18 [2] : vector<8x8x8xf32> to vector<8x8xf32>
    %65 = vector.shape_cast %64 : vector<8x8xf32> to vector<8x8x1xf32>
    %66 = tpu.reciprocal %65 {approx = true} : vector<8x8x1xf32> -> vector<8x8x1xf32>
    %67 = vector.broadcast %66 : vector<8x8x1xf32> to vector<8x8x8xf32>
    %68 = arith.mulf %63, %67 : vector<8x8x8xf32>
    "tpu.trace_start"() <{level = 10 : i32, message = "bqk,bkd->bqd"}> : () -> ()
    %cst_19 = arith.constant dense<0.000000e+00> : vector<8x8x8xf32>
    %69 = tpu.matmul %68, %57, %cst_19 {dimension_numbers = #tpu.dot_dimension_numbers<[2], [1], [1], [2], [0, 0, 0, 1, 1, 2], [0], [0]>} : vector<8x8x8xf32>, vector<8x8x8xf32>, vector<8x8x8xf32> -> vector<8x8x8xf32>
    "tpu.trace_stop"() : () -> ()
    %70 = tpu.concatenate %24, %39, %54, %69 in 2 : vector<8x8x8xf32>, vector<8x8x8xf32>, vector<8x8x8xf32>, vector<8x8x8xf32> -> vector<8x8x32xf32>
    %71 = vector.shape_cast %70 : vector<8x8x32xf32> to vector<64x32xf32>
    %c0_20 = arith.constant 0 : index
    %c0_21 = arith.constant 0 : index
    %72 = vector.load %arg3[%c0_20, %c0_21] : memref<32x32xf32, #tpu.memory_space<vmem>>, vector<32x32xf32>
    %cst_22 = arith.constant dense<0.000000e+00> : vector<64x32xf32>
    %73 = tpu.matmul %71, %72, %cst_22 {dimension_numbers = #tpu.dot_dimension_numbers<[1], [0], [0], [1], [0, 0, 1, 1], [], []>} : vector<64x32xf32>, vector<32x32xf32>, vector<64x32xf32> -> vector<64x32xf32>
    %c0_23 = arith.constant 0 : index
    %c0_24 = arith.constant 0 : index
    %74 = vector.load %arg4[%c0_23, %c0_24] : memref<1x32xf32, #tpu.memory_space<vmem>>, vector<1x32xf32>
    %75 = vector.broadcast %74 : vector<1x32xf32> to vector<64x32xf32>
    %76 = arith.addf %73, %75 : vector<64x32xf32>
    %77 = arith.addf %1, %76 : vector<64x32xf32>
    %c0_25 = arith.constant 0 : index
    %c0_26 = arith.constant 0 : index
    %78 = vector.load %arg9[%c0_25, %c0_26] : memref<1x32xf32, #tpu.memory_space<vmem>>, vector<1x32xf32>
    %c0_27 = arith.constant 0 : index
    %c0_28 = arith.constant 0 : index
    %79 = vector.load %arg10[%c0_27, %c0_28] : memref<1x32xf32, #tpu.memory_space<vmem>>, vector<1x32xf32>
    %cst_29 = arith.constant dense<0.000000e+00> : vector<64xf32>
    %80 = vector.multi_reduction <add>, %77, %cst_29 [1] : vector<64x32xf32> to vector<64xf32>
    %81 = vector.shape_cast %80 : vector<64xf32> to vector<64x1xf32>
    %cst_30 = arith.constant 3.200000e+01 : f32
    %82 = vector.broadcast %cst_30 : f32 to vector<64x1xf32>
    %83 = arith.divf %81, %82 : vector<64x1xf32>
    %84 = vector.broadcast %83 : vector<64x1xf32> to vector<64x32xf32>
    %85 = arith.subf %77, %84 : vector<64x32xf32>
    %86 = arith.mulf %85, %85 : vector<64x32xf32>
    %cst_31 = arith.constant dense<0.000000e+00> : vector<64xf32>
    %87 = vector.multi_reduction <add>, %86, %cst_31 [1] : vector<64x32xf32> to vector<64xf32>
    %88 = vector.shape_cast %87 : vector<64xf32> to vector<64x1xf32>
    %cst_32 = arith.constant 3.200000e+01 : f32
    %89 = vector.broadcast %cst_32 : f32 to vector<64x1xf32>
    %90 = arith.divf %88, %89 : vector<64x1xf32>
    %cst_33 = arith.constant 9.99999997E-7 : f32
    %91 = vector.broadcast %cst_33 : f32 to vector<64x1xf32>
    %92 = arith.addf %90, %91 : vector<64x1xf32>
    %93 = math.rsqrt %92 : vector<64x1xf32>
    %94 = vector.broadcast %93 : vector<64x1xf32> to vector<64x32xf32>
    %95 = arith.mulf %85, %94 : vector<64x32xf32>
    %96 = vector.broadcast %78 : vector<1x32xf32> to vector<64x32xf32>
    %97 = arith.mulf %95, %96 : vector<64x32xf32>
    %98 = vector.broadcast %79 : vector<1x32xf32> to vector<64x32xf32>
    %99 = arith.addf %97, %98 : vector<64x32xf32>
    %c0_34 = arith.constant 0 : index
    %c0_35 = arith.constant 0 : index
    %100 = vector.load %arg5[%c0_34, %c0_35] : memref<32x64xf32, #tpu.memory_space<vmem>>, vector<32x64xf32>
    %cst_36 = arith.constant dense<0.000000e+00> : vector<64x64xf32>
    %101 = tpu.matmul %99, %100, %cst_36 {dimension_numbers = #tpu.dot_dimension_numbers<[1], [0], [0], [1], [0, 0, 1, 1], [], []>} : vector<64x32xf32>, vector<32x64xf32>, vector<64x64xf32> -> vector<64x64xf32>
    %c0_37 = arith.constant 0 : index
    %c0_38 = arith.constant 0 : index
    %102 = vector.load %arg6[%c0_37, %c0_38] : memref<1x64xf32, #tpu.memory_space<vmem>>, vector<1x64xf32>
    %103 = vector.broadcast %102 : vector<1x64xf32> to vector<64x64xf32>
    %104 = arith.addf %101, %103 : vector<64x64xf32>
    %cst_39 = arith.constant 0.000000e+00 : f32
    %105 = vector.broadcast %cst_39 : f32 to vector<64x64xf32>
    %106 = arith.maximumf %104, %105 : vector<64x64xf32>
    %c0_40 = arith.constant 0 : index
    %c0_41 = arith.constant 0 : index
    %107 = vector.load %arg7[%c0_40, %c0_41] : memref<64x32xf32, #tpu.memory_space<vmem>>, vector<64x32xf32>
    %cst_42 = arith.constant dense<0.000000e+00> : vector<64x32xf32>
    %108 = tpu.matmul %106, %107, %cst_42 {dimension_numbers = #tpu.dot_dimension_numbers<[1], [0], [0], [1], [0, 0, 1, 1], [], []>} : vector<64x64xf32>, vector<64x32xf32>, vector<64x32xf32> -> vector<64x32xf32>
    %c0_43 = arith.constant 0 : index
    %c0_44 = arith.constant 0 : index
    %109 = vector.load %arg8[%c0_43, %c0_44] : memref<1x32xf32, #tpu.memory_space<vmem>>, vector<1x32xf32>
    %110 = vector.broadcast %109 : vector<1x32xf32> to vector<64x32xf32>
    %111 = arith.addf %108, %110 : vector<64x32xf32>
    %112 = arith.addf %99, %111 : vector<64x32xf32>
    %c0_45 = arith.constant 0 : index
    %c0_46 = arith.constant 0 : index
    %113 = vector.load %arg11[%c0_45, %c0_46] : memref<1x32xf32, #tpu.memory_space<vmem>>, vector<1x32xf32>
    %c0_47 = arith.constant 0 : index
    %c0_48 = arith.constant 0 : index
    %114 = vector.load %arg12[%c0_47, %c0_48] : memref<1x32xf32, #tpu.memory_space<vmem>>, vector<1x32xf32>
    %cst_49 = arith.constant dense<0.000000e+00> : vector<64xf32>
    %115 = vector.multi_reduction <add>, %112, %cst_49 [1] : vector<64x32xf32> to vector<64xf32>
    %116 = vector.shape_cast %115 : vector<64xf32> to vector<64x1xf32>
    %cst_50 = arith.constant 3.200000e+01 : f32
    %117 = vector.broadcast %cst_50 : f32 to vector<64x1xf32>
    %118 = arith.divf %116, %117 : vector<64x1xf32>
    %119 = vector.broadcast %118 : vector<64x1xf32> to vector<64x32xf32>
    %120 = arith.subf %112, %119 : vector<64x32xf32>
    %121 = arith.mulf %120, %120 : vector<64x32xf32>
    %cst_51 = arith.constant dense<0.000000e+00> : vector<64xf32>
    %122 = vector.multi_reduction <add>, %121, %cst_51 [1] : vector<64x32xf32> to vector<64xf32>
    %123 = vector.shape_cast %122 : vector<64xf32> to vector<64x1xf32>
    %cst_52 = arith.constant 3.200000e+01 : f32
    %124 = vector.broadcast %cst_52 : f32 to vector<64x1xf32>
    %125 = arith.divf %123, %124 : vector<64x1xf32>
    %cst_53 = arith.constant 9.99999997E-7 : f32
    %126 = vector.broadcast %cst_53 : f32 to vector<64x1xf32>
    %127 = arith.addf %125, %126 : vector<64x1xf32>
    %128 = math.rsqrt %127 : vector<64x1xf32>
    %129 = vector.broadcast %128 : vector<64x1xf32> to vector<64x32xf32>
    %130 = arith.mulf %120, %129 : vector<64x32xf32>
    %131 = vector.broadcast %113 : vector<1x32xf32> to vector<64x32xf32>
    %132 = arith.mulf %130, %131 : vector<64x32xf32>
    %133 = vector.broadcast %114 : vector<1x32xf32> to vector<64x32xf32>
    %134 = arith.addf %132, %133 : vector<64x32xf32>
    %135 = vector.shape_cast %134 : vector<64x32xf32> to vector<8x8x32xf32>
    %c0_54 = arith.constant 0 : index
    %c0_55 = arith.constant 0 : index
    %c0_56 = arith.constant 0 : index
    %136 = vector.load %arg13[%c0_54, %c0_55, %c0_56] : memref<8x8x32xf32, #tpu.memory_space<vmem>>, vector<8x8x32xf32>
    tpu.vector_store %arg13[%c0_54, %c0_55, %c0_56], %135 {strides = array<i32>} : memref<8x8x32xf32, #tpu.memory_space<vmem>>, vector<8x8x32xf32>,
    return
  }
  func.func @transform_0(%arg0: i32) -> (i32, i32, i32) {
    %c0_i32 = arith.constant 0 : i32
    %c0_i32_0 = arith.constant 0 : i32
    %c0_i32_1 = arith.constant 0 : i32
    return %arg0, %c0_i32, %c0_i32_0 : i32, i32, i32
  }
  func.func @transform_1(%arg0: i32) -> (i32, i32) {
    %c0_i32 = arith.constant 0 : i32
    %c0_i32_0 = arith.constant 0 : i32
    %c0_i32_1 = arith.constant 0 : i32
    return %c0_i32, %c0_i32_0 : i32, i32
  }
  func.func @transform_2(%arg0: i32) -> (i32, i32) {
    %c0_i32 = arith.constant 0 : i32
    %c0_i32_0 = arith.constant 0 : i32
    %c0_i32_1 = arith.constant 0 : i32
    return %c0_i32, %c0_i32_0 : i32, i32
  }
  func.func @transform_3(%arg0: i32) -> (i32, i32) {
    %c0_i32 = arith.constant 0 : i32
    %c0_i32_0 = arith.constant 0 : i32
    %c0_i32_1 = arith.constant 0 : i32
    return %c0_i32, %c0_i32_0 : i32, i32
  }
  func.func @transform_4(%arg0: i32) -> (i32, i32) {
    %c0_i32 = arith.constant 0 : i32
    %c0_i32_0 = arith.constant 0 : i32
    %c0_i32_1 = arith.constant 0 : i32
    return %c0_i32, %c0_i32_0 : i32, i32
  }
  func.func @transform_5(%arg0: i32) -> (i32, i32) {
    %c0_i32 = arith.constant 0 : i32
    %c0_i32_0 = arith.constant 0 : i32
    %c0_i32_1 = arith.constant 0 : i32
    return %c0_i32, %c0_i32_0 : i32, i32
  }
  func.func @transform_6(%arg0: i32) -> (i32, i32) {
    %c0_i32 = arith.constant 0 : i32
    %c0_i32_0 = arith.constant 0 : i32
    %c0_i32_1 = arith.constant 0 : i32
    return %c0_i32, %c0_i32_0 : i32, i32
  }
  func.func @transform_7(%arg0: i32) -> (i32, i32) {
    %c0_i32 = arith.constant 0 : i32
    %c0_i32_0 = arith.constant 0 : i32
    %c0_i32_1 = arith.constant 0 : i32
    return %c0_i32, %c0_i32_0 : i32, i32
  }
  func.func @transform_8(%arg0: i32) -> (i32, i32) {
    %c0_i32 = arith.constant 0 : i32
    %c0_i32_0 = arith.constant 0 : i32
    %c0_i32_1 = arith.constant 0 : i32
    return %c0_i32, %c0_i32_0 : i32, i32
  }
  func.func @transform_9(%arg0: i32) -> (i32, i32) {
    %c0_i32 = arith.constant 0 : i32
    %c0_i32_0 = arith.constant 0 : i32
    %c0_i32_1 = arith.constant 0 : i32
    return %c0_i32, %c0_i32_0 : i32, i32
  }
  func.func @transform_10(%arg0: i32) -> (i32, i32) {
    %c0_i32 = arith.constant 0 : i32
    %c0_i32_0 = arith.constant 0 : i32
    %c0_i32_1 = arith.constant 0 : i32
    return %c0_i32, %c0_i32_0 : i32, i32
  }
  func.func @transform_11(%arg0: i32) -> (i32, i32) {
    %c0_i32 = arith.constant 0 : i32
    %c0_i32_0 = arith.constant 0 : i32
    %c0_i32_1 = arith.constant 0 : i32
    return %c0_i32, %c0_i32_0 : i32, i32
  }
  func.func @transform_12(%arg0: i32) -> (i32, i32, i32) {
    %c0_i32 = arith.constant 0 : i32
    %c0_i32_0 = arith.constant 0 : i32
    %c0_i32_1 = arith.constant 0 : i32
    return %arg0, %c0_i32, %c0_i32_0 : i32, i32, i32
  }
}

</mosaic_0001>

<llo_original>
// kernel: tpu_custom_call.1
$region0: #{tpu_custom_call.1}
  #allocation0 [shape = 'u32[]', space=smem, size = 0x4, offset = 0x4, fixed_abs, tag = 'smem constant byte address 0x4 - core index']
  #allocation1 [shape = 'u32[144,128]{1,0:T(1,128)}', space=vmem, size = 0x12000, scoped, tag = 'internal scratch']
  %s0 = inlined_call_operand.hbm [shape: f32[16,8,32], index: 0, kind: input, shape index: {}]
  %s1 = inlined_call_operand.vmem [shape: f32[32,96], index: 1, kind: input, shape index: {}]
  %s2 = inlined_call_operand.vmem [shape: f32[32,32], index: 2, kind: input, shape index: {}]
  %s3 = inlined_call_operand.vmem [shape: f32[1,32], index: 3, kind: input, shape index: {}]
  %s4 = inlined_call_operand.vmem [shape: f32[32,64], index: 4, kind: input, shape index: {}]
  %s5 = inlined_call_operand.vmem [shape: f32[1,64], index: 5, kind: input, shape index: {}]
  %s6 = inlined_call_operand.vmem [shape: f32[64,32], index: 6, kind: input, shape index: {}]
  %s7 = inlined_call_operand.vmem [shape: f32[1,32], index: 7, kind: input, shape index: {}]
  %s8 = inlined_call_operand.vmem [shape: f32[1,32], index: 8, kind: input, shape index: {}]
  %s9 = inlined_call_operand.vmem [shape: f32[1,32], index: 9, kind: input, shape index: {}]
  %s10 = inlined_call_operand.vmem [shape: f32[1,32], index: 10, kind: input, shape index: {}]
  %s11 = inlined_call_operand.vmem [shape: f32[1,32], index: 11, kind: input, shape index: {}]
  %s12 = inlined_call_operand.hbm [shape: f32[16,8,32], index: 12, kind: output, shape index: {}]
  %s13 = sld [smem:[#allocation0]]
  $region85: #{tpu_custom_call.1} parent=0
    _
  %s15 = ssub.s32 1, %s13
  %s16 = scalar_select 0, %s15, %s13
  $region1: #{tpu_custom_call.1} parent=0
    #allocation2 [shape = 'u8[65536]{0}', space=vmem, size = 0x10000, scoped, tag = 'input window, operand 0']
    #allocation3 [shape = 's32[2]{0}', space=sflag, size = 0x8, scoped, tag = 'scoped memory for tpu_custom_call.1']
    #allocation4 [shape = 's32[2]{0}', space=sflag, size = 0x8, scoped, tag = 'scoped memory for tpu_custom_call.1']
    #allocation5 [shape = 'u8[65536]{0}', space=vmem, size = 0x10000, scoped, tag = 'output window, operand 0']
    %17 = vsyncpa [#allocation3], 0
    %s18 = scalar_lea.sflag [#allocation3], 1
    %19 = vsyncpa %s18, 0
    %20 = vsyncpa [#allocation4], 0
    %s21 = scalar_lea.sflag [#allocation4], 1
    %22 = vsyncpa %s21, 0
    loop: start=0, step=1, limit=4
    $region2: #{tpu_custom_call.1} parent=1 // loop_pre_header
      _
    $region3: #{tpu_custom_call.1} parent=1 // loop_header
      %s24 = sphi 0, %s28
      %p25 = scmp.ge.s32.totalorder %s24, 4
      %s34 = sphi 0, %s36
      %s37 = sphi 0, %s34
      %s38 = sphi 0, %s37
      %s54 = sphi 0, %s38
      %s58 = sphi 0, %s58
      %s60 = sphi 0, %s58
      %s61 = sphi 0, %s60
      %s75 = sphi 0, %s61
      %s79 = sphi 0, %s79
      %s81 = sphi 0, %s79
      %s82 = sphi 0, %s81
      %s96 = sphi 0, %s82
      %s100 = sphi 0, %s100
      %s102 = sphi 0, %s100
      %s103 = sphi 0, %s102
      %s117 = sphi 0, %s103
      %s121 = sphi 0, %s121
      %s123 = sphi 0, %s121
      %s124 = sphi 0, %s123
      %s138 = sphi 0, %s124
      %s142 = sphi 0, %s142
      %s144 = sphi 0, %s142
      %s145 = sphi 0, %s144
      %s159 = sphi 0, %s145
      %s163 = sphi 0, %s163
      %s165 = sphi 0, %s163
      %s166 = sphi 0, %s165
      %s180 = sphi 0, %s166
      %s184 = sphi 0, %s184
      %s186 = sphi 0, %s184
      %s187 = sphi 0, %s186
      %s201 = sphi 0, %s187
      %s205 = sphi 0, %s205
      %s207 = sphi 0, %s205
      %s208 = sphi 0, %s207
      %s222 = sphi 0, %s208
      %s226 = sphi 0, %s226
      %s228 = sphi 0, %s226
      %s229 = sphi 0, %s228
      %s243 = sphi 0, %s229
      %s247 = sphi 0, %s247
      %s249 = sphi 0, %s247
      %s250 = sphi 0, %s249
      %s264 = sphi 0, %s250
      %s268 = sphi 0, %s268
      %s270 = sphi 0, %s268
      %s271 = sphi 0, %s270
      %s285 = sphi 0, %s271
      %s291 = sphi 0, %s293
      %s294 = sphi 0, %s291
      %s295 = sphi 0, %s294
      %s311 = sphi 0, %s295
    $region4: #{tpu_custom_call.1} parent=1 // loop_header_branch
      %27 = sbr.rel (%p25) target = $region8
    $region5: #{tpu_custom_call.1} parent=1 // loop_body
      %s29 = ssub.s32 %s24, 1
      %s30 = ssub.s32 %s24, 2
      %s31 = sadd.s32 %s24, 1
      %s32 = ssub.s32 %s24, %s31
      %p33 = scmp.eq.s32.totalorder %s32, 0
      %s35 = sadd.s32 %s34, 1
      %s36 = scalar_select %p33, %s34, %s35
      %p39 = pneg %p33
      %p40 = scmp.eq.s32.totalorder %s24, 1
      %p41 = por %p39, %p40
      %p42 = scmp.ne.s32.totalorder %s34, %s37
      %p43 = scmp.eq.s32.totalorder %s24, 0
      %p44 = por %p42, %p43
      %p45 = scmp.ne.s32.totalorder %s34, %s37
      %p46 = scmp.eq.s32.totalorder %s29, 1
      %p47 = por %p45, %p46
      %p48 = scmp.ne.s32.totalorder %s37, %s38
      %p49 = scmp.eq.s32.totalorder %s29, 0
      %p50 = por %p48, %p49
      %p51 = scmp.ne.s32.totalorder %s37, %s38
      %p52 = scmp.eq.s32.totalorder %s30, 1
      %p53 = por %p51, %p52
      %p55 = scmp.ne.s32.totalorder %s38, %s54
      %p56 = scmp.eq.s32.totalorder %s30, 0
      %p57 = por %p55, %p56
      %s59 = sadd.s32 %s58, 1
      %p62 = scmp.eq.s32.totalorder %s24, 1
      %p63 = scmp.ne.s32.totalorder %s58, %s60
      %p64 = scmp.eq.s32.totalorder %s24, 0
      %p65 = por %p63, %p64
      %p66 = scmp.ne.s32.totalorder %s58, %s60
      %p67 = scmp.eq.s32.totalorder %s29, 1
      %p68 = por %p66, %p67
      %p69 = scmp.ne.s32.totalorder %s60, %s61
      %p70 = scmp.eq.s32.totalorder %s29, 0
      %p71 = por %p69, %p70
      %p72 = scmp.ne.s32.totalorder %s60, %s61
      %p73 = scmp.eq.s32.totalorder %s30, 1
      %p74 = por %p72, %p73
      %p76 = scmp.ne.s32.totalorder %s61, %s75
      %p77 = scmp.eq.s32.totalorder %s30, 0
      %p78 = por %p76, %p77
      %s80 = sadd.s32 %s79, 1
      %p83 = scmp.eq.s32.totalorder %s24, 1
      %p84 = scmp.ne.s32.totalorder %s79, %s81
      %p85 = scmp.eq.s32.totalorder %s24, 0
      %p86 = por %p84, %p85
      %p87 = scmp.ne.s32.totalorder %s79, %s81
      %p88 = scmp.eq.s32.totalorder %s29, 1
      %p89 = por %p87, %p88
      %p90 = scmp.ne.s32.totalorder %s81, %s82
      %p91 = scmp.eq.s32.totalorder %s29, 0
      %p92 = por %p90, %p91
      %p93 = scmp.ne.s32.totalorder %s81, %s82
      %p94 = scmp.eq.s32.totalorder %s30, 1
      %p95 = por %p93, %p94
      %p97 = scmp.ne.s32.totalorder %s82, %s96
      %p98 = scmp.eq.s32.totalorder %s30, 0
      %p99 = por %p97, %p98
      %s101 = sadd.s32 %s100, 1
      %p104 = scmp.eq.s32.totalorder %s24, 1
      %p105 = scmp.ne.s32.totalorder %s100, %s102
      %p106 = scmp.eq.s32.totalorder %s24, 0
      %p107 = por %p105, %p106
      %p108 = scmp.ne.s32.totalorder %s100, %s102
      %p109 = scmp.eq.s32.totalorder %s29, 1
      %p110 = por %p108, %p109
      %p111 = scmp.ne.s32.totalorder %s102, %s103
      %p112 = scmp.eq.s32.totalorder %s29, 0
      %p113 = por %p111, %p112
      %p114 = scmp.ne.s32.totalorder %s102, %s103
      %p115 = scmp.eq.s32.totalorder %s30, 1
      %p116 = por %p114, %p115
      %p118 = scmp.ne.s32.totalorder %s103, %s117
      %p119 = scmp.eq.s32.totalorder %s30, 0
      %p120 = por %p118, %p119
      %s122 = sadd.s32 %s121, 1
      %p125 = scmp.eq.s32.totalorder %s24, 1
      %p126 = scmp.ne.s32.totalorder %s121, %s123
      %p127 = scmp.eq.s32.totalorder %s24, 0
      %p128 = por %p126, %p127
      %p129 = scmp.ne.s32.totalorder %s121, %s123
      %p130 = scmp.eq.s32.totalorder %s29, 1
      %p131 = por %p129, %p130
      %p132 = scmp.ne.s32.totalorder %s123, %s124
      %p133 = scmp.eq.s32.totalorder %s29, 0
      %p134 = por %p132, %p133
      %p135 = scmp.ne.s32.totalorder %s123, %s124
      %p136 = scmp.eq.s32.totalorder %s30, 1
      %p137 = por %p135, %p136
      %p139 = scmp.ne.s32.totalorder %s124, %s138
      %p140 = scmp.eq.s32.totalorder %s30, 0
      %p141 = por %p139, %p140
      %s143 = sadd.s32 %s142, 1
      %p146 = scmp.eq.s32.totalorder %s24, 1
      %p147 = scmp.ne.s32.totalorder %s142, %s144
      %p148 = scmp.eq.s32.totalorder %s24, 0
      %p149 = por %p147, %p148
      %p150 = scmp.ne.s32.totalorder %s142, %s144
      %p151 = scmp.eq.s32.totalorder %s29, 1
      %p152 = por %p150, %p151
      %p153 = scmp.ne.s32.totalorder %s144, %s145
      %p154 = scmp.eq.s32.totalorder %s29, 0
      %p155 = por %p153, %p154
      %p156 = scmp.ne.s32.totalorder %s144, %s145
      %p157 = scmp.eq.s32.totalorder %s30, 1
      %p158 = por %p156, %p157
      %p160 = scmp.ne.s32.totalorder %s145, %s159
      %p161 = scmp.eq.s32.totalorder %s30, 0
      %p162 = por %p160, %p161
      %s164 = sadd.s32 %s163, 1
      %p167 = scmp.eq.s32.totalorder %s24, 1
      %p168 = scmp.ne.s32.totalorder %s163, %s165
      %p169 = scmp.eq.s32.totalorder %s24, 0
      %p170 = por %p168, %p169
      %p171 = scmp.ne.s32.totalorder %s163, %s165
      %p172 = scmp.eq.s32.totalorder %s29, 1
      %p173 = por %p171, %p172
      %p174 = scmp.ne.s32.totalorder %s165, %s166
      %p175 = scmp.eq.s32.totalorder %s29, 0
      %p176 = por %p174, %p175
      %p177 = scmp.ne.s32.totalorder %s165, %s166
      %p178 = scmp.eq.s32.totalorder %s30, 1
      %p179 = por %p177, %p178
      %p181 = scmp.ne.s32.totalorder %s166, %s180
      %p182 = scmp.eq.s32.totalorder %s30, 0
      %p183 = por %p181, %p182
      %s185 = sadd.s32 %s184, 1
      %p188 = scmp.eq.s32.totalorder %s24, 1
      %p189 = scmp.ne.s32.totalorder %s184, %s186
      %p190 = scmp.eq.s32.totalorder %s24, 0
      %p191 = por %p189, %p190
      %p192 = scmp.ne.s32.totalorder %s184, %s186
      %p193 = scmp.eq.s32.totalorder %s29, 1
      %p194 = por %p192, %p193
      %p195 = scmp.ne.s32.totalorder %s186, %s187
      %p196 = scmp.eq.s32.totalorder %s29, 0
      %p197 = por %p195, %p196
      %p198 = scmp.ne.s32.totalorder %s186, %s187
      %p199 = scmp.eq.s32.totalorder %s30, 1
      %p200 = por %p198, %p199
      %p202 = scmp.ne.s32.totalorder %s187, %s201
      %p203 = scmp.eq.s32.totalorder %s30, 0
      %p204 = por %p202, %p203
      %s206 = sadd.s32 %s205, 1
      %p209 = scmp.eq.s32.totalorder %s24, 1
      %p210 = scmp.ne.s32.totalorder %s205, %s207
      %p211 = scmp.eq.s32.totalorder %s24, 0
      %p212 = por %p210, %p211
      %p213 = scmp.ne.s32.totalorder %s205, %s207
      %p214 = scmp.eq.s32.totalorder %s29, 1
      %p215 = por %p213, %p214
      %p216 = scmp.ne.s32.totalorder %s207, %s208
      %p217 = scmp.eq.s32.totalorder %s29, 0
      %p218 = por %p216, %p217
      %p219 = scmp.ne.s32.totalorder %s207, %s208
      %p220 = scmp.eq.s32.totalorder %s30, 1
      %p221 = por %p219, %p220
      %p223 = scmp.ne.s32.totalorder %s208, %s222
      %p224 = scmp.eq.s32.totalorder %s30, 0
      %p225 = por %p223, %p224
      %s227 = sadd.s32 %s226, 1
      %p230 = scmp.eq.s32.totalorder %s24, 1
      %p231 = scmp.ne.s32.totalorder %s226, %s228
      %p232 = scmp.eq.s32.totalorder %s24, 0
      %p233 = por %p231, %p232
      %p234 = scmp.ne.s32.totalorder %s226, %s228
      %p235 = scmp.eq.s32.totalorder %s29, 1
      %p236 = por %p234, %p235
      %p237 = scmp.ne.s32.totalorder %s228, %s229
      %p238 = scmp.eq.s32.totalorder %s29, 0
      %p239 = por %p237, %p238
      %p240 = scmp.ne.s32.totalorder %s228, %s229
      %p241 = scmp.eq.s32.totalorder %s30, 1
      %p242 = por %p240, %p241
      %p244 = scmp.ne.s32.totalorder %s229, %s243
      %p245 = scmp.eq.s32.totalorder %s30, 0
      %p246 = por %p244, %p245
      %s248 = sadd.s32 %s247, 1
      %p251 = scmp.eq.s32.totalorder %s24, 1
      %p252 = scmp.ne.s32.totalorder %s247, %s249
      %p253 = scmp.eq.s32.totalorder %s24, 0
      %p254 = por %p252, %p253
      %p255 = scmp.ne.s32.totalorder %s247, %s249
      %p256 = scmp.eq.s32.totalorder %s29, 1
      %p257 = por %p255, %p256
      %p258 = scmp.ne.s32.totalorder %s249, %s250
      %p259 = scmp.eq.s32.totalorder %s29, 0
      %p260 = por %p258, %p259
      %p261 = scmp.ne.s32.totalorder %s249, %s250
      %p262 = scmp.eq.s32.totalorder %s30, 1
      %p263 = por %p261, %p262
      %p265 = scmp.ne.s32.totalorder %s250, %s264
      %p266 = scmp.eq.s32.totalorder %s30, 0
      %p267 = por %p265, %p266
      %s269 = sadd.s32 %s268, 1
      %p272 = scmp.eq.s32.totalorder %s24, 1
      %p273 = scmp.ne.s32.totalorder %s268, %s270
      %p274 = scmp.eq.s32.totalorder %s24, 0
      %p275 = por %p273, %p274
      %p276 = scmp.ne.s32.totalorder %s268, %s270
      %p277 = scmp.eq.s32.totalorder %s29, 1
      %p278 = por %p276, %p277
      %p279 = scmp.ne.s32.totalorder %s270, %s271
      %p280 = scmp.eq.s32.totalorder %s29, 0
      %p281 = por %p279, %p280
      %p282 = scmp.ne.s32.totalorder %s270, %s271
      %p283 = scmp.eq.s32.totalorder %s30, 1
      %p284 = por %p282, %p283
      %p286 = scmp.ne.s32.totalorder %s271, %s285
      %p287 = scmp.eq.s32.totalorder %s30, 0
      %p288 = por %p286, %p287
      %s289 = ssub.s32 %s24, %s31
      %p290 = scmp.eq.s32.totalorder %s289, 0
      %s292 = sadd.s32 %s291, 1
      %s293 = scalar_select %p290, %s291, %s292
      %p296 = pneg %p290
      %p297 = scmp.eq.s32.totalorder %s24, 1
      %p298 = por %p296, %p297
      %p299 = scmp.ne.s32.totalorder %s291, %s294
      %p300 = scmp.eq.s32.totalorder %s24, 0
      %p301 = por %p299, %p300
      %p302 = scmp.ne.s32.totalorder %s291, %s294
      %p303 = scmp.eq.s32.totalorder %s29, 1
      %p304 = por %p302, %p303
      %p305 = scmp.ne.s32.totalorder %s294, %s295
      %p306 = scmp.eq.s32.totalorder %s29, 0
      %p307 = por %p305, %p306
      %p308 = scmp.ne.s32.totalorder %s294, %s295
      %p309 = scmp.eq.s32.totalorder %s30, 1
      %p310 = por %p308, %p309
      %p312 = scmp.ne.s32.totalorder %s295, %s311
      %p313 = scmp.eq.s32.totalorder %s30, 0
      %p314 = por %p312, %p313
      %p315 = scmp.le.s32.totalorder 1, %s24
      %p316 = scmp.lt.s32.totalorder %s24, 3
      %p317 = pnand %p315, %p316
      %p318 = pneg %p317
      // Predicated region
      $region9: #{tpu_custom_call.1} parent=5 // pred_check
        _
      $region10: #{tpu_custom_call.1} parent=5 // pred_check_branch
        %320 = sbr.rel (%p317) target = $region12
      $region11: #{tpu_custom_call.1} parent=5 // pred_region
        %s321 = ssub.s32 %s24, 1
        // Predicated region
        $region13: #{tpu_custom_call.1} parent=11 // pred_check
          %p322 = pneg %p71
        $region14: #{tpu_custom_call.1} parent=11 // pred_check_branch
          %324 = sbr.rel (%p322) target = $region16
        $region15: #{tpu_custom_call.1} parent=11 // pred_region
          _
        $region16: #{tpu_custom_call.1} parent=11 // pred_fallthru
          _
        // Predicated region
        $region17: #{tpu_custom_call.1} parent=11 // pred_check
          %p325 = pneg %p92
        $region18: #{tpu_custom_call.1} parent=11 // pred_check_branch
          %327 = sbr.rel (%p325) target = $region20
        $region19: #{tpu_custom_call.1} parent=11 // pred_region
          _
        $region20: #{tpu_custom_call.1} parent=11 // pred_fallthru
          _
        // Predicated region
        $region21: #{tpu_custom_call.1} parent=11 // pred_check
          %p328 = pneg %p113
        $region22: #{tpu_custom_call.1} parent=11 // pred_check_branch
          %330 = sbr.rel (%p328) target = $region24
        $region23: #{tpu_custom_call.1} parent=11 // pred_region
          _
        $region24: #{tpu_custom_call.1} parent=11 // pred_fallthru
          _
        // Predicated region
        $region25: #{tpu_custom_call.1} parent=11 // pred_check
          %p331 = pneg %p134
        $region26: #{tpu_custom_call.1} parent=11 // pred_check_branch
          %333 = sbr.rel (%p331) target = $region28
        $region27: #{tpu_custom_call.1} parent=11 // pred_region
          _
        $region28: #{tpu_custom_call.1} parent=11 // pred_fallthru
          _
        // Predicated region
        $region29: #{tpu_custom_call.1} parent=11 // pred_check
          %p334 = pneg %p155
        $region30: #{tpu_custom_call.1} parent=11 // pred_check_branch
          %336 = sbr.rel (%p334) target = $region32
        $region31: #{tpu_custom_call.1} parent=11 // pred_region
          _
        $region32: #{tpu_custom_call.1} parent=11 // pred_fallthru
          _
        // Predicated region
        $region33: #{tpu_custom_call.1} parent=11 // pred_check
          %p337 = pneg %p176
        $region34: #{tpu_custom_call.1} parent=11 // pred_check_branch
          %339 = sbr.rel (%p337) target = $region36
        $region35: #{tpu_custom_call.1} parent=11 // pred_region
          _
        $region36: #{tpu_custom_call.1} parent=11 // pred_fallthru
          _
        // Predicated region
        $region37: #{tpu_custom_call.1} parent=11 // pred_check
          %p340 = pneg %p197
        $region38: #{tpu_custom_call.1} parent=11 // pred_check_branch
          %342 = sbr.rel (%p340) target = $region40
        $region39: #{tpu_custom_call.1} parent=11 // pred_region
          _
        $region40: #{tpu_custom_call.1} parent=11 // pred_fallthru
          _
        // Predicated region
        $region41: #{tpu_custom_call.1} parent=11 // pred_check
          %p343 = pneg %p218
        $region42: #{tpu_custom_call.1} parent=11 // pred_check_branch
          %345 = sbr.rel (%p343) target = $region44
        $region43: #{tpu_custom_call.1} parent=11 // pred_region
          _
        $region44: #{tpu_custom_call.1} parent=11 // pred_fallthru
          _
        // Predicated region
        $region45: #{tpu_custom_call.1} parent=11 // pred_check
          %p346 = pneg %p239
        $region46: #{tpu_custom_call.1} parent=11 // pred_check_branch
          %348 = sbr.rel (%p346) target = $region48
        $region47: #{tpu_custom_call.1} parent=11 // pred_region
          _
        $region48: #{tpu_custom_call.1} parent=11 // pred_fallthru
          _
        // Predicated region
        $region49: #{tpu_custom_call.1} parent=11 // pred_check
          %p349 = pneg %p260
        $region50: #{tpu_custom_call.1} parent=11 // pred_check_branch
          %351 = sbr.rel (%p349) target = $region52
        $region51: #{tpu_custom_call.1} parent=11 // pred_region
          _
        $region52: #{tpu_custom_call.1} parent=11 // pred_fallthru
          _
        // Predicated region
        $region53: #{tpu_custom_call.1} parent=11 // pred_check
          %p352 = pneg %p281
        $region54: #{tpu_custom_call.1} parent=11 // pred_check_branch
          %354 = sbr.rel (%p352) target = $region56
        $region55: #{tpu_custom_call.1} parent=11 // pred_region
          _
        $region56: #{tpu_custom_call.1} parent=11 // pred_fallthru
          _
      $region12: #{tpu_custom_call.1} parent=5 // pred_fallthru
        _
      %p355 = scmp.lt.s32.totalorder %s24, 2
      // Predicated region
      $region57: #{tpu_custom_call.1} parent=5 // pred_check
        %p356 = pneg %p355
      $region58: #{tpu_custom_call.1} parent=5 // pred_check_branch
        %358 = sbr.rel (%p356) target = $region60
      $region59: #{tpu_custom_call.1} parent=5 // pred_region
        // Predicated region
        $region61: #{tpu_custom_call.1} parent=59 // pred_check
          %p359 = pneg %p44
        $region62: #{tpu_custom_call.1} parent=59 // pred_check_branch
          %361 = sbr.rel (%p359) target = $region64
        $region63: #{tpu_custom_call.1} parent=59 // pred_region
          %s362 = sand.u32 %s34, 1
          %s363 = scalar_lea.sflag [#allocation3], %s362
          %s364 = sand.u32 %s34, 1
          %s365 = smul.addr %s364, 64
          %s366 = scalar_lea.vmem [#allocation2], %s365
          %s367 = smul.u32 8, %s24
          %s369 = ssub.s32 1024, 1024
          %370 = vsyncadd %s363, %s369
          %s371 = smul.addr %s367, 128
          %s372 = scalar_lea.hbm %s0, %s371
          %s373 = sshll.u32 %s366, 4
          %s374 = int_to_ptr.vmem [resolvable:$true] %s373
          %379 = dma.hbm_to_vmem [thread:$0]  %s372, 1024, %s374, %s363, 128, 128, 8
        $region64: #{tpu_custom_call.1} parent=59 // pred_fallthru
          _
      $region60: #{tpu_custom_call.1} parent=5 // pred_fallthru
        _
      %p380 = scmp.le.s32.totalorder 1, %s24
      %p381 = scmp.lt.s32.totalorder %s24, 3
      %p382 = pnand %p380, %p381
      %p383 = pneg %p382
      // Predicated region
      $region65: #{tpu_custom_call.1} parent=5 // pred_check
        _
      $region66: #{tpu_custom_call.1} parent=5 // pred_check_branch
        %385 = sbr.rel (%p382) target = $region68
      $region67: #{tpu_custom_call.1} parent=5 // pred_region
        %s386 = ssub.s32 %s24, 1
        %s387 = sand.u32 %s37, 1
        %s388 = scalar_lea.sflag [#allocation3], %s387
        %s389 = sand.u32 %s37, 1
        %s390 = smul.addr %s389, 64
        %s391 = scalar_lea.vmem [#allocation2], %s390
        // Predicated region
        $region69: #{tpu_custom_call.1} parent=67 // pred_check
          %p392 = pneg %p50
        $region70: #{tpu_custom_call.1} parent=67 // pred_check_branch
          %394 = sbr.rel (%p392) target = $region72
        $region71: #{tpu_custom_call.1} parent=67 // pred_region
          %395 = dma.done %s388, 1024
        $region72: #{tpu_custom_call.1} parent=67 // pred_fallthru
          _
        %s396 = sand.u32 %s37, 1
        %s397 = scalar_lea.sflag [#allocation3], %s396
        %s398 = sand.u32 %s37, 1
        %s399 = smul.addr %s398, 64
        %s400 = scalar_lea.vmem [#allocation2], %s399
        %p401 = pneg %p50
        %p402 = pneg %p47
        %p403 = pneg %p71
        %p404 = pneg %p68
        %p405 = pneg %p92
        %p406 = pneg %p89
        %p407 = pneg %p113
        %p408 = pneg %p110
        %p409 = pneg %p134
        %p410 = pneg %p131
        %p411 = pneg %p155
        %p412 = pneg %p152
        %p413 = pneg %p176
        %p414 = pneg %p173
        %p415 = pneg %p197
        %p416 = pneg %p194
        %p417 = pneg %p218
        %p418 = pneg %p215
        %p419 = pneg %p239
        %p420 = pneg %p236
        %p421 = pneg %p260
        %p422 = pneg %p257
        %p423 = pneg %p281
        %p424 = pneg %p278
        %p425 = pneg %p307
        %p426 = pneg %p304
        %s427 = sand.u32 %s294, 1
        %s428 = scalar_lea.sflag [#allocation4], %s427
        %s429 = sand.u32 %s294, 1
        %s430 = smul.addr %s429, 64
        %s431 = scalar_lea.vmem [#allocation5], %s430
        %s432 = smul.u32 8, %s29
        %s433 = smul.u32 8, %s29
        %v434 = vld [vmem:[%s391] sm:$0xff]
        %v435 = vld [vmem:[%s391 + $0x8] sm:$0xff]
        %v436 = vld [vmem:[%s391 + $0x10] sm:$0xff]
        %v437 = vld [vmem:[%s391 + $0x18] sm:$0xff]
        %v438 = vld [vmem:[%s391 + $0x20] sm:$0xff]
        %v439 = vld [vmem:[%s391 + $0x28] sm:$0xff]
        %v440 = vld [vmem:[%s391 + $0x30] sm:$0xff]
        %v441 = vld [vmem:[%s391 + $0x38] sm:$0xff]
        %v442 = vld [vmem:[%s1] sm:$0xff]
        %v443 = vld [vmem:[%s1 + $0x8] sm:$0xff]
        %v444 = vld [vmem:[%s1 + $0x10] sm:$0xff]
        %v445 = vld [vmem:[%s1 + $0x18] sm:$0xff]
        %vm446 = vcmask 261120
        %v448 = vsel %vm446, %v434, 0
        %v451 = vsel %vm446, %v435, 0
        %v454 = vsel %vm446, %v436, 0
        %v457 = vsel %vm446, %v437, 0
        %v460 = vsel %vm446, %v438, 0
        %v463 = vsel %vm446, %v439, 0
        %v466 = vsel %vm446, %v440, 0
        %v469 = vsel %vm446, %v441, 0
        %471 = vmatprep.subr.mxu0 0.0
        %472 = vmatpush1.msra.mxu0 %v442
        %473 = vmatprep.subr.mxu0 0.0
        %474 = vmatpush1.msra.mxu0 %v443
        %475 = vmatprep.subr.mxu0 0.0
        %476 = vmatpush1.msra.mxu0 %v444
        %477 = vmatprep.subr.mxu0 0.0
        %478 = vmatpush1.msra.mxu0 %v445
        %479 = vmatprep.subr.mxu0 0.0
        %480 = vmatpush1.msra.mxu0 0.0
        %481 = vmatprep.subr.mxu0 0.0
        %482 = vmatpush1.msra.mxu0 0.0
        %483 = vmatprep.subr.mxu0 0.0
        %484 = vmatpush1.msra.mxu0 0.0
        %485 = vmatprep.subr.mxu0 0.0
        %486 = vmatpush1.msra.mxu0 0.0
        %487 = vmatprep.subr.mxu0 0.0
        %488 = vmatpush1.msra.mxu0 0.0
        %489 = vmatprep.subr.mxu0 0.0
        %490 = vmatpush1.msra.mxu0 0.0
        %491 = vmatprep.subr.mxu0 0.0
        %492 = vmatpush1.msra.mxu0 0.0
        %493 = vmatprep.subr.mxu0 0.0
        %494 = vmatpush1.msra.mxu0 0.0
        %495 = vmatprep.subr.mxu0 0.0
        %496 = vmatpush1.msra.mxu0 0.0
        %497 = vmatprep.subr.mxu0 0.0
        %498 = vmatpush1.msra.mxu0 0.0
        %499 = vmatprep.subr.mxu0 0.0
        %500 = vmatpush1.msra.mxu0 0.0
        %501 = vmatprep.subr.mxu0 0.0
        %502 = vmatpush1.msra.mxu0 0.0
        %503 = vmatprep.subr.mxu0 0.0
        %504 = vmatpush1.msra.mxu0 0.0
        %505 = vmatprep.subr.mxu0 0.0
        %506 = vmatpush1.msra.mxu0 0.0
        %507 = vmatprep.subr.mxu0 0.0
        %508 = vmatpush1.msra.mxu0 0.0
        %509 = vmatprep.subr.mxu0 0.0
        %510 = vmatpush1.msra.mxu0 0.0
        %511 = vmatprep.subr.mxu0 0.0
        %512 = vmatpush1.msra.mxu0 0.0
        %513 = vmatprep.subr.mxu0 0.0
        %514 = vmatpush1.msra.mxu0 0.0
        %515 = vmatprep.subr.mxu0 0.0
        %516 = vmatpush1.msra.mxu0 0.0
        %517 = vmatprep.subr.mxu0 0.0
        %518 = vmatpush1.msra.mxu0 0.0
        %519 = vmatprep.subr.mxu0 0.0
        %520 = vmatpush1.msra.mxu0 0.0
        %521 = vmatprep.subr.mxu0 0.0
        %522 = vmatpush1.msra.mxu0 0.0
        %523 = vmatprep.subr.mxu0 0.0
        %524 = vmatpush1.msra.mxu0 0.0
        %525 = vmatprep.subr.mxu0 0.0
        %526 = vmatpush1.msra.mxu0 0.0
        %527 = vmatprep.subr.mxu0 0.0
        %528 = vmatpush1.msra.mxu0 0.0
        %529 = vmatprep.subr.mxu0 0.0
        %530 = vmatpush1.msra.mxu0 0.0
        %531 = vmatprep.subr.mxu0 0.0
        %532 = vmatpush1.msra.mxu0 0.0
        %533 = vmatprep.subr.mxu0 0.0
        %534 = vmatpush1.msra.mxu0 0.0
        %535 = vmatprep.mubr.f32.mxu0 0.0
        %536 = vmatmul.mubr.f32.gmra.mrb[0].mxu0 %v448
        %v537 = vpop.f32.mrb[0].mxu0
        %v538 = vadd.f32 0.0, %v537
        %v539 = vpop.f32.mrb[0].mxu0
        %540 = vmatprep.mubr.f32.mxu0 0.0
        %541 = vmatmul.mubr.f32.gmra.mrb[0].mxu0 %v451
        %v542 = vpop.f32.mrb[0].mxu0
        %v543 = vadd.f32 0.0, %v542
        %v544 = vpop.f32.mrb[0].mxu0
        %545 = vmatprep.mubr.f32.mxu0 0.0
        %546 = vmatmul.mubr.f32.gmra.mrb[0].mxu0 %v454
        %v547 = vpop.f32.mrb[0].mxu0
        %v548 = vadd.f32 0.0, %v547
        %v549 = vpop.f32.mrb[0].mxu0
        %550 = vmatprep.mubr.f32.mxu0 0.0
        %551 = vmatmul.mubr.f32.gmra.mrb[0].mxu0 %v457
        %v552 = vpop.f32.mrb[0].mxu0
        %v553 = vadd.f32 0.0, %v552
        %v554 = vpop.f32.mrb[0].mxu0
        %555 = vmatprep.mubr.f32.mxu0 0.0
        %556 = vmatmul.mubr.f32.gmra.mrb[0].mxu0 %v460
        %v557 = vpop.f32.mrb[0].mxu0
        %v558 = vadd.f32 0.0, %v557
        %v559 = vpop.f32.mrb[0].mxu0
        %560 = vmatprep.mubr.f32.mxu0 0.0
        %561 = vmatmul.mubr.f32.gmra.mrb[0].mxu0 %v463
        %v562 = vpop.f32.mrb[0].mxu0
        %v563 = vadd.f32 0.0, %v562
        %v564 = vpop.f32.mrb[0].mxu0
        %565 = vmatprep.mubr.f32.mxu0 0.0
        %566 = vmatmul.mubr.f32.gmra.mrb[0].mxu0 %v466
        %v567 = vpop.f32.mrb[0].mxu0
        %v568 = vadd.f32 0.0, %v567
        %v569 = vpop.f32.mrb[0].mxu0
        %570 = vmatprep.mubr.f32.mxu0 0.0
        %571 = vmatmul.mubr.f32.gmra.mrb[0].mxu0 %v469
        %v572 = vpop.f32.mrb[0].mxu0
        %v573 = vadd.f32 0.0, %v572
        %v574 = vpop.f32.mrb[0].mxu0
        %575 = vdwg.mxu0
        %577 = vrot.lane.b32.xlu0 %v538, 96
        %v578 = vpop.permute.xlu0 %577
        %vm579 = vcmask 64512
        %v580 = vsel %vm579, %v538, 0
        %v582 = vsel %vm579, %v578, 0
        %584 = vmatprep.subr.mxu0 0.0
        %585 = vmatpush1.xpose.msra.mxu0 %v582
        %586 = vmatprep.subr.mxu0 0.0
        %587 = vmatpush1.xpose.msra.mxu0 0.0
        %588 = vmatprep.subr.mxu0 0.0
        %589 = vmatpush1.xpose.msra.mxu0 0.0
        %590 = vmatprep.subr.mxu0 0.0
        %591 = vmatpush1.xpose.msra.mxu0 0.0
        %592 = vmatprep.subr.mxu0 0.0
        %593 = vmatpush1.xpose.msra.mxu0 0.0
        %594 = vmatprep.subr.mxu0 0.0
        %595 = vmatpush1.xpose.msra.mxu0 0.0
        %596 = vmatprep.subr.mxu0 0.0
        %597 = vmatpush1.xpose.msra.mxu0 0.0
        %598 = vmatprep.subr.mxu0 0.0
        %599 = vmatpush1.xpose.msra.mxu0 0.0
        %600 = vmatprep.subr.mxu0 0.0
        %601 = vmatpush1.xpose.msra.mxu0 0.0
        %602 = vmatprep.subr.mxu0 0.0
        %603 = vmatpush1.xpose.msra.mxu0 0.0
        %604 = vmatprep.subr.mxu0 0.0
        %605 = vmatpush1.xpose.msra.mxu0 0.0
        %606 = vmatprep.subr.mxu0 0.0
        %607 = vmatpush1.xpose.msra.mxu0 0.0
        %608 = vmatprep.subr.mxu0 0.0
        %609 = vmatpush1.xpose.msra.mxu0 0.0
        %610 = vmatprep.subr.mxu0 0.0
        %611 = vmatpush1.xpose.msra.mxu0 0.0
        %612 = vmatprep.subr.mxu0 0.0
        %613 = vmatpush1.xpose.msra.mxu0 0.0
        %614 = vmatprep.subr.mxu0 0.0
        %615 = vmatpush1.xpose.msra.mxu0 0.0
        %616 = vmatprep.subr.mxu0 0.0
        %617 = vmatpush1.xpose.msra.mxu0 0.0
        %618 = vmatprep.subr.mxu0 0.0
        %619 = vmatpush1.xpose.msra.mxu0 0.0
        %620 = vmatprep.subr.mxu0 0.0
        %621 = vmatpush1.xpose.msra.mxu0 0.0
        %622 = vmatprep.subr.mxu0 0.0
        %623 = vmatpush1.xpose.msra.mxu0 0.0
        %624 = vmatprep.subr.mxu0 0.0
        %625 = vmatpush1.xpose.msra.mxu0 0.0
        %626 = vmatprep.subr.mxu0 0.0
        %627 = vmatpush1.xpose.msra.mxu0 0.0
        %628 = vmatprep.subr.mxu0 0.0
        %629 = vmatpush1.xpose.msra.mxu0 0.0
        %630 = vmatprep.subr.mxu0 0.0
        %631 = vmatpush1.xpose.msra.mxu0 0.0
        %632 = vmatprep.subr.mxu0 0.0
        %633 = vmatpush1.xpose.msra.mxu0 0.0
        %634 = vmatprep.subr.mxu0 0.0
        %635 = vmatpush1.xpose.msra.mxu0 0.0
        %636 = vmatprep.subr.mxu0 0.0
        %637 = vmatpush1.xpose.msra.mxu0 0.0
        %638 = vmatprep.subr.mxu0 0.0
        %639 = vmatpush1.xpose.msra.mxu0 0.0
        %640 = vmatprep.subr.mxu0 0.0
        %641 = vmatpush1.xpose.msra.mxu0 0.0
        %642 = vmatprep.subr.mxu0 0.0
        %643 = vmatpush1.xpose.msra.mxu0 0.0
        %644 = vmatprep.subr.mxu0 0.0
        %645 = vmatpush1.xpose.msra.mxu0 0.0
        %646 = vmatprep.subr.mxu0 0.0
        %647 = vmatpush1.xpose.msra.mxu0 0.0
        %648 = vmatprep.mubr.f32.mxu0 0.0
        %649 = vmatmul.mubr.f32.gmra.mrb[0].mxu0 %v580
        %v650 = vpop.f32.mrb[0].mxu0
        %v651 = vadd.f32 0.0, %v650
        %v652 = vpop.f32.mrb[0].mxu0
        %653 = vdwg.mxu0
        %655 = vrot.lane.b32.xlu0 %v543, 96
        %v656 = vpop.permute.xlu0 %655
        %v657 = vsel %vm579, %v543, 0
        %v659 = vsel %vm579, %v656, 0
        %661 = vmatprep.subr.mxu0 0.0
        %662 = vmatpush1.xpose.msra.mxu0 %v659
        %663 = vmatprep.subr.mxu0 0.0
        %664 = vmatpush1.xpose.msra.mxu0 0.0
        %665 = vmatprep.subr.mxu0 0.0
        %666 = vmatpush1.xpose.msra.mxu0 0.0
        %667 = vmatprep.subr.mxu0 0.0
        %668 = vmatpush1.xpose.msra.mxu0 0.0
        %669 = vmatprep.subr.mxu0 0.0
        %670 = vmatpush1.xpose.msra.mxu0 0.0
        %671 = vmatprep.subr.mxu0 0.0
        %672 = vmatpush1.xpose.msra.mxu0 0.0
        %673 = vmatprep.subr.mxu0 0.0
        %674 = vmatpush1.xpose.msra.mxu0 0.0
        %675 = vmatprep.subr.mxu0 0.0
        %676 = vmatpush1.xpose.msra.mxu0 0.0
        %677 = vmatprep.subr.mxu0 0.0
        %678 = vmatpush1.xpose.msra.mxu0 0.0
        %679 = vmatprep.subr.mxu0 0.0
        %680 = vmatpush1.xpose.msra.mxu0 0.0
        %681 = vmatprep.subr.mxu0 0.0
        %682 = vmatpush1.xpose.msra.mxu0 0.0
        %683 = vmatprep.subr.mxu0 0.0
        %684 = vmatpush1.xpose.msra.mxu0 0.0
        %685 = vmatprep.subr.mxu0 0.0
        %686 = vmatpush1.xpose.msra.mxu0 0.0
        %687 = vmatprep.subr.mxu0 0.0
        %688 = vmatpush1.xpose.msra.mxu0 0.0
        %689 = vmatprep.subr.mxu0 0.0
        %690 = vmatpush1.xpose.msra.mxu0 0.0
        %691 = vmatprep.subr.mxu0 0.0
        %692 = vmatpush1.xpose.msra.mxu0 0.0
        %693 = vmatprep.subr.mxu0 0.0
        %694 = vmatpush1.xpose.msra.mxu0 0.0
        %695 = vmatprep.subr.mxu0 0.0
        %696 = vmatpush1.xpose.msra.mxu0 0.0
        %697 = vmatprep.subr.mxu0 0.0
        %698 = vmatpush1.xpose.msra.mxu0 0.0
        %699 = vmatprep.subr.mxu0 0.0
        %700 = vmatpush1.xpose.msra.mxu0 0.0
        %701 = vmatprep.subr.mxu0 0.0
        %702 = vmatpush1.xpose.msra.mxu0 0.0
        %703 = vmatprep.subr.mxu0 0.0
        %704 = vmatpush1.xpose.msra.mxu0 0.0
        %705 = vmatprep.subr.mxu0 0.0
        %706 = vmatpush1.xpose.msra.mxu0 0.0
        %707 = vmatprep.subr.mxu0 0.0
        %708 = vmatpush1.xpose.msra.mxu0 0.0
        %709 = vmatprep.subr.mxu0 0.0
        %710 = vmatpush1.xpose.msra.mxu0 0.0
        %711 = vmatprep.subr.mxu0 0.0
        %712 = vmatpush1.xpose.msra.mxu0 0.0
        %713 = vmatprep.subr.mxu0 0.0
        %714 = vmatpush1.xpose.msra.mxu0 0.0
        %715 = vmatprep.subr.mxu0 0.0
        %716 = vmatpush1.xpose.msra.mxu0 0.0
        %717 = vmatprep.subr.mxu0 0.0
        %718 = vmatpush1.xpose.msra.mxu0 0.0
        %719 = vmatprep.subr.mxu0 0.0
        %720 = vmatpush1.xpose.msra.mxu0 0.0
        %721 = vmatprep.subr.mxu0 0.0
        %722 = vmatpush1.xpose.msra.mxu0 0.0
        %723 = vmatprep.subr.mxu0 0.0
        %724 = vmatpush1.xpose.msra.mxu0 0.0
        %725 = vmatprep.mubr.f32.mxu0 0.0
        %726 = vmatmul.mubr.f32.gmra.mrb[0].mxu0 %v657
        %v727 = vpop.f32.mrb[0].mxu0
        %v728 = vadd.f32 0.0, %v727
        %v729 = vpop.f32.mrb[0].mxu0
        %730 = vdwg.mxu0
        %732 = vrot.lane.b32.xlu0 %v548, 96
        %v733 = vpop.permute.xlu0 %732
        %v734 = vsel %vm579, %v548, 0
        %v736 = vsel %vm579, %v733, 0
        %738 = vmatprep.subr.mxu0 0.0
        %739 = vmatpush1.xpose.msra.mxu0 %v736
        %740 = vmatprep.subr.mxu0 0.0
        %741 = vmatpush1.xpose.msra.mxu0 0.0
        %742 = vmatprep.subr.mxu0 0.0
        %743 = vmatpush1.xpose.msra.mxu0 0.0
        %744 = vmatprep.subr.mxu0 0.0
        %745 = vmatpush1.xpose.msra.mxu0 0.0
        %746 = vmatprep.subr.mxu0 0.0
        %747 = vmatpush1.xpose.msra.mxu0 0.0
        %748 = vmatprep.subr.mxu0 0.0
        %749 = vmatpush1.xpose.msra.mxu0 0.0
        %750 = vmatprep.subr.mxu0 0.0
        %751 = vmatpush1.xpose.msra.mxu0 0.0
        %752 = vmatprep.subr.mxu0 0.0
        %753 = vmatpush1.xpose.msra.mxu0 0.0
        %754 = vmatprep.subr.mxu0 0.0
        %755 = vmatpush1.xpose.msra.mxu0 0.0
        %756 = vmatprep.subr.mxu0 0.0
        %757 = vmatpush1.xpose.msra.mxu0 0.0
        %758 = vmatprep.subr.mxu0 0.0
        %759 = vmatpush1.xpose.msra.mxu0 0.0
        %760 = vmatprep.subr.mxu0 0.0
        %761 = vmatpush1.xpose.msra.mxu0 0.0
        %762 = vmatprep.subr.mxu0 0.0
        %763 = vmatpush1.xpose.msra.mxu0 0.0
        %764 = vmatprep.subr.mxu0 0.0
        %765 = vmatpush1.xpose.msra.mxu0 0.0
        %766 = vmatprep.subr.mxu0 0.0
        %767 = vmatpush1.xpose.msra.mxu0 0.0
        %768 = vmatprep.subr.mxu0 0.0
        %769 = vmatpush1.xpose.msra.mxu0 0.0
        %770 = vmatprep.subr.mxu0 0.0
        %771 = vmatpush1.xpose.msra.mxu0 0.0
        %772 = vmatprep.subr.mxu0 0.0
        %773 = vmatpush1.xpose.msra.mxu0 0.0
        %774 = vmatprep.subr.mxu0 0.0
        %775 = vmatpush1.xpose.msra.mxu0 0.0
        %776 = vmatprep.subr.mxu0 0.0
        %777 = vmatpush1.xpose.msra.mxu0 0.0
        %778 = vmatprep.subr.mxu0 0.0
        %779 = vmatpush1.xpose.msra.mxu0 0.0
        %780 = vmatprep.subr.mxu0 0.0
        %781 = vmatpush1.xpose.msra.mxu0 0.0
        %782 = vmatprep.subr.mxu0 0.0
        %783 = vmatpush1.xpose.msra.mxu0 0.0
        %784 = vmatprep.subr.mxu0 0.0
        %785 = vmatpush1.xpose.msra.mxu0 0.0
        %786 = vmatprep.subr.mxu0 0.0
        %787 = vmatpush1.xpose.msra.mxu0 0.0
        %788 = vmatprep.subr.mxu0 0.0
        %789 = vmatpush1.xpose.msra.mxu0 0.0
        %790 = vmatprep.subr.mxu0 0.0
        %791 = vmatpush1.xpose.msra.mxu0 0.0
        %792 = vmatprep.subr.mxu0 0.0
        %793 = vmatpush1.xpose.msra.mxu0 0.0
        %794 = vmatprep.subr.mxu0 0.0
        %795 = vmatpush1.xpose.msra.mxu0 0.0
        %796 = vmatprep.subr.mxu0 0.0
        %797 = vmatpush1.xpose.msra.mxu0 0.0
        %798 = vmatprep.subr.mxu0 0.0
        %799 = vmatpush1.xpose.msra.mxu0 0.0
        %800 = vmatprep.subr.mxu0 0.0
        %801 = vmatpush1.xpose.msra.mxu0 0.0
        %802 = vmatprep.mubr.f32.mxu0 0.0
        %803 = vmatmul.mubr.f32.gmra.mrb[0].mxu0 %v734
        %v804 = vpop.f32.mrb[0].mxu0
        %v805 = vadd.f32 0.0, %v804
        %v806 = vpop.f32.mrb[0].mxu0
        %807 = vdwg.mxu0
        %809 = vrot.lane.b32.xlu0 %v553, 96
        %v810 = vpop.permute.xlu0 %809
        %v811 = vsel %vm579, %v553, 0
        %v813 = vsel %vm579, %v810, 0
        %815 = vmatprep.subr.mxu0 0.0
        %816 = vmatpush1.xpose.msra.mxu0 %v813
        %817 = vmatprep.subr.mxu0 0.0
        %818 = vmatpush1.xpose.msra.mxu0 0.0
        %819 = vmatprep.subr.mxu0 0.0
        %820 = vmatpush1.xpose.msra.mxu0 0.0
        %821 = vmatprep.subr.mxu0 0.0
        %822 = vmatpush1.xpose.msra.mxu0 0.0
        %823 = vmatprep.subr.mxu0 0.0
        %824 = vmatpush1.xpose.msra.mxu0 0.0
        %825 = vmatprep.subr.mxu0 0.0
        %826 = vmatpush1.xpose.msra.mxu0 0.0
        %827 = vmatprep.subr.mxu0 0.0
        %828 = vmatpush1.xpose.msra.mxu0 0.0
        %829 = vmatprep.subr.mxu0 0.0
        %830 = vmatpush1.xpose.msra.mxu0 0.0
        %831 = vmatprep.subr.mxu0 0.0
        %832 = vmatpush1.xpose.msra.mxu0 0.0
        %833 = vmatprep.subr.mxu0 0.0
        %834 = vmatpush1.xpose.msra.mxu0 0.0
        %835 = vmatprep.subr.mxu0 0.0
        %836 = vmatpush1.xpose.msra.mxu0 0.0
        %837 = vmatprep.subr.mxu0 0.0
        %838 = vmatpush1.xpose.msra.mxu0 0.0
        %839 = vmatprep.subr.mxu0 0.0
        %840 = vmatpush1.xpose.msra.mxu0 0.0
        %841 = vmatprep.subr.mxu0 0.0
        %842 = vmatpush1.xpose.msra.mxu0 0.0
        %843 = vmatprep.subr.mxu0 0.0
        %844 = vmatpush1.xpose.msra.mxu0 0.0
        %845 = vmatprep.subr.mxu0 0.0
        %846 = vmatpush1.xpose.msra.mxu0 0.0
        %847 = vmatprep.subr.mxu0 0.0
        %848 = vmatpush1.xpose.msra.mxu0 0.0
        %849 = vmatprep.subr.mxu0 0.0
        %850 = vmatpush1.xpose.msra.mxu0 0.0
        %851 = vmatprep.subr.mxu0 0.0
        %852 = vmatpush1.xpose.msra.mxu0 0.0
        %853 = vmatprep.subr.mxu0 0.0
        %854 = vmatpush1.xpose.msra.mxu0 0.0
        %855 = vmatprep.subr.mxu0 0.0
        %856 = vmatpush1.xpose.msra.mxu0 0.0
        %857 = vmatprep.subr.mxu0 0.0
        %858 = vmatpush1.xpose.msra.mxu0 0.0
        %859 = vmatprep.subr.mxu0 0.0
        %860 = vmatpush1.xpose.msra.mxu0 0.0
        %861 = vmatprep.subr.mxu0 0.0
        %862 = vmatpush1.xpose.msra.mxu0 0.0
        %863 = vmatprep.subr.mxu0 0.0
        %864 = vmatpush1.xpose.msra.mxu0 0.0
        %865 = vmatprep.subr.mxu0 0.0
        %866 = vmatpush1.xpose.msra.mxu0 0.0
        %867 = vmatprep.subr.mxu0 0.0
        %868 = vmatpush1.xpose.msra.mxu0 0.0
        %869 = vmatprep.subr.mxu0 0.0
        %870 = vmatpush1.xpose.msra.mxu0 0.0
        %871 = vmatprep.subr.mxu0 0.0
        %872 = vmatpush1.xpose.msra.mxu0 0.0
        %873 = vmatprep.subr.mxu0 0.0
        %874 = vmatpush1.xpose.msra.mxu0 0.0
        %875 = vmatprep.subr.mxu0 0.0
        %876 = vmatpush1.xpose.msra.mxu0 0.0
        %877 = vmatprep.subr.mxu0 0.0
        %878 = vmatpush1.xpose.msra.mxu0 0.0
        %879 = vmatprep.mubr.f32.mxu0 0.0
        %880 = vmatmul.mubr.f32.gmra.mrb[0].mxu0 %v811
        %v881 = vpop.f32.mrb[0].mxu0
        %v882 = vadd.f32 0.0, %v881
        %v883 = vpop.f32.mrb[0].mxu0
        %884 = vdwg.mxu0
        %886 = vrot.lane.b32.xlu0 %v558, 96
        %v887 = vpop.permute.xlu0 %886
        %v888 = vsel %vm579, %v558, 0
        %v890 = vsel %vm579, %v887, 0
        %892 = vmatprep.subr.mxu0 0.0
        %893 = vmatpush1.xpose.msra.mxu0 %v890
        %894 = vmatprep.subr.mxu0 0.0
        %895 = vmatpush1.xpose.msra.mxu0 0.0
        %896 = vmatprep.subr.mxu0 0.0
        %897 = vmatpush1.xpose.msra.mxu0 0.0
        %898 = vmatprep.subr.mxu0 0.0
        %899 = vmatpush1.xpose.msra.mxu0 0.0
        %900 = vmatprep.subr.mxu0 0.0
        %901 = vmatpush1.xpose.msra.mxu0 0.0
        %902 = vmatprep.subr.mxu0 0.0
        %903 = vmatpush1.xpose.msra.mxu0 0.0
        %904 = vmatprep.subr.mxu0 0.0
        %905 = vmatpush1.xpose.msra.mxu0 0.0
        %906 = vmatprep.subr.mxu0 0.0
        %907 = vmatpush1.xpose.msra.mxu0 0.0
        %908 = vmatprep.subr.mxu0 0.0
        %909 = vmatpush1.xpose.msra.mxu0 0.0
        %910 = vmatprep.subr.mxu0 0.0
        %911 = vmatpush1.xpose.msra.mxu0 0.0
        %912 = vmatprep.subr.mxu0 0.0
        %913 = vmatpush1.xpose.msra.mxu0 0.0
        %914 = vmatprep.subr.mxu0 0.0
        %915 = vmatpush1.xpose.msra.mxu0 0.0
        %916 = vmatprep.subr.mxu0 0.0
        %917 = vmatpush1.xpose.msra.mxu0 0.0
        %918 = vmatprep.subr.mxu0 0.0
        %919 = vmatpush1.xpose.msra.mxu0 0.0
        %920 = vmatprep.subr.mxu0 0.0
        %921 = vmatpush1.xpose.msra.mxu0 0.0
        %922 = vmatprep.subr.mxu0 0.0
        %923 = vmatpush1.xpose.msra.mxu0 0.0
        %924 = vmatprep.subr.mxu0 0.0
        %925 = vmatpush1.xpose.msra.mxu0 0.0
        %926 = vmatprep.subr.mxu0 0.0
        %927 = vmatpush1.xpose.msra.mxu0 0.0
        %928 = vmatprep.subr.mxu0 0.0
        %929 = vmatpush1.xpose.msra.mxu0 0.0
        %930 = vmatprep.subr.mxu0 0.0
        %931 = vmatpush1.xpose.msra.mxu0 0.0
        %932 = vmatprep.subr.mxu0 0.0
        %933 = vmatpush1.xpose.msra.mxu0 0.0
        %934 = vmatprep.subr.mxu0 0.0
        %935 = vmatpush1.xpose.msra.mxu0 0.0
        %936 = vmatprep.subr.mxu0 0.0
        %937 = vmatpush1.xpose.msra.mxu0 0.0
        %938 = vmatprep.subr.mxu0 0.0
        %939 = vmatpush1.xpose.msra.mxu0 0.0
        %940 = vmatprep.subr.mxu0 0.0
        %941 = vmatpush1.xpose.msra.mxu0 0.0
        %942 = vmatprep.subr.mxu0 0.0
        %943 = vmatpush1.xpose.msra.mxu0 0.0
        %944 = vmatprep.subr.mxu0 0.0
        %945 = vmatpush1.xpose.msra.mxu0 0.0
        %946 = vmatprep.subr.mxu0 0.0
        %947 = vmatpush1.xpose.msra.mxu0 0.0
        %948 = vmatprep.subr.mxu0 0.0
        %949 = vmatpush1.xpose.msra.mxu0 0.0
        %950 = vmatprep.subr.mxu0 0.0
        %951 = vmatpush1.xpose.msra.mxu0 0.0
        %952 = vmatprep.subr.mxu0 0.0
        %953 = vmatpush1.xpose.msra.mxu0 0.0
        %954 = vmatprep.subr.mxu0 0.0
        %955 = vmatpush1.xpose.msra.mxu0 0.0
        %956 = vmatprep.mubr.f32.mxu0 0.0
        %957 = vmatmul.mubr.f32.gmra.mrb[0].mxu0 %v888
        %v958 = vpop.f32.mrb[0].mxu0
        %v959 = vadd.f32 0.0, %v958
        %v960 = vpop.f32.mrb[0].mxu0
        %961 = vdwg.mxu0
        %963 = vrot.lane.b32.xlu0 %v563, 96
        %v964 = vpop.permute.xlu0 %963
        %v965 = vsel %vm579, %v563, 0
        %v967 = vsel %vm579, %v964, 0
        %969 = vmatprep.subr.mxu0 0.0
        %970 = vmatpush1.xpose.msra.mxu0 %v967
        %971 = vmatprep.subr.mxu0 0.0
        %972 = vmatpush1.xpose.msra.mxu0 0.0
        %973 = vmatprep.subr.mxu0 0.0
        %974 = vmatpush1.xpose.msra.mxu0 0.0
        %975 = vmatprep.subr.mxu0 0.0
        %976 = vmatpush1.xpose.msra.mxu0 0.0
        %977 = vmatprep.subr.mxu0 0.0
        %978 = vmatpush1.xpose.msra.mxu0 0.0
        %979 = vmatprep.subr.mxu0 0.0
        %980 = vmatpush1.xpose.msra.mxu0 0.0
        %981 = vmatprep.subr.mxu0 0.0
        %982 = vmatpush1.xpose.msra.mxu0 0.0
        %983 = vmatprep.subr.mxu0 0.0
        %984 = vmatpush1.xpose.msra.mxu0 0.0
        %985 = vmatprep.subr.mxu0 0.0
        %986 = vmatpush1.xpose.msra.mxu0 0.0
        %987 = vmatprep.subr.mxu0 0.0
        %988 = vmatpush1.xpose.msra.mxu0 0.0
        %989 = vmatprep.subr.mxu0 0.0
        %990 = vmatpush1.xpose.msra.mxu0 0.0
        %991 = vmatprep.subr.mxu0 0.0
        %992 = vmatpush1.xpose.msra.mxu0 0.0
        %993 = vmatprep.subr.mxu0 0.0
        %994 = vmatpush1.xpose.msra.mxu0 0.0
        %995 = vmatprep.subr.mxu0 0.0
        %996 = vmatpush1.xpose.msra.mxu0 0.0
        %997 = vmatprep.subr.mxu0 0.0
        %998 = vmatpush1.xpose.msra.mxu0 0.0
        %999 = vmatprep.subr.mxu0 0.0
        %1000 = vmatpush1.xpose.msra.mxu0 0.0
        %1001 = vmatprep.subr.mxu0 0.0
        %1002 = vmatpush1.xpose.msra.mxu0 0.0
        %1003 = vmatprep.subr.mxu0 0.0
        %1004 = vmatpush1.xpose.msra.mxu0 0.0
        %1005 = vmatprep.subr.mxu0 0.0
        %1006 = vmatpush1.xpose.msra.mxu0 0.0
        %1007 = vmatprep.subr.mxu0 0.0
        %1008 = vmatpush1.xpose.msra.mxu0 0.0
        %1009 = vmatprep.subr.mxu0 0.0
        %1010 = vmatpush1.xpose.msra.mxu0 0.0
        %1011 = vmatprep.subr.mxu0 0.0
        %1012 = vmatpush1.xpose.msra.mxu0 0.0
        %1013 = vmatprep.subr.mxu0 0.0
        %1014 = vmatpush1.xpose.msra.mxu0 0.0
        %1015 = vmatprep.subr.mxu0 0.0
        %1016 = vmatpush1.xpose.msra.mxu0 0.0
        %1017 = vmatprep.subr.mxu0 0.0
        %1018 = vmatpush1.xpose.msra.mxu0 0.0
        %1019 = vmatprep.subr.mxu0 0.0
        %1020 = vmatpush1.xpose.msra.mxu0 0.0
        %1021 = vmatprep.subr.mxu0 0.0
        %1022 = vmatpush1.xpose.msra.mxu0 0.0
        %1023 = vmatprep.subr.mxu0 0.0
        %1024 = vmatpush1.xpose.msra.mxu0 0.0
        %1025 = vmatprep.subr.mxu0 0.0
        %1026 = vmatpush1.xpose.msra.mxu0 0.0
        %1027 = vmatprep.subr.mxu0 0.0
        %1028 = vmatpush1.xpose.msra.mxu0 0.0
        %1029 = vmatprep.subr.mxu0 0.0
        %1030 = vmatpush1.xpose.msra.mxu0 0.0
        %1031 = vmatprep.subr.mxu0 0.0
        %1032 = vmatpush1.xpose.msra.mxu0 0.0
        %1033 = vmatprep.mubr.f32.mxu0 0.0
        %1034 = vmatmul.mubr.f32.gmra.mrb[0].mxu0 %v965
        %v1035 = vpop.f32.mrb[0].mxu0
        %v1036 = vadd.f32 0.0, %v1035
        %v1037 = vpop.f32.mrb[0].mxu0
        %1038 = vdwg.mxu0
        %1040 = vrot.lane.b32.xlu0 %v568, 96
        %v1041 = vpop.permute.xlu0 %1040
        %v1042 = vsel %vm579, %v568, 0
        %v1044 = vsel %vm579, %v1041, 0
        %1046 = vmatprep.subr.mxu0 0.0
        %1047 = vmatpush1.xpose.msra.mxu0 %v1044
        %1048 = vmatprep.subr.mxu0 0.0
        %1049 = vmatpush1.xpose.msra.mxu0 0.0
        %1050 = vmatprep.subr.mxu0 0.0
        %1051 = vmatpush1.xpose.msra.mxu0 0.0
        %1052 = vmatprep.subr.mxu0 0.0
        %1053 = vmatpush1.xpose.msra.mxu0 0.0
        %1054 = vmatprep.subr.mxu0 0.0
        %1055 = vmatpush1.xpose.msra.mxu0 0.0
        %1056 = vmatprep.subr.mxu0 0.0
        %1057 = vmatpush1.xpose.msra.mxu0 0.0
        %1058 = vmatprep.subr.mxu0 0.0
        %1059 = vmatpush1.xpose.msra.mxu0 0.0
        %1060 = vmatprep.subr.mxu0 0.0
        %1061 = vmatpush1.xpose.msra.mxu0 0.0
        %1062 = vmatprep.subr.mxu0 0.0
        %1063 = vmatpush1.xpose.msra.mxu0 0.0
        %1064 = vmatprep.subr.mxu0 0.0
        %1065 = vmatpush1.xpose.msra.mxu0 0.0
        %1066 = vmatprep.subr.mxu0 0.0
        %1067 = vmatpush1.xpose.msra.mxu0 0.0
        %1068 = vmatprep.subr.mxu0 0.0
        %1069 = vmatpush1.xpose.msra.mxu0 0.0
        %1070 = vmatprep.subr.mxu0 0.0
        %1071 = vmatpush1.xpose.msra.mxu0 0.0
        %1072 = vmatprep.subr.mxu0 0.0
        %1073 = vmatpush1.xpose.msra.mxu0 0.0
        %1074 = vmatprep.subr.mxu0 0.0
        %1075 = vmatpush1.xpose.msra.mxu0 0.0
        %1076 = vmatprep.subr.mxu0 0.0
        %1077 = vmatpush1.xpose.msra.mxu0 0.0
        %1078 = vmatprep.subr.mxu0 0.0
        %1079 = vmatpush1.xpose.msra.mxu0 0.0
        %1080 = vmatprep.subr.mxu0 0.0
        %1081 = vmatpush1.xpose.msra.mxu0 0.0
        %1082 = vmatprep.subr.mxu0 0.0
        %1083 = vmatpush1.xpose.msra.mxu0 0.0
        %1084 = vmatprep.subr.mxu0 0.0
        %1085 = vmatpush1.xpose.msra.mxu0 0.0
        %1086 = vmatprep.subr.mxu0 0.0
        %1087 = vmatpush1.xpose.msra.mxu0 0.0
        %1088 = vmatprep.subr.mxu0 0.0
        %1089 = vmatpush1.xpose.msra.mxu0 0.0
        %1090 = vmatprep.subr.mxu0 0.0
        %1091 = vmatpush1.xpose.msra.mxu0 0.0
        %1092 = vmatprep.subr.mxu0 0.0
        %1093 = vmatpush1.xpose.msra.mxu0 0.0
        %1094 = vmatprep.subr.mxu0 0.0
        %1095 = vmatpush1.xpose.msra.mxu0 0.0
        %1096 = vmatprep.subr.mxu0 0.0
        %1097 = vmatpush1.xpose.msra.mxu0 0.0
        %1098 = vmatprep.subr.mxu0 0.0
        %1099 = vmatpush1.xpose.msra.mxu0 0.0
        %1100 = vmatprep.subr.mxu0 0.0
        %1101 = vmatpush1.xpose.msra.mxu0 0.0
        %1102 = vmatprep.subr.mxu0 0.0
        %1103 = vmatpush1.xpose.msra.mxu0 0.0
        %1104 = vmatprep.subr.mxu0 0.0
        %1105 = vmatpush1.xpose.msra.mxu0 0.0
        %1106 = vmatprep.subr.mxu0 0.0
        %1107 = vmatpush1.xpose.msra.mxu0 0.0
        %1108 = vmatprep.subr.mxu0 0.0
        %1109 = vmatpush1.xpose.msra.mxu0 0.0
        %1110 = vmatprep.mubr.f32.mxu0 0.0
        %1111 = vmatmul.mubr.f32.gmra.mrb[0].mxu0 %v1042
        %v1112 = vpop.f32.mrb[0].mxu0
        %v1113 = vadd.f32 0.0, %v1112
        %v1114 = vpop.f32.mrb[0].mxu0
        %1115 = vdwg.mxu0
        %1117 = vrot.lane.b32.xlu0 %v573, 96
        %v1118 = vpop.permute.xlu0 %1117
        %v1119 = vsel %vm579, %v573, 0
        %v1121 = vsel %vm579, %v1118, 0
        %1123 = vmatprep.subr.mxu0 0.0
        %1124 = vmatpush1.xpose.msra.mxu0 %v1121
        %1125 = vmatprep.subr.mxu0 0.0
        %1126 = vmatpush1.xpose.msra.mxu0 0.0
        %1127 = vmatprep.subr.mxu0 0.0
        %1128 = vmatpush1.xpose.msra.mxu0 0.0
        %1129 = vmatprep.subr.mxu0 0.0
        %1130 = vmatpush1.xpose.msra.mxu0 0.0
        %1131 = vmatprep.subr.mxu0 0.0
        %1132 = vmatpush1.xpose.msra.mxu0 0.0
        %1133 = vmatprep.subr.mxu0 0.0
        %1134 = vmatpush1.xpose.msra.mxu0 0.0
        %1135 = vmatprep.subr.mxu0 0.0
        %1136 = vmatpush1.xpose.msra.mxu0 0.0
        %1137 = vmatprep.subr.mxu0 0.0
        %1138 = vmatpush1.xpose.msra.mxu0 0.0
        %1139 = vmatprep.subr.mxu0 0.0
        %1140 = vmatpush1.xpose.msra.mxu0 0.0
        %1141 = vmatprep.subr.mxu0 0.0
        %1142 = vmatpush1.xpose.msra.mxu0 0.0
        %1143 = vmatprep.subr.mxu0 0.0
        %1144 = vmatpush1.xpose.msra.mxu0 0.0
        %1145 = vmatprep.subr.mxu0 0.0
        %1146 = vmatpush1.xpose.msra.mxu0 0.0
        %1147 = vmatprep.subr.mxu0 0.0
        %1148 = vmatpush1.xpose.msra.mxu0 0.0
        %1149 = vmatprep.subr.mxu0 0.0
        %1150 = vmatpush1.xpose.msra.mxu0 0.0
        %1151 = vmatprep.subr.mxu0 0.0
        %1152 = vmatpush1.xpose.msra.mxu0 0.0
        %1153 = vmatprep.subr.mxu0 0.0
        %1154 = vmatpush1.xpose.msra.mxu0 0.0
        %1155 = vmatprep.subr.mxu0 0.0
        %1156 = vmatpush1.xpose.msra.mxu0 0.0
        %1157 = vmatprep.subr.mxu0 0.0
        %1158 = vmatpush1.xpose.msra.mxu0 0.0
        %1159 = vmatprep.subr.mxu0 0.0
        %1160 = vmatpush1.xpose.msra.mxu0 0.0
        %1161 = vmatprep.subr.mxu0 0.0
        %1162 = vmatpush1.xpose.msra.mxu0 0.0
        %1163 = vmatprep.subr.mxu0 0.0
        %1164 = vmatpush1.xpose.msra.mxu0 0.0
        %1165 = vmatprep.subr.mxu0 0.0
        %1166 = vmatpush1.xpose.msra.mxu0 0.0
        %1167 = vmatprep.subr.mxu0 0.0
        %1168 = vmatpush1.xpose.msra.mxu0 0.0
        %1169 = vmatprep.subr.mxu0 0.0
        %1170 = vmatpush1.xpose.msra.mxu0 0.0
        %1171 = vmatprep.subr.mxu0 0.0
        %1172 = vmatpush1.xpose.msra.mxu0 0.0
        %1173 = vmatprep.subr.mxu0 0.0
        %1174 = vmatpush1.xpose.msra.mxu0 0.0
        %1175 = vmatprep.subr.mxu0 0.0
        %1176 = vmatpush1.xpose.msra.mxu0 0.0
        %1177 = vmatprep.subr.mxu0 0.0
        %1178 = vmatpush1.xpose.msra.mxu0 0.0
        %1179 = vmatprep.subr.mxu0 0.0
        %1180 = vmatpush1.xpose.msra.mxu0 0.0
        %1181 = vmatprep.subr.mxu0 0.0
        %1182 = vmatpush1.xpose.msra.mxu0 0.0
        %1183 = vmatprep.subr.mxu0 0.0
        %1184 = vmatpush1.xpose.msra.mxu0 0.0
        %1185 = vmatprep.subr.mxu0 0.0
        %1186 = vmatpush1.xpose.msra.mxu0 0.0
        %1187 = vmatprep.mubr.f32.mxu0 0.0
        %1188 = vmatmul.mubr.f32.gmra.mrb[0].mxu0 %v1119
        %v1189 = vpop.f32.mrb[0].mxu0
        %v1190 = vadd.f32 0.0, %v1189
        %v1191 = vpop.f32.mrb[0].mxu0
        %1192 = vdwg.mxu0
        %v1193 = vsel %vm579, %v651, -inf
        %1194 = vmax.xlane.f32.xlu0 %v1193
        %v1195 = vpop.xlane.xlu0 %1194
        %v1196 = vsel %vm579, %v728, -inf
        %1197 = vmax.xlane.f32.xlu0 %v1196
        %v1198 = vpop.xlane.xlu0 %1197
        %v1199 = vsel %vm579, %v805, -inf
        %1200 = vmax.xlane.f32.xlu0 %v1199
        %v1201 = vpop.xlane.xlu0 %1200
        %v1202 = vsel %vm579, %v882, -inf
        %1203 = vmax.xlane.f32.xlu0 %v1202
        %v1204 = vpop.xlane.xlu0 %1203
        %v1205 = vsel %vm579, %v959, -inf
        %1206 = vmax.xlane.f32.xlu0 %v1205
        %v1207 = vpop.xlane.xlu0 %1206
        %v1208 = vsel %vm579, %v1036, -inf
        %1209 = vmax.xlane.f32.xlu0 %v1208
        %v1210 = vpop.xlane.xlu0 %1209
        %v1211 = vsel %vm579, %v1113, -inf
        %1212 = vmax.xlane.f32.xlu0 %v1211
        %v1213 = vpop.xlane.xlu0 %1212
        %v1214 = vsel %vm579, %v1190, -inf
        %1215 = vmax.xlane.f32.xlu0 %v1214
        %v1216 = vpop.xlane.xlu0 %1215
        %v1217 = vsub.f32 %v651, %v1195
        %v1218 = vsub.f32 %v728, %v1198
        %v1219 = vsub.f32 %v805, %v1201
        %v1220 = vsub.f32 %v882, %v1204
        %v1221 = vsub.f32 %v959, %v1207
        %v1222 = vsub.f32 %v1036, %v1210
        %v1223 = vsub.f32 %v1113, %v1213
        %v1224 = vsub.f32 %v1190, %v1216
        %v1225 = vmul.f32 %v1217, 1.442695
        %v1226 = vpow.pop %v1225
        %v1227 = vmul.f32 %v1218, 1.442695
        %v1228 = vpow.pop %v1227
        %v1229 = vmul.f32 %v1219, 1.442695
        %v1230 = vpow.pop %v1229
        %v1231 = vmul.f32 %v1220, 1.442695
        %v1232 = vpow.pop %v1231
        %v1233 = vmul.f32 %v1221, 1.442695
        %v1234 = vpow.pop %v1233
        %v1235 = vmul.f32 %v1222, 1.442695
        %v1236 = vpow.pop %v1235
        %v1237 = vmul.f32 %v1223, 1.442695
        %v1238 = vpow.pop %v1237
        %v1239 = vmul.f32 %v1224, 1.442695
        %v1240 = vpow.pop %v1239
        %v1241 = vsel %vm579, %v1226, 0.0
        %1242 = vadd.xlane.f32.xlu0 %v1241
        %v1243 = vpop.xlane.xlu0 %1242
        %v1244 = vsel %vm579, %v1228, 0.0
        %1245 = vadd.xlane.f32.xlu0 %v1244
        %v1246 = vpop.xlane.xlu0 %1245
        %v1247 = vsel %vm579, %v1230, 0.0
        %1248 = vadd.xlane.f32.xlu0 %v1247
        %v1249 = vpop.xlane.xlu0 %1248
        %v1250 = vsel %vm579, %v1232, 0.0
        %1251 = vadd.xlane.f32.xlu0 %v1250
        %v1252 = vpop.xlane.xlu0 %1251
        %v1253 = vsel %vm579, %v1234, 0.0
        %1254 = vadd.xlane.f32.xlu0 %v1253
        %v1255 = vpop.xlane.xlu0 %1254
        %v1256 = vsel %vm579, %v1236, 0.0
        %1257 = vadd.xlane.f32.xlu0 %v1256
        %v1258 = vpop.xlane.xlu0 %1257
        %v1259 = vsel %vm579, %v1238, 0.0
        %1260 = vadd.xlane.f32.xlu0 %v1259
        %v1261 = vpop.xlane.xlu0 %1260
        %v1262 = vsel %vm579, %v1240, 0.0
        %1263 = vadd.xlane.f32.xlu0 %v1262
        %v1264 = vpop.xlane.xlu0 %1263
        %v1265 = vrcp.pop %v1243
        %v1266 = vrcp.pop %v1246
        %v1267 = vrcp.pop %v1249
        %v1268 = vrcp.pop %v1252
        %v1269 = vrcp.pop %v1255
        %v1270 = vrcp.pop %v1258
        %v1271 = vrcp.pop %v1261
        %v1272 = vrcp.pop %v1264
        %v1273 = vmul.f32 %v1226, %v1265
        %v1274 = vmul.f32 %v1228, %v1266
        %v1275 = vmul.f32 %v1230, %v1267
        %v1276 = vmul.f32 %v1232, %v1268
        %v1277 = vmul.f32 %v1234, %v1269
        %v1278 = vmul.f32 %v1236, %v1270
        %v1279 = vmul.f32 %v1238, %v1271
        %v1280 = vmul.f32 %v1240, %v1272
        %1281 = vrot.lane.b32.xlu0 %v538, 64
        %v1282 = vpop.permute.xlu0 %1281
        %v1285 = vsel %vm579, %v1273, 0
        %1287 = vmatprep.subr.mxu0 0.0
        %1288 = vmatpush1.msra.mxu0 %v1282
        %1289 = vmatprep.subr.mxu0 0.0
        %1290 = vmatpush1.msra.mxu0 0.0
        %1291 = vmatprep.subr.mxu0 0.0
        %1292 = vmatpush1.msra.mxu0 0.0
        %1293 = vmatprep.subr.mxu0 0.0
        %1294 = vmatpush1.msra.mxu0 0.0
        %1295 = vmatprep.subr.mxu0 0.0
        %1296 = vmatpush1.msra.mxu0 0.0
        %1297 = vmatprep.subr.mxu0 0.0
        %1298 = vmatpush1.msra.mxu0 0.0
        %1299 = vmatprep.subr.mxu0 0.0
        %1300 = vmatpush1.msra.mxu0 0.0
        %1301 = vmatprep.subr.mxu0 0.0
        %1302 = vmatpush1.msra.mxu0 0.0
        %1303 = vmatprep.subr.mxu0 0.0
        %1304 = vmatpush1.msra.mxu0 0.0
        %1305 = vmatprep.subr.mxu0 0.0
        %1306 = vmatpush1.msra.mxu0 0.0
        %1307 = vmatprep.subr.mxu0 0.0
        %1308 = vmatpush1.msra.mxu0 0.0
        %1309 = vmatprep.subr.mxu0 0.0
        %1310 = vmatpush1.msra.mxu0 0.0
        %1311 = vmatprep.subr.mxu0 0.0
        %1312 = vmatpush1.msra.mxu0 0.0
        %1313 = vmatprep.subr.mxu0 0.0
        %1314 = vmatpush1.msra.mxu0 0.0
        %1315 = vmatprep.subr.mxu0 0.0
        %1316 = vmatpush1.msra.mxu0 0.0
        %1317 = vmatprep.subr.mxu0 0.0
        %1318 = vmatpush1.msra.mxu0 0.0
        %1319 = vmatprep.subr.mxu0 0.0
        %1320 = vmatpush1.msra.mxu0 0.0
        %1321 = vmatprep.subr.mxu0 0.0
        %1322 = vmatpush1.msra.mxu0 0.0
        %1323 = vmatprep.subr.mxu0 0.0
        %1324 = vmatpush1.msra.mxu0 0.0
        %1325 = vmatprep.subr.mxu0 0.0
        %1326 = vmatpush1.msra.mxu0 0.0
        %1327 = vmatprep.subr.mxu0 0.0
        %1328 = vmatpush1.msra.mxu0 0.0
        %1329 = vmatprep.subr.mxu0 0.0
        %1330 = vmatpush1.msra.mxu0 0.0
        %1331 = vmatprep.subr.mxu0 0.0
        %1332 = vmatpush1.msra.mxu0 0.0
        %1333 = vmatprep.subr.mxu0 0.0
        %1334 = vmatpush1.msra.mxu0 0.0
        %1335 = vmatprep.subr.mxu0 0.0
        %1336 = vmatpush1.msra.mxu0 0.0
        %1337 = vmatprep.subr.mxu0 0.0
        %1338 = vmatpush1.msra.mxu0 0.0
        %1339 = vmatprep.subr.mxu0 0.0
        %1340 = vmatpush1.msra.mxu0 0.0
        %1341 = vmatprep.subr.mxu0 0.0
        %1342 = vmatpush1.msra.mxu0 0.0
        %1343 = vmatprep.subr.mxu0 0.0
        %1344 = vmatpush1.msra.mxu0 0.0
        %1345 = vmatprep.subr.mxu0 0.0
        %1346 = vmatpush1.msra.mxu0 0.0
        %1347 = vmatprep.subr.mxu0 0.0
        %1348 = vmatpush1.msra.mxu0 0.0
        %1349 = vmatprep.subr.mxu0 0.0
        %1350 = vmatpush1.msra.mxu0 0.0
        %1351 = vmatprep.mubr.f32.mxu0 0.0
        %1352 = vmatmul.mubr.f32.gmra.mrb[0].mxu0 %v1285
        %v1353 = vpop.f32.mrb[0].mxu0
        %v1354 = vadd.f32 0.0, %v1353
        %v1355 = vpop.f32.mrb[0].mxu0
        %1356 = vdwg.mxu0
        %1357 = vrot.lane.b32.xlu0 %v543, 64
        %v1358 = vpop.permute.xlu0 %1357
        %v1361 = vsel %vm579, %v1274, 0
        %1363 = vmatprep.subr.mxu0 0.0
        %1364 = vmatpush1.msra.mxu0 %v1358
        %1365 = vmatprep.subr.mxu0 0.0
        %1366 = vmatpush1.msra.mxu0 0.0
        %1367 = vmatprep.subr.mxu0 0.0
        %1368 = vmatpush1.msra.mxu0 0.0
        %1369 = vmatprep.subr.mxu0 0.0
        %1370 = vmatpush1.msra.mxu0 0.0
        %1371 = vmatprep.subr.mxu0 0.0
        %1372 = vmatpush1.msra.mxu0 0.0
        %1373 = vmatprep.subr.mxu0 0.0
        %1374 = vmatpush1.msra.mxu0 0.0
        %1375 = vmatprep.subr.mxu0 0.0
        %1376 = vmatpush1.msra.mxu0 0.0
        %1377 = vmatprep.subr.mxu0 0.0
        %1378 = vmatpush1.msra.mxu0 0.0
        %1379 = vmatprep.subr.mxu0 0.0
        %1380 = vmatpush1.msra.mxu0 0.0
        %1381 = vmatprep.subr.mxu0 0.0
        %1382 = vmatpush1.msra.mxu0 0.0
        %1383 = vmatprep.subr.mxu0 0.0
        %1384 = vmatpush1.msra.mxu0 0.0
        %1385 = vmatprep.subr.mxu0 0.0
        %1386 = vmatpush1.msra.mxu0 0.0
        %1387 = vmatprep.subr.mxu0 0.0
        %1388 = vmatpush1.msra.mxu0 0.0
        %1389 = vmatprep.subr.mxu0 0.0
        %1390 = vmatpush1.msra.mxu0 0.0
        %1391 = vmatprep.subr.mxu0 0.0
        %1392 = vmatpush1.msra.mxu0 0.0
        %1393 = vmatprep.subr.mxu0 0.0
        %1394 = vmatpush1.msra.mxu0 0.0
        %1395 = vmatprep.subr.mxu0 0.0
        %1396 = vmatpush1.msra.mxu0 0.0
        %1397 = vmatprep.subr.mxu0 0.0
        %1398 = vmatpush1.msra.mxu0 0.0
        %1399 = vmatprep.subr.mxu0 0.0
        %1400 = vmatpush1.msra.mxu0 0.0
        %1401 = vmatprep.subr.mxu0 0.0
        %1402 = vmatpush1.msra.mxu0 0.0
        %1403 = vmatprep.subr.mxu0 0.0
        %1404 = vmatpush1.msra.mxu0 0.0
        %1405 = vmatprep.subr.mxu0 0.0
        %1406 = vmatpush1.msra.mxu0 0.0
        %1407 = vmatprep.subr.mxu0 0.0
        %1408 = vmatpush1.msra.mxu0 0.0
        %1409 = vmatprep.subr.mxu0 0.0
        %1410 = vmatpush1.msra.mxu0 0.0
        %1411 = vmatprep.subr.mxu0 0.0
        %1412 = vmatpush1.msra.mxu0 0.0
        %1413 = vmatprep.subr.mxu0 0.0
        %1414 = vmatpush1.msra.mxu0 0.0
        %1415 = vmatprep.subr.mxu0 0.0
        %1416 = vmatpush1.msra.mxu0 0.0
        %1417 = vmatprep.subr.mxu0 0.0
        %1418 = vmatpush1.msra.mxu0 0.0
        %1419 = vmatprep.subr.mxu0 0.0
        %1420 = vmatpush1.msra.mxu0 0.0
        %1421 = vmatprep.subr.mxu0 0.0
        %1422 = vmatpush1.msra.mxu0 0.0
        %1423 = vmatprep.subr.mxu0 0.0
        %1424 = vmatpush1.msra.mxu0 0.0
        %1425 = vmatprep.subr.mxu0 0.0
        %1426 = vmatpush1.msra.mxu0 0.0
        %1427 = vmatprep.mubr.f32.mxu0 0.0
        %1428 = vmatmul.mubr.f32.gmra.mrb[0].mxu0 %v1361
        %v1429 = vpop.f32.mrb[0].mxu0
        %v1430 = vadd.f32 0.0, %v1429
        %v1431 = vpop.f32.mrb[0].mxu0
        %1432 = vdwg.mxu0
        %1433 = vrot.lane.b32.xlu0 %v548, 64
        %v1434 = vpop.permute.xlu0 %1433
        %v1437 = vsel %vm579, %v1275, 0
        %1439 = vmatprep.subr.mxu0 0.0
        %1440 = vmatpush1.msra.mxu0 %v1434
        %1441 = vmatprep.subr.mxu0 0.0
        %1442 = vmatpush1.msra.mxu0 0.0
        %1443 = vmatprep.subr.mxu0 0.0
        %1444 = vmatpush1.msra.mxu0 0.0
        %1445 = vmatprep.subr.mxu0 0.0
        %1446 = vmatpush1.msra.mxu0 0.0
        %1447 = vmatprep.subr.mxu0 0.0
        %1448 = vmatpush1.msra.mxu0 0.0
        %1449 = vmatprep.subr.mxu0 0.0
        %1450 = vmatpush1.msra.mxu0 0.0
        %1451 = vmatprep.subr.mxu0 0.0
        %1452 = vmatpush1.msra.mxu0 0.0
        %1453 = vmatprep.subr.mxu0 0.0
        %1454 = vmatpush1.msra.mxu0 0.0
        %1455 = vmatprep.subr.mxu0 0.0
        %1456 = vmatpush1.msra.mxu0 0.0
        %1457 = vmatprep.subr.mxu0 0.0
        %1458 = vmatpush1.msra.mxu0 0.0
        %1459 = vmatprep.subr.mxu0 0.0
        %1460 = vmatpush1.msra.mxu0 0.0
        %1461 = vmatprep.subr.mxu0 0.0
        %1462 = vmatpush1.msra.mxu0 0.0
        %1463 = vmatprep.subr.mxu0 0.0
        %1464 = vmatpush1.msra.mxu0 0.0
        %1465 = vmatprep.subr.mxu0 0.0
        %1466 = vmatpush1.msra.mxu0 0.0
        %1467 = vmatprep.subr.mxu0 0.0
        %1468 = vmatpush1.msra.mxu0 0.0
        %1469 = vmatprep.subr.mxu0 0.0
        %1470 = vmatpush1.msra.mxu0 0.0
        %1471 = vmatprep.subr.mxu0 0.0
        %1472 = vmatpush1.msra.mxu0 0.0
        %1473 = vmatprep.subr.mxu0 0.0
        %1474 = vmatpush1.msra.mxu0 0.0
        %1475 = vmatprep.subr.mxu0 0.0
        %1476 = vmatpush1.msra.mxu0 0.0
        %1477 = vmatprep.subr.mxu0 0.0
        %1478 = vmatpush1.msra.mxu0 0.0
        %1479 = vmatprep.subr.mxu0 0.0
        %1480 = vmatpush1.msra.mxu0 0.0
        %1481 = vmatprep.subr.mxu0 0.0
        %1482 = vmatpush1.msra.mxu0 0.0
        %1483 = vmatprep.subr.mxu0 0.0
        %1484 = vmatpush1.msra.mxu0 0.0
        %1485 = vmatprep.subr.mxu0 0.0
        %1486 = vmatpush1.msra.mxu0 0.0
        %1487 = vmatprep.subr.mxu0 0.0
        %1488 = vmatpush1.msra.mxu0 0.0
        %1489 = vmatprep.subr.mxu0 0.0
        %1490 = vmatpush1.msra.mxu0 0.0
        %1491 = vmatprep.subr.mxu0 0.0
        %1492 = vmatpush1.msra.mxu0 0.0
        %1493 = vmatprep.subr.mxu0 0.0
        %1494 = vmatpush1.msra.mxu0 0.0
        %1495 = vmatprep.subr.mxu0 0.0
        %1496 = vmatpush1.msra.mxu0 0.0
        %1497 = vmatprep.subr.mxu0 0.0
        %1498 = vmatpush1.msra.mxu0 0.0
        %1499 = vmatprep.subr.mxu0 0.0
        %1500 = vmatpush1.msra.mxu0 0.0
        %1501 = vmatprep.subr.mxu0 0.0
        %1502 = vmatpush1.msra.mxu0 0.0
        %1503 = vmatprep.mubr.f32.mxu0 0.0
        %1504 = vmatmul.mubr.f32.gmra.mrb[0].mxu0 %v1437
        %v1505 = vpop.f32.mrb[0].mxu0
        %v1506 = vadd.f32 0.0, %v1505
        %v1507 = vpop.f32.mrb[0].mxu0
        %1508 = vdwg.mxu0
        %1509 = vrot.lane.b32.xlu0 %v553, 64
        %v1510 = vpop.permute.xlu0 %1509
        %v1513 = vsel %vm579, %v1276, 0
        %1515 = vmatprep.subr.mxu0 0.0
        %1516 = vmatpush1.msra.mxu0 %v1510
        %1517 = vmatprep.subr.mxu0 0.0
        %1518 = vmatpush1.msra.mxu0 0.0
        %1519 = vmatprep.subr.mxu0 0.0
        %1520 = vmatpush1.msra.mxu0 0.0
        %1521 = vmatprep.subr.mxu0 0.0
        %1522 = vmatpush1.msra.mxu0 0.0
        %1523 = vmatprep.subr.mxu0 0.0
        %1524 = vmatpush1.msra.mxu0 0.0
        %1525 = vmatprep.subr.mxu0 0.0
        %1526 = vmatpush1.msra.mxu0 0.0
        %1527 = vmatprep.subr.mxu0 0.0
        %1528 = vmatpush1.msra.mxu0 0.0
        %1529 = vmatprep.subr.mxu0 0.0
        %1530 = vmatpush1.msra.mxu0 0.0
        %1531 = vmatprep.subr.mxu0 0.0
        %1532 = vmatpush1.msra.mxu0 0.0
        %1533 = vmatprep.subr.mxu0 0.0
        %1534 = vmatpush1.msra.mxu0 0.0
        %1535 = vmatprep.subr.mxu0 0.0
        %1536 = vmatpush1.msra.mxu0 0.0
        %1537 = vmatprep.subr.mxu0 0.0
        %1538 = vmatpush1.msra.mxu0 0.0
        %1539 = vmatprep.subr.mxu0 0.0
        %1540 = vmatpush1.msra.mxu0 0.0
        %1541 = vmatprep.subr.mxu0 0.0
        %1542 = vmatpush1.msra.mxu0 0.0
        %1543 = vmatprep.subr.mxu0 0.0
        %1544 = vmatpush1.msra.mxu0 0.0
        %1545 = vmatprep.subr.mxu0 0.0
        %1546 = vmatpush1.msra.mxu0 0.0
        %1547 = vmatprep.subr.mxu0 0.0
        %1548 = vmatpush1.msra.mxu0 0.0
        %1549 = vmatprep.subr.mxu0 0.0
        %1550 = vmatpush1.msra.mxu0 0.0
        %1551 = vmatprep.subr.mxu0 0.0
        %1552 = vmatpush1.msra.mxu0 0.0
        %1553 = vmatprep.subr.mxu0 0.0
        %1554 = vmatpush1.msra.mxu0 0.0
        %1555 = vmatprep.subr.mxu0 0.0
        %1556 = vmatpush1.msra.mxu0 0.0
        %1557 = vmatprep.subr.mxu0 0.0
        %1558 = vmatpush1.msra.mxu0 0.0
        %1559 = vmatprep.subr.mxu0 0.0
        %1560 = vmatpush1.msra.mxu0 0.0
        %1561 = vmatprep.subr.mxu0 0.0
        %1562 = vmatpush1.msra.mxu0 0.0
        %1563 = vmatprep.subr.mxu0 0.0
        %1564 = vmatpush1.msra.mxu0 0.0
        %1565 = vmatprep.subr.mxu0 0.0
        %1566 = vmatpush1.msra.mxu0 0.0
        %1567 = vmatprep.subr.mxu0 0.0
        %1568 = vmatpush1.msra.mxu0 0.0
        %1569 = vmatprep.subr.mxu0 0.0
        %1570 = vmatpush1.msra.mxu0 0.0
        %1571 = vmatprep.subr.mxu0 0.0
        %1572 = vmatpush1.msra.mxu0 0.0
        %1573 = vmatprep.subr.mxu0 0.0
        %1574 = vmatpush1.msra.mxu0 0.0
        %1575 = vmatprep.subr.mxu0 0.0
        %1576 = vmatpush1.msra.mxu0 0.0
        %1577 = vmatprep.subr.mxu0 0.0
        %1578 = vmatpush1.msra.mxu0 0.0
        %1579 = vmatprep.mubr.f32.mxu0 0.0
        %1580 = vmatmul.mubr.f32.gmra.mrb[0].mxu0 %v1513
        %v1581 = vpop.f32.mrb[0].mxu0
        %v1582 = vadd.f32 0.0, %v1581
        %v1583 = vpop.f32.mrb[0].mxu0
        %1584 = vdwg.mxu0
        %1585 = vrot.lane.b32.xlu0 %v558, 64
        %v1586 = vpop.permute.xlu0 %1585
        %v1589 = vsel %vm579, %v1277, 0
        %1591 = vmatprep.subr.mxu0 0.0
        %1592 = vmatpush1.msra.mxu0 %v1586
        %1593 = vmatprep.subr.mxu0 0.0
        %1594 = vmatpush1.msra.mxu0 0.0
        %1595 = vmatprep.subr.mxu0 0.0
        %1596 = vmatpush1.msra.mxu0 0.0
        %1597 = vmatprep.subr.mxu0 0.0
        %1598 = vmatpush1.msra.mxu0 0.0
        %1599 = vmatprep.subr.mxu0 0.0
        %1600 = vmatpush1.msra.mxu0 0.0
        %1601 = vmatprep.subr.mxu0 0.0
        %1602 = vmatpush1.msra.mxu0 0.0
        %1603 = vmatprep.subr.mxu0 0.0
        %1604 = vmatpush1.msra.mxu0 0.0
        %1605 = vmatprep.subr.mxu0 0.0
        %1606 = vmatpush1.msra.mxu0 0.0
        %1607 = vmatprep.subr.mxu0 0.0
        %1608 = vmatpush1.msra.mxu0 0.0
        %1609 = vmatprep.subr.mxu0 0.0
        %1610 = vmatpush1.msra.mxu0 0.0
        %1611 = vmatprep.subr.mxu0 0.0
        %1612 = vmatpush1.msra.mxu0 0.0
        %1613 = vmatprep.subr.mxu0 0.0
        %1614 = vmatpush1.msra.mxu0 0.0
        %1615 = vmatprep.subr.mxu0 0.0
        %1616 = vmatpush1.msra.mxu0 0.0
        %1617 = vmatprep.subr.mxu0 0.0
        %1618 = vmatpush1.msra.mxu0 0.0
        %1619 = vmatprep.subr.mxu0 0.0
        %1620 = vmatpush1.msra.mxu0 0.0
        %1621 = vmatprep.subr.mxu0 0.0
        %1622 = vmatpush1.msra.mxu0 0.0
        %1623 = vmatprep.subr.mxu0 0.0
        %1624 = vmatpush1.msra.mxu0 0.0
        %1625 = vmatprep.subr.mxu0 0.0
        %1626 = vmatpush1.msra.mxu0 0.0
        %1627 = vmatprep.subr.mxu0 0.0
        %1628 = vmatpush1.msra.mxu0 0.0
        %1629 = vmatprep.subr.mxu0 0.0
        %1630 = vmatpush1.msra.mxu0 0.0
        %1631 = vmatprep.subr.mxu0 0.0
        %1632 = vmatpush1.msra.mxu0 0.0
        %1633 = vmatprep.subr.mxu0 0.0
        %1634 = vmatpush1.msra.mxu0 0.0
        %1635 = vmatprep.subr.mxu0 0.0
        %1636 = vmatpush1.msra.mxu0 0.0
        %1637 = vmatprep.subr.mxu0 0.0
        %1638 = vmatpush1.msra.mxu0 0.0
        %1639 = vmatprep.subr.mxu0 0.0
        %1640 = vmatpush1.msra.mxu0 0.0
        %1641 = vmatprep.subr.mxu0 0.0
        %1642 = vmatpush1.msra.mxu0 0.0
        %1643 = vmatprep.subr.mxu0 0.0
        %1644 = vmatpush1.msra.mxu0 0.0
        %1645 = vmatprep.subr.mxu0 0.0
        %1646 = vmatpush1.msra.mxu0 0.0
        %1647 = vmatprep.subr.mxu0 0.0
        %1648 = vmatpush1.msra.mxu0 0.0
        %1649 = vmatprep.subr.mxu0 0.0
        %1650 = vmatpush1.msra.mxu0 0.0
        %1651 = vmatprep.subr.mxu0 0.0
        %1652 = vmatpush1.msra.mxu0 0.0
        %1653 = vmatprep.subr.mxu0 0.0
        %1654 = vmatpush1.msra.mxu0 0.0
        %1655 = vmatprep.mubr.f32.mxu0 0.0
        %1656 = vmatmul.mubr.f32.gmra.mrb[0].mxu0 %v1589
        %v1657 = vpop.f32.mrb[0].mxu0
        %v1658 = vadd.f32 0.0, %v1657
        %v1659 = vpop.f32.mrb[0].mxu0
        %1660 = vdwg.mxu0
        %1661 = vrot.lane.b32.xlu0 %v563, 64
        %v1662 = vpop.permute.xlu0 %1661
        %v1665 = vsel %vm579, %v1278, 0
        %1667 = vmatprep.subr.mxu0 0.0
        %1668 = vmatpush1.msra.mxu0 %v1662
        %1669 = vmatprep.subr.mxu0 0.0
        %1670 = vmatpush1.msra.mxu0 0.0
        %1671 = vmatprep.subr.mxu0 0.0
        %1672 = vmatpush1.msra.mxu0 0.0
        %1673 = vmatprep.subr.mxu0 0.0
        %1674 = vmatpush1.msra.mxu0 0.0
        %1675 = vmatprep.subr.mxu0 0.0
        %1676 = vmatpush1.msra.mxu0 0.0
        %1677 = vmatprep.subr.mxu0 0.0
        %1678 = vmatpush1.msra.mxu0 0.0
        %1679 = vmatprep.subr.mxu0 0.0
        %1680 = vmatpush1.msra.mxu0 0.0
        %1681 = vmatprep.subr.mxu0 0.0
        %1682 = vmatpush1.msra.mxu0 0.0
        %1683 = vmatprep.subr.mxu0 0.0
        %1684 = vmatpush1.msra.mxu0 0.0
        %1685 = vmatprep.subr.mxu0 0.0
        %1686 = vmatpush1.msra.mxu0 0.0
        %1687 = vmatprep.subr.mxu0 0.0
        %1688 = vmatpush1.msra.mxu0 0.0
        %1689 = vmatprep.subr.mxu0 0.0
        %1690 = vmatpush1.msra.mxu0 0.0
        %1691 = vmatprep.subr.mxu0 0.0
        %1692 = vmatpush1.msra.mxu0 0.0
        %1693 = vmatprep.subr.mxu0 0.0
        %1694 = vmatpush1.msra.mxu0 0.0
        %1695 = vmatprep.subr.mxu0 0.0
        %1696 = vmatpush1.msra.mxu0 0.0
        %1697 = vmatprep.subr.mxu0 0.0
        %1698 = vmatpush1.msra.mxu0 0.0
        %1699 = vmatprep.subr.mxu0 0.0
        %1700 = vmatpush1.msra.mxu0 0.0
        %1701 = vmatprep.subr.mxu0 0.0
        %1702 = vmatpush1.msra.mxu0 0.0
        %1703 = vmatprep.subr.mxu0 0.0
        %1704 = vmatpush1.msra.mxu0 0.0
        %1705 = vmatprep.subr.mxu0 0.0
        %1706 = vmatpush1.msra.mxu0 0.0
        %1707 = vmatprep.subr.mxu0 0.0
        %1708 = vmatpush1.msra.mxu0 0.0
        %1709 = vmatprep.subr.mxu0 0.0
        %1710 = vmatpush1.msra.mxu0 0.0
        %1711 = vmatprep.subr.mxu0 0.0
        %1712 = vmatpush1.msra.mxu0 0.0
        %1713 = vmatprep.subr.mxu0 0.0
        %1714 = vmatpush1.msra.mxu0 0.0
        %1715 = vmatprep.subr.mxu0 0.0
        %1716 = vmatpush1.msra.mxu0 0.0
        %1717 = vmatprep.subr.mxu0 0.0
        %1718 = vmatpush1.msra.mxu0 0.0
        %1719 = vmatprep.subr.mxu0 0.0
        %1720 = vmatpush1.msra.mxu0 0.0
        %1721 = vmatprep.subr.mxu0 0.0
        %1722 = vmatpush1.msra.mxu0 0.0
        %1723 = vmatprep.subr.mxu0 0.0
        %1724 = vmatpush1.msra.mxu0 0.0
        %1725 = vmatprep.subr.mxu0 0.0
        %1726 = vmatpush1.msra.mxu0 0.0
        %1727 = vmatprep.subr.mxu0 0.0
        %1728 = vmatpush1.msra.mxu0 0.0
        %1729 = vmatprep.subr.mxu0 0.0
        %1730 = vmatpush1.msra.mxu0 0.0
        %1731 = vmatprep.mubr.f32.mxu0 0.0
        %1732 = vmatmul.mubr.f32.gmra.mrb[0].mxu0 %v1665
        %v1733 = vpop.f32.mrb[0].mxu0
        %v1734 = vadd.f32 0.0, %v1733
        %v1735 = vpop.f32.mrb[0].mxu0
        %1736 = vdwg.mxu0
        %1737 = vrot.lane.b32.xlu0 %v568, 64
        %v1738 = vpop.permute.xlu0 %1737
        %v1741 = vsel %vm579, %v1279, 0
        %1743 = vmatprep.subr.mxu0 0.0
        %1744 = vmatpush1.msra.mxu0 %v1738
        %1745 = vmatprep.subr.mxu0 0.0
        %1746 = vmatpush1.msra.mxu0 0.0
        %1747 = vmatprep.subr.mxu0 0.0
        %1748 = vmatpush1.msra.mxu0 0.0
        %1749 = vmatprep.subr.mxu0 0.0
        %1750 = vmatpush1.msra.mxu0 0.0
        %1751 = vmatprep.subr.mxu0 0.0
        %1752 = vmatpush1.msra.mxu0 0.0
        %1753 = vmatprep.subr.mxu0 0.0
        %1754 = vmatpush1.msra.mxu0 0.0
        %1755 = vmatprep.subr.mxu0 0.0
        %1756 = vmatpush1.msra.mxu0 0.0
        %1757 = vmatprep.subr.mxu0 0.0
        %1758 = vmatpush1.msra.mxu0 0.0
        %1759 = vmatprep.subr.mxu0 0.0
        %1760 = vmatpush1.msra.mxu0 0.0
        %1761 = vmatprep.subr.mxu0 0.0
        %1762 = vmatpush1.msra.mxu0 0.0
        %1763 = vmatprep.subr.mxu0 0.0
        %1764 = vmatpush1.msra.mxu0 0.0
        %1765 = vmatprep.subr.mxu0 0.0
        %1766 = vmatpush1.msra.mxu0 0.0
        %1767 = vmatprep.subr.mxu0 0.0
        %1768 = vmatpush1.msra.mxu0 0.0
        %1769 = vmatprep.subr.mxu0 0.0
        %1770 = vmatpush1.msra.mxu0 0.0
        %1771 = vmatprep.subr.mxu0 0.0
        %1772 = vmatpush1.msra.mxu0 0.0
        %1773 = vmatprep.subr.mxu0 0.0
        %1774 = vmatpush1.msra.mxu0 0.0
        %1775 = vmatprep.subr.mxu0 0.0
        %1776 = vmatpush1.msra.mxu0 0.0
        %1777 = vmatprep.subr.mxu0 0.0
        %1778 = vmatpush1.msra.mxu0 0.0
        %1779 = vmatprep.subr.mxu0 0.0
        %1780 = vmatpush1.msra.mxu0 0.0
        %1781 = vmatprep.subr.mxu0 0.0
        %1782 = vmatpush1.msra.mxu0 0.0
        %1783 = vmatprep.subr.mxu0 0.0
        %1784 = vmatpush1.msra.mxu0 0.0
        %1785 = vmatprep.subr.mxu0 0.0
        %1786 = vmatpush1.msra.mxu0 0.0
        %1787 = vmatprep.subr.mxu0 0.0
        %1788 = vmatpush1.msra.mxu0 0.0
        %1789 = vmatprep.subr.mxu0 0.0
        %1790 = vmatpush1.msra.mxu0 0.0
        %1791 = vmatprep.subr.mxu0 0.0
        %1792 = vmatpush1.msra.mxu0 0.0
        %1793 = vmatprep.subr.mxu0 0.0
        %1794 = vmatpush1.msra.mxu0 0.0
        %1795 = vmatprep.subr.mxu0 0.0
        %1796 = vmatpush1.msra.mxu0 0.0
        %1797 = vmatprep.subr.mxu0 0.0
        %1798 = vmatpush1.msra.mxu0 0.0
        %1799 = vmatprep.subr.mxu0 0.0
        %1800 = vmatpush1.msra.mxu0 0.0
        %1801 = vmatprep.subr.mxu0 0.0
        %1802 = vmatpush1.msra.mxu0 0.0
        %1803 = vmatprep.subr.mxu0 0.0
        %1804 = vmatpush1.msra.mxu0 0.0
        %1805 = vmatprep.subr.mxu0 0.0
        %1806 = vmatpush1.msra.mxu0 0.0
        %1807 = vmatprep.mubr.f32.mxu0 0.0
        %1808 = vmatmul.mubr.f32.gmra.mrb[0].mxu0 %v1741
        %v1809 = vpop.f32.mrb[0].mxu0
        %v1810 = vadd.f32 0.0, %v1809
        %v1811 = vpop.f32.mrb[0].mxu0
        %1812 = vdwg.mxu0
        %1813 = vrot.lane.b32.xlu0 %v573, 64
        %v1814 = vpop.permute.xlu0 %1813
        %v1817 = vsel %vm579, %v1280, 0
        %1819 = vmatprep.subr.mxu0 0.0
        %1820 = vmatpush1.msra.mxu0 %v1814
        %1821 = vmatprep.subr.mxu0 0.0
        %1822 = vmatpush1.msra.mxu0 0.0
        %1823 = vmatprep.subr.mxu0 0.0
        %1824 = vmatpush1.msra.mxu0 0.0
        %1825 = vmatprep.subr.mxu0 0.0
        %1826 = vmatpush1.msra.mxu0 0.0
        %1827 = vmatprep.subr.mxu0 0.0
        %1828 = vmatpush1.msra.mxu0 0.0
        %1829 = vmatprep.subr.mxu0 0.0
        %1830 = vmatpush1.msra.mxu0 0.0
        %1831 = vmatprep.subr.mxu0 0.0
        %1832 = vmatpush1.msra.mxu0 0.0
        %1833 = vmatprep.subr.mxu0 0.0
        %1834 = vmatpush1.msra.mxu0 0.0
        %1835 = vmatprep.subr.mxu0 0.0
        %1836 = vmatpush1.msra.mxu0 0.0
        %1837 = vmatprep.subr.mxu0 0.0
        %1838 = vmatpush1.msra.mxu0 0.0
        %1839 = vmatprep.subr.mxu0 0.0
        %1840 = vmatpush1.msra.mxu0 0.0
        %1841 = vmatprep.subr.mxu0 0.0
        %1842 = vmatpush1.msra.mxu0 0.0
        %1843 = vmatprep.subr.mxu0 0.0
        %1844 = vmatpush1.msra.mxu0 0.0
        %1845 = vmatprep.subr.mxu0 0.0
        %1846 = vmatpush1.msra.mxu0 0.0
        %1847 = vmatprep.subr.mxu0 0.0
        %1848 = vmatpush1.msra.mxu0 0.0
        %1849 = vmatprep.subr.mxu0 0.0
        %1850 = vmatpush1.msra.mxu0 0.0
        %1851 = vmatprep.subr.mxu0 0.0
        %1852 = vmatpush1.msra.mxu0 0.0
        %1853 = vmatprep.subr.mxu0 0.0
        %1854 = vmatpush1.msra.mxu0 0.0
        %1855 = vmatprep.subr.mxu0 0.0
        %1856 = vmatpush1.msra.mxu0 0.0
        %1857 = vmatprep.subr.mxu0 0.0
        %1858 = vmatpush1.msra.mxu0 0.0
        %1859 = vmatprep.subr.mxu0 0.0
        %1860 = vmatpush1.msra.mxu0 0.0
        %1861 = vmatprep.subr.mxu0 0.0
        %1862 = vmatpush1.msra.mxu0 0.0
        %1863 = vmatprep.subr.mxu0 0.0
        %1864 = vmatpush1.msra.mxu0 0.0
        %1865 = vmatprep.subr.mxu0 0.0
        %1866 = vmatpush1.msra.mxu0 0.0
        %1867 = vmatprep.subr.mxu0 0.0
        %1868 = vmatpush1.msra.mxu0 0.0
        %1869 = vmatprep.subr.mxu0 0.0
        %1870 = vmatpush1.msra.mxu0 0.0
        %1871 = vmatprep.subr.mxu0 0.0
        %1872 = vmatpush1.msra.mxu0 0.0
        %1873 = vmatprep.subr.mxu0 0.0
        %1874 = vmatpush1.msra.mxu0 0.0
        %1875 = vmatprep.subr.mxu0 0.0
        %1876 = vmatpush1.msra.mxu0 0.0
        %1877 = vmatprep.subr.mxu0 0.0
        %1878 = vmatpush1.msra.mxu0 0.0
        %1879 = vmatprep.subr.mxu0 0.0
        %1880 = vmatpush1.msra.mxu0 0.0
        %1881 = vmatprep.subr.mxu0 0.0
        %1882 = vmatpush1.msra.mxu0 0.0
        %1883 = vmatprep.mubr.f32.mxu0 0.0
        %1884 = vmatmul.mubr.f32.gmra.mrb[0].mxu0 %v1817
        %v1885 = vpop.f32.mrb[0].mxu0
        %v1886 = vadd.f32 0.0, %v1885
        %v1887 = vpop.f32.mrb[0].mxu0
        %1888 = vdwg.mxu0
        %1889 = vrot.lane.b32.xlu0 %v538, 120
        %v1890 = vpop.permute.xlu0 %1889
        %1891 = vrot.lane.b32.xlu0 %v538, 88
        %v1892 = vpop.permute.xlu0 %1891
        %v1893 = vsel %vm579, %v1890, 0
        %v1895 = vsel %vm579, %v1892, 0
        %1897 = vmatprep.subr.mxu0 0.0
        %1898 = vmatpush1.xpose.msra.mxu0 %v1895
        %1899 = vmatprep.subr.mxu0 0.0
        %1900 = vmatpush1.xpose.msra.mxu0 0.0
        %1901 = vmatprep.subr.mxu0 0.0
        %1902 = vmatpush1.xpose.msra.mxu0 0.0
        %1903 = vmatprep.subr.mxu0 0.0
        %1904 = vmatpush1.xpose.msra.mxu0 0.0
        %1905 = vmatprep.subr.mxu0 0.0
        %1906 = vmatpush1.xpose.msra.mxu0 0.0
        %1907 = vmatprep.subr.mxu0 0.0
        %1908 = vmatpush1.xpose.msra.mxu0 0.0
        %1909 = vmatprep.subr.mxu0 0.0
        %1910 = vmatpush1.xpose.msra.mxu0 0.0
        %1911 = vmatprep.subr.mxu0 0.0
        %1912 = vmatpush1.xpose.msra.mxu0 0.0
        %1913 = vmatprep.subr.mxu0 0.0
        %1914 = vmatpush1.xpose.msra.mxu0 0.0
        %1915 = vmatprep.subr.mxu0 0.0
        %1916 = vmatpush1.xpose.msra.mxu0 0.0
        %1917 = vmatprep.subr.mxu0 0.0
        %1918 = vmatpush1.xpose.msra.mxu0 0.0
        %1919 = vmatprep.subr.mxu0 0.0
        %1920 = vmatpush1.xpose.msra.mxu0 0.0
        %1921 = vmatprep.subr.mxu0 0.0
        %1922 = vmatpush1.xpose.msra.mxu0 0.0
        %1923 = vmatprep.subr.mxu0 0.0
        %1924 = vmatpush1.xpose.msra.mxu0 0.0
        %1925 = vmatprep.subr.mxu0 0.0
        %1926 = vmatpush1.xpose.msra.mxu0 0.0
        %1927 = vmatprep.subr.mxu0 0.0
        %1928 = vmatpush1.xpose.msra.mxu0 0.0
        %1929 = vmatprep.subr.mxu0 0.0
        %1930 = vmatpush1.xpose.msra.mxu0 0.0
        %1931 = vmatprep.subr.mxu0 0.0
        %1932 = vmatpush1.xpose.msra.mxu0 0.0
        %1933 = vmatprep.subr.mxu0 0.0
        %1934 = vmatpush1.xpose.msra.mxu0 0.0
        %1935 = vmatprep.subr.mxu0 0.0
        %1936 = vmatpush1.xpose.msra.mxu0 0.0
        %1937 = vmatprep.subr.mxu0 0.0
        %1938 = vmatpush1.xpose.msra.mxu0 0.0
        %1939 = vmatprep.subr.mxu0 0.0
        %1940 = vmatpush1.xpose.msra.mxu0 0.0
        %1941 = vmatprep.subr.mxu0 0.0
        %1942 = vmatpush1.xpose.msra.mxu0 0.0
        %1943 = vmatprep.subr.mxu0 0.0
        %1944 = vmatpush1.xpose.msra.mxu0 0.0
        %1945 = vmatprep.subr.mxu0 0.0
        %1946 = vmatpush1.xpose.msra.mxu0 0.0
        %1947 = vmatprep.subr.mxu0 0.0
        %1948 = vmatpush1.xpose.msra.mxu0 0.0
        %1949 = vmatprep.subr.mxu0 0.0
        %1950 = vmatpush1.xpose.msra.mxu0 0.0
        %1951 = vmatprep.subr.mxu0 0.0
        %1952 = vmatpush1.xpose.msra.mxu0 0.0
        %1953 = vmatprep.subr.mxu0 0.0
        %1954 = vmatpush1.xpose.msra.mxu0 0.0
        %1955 = vmatprep.subr.mxu0 0.0
        %1956 = vmatpush1.xpose.msra.mxu0 0.0
        %1957 = vmatprep.subr.mxu0 0.0
        %1958 = vmatpush1.xpose.msra.mxu0 0.0
        %1959 = vmatprep.subr.mxu0 0.0
        %1960 = vmatpush1.xpose.msra.mxu0 0.0
        %1961 = vmatprep.mubr.f32.mxu0 0.0
        %1962 = vmatmul.mubr.f32.gmra.mrb[0].mxu0 %v1893
        %v1963 = vpop.f32.mrb[0].mxu0
        %v1964 = vadd.f32 0.0, %v1963
        %v1965 = vpop.f32.mrb[0].mxu0
        %1966 = vdwg.mxu0
        %1967 = vrot.lane.b32.xlu0 %v543, 120
        %v1968 = vpop.permute.xlu0 %1967
        %1969 = vrot.lane.b32.xlu0 %v543, 88
        %v1970 = vpop.permute.xlu0 %1969
        %v1971 = vsel %vm579, %v1968, 0
        %v1973 = vsel %vm579, %v1970, 0
        %1975 = vmatprep.subr.mxu0 0.0
        %1976 = vmatpush1.xpose.msra.mxu0 %v1973
        %1977 = vmatprep.subr.mxu0 0.0
        %1978 = vmatpush1.xpose.msra.mxu0 0.0
        %1979 = vmatprep.subr.mxu0 0.0
        %1980 = vmatpush1.xpose.msra.mxu0 0.0
        %1981 = vmatprep.subr.mxu0 0.0
        %1982 = vmatpush1.xpose.msra.mxu0 0.0
        %1983 = vmatprep.subr.mxu0 0.0
        %1984 = vmatpush1.xpose.msra.mxu0 0.0
        %1985 = vmatprep.subr.mxu0 0.0
        %1986 = vmatpush1.xpose.msra.mxu0 0.0
        %1987 = vmatprep.subr.mxu0 0.0
        %1988 = vmatpush1.xpose.msra.mxu0 0.0
        %1989 = vmatprep.subr.mxu0 0.0
        %1990 = vmatpush1.xpose.msra.mxu0 0.0
        %1991 = vmatprep.subr.mxu0 0.0
        %1992 = vmatpush1.xpose.msra.mxu0 0.0
        %1993 = vmatprep.subr.mxu0 0.0
        %1994 = vmatpush1.xpose.msra.mxu0 0.0
        %1995 = vmatprep.subr.mxu0 0.0
        %1996 = vmatpush1.xpose.msra.mxu0 0.0
        %1997 = vmatprep.subr.mxu0 0.0
        %1998 = vmatpush1.xpose.msra.mxu0 0.0
        %1999 = vmatprep.subr.mxu0 0.0
        %2000 = vmatpush1.xpose.msra.mxu0 0.0
        %2001 = vmatprep.subr.mxu0 0.0
        %2002 = vmatpush1.xpose.msra.mxu0 0.0
        %2003 = vmatprep.subr.mxu0 0.0
        %2004 = vmatpush1.xpose.msra.mxu0 0.0
        %2005 = vmatprep.subr.mxu0 0.0
        %2006 = vmatpush1.xpose.msra.mxu0 0.0
        %2007 = vmatprep.subr.mxu0 0.0
        %2008 = vmatpush1.xpose.msra.mxu0 0.0
        %2009 = vmatprep.subr.mxu0 0.0
        %2010 = vmatpush1.xpose.msra.mxu0 0.0
        %2011 = vmatprep.subr.mxu0 0.0
        %2012 = vmatpush1.xpose.msra.mxu0 0.0
        %2013 = vmatprep.subr.mxu0 0.0
        %2014 = vmatpush1.xpose.msra.mxu0 0.0
        %2015 = vmatprep.subr.mxu0 0.0
        %2016 = vmatpush1.xpose.msra.mxu0 0.0
        %2017 = vmatprep.subr.mxu0 0.0
        %2018 = vmatpush1.xpose.msra.mxu0 0.0
        %2019 = vmatprep.subr.mxu0 0.0
        %2020 = vmatpush1.xpose.msra.mxu0 0.0
        %2021 = vmatprep.subr.mxu0 0.0
        %2022 = vmatpush1.xpose.msra.mxu0 0.0
        %2023 = vmatprep.subr.mxu0 0.0
        %2024 = vmatpush1.xpose.msra.mxu0 0.0
        %2025 = vmatprep.subr.mxu0 0.0
        %2026 = vmatpush1.xpose.msra.mxu0 0.0
        %2027 = vmatprep.subr.mxu0 0.0
        %2028 = vmatpush1.xpose.msra.mxu0 0.0
        %2029 = vmatprep.subr.mxu0 0.0
        %2030 = vmatpush1.xpose.msra.mxu0 0.0
        %2031 = vmatprep.subr.mxu0 0.0
        %2032 = vmatpush1.xpose.msra.mxu0 0.0
        %2033 = vmatprep.subr.mxu0 0.0
        %2034 = vmatpush1.xpose.msra.mxu0 0.0
        %2035 = vmatprep.subr.mxu0 0.0
        %2036 = vmatpush1.xpose.msra.mxu0 0.0
        %2037 = vmatprep.subr.mxu0 0.0
        %2038 = vmatpush1.xpose.msra.mxu0 0.0
        %2039 = vmatprep.mubr.f32.mxu0 0.0
        %2040 = vmatmul.mubr.f32.gmra.mrb[0].mxu0 %v1971
        %v2041 = vpop.f32.mrb[0].mxu0
        %v2042 = vadd.f32 0.0, %v2041
        %v2043 = vpop.f32.mrb[0].mxu0
        %2044 = vdwg.mxu0
        %2045 = vrot.lane.b32.xlu0 %v548, 120
        %v2046 = vpop.permute.xlu0 %2045
        %2047 = vrot.lane.b32.xlu0 %v548, 88
        %v2048 = vpop.permute.xlu0 %2047
        %v2049 = vsel %vm579, %v2046, 0
        %v2051 = vsel %vm579, %v2048, 0
        %2053 = vmatprep.subr.mxu0 0.0
        %2054 = vmatpush1.xpose.msra.mxu0 %v2051
        %2055 = vmatprep.subr.mxu0 0.0
        %2056 = vmatpush1.xpose.msra.mxu0 0.0
        %2057 = vmatprep.subr.mxu0 0.0
        %2058 = vmatpush1.xpose.msra.mxu0 0.0
        %2059 = vmatprep.subr.mxu0 0.0
        %2060 = vmatpush1.xpose.msra.mxu0 0.0
        %2061 = vmatprep.subr.mxu0 0.0
        %2062 = vmatpush1.xpose.msra.mxu0 0.0
        %2063 = vmatprep.subr.mxu0 0.0
        %2064 = vmatpush1.xpose.msra.mxu0 0.0
        %2065 = vmatprep.subr.mxu0 0.0
        %2066 = vmatpush1.xpose.msra.mxu0 0.0
        %2067 = vmatprep.subr.mxu0 0.0
        %2068 = vmatpush1.xpose.msra.mxu0 0.0
        %2069 = vmatprep.subr.mxu0 0.0
        %2070 = vmatpush1.xpose.msra.mxu0 0.0
        %2071 = vmatprep.subr.mxu0 0.0
        %2072 = vmatpush1.xpose.msra.mxu0 0.0
        %2073 = vmatprep.subr.mxu0 0.0
        %2074 = vmatpush1.xpose.msra.mxu0 0.0
        %2075 = vmatprep.subr.mxu0 0.0
        %2076 = vmatpush1.xpose.msra.mxu0 0.0
        %2077 = vmatprep.subr.mxu0 0.0
        %2078 = vmatpush1.xpose.msra.mxu0 0.0
        %2079 = vmatprep.subr.mxu0 0.0
        %2080 = vmatpush1.xpose.msra.mxu0 0.0
        %2081 = vmatprep.subr.mxu0 0.0
        %2082 = vmatpush1.xpose.msra.mxu0 0.0
        %2083 = vmatprep.subr.mxu0 0.0
        %2084 = vmatpush1.xpose.msra.mxu0 0.0
        %2085 = vmatprep.subr.mxu0 0.0
        %2086 = vmatpush1.xpose.msra.mxu0 0.0
        %2087 = vmatprep.subr.mxu0 0.0
        %2088 = vmatpush1.xpose.msra.mxu0 0.0
        %2089 = vmatprep.subr.mxu0 0.0
        %2090 = vmatpush1.xpose.msra.mxu0 0.0
        %2091 = vmatprep.subr.mxu0 0.0
        %2092 = vmatpush1.xpose.msra.mxu0 0.0
        %2093 = vmatprep.subr.mxu0 0.0
        %2094 = vmatpush1.xpose.msra.mxu0 0.0
        %2095 = vmatprep.subr.mxu0 0.0
        %2096 = vmatpush1.xpose.msra.mxu0 0.0
        %2097 = vmatprep.subr.mxu0 0.0
        %2098 = vmatpush1.xpose.msra.mxu0 0.0
        %2099 = vmatprep.subr.mxu0 0.0
        %2100 = vmatpush1.xpose.msra.mxu0 0.0
        %2101 = vmatprep.subr.mxu0 0.0
        %2102 = vmatpush1.xpose.msra.mxu0 0.0
        %2103 = vmatprep.subr.mxu0 0.0
        %2104 = vmatpush1.xpose.msra.mxu0 0.0
        %2105 = vmatprep.subr.mxu0 0.0
        %2106 = vmatpush1.xpose.msra.mxu0 0.0
        %2107 = vmatprep.subr.mxu0 0.0
        %2108 = vmatpush1.xpose.msra.mxu0 0.0
        %2109 = vmatprep.subr.mxu0 0.0
        %2110 = vmatpush1.xpose.msra.mxu0 0.0
        %2111 = vmatprep.subr.mxu0 0.0
        %2112 = vmatpush1.xpose.msra.mxu0 0.0
        %2113 = vmatprep.subr.mxu0 0.0
        %2114 = vmatpush1.xpose.msra.mxu0 0.0
        %2115 = vmatprep.subr.mxu0 0.0
        %2116 = vmatpush1.xpose.msra.mxu0 0.0
        %2117 = vmatprep.mubr.f32.mxu0 0.0
        %2118 = vmatmul.mubr.f32.gmra.mrb[0].mxu0 %v2049
        %v2119 = vpop.f32.mrb[0].mxu0
        %v2120 = vadd.f32 0.0, %v2119
        %v2121 = vpop.f32.mrb[0].mxu0
        %2122 = vdwg.mxu0
        %2123 = vrot.lane.b32.xlu0 %v553, 120
        %v2124 = vpop.permute.xlu0 %2123
        %2125 = vrot.lane.b32.xlu0 %v553, 88
        %v2126 = vpop.permute.xlu0 %2125
        %v2127 = vsel %vm579, %v2124, 0
        %v2129 = vsel %vm579, %v2126, 0
        %2131 = vmatprep.subr.mxu0 0.0
        %2132 = vmatpush1.xpose.msra.mxu0 %v2129
        %2133 = vmatprep.subr.mxu0 0.0
        %2134 = vmatpush1.xpose.msra.mxu0 0.0
        %2135 = vmatprep.subr.mxu0 0.0
        %2136 = vmatpush1.xpose.msra.mxu0 0.0
        %2137 = vmatprep.subr.mxu0 0.0
        %2138 = vmatpush1.xpose.msra.mxu0 0.0
        %2139 = vmatprep.subr.mxu0 0.0
        %2140 = vmatpush1.xpose.msra.mxu0 0.0
        %2141 = vmatprep.subr.mxu0 0.0
        %2142 = vmatpush1.xpose.msra.mxu0 0.0
        %2143 = vmatprep.subr.mxu0 0.0
        %2144 = vmatpush1.xpose.msra.mxu0 0.0
        %2145 = vmatprep.subr.mxu0 0.0
        %2146 = vmatpush1.xpose.msra.mxu0 0.0
        %2147 = vmatprep.subr.mxu0 0.0
        %2148 = vmatpush1.xpose.msra.mxu0 0.0
        %2149 = vmatprep.subr.mxu0 0.0
        %2150 = vmatpush1.xpose.msra.mxu0 0.0
        %2151 = vmatprep.subr.mxu0 0.0
        %2152 = vmatpush1.xpose.msra.mxu0 0.0
        %2153 = vmatprep.subr.mxu0 0.0
        %2154 = vmatpush1.xpose.msra.mxu0 0.0
        %2155 = vmatprep.subr.mxu0 0.0
        %2156 = vmatpush1.xpose.msra.mxu0 0.0
        %2157 = vmatprep.subr.mxu0 0.0
        %2158 = vmatpush1.xpose.msra.mxu0 0.0
        %2159 = vmatprep.subr.mxu0 0.0
        %2160 = vmatpush1.xpose.msra.mxu0 0.0
        %2161 = vmatprep.subr.mxu0 0.0
        %2162 = vmatpush1.xpose.msra.mxu0 0.0
        %2163 = vmatprep.subr.mxu0 0.0
        %2164 = vmatpush1.xpose.msra.mxu0 0.0
        %2165 = vmatprep.subr.mxu0 0.0
        %2166 = vmatpush1.xpose.msra.mxu0 0.0
        %2167 = vmatprep.subr.mxu0 0.0
        %2168 = vmatpush1.xpose.msra.mxu0 0.0
        %2169 = vmatprep.subr.mxu0 0.0
        %2170 = vmatpush1.xpose.msra.mxu0 0.0
        %2171 = vmatprep.subr.mxu0 0.0
        %2172 = vmatpush1.xpose.msra.mxu0 0.0
        %2173 = vmatprep.subr.mxu0 0.0
        %2174 = vmatpush1.xpose.msra.mxu0 0.0
        %2175 = vmatprep.subr.mxu0 0.0
        %2176 = vmatpush1.xpose.msra.mxu0 0.0
        %2177 = vmatprep.subr.mxu0 0.0
        %2178 = vmatpush1.xpose.msra.mxu0 0.0
        %2179 = vmatprep.subr.mxu0 0.0
        %2180 = vmatpush1.xpose.msra.mxu0 0.0
        %2181 = vmatprep.subr.mxu0 0.0
        %2182 = vmatpush1.xpose.msra.mxu0 0.0
        %2183 = vmatprep.subr.mxu0 0.0
        %2184 = vmatpush1.xpose.msra.mxu0 0.0
        %2185 = vmatprep.subr.mxu0 0.0
        %2186 = vmatpush1.xpose.msra.mxu0 0.0
        %2187 = vmatprep.subr.mxu0 0.0
        %2188 = vmatpush1.xpose.msra.mxu0 0.0
        %2189 = vmatprep.subr.mxu0 0.0
        %2190 = vmatpush1.xpose.msra.mxu0 0.0
        %2191 = vmatprep.subr.mxu0 0.0
        %2192 = vmatpush1.xpose.msra.mxu0 0.0
        %2193 = vmatprep.subr.mxu0 0.0
        %2194 = vmatpush1.xpose.msra.mxu0 0.0
        %2195 = vmatprep.mubr.f32.mxu0 0.0
        %2196 = vmatmul.mubr.f32.gmra.mrb[0].mxu0 %v2127
        %v2197 = vpop.f32.mrb[0].mxu0
        %v2198 = vadd.f32 0.0, %v2197
        %v2199 = vpop.f32.mrb[0].mxu0
        %2200 = vdwg.mxu0
        %2201 = vrot.lane.b32.xlu0 %v558, 120
        %v2202 = vpop.permute.xlu0 %2201
        %2203 = vrot.lane.b32.xlu0 %v558, 88
        %v2204 = vpop.permute.xlu0 %2203
        %v2205 = vsel %vm579, %v2202, 0
        %v2207 = vsel %vm579, %v2204, 0
        %2209 = vmatprep.subr.mxu0 0.0
        %2210 = vmatpush1.xpose.msra.mxu0 %v2207
        %2211 = vmatprep.subr.mxu0 0.0
        %2212 = vmatpush1.xpose.msra.mxu0 0.0
        %2213 = vmatprep.subr.mxu0 0.0
        %2214 = vmatpush1.xpose.msra.mxu0 0.0
        %2215 = vmatprep.subr.mxu0 0.0
        %2216 = vmatpush1.xpose.msra.mxu0 0.0
        %2217 = vmatprep.subr.mxu0 0.0
        %2218 = vmatpush1.xpose.msra.mxu0 0.0
        %2219 = vmatprep.subr.mxu0 0.0
        %2220 = vmatpush1.xpose.msra.mxu0 0.0
        %2221 = vmatprep.subr.mxu0 0.0
        %2222 = vmatpush1.xpose.msra.mxu0 0.0
        %2223 = vmatprep.subr.mxu0 0.0
        %2224 = vmatpush1.xpose.msra.mxu0 0.0
        %2225 = vmatprep.subr.mxu0 0.0
        %2226 = vmatpush1.xpose.msra.mxu0 0.0
        %2227 = vmatprep.subr.mxu0 0.0
        %2228 = vmatpush1.xpose.msra.mxu0 0.0
        %2229 = vmatprep.subr.mxu0 0.0
        %2230 = vmatpush1.xpose.msra.mxu0 0.0
        %2231 = vmatprep.subr.mxu0 0.0
        %2232 = vmatpush1.xpose.msra.mxu0 0.0
        %2233 = vmatprep.subr.mxu0 0.0
        %2234 = vmatpush1.xpose.msra.mxu0 0.0
        %2235 = vmatprep.subr.mxu0 0.0
        %2236 = vmatpush1.xpose.msra.mxu0 0.0
        %2237 = vmatprep.subr.mxu0 0.0
        %2238 = vmatpush1.xpose.msra.mxu0 0.0
        %2239 = vmatprep.subr.mxu0 0.0
        %2240 = vmatpush1.xpose.msra.mxu0 0.0
        %2241 = vmatprep.subr.mxu0 0.0
        %2242 = vmatpush1.xpose.msra.mxu0 0.0
        %2243 = vmatprep.subr.mxu0 0.0
        %2244 = vmatpush1.xpose.msra.mxu0 0.0
        %2245 = vmatprep.subr.mxu0 0.0
        %2246 = vmatpush1.xpose.msra.mxu0 0.0
        %2247 = vmatprep.subr.mxu0 0.0
        %2248 = vmatpush1.xpose.msra.mxu0 0.0
        %2249 = vmatprep.subr.mxu0 0.0
        %2250 = vmatpush1.xpose.msra.mxu0 0.0
        %2251 = vmatprep.subr.mxu0 0.0
        %2252 = vmatpush1.xpose.msra.mxu0 0.0
        %2253 = vmatprep.subr.mxu0 0.0
        %2254 = vmatpush1.xpose.msra.mxu0 0.0
        %2255 = vmatprep.subr.mxu0 0.0
        %2256 = vmatpush1.xpose.msra.mxu0 0.0
        %2257 = vmatprep.subr.mxu0 0.0
        %2258 = vmatpush1.xpose.msra.mxu0 0.0
        %2259 = vmatprep.subr.mxu0 0.0
        %2260 = vmatpush1.xpose.msra.mxu0 0.0
        %2261 = vmatprep.subr.mxu0 0.0
        %2262 = vmatpush1.xpose.msra.mxu0 0.0
        %2263 = vmatprep.subr.mxu0 0.0
        %2264 = vmatpush1.xpose.msra.mxu0 0.0
        %2265 = vmatprep.subr.mxu0 0.0
        %2266 = vmatpush1.xpose.msra.mxu0 0.0
        %2267 = vmatprep.subr.mxu0 0.0
        %2268 = vmatpush1.xpose.msra.mxu0 0.0
        %2269 = vmatprep.subr.mxu0 0.0
        %2270 = vmatpush1.xpose.msra.mxu0 0.0
        %2271 = vmatprep.subr.mxu0 0.0
        %2272 = vmatpush1.xpose.msra.mxu0 0.0
        %2273 = vmatprep.mubr.f32.mxu0 0.0
        %2274 = vmatmul.mubr.f32.gmra.mrb[0].mxu0 %v2205
        %v2275 = vpop.f32.mrb[0].mxu0
        %v2276 = vadd.f32 0.0, %v2275
        %v2277 = vpop.f32.mrb[0].mxu0
        %2278 = vdwg.mxu0
        %2279 = vrot.lane.b32.xlu0 %v563, 120
        %v2280 = vpop.permute.xlu0 %2279
        %2281 = vrot.lane.b32.xlu0 %v563, 88
        %v2282 = vpop.permute.xlu0 %2281
        %v2283 = vsel %vm579, %v2280, 0
        %v2285 = vsel %vm579, %v2282, 0
        %2287 = vmatprep.subr.mxu0 0.0
        %2288 = vmatpush1.xpose.msra.mxu0 %v2285
        %2289 = vmatprep.subr.mxu0 0.0
        %2290 = vmatpush1.xpose.msra.mxu0 0.0
        %2291 = vmatprep.subr.mxu0 0.0
        %2292 = vmatpush1.xpose.msra.mxu0 0.0
        %2293 = vmatprep.subr.mxu0 0.0
        %2294 = vmatpush1.xpose.msra.mxu0 0.0
        %2295 = vmatprep.subr.mxu0 0.0
        %2296 = vmatpush1.xpose.msra.mxu0 0.0
        %2297 = vmatprep.subr.mxu0 0.0
        %2298 = vmatpush1.xpose.msra.mxu0 0.0
        %2299 = vmatprep.subr.mxu0 0.0
        %2300 = vmatpush1.xpose.msra.mxu0 0.0
        %2301 = vmatprep.subr.mxu0 0.0
        %2302 = vmatpush1.xpose.msra.mxu0 0.0
        %2303 = vmatprep.subr.mxu0 0.0
        %2304 = vmatpush1.xpose.msra.mxu0 0.0
        %2305 = vmatprep.subr.mxu0 0.0
        %2306 = vmatpush1.xpose.msra.mxu0 0.0
        %2307 = vmatprep.subr.mxu0 0.0
        %2308 = vmatpush1.xpose.msra.mxu0 0.0
        %2309 = vmatprep.subr.mxu0 0.0
        %2310 = vmatpush1.xpose.msra.mxu0 0.0
        %2311 = vmatprep.subr.mxu0 0.0
        %2312 = vmatpush1.xpose.msra.mxu0 0.0
        %2313 = vmatprep.subr.mxu0 0.0
        %2314 = vmatpush1.xpose.msra.mxu0 0.0
        %2315 = vmatprep.subr.mxu0 0.0
        %2316 = vmatpush1.xpose.msra.mxu0 0.0
        %2317 = vmatprep.subr.mxu0 0.0
        %2318 = vmatpush1.xpose.msra.mxu0 0.0
        %2319 = vmatprep.subr.mxu0 0.0
        %2320 = vmatpush1.xpose.msra.mxu0 0.0
        %2321 = vmatprep.subr.mxu0 0.0
        %2322 = vmatpush1.xpose.msra.mxu0 0.0
        %2323 = vmatprep.subr.mxu0 0.0
        %2324 = vmatpush1.xpose.msra.mxu0 0.0
        %2325 = vmatprep.subr.mxu0 0.0
        %2326 = vmatpush1.xpose.msra.mxu0 0.0
        %2327 = vmatprep.subr.mxu0 0.0
        %2328 = vmatpush1.xpose.msra.mxu0 0.0
        %2329 = vmatprep.subr.mxu0 0.0
        %2330 = vmatpush1.xpose.msra.mxu0 0.0
        %2331 = vmatprep.subr.mxu0 0.0
        %2332 = vmatpush1.xpose.msra.mxu0 0.0
        %2333 = vmatprep.subr.mxu0 0.0
        %2334 = vmatpush1.xpose.msra.mxu0 0.0
        %2335 = vmatprep.subr.mxu0 0.0
        %2336 = vmatpush1.xpose.msra.mxu0 0.0
        %2337 = vmatprep.subr.mxu0 0.0
        %2338 = vmatpush1.xpose.msra.mxu0 0.0
        %2339 = vmatprep.subr.mxu0 0.0
        %2340 = vmatpush1.xpose.msra.mxu0 0.0
        %2341 = vmatprep.subr.mxu0 0.0
        %2342 = vmatpush1.xpose.msra.mxu0 0.0
        %2343 = vmatprep.subr.mxu0 0.0
        %2344 = vmatpush1.xpose.msra.mxu0 0.0
        %2345 = vmatprep.subr.mxu0 0.0
        %2346 = vmatpush1.xpose.msra.mxu0 0.0
        %2347 = vmatprep.subr.mxu0 0.0
        %2348 = vmatpush1.xpose.msra.mxu0 0.0
        %2349 = vmatprep.subr.mxu0 0.0
        %2350 = vmatpush1.xpose.msra.mxu0 0.0
        %2351 = vmatprep.mubr.f32.mxu0 0.0
        %2352 = vmatmul.mubr.f32.gmra.mrb[0].mxu0 %v2283
        %v2353 = vpop.f32.mrb[0].mxu0
        %v2354 = vadd.f32 0.0, %v2353
        %v2355 = vpop.f32.mrb[0].mxu0
        %2356 = vdwg.mxu0
        %2357 = vrot.lane.b32.xlu0 %v568, 120
        %v2358 = vpop.permute.xlu0 %2357
        %2359 = vrot.lane.b32.xlu0 %v568, 88
        %v2360 = vpop.permute.xlu0 %2359
        %v2361 = vsel %vm579, %v2358, 0
        %v2363 = vsel %vm579, %v2360, 0
        %2365 = vmatprep.subr.mxu0 0.0
        %2366 = vmatpush1.xpose.msra.mxu0 %v2363
        %2367 = vmatprep.subr.mxu0 0.0
        %2368 = vmatpush1.xpose.msra.mxu0 0.0
        %2369 = vmatprep.subr.mxu0 0.0
        %2370 = vmatpush1.xpose.msra.mxu0 0.0
        %2371 = vmatprep.subr.mxu0 0.0
        %2372 = vmatpush1.xpose.msra.mxu0 0.0
        %2373 = vmatprep.subr.mxu0 0.0
        %2374 = vmatpush1.xpose.msra.mxu0 0.0
        %2375 = vmatprep.subr.mxu0 0.0
        %2376 = vmatpush1.xpose.msra.mxu0 0.0
        %2377 = vmatprep.subr.mxu0 0.0
        %2378 = vmatpush1.xpose.msra.mxu0 0.0
        %2379 = vmatprep.subr.mxu0 0.0
        %2380 = vmatpush1.xpose.msra.mxu0 0.0
        %2381 = vmatprep.subr.mxu0 0.0
        %2382 = vmatpush1.xpose.msra.mxu0 0.0
        %2383 = vmatprep.subr.mxu0 0.0
        %2384 = vmatpush1.xpose.msra.mxu0 0.0
        %2385 = vmatprep.subr.mxu0 0.0
        %2386 = vmatpush1.xpose.msra.mxu0 0.0
        %2387 = vmatprep.subr.mxu0 0.0
        %2388 = vmatpush1.xpose.msra.mxu0 0.0
        %2389 = vmatprep.subr.mxu0 0.0
        %2390 = vmatpush1.xpose.msra.mxu0 0.0
        %2391 = vmatprep.subr.mxu0 0.0
        %2392 = vmatpush1.xpose.msra.mxu0 0.0
        %2393 = vmatprep.subr.mxu0 0.0
        %2394 = vmatpush1.xpose.msra.mxu0 0.0
        %2395 = vmatprep.subr.mxu0 0.0
        %2396 = vmatpush1.xpose.msra.mxu0 0.0
        %2397 = vmatprep.subr.mxu0 0.0
        %2398 = vmatpush1.xpose.msra.mxu0 0.0
        %2399 = vmatprep.subr.mxu0 0.0
        %2400 = vmatpush1.xpose.msra.mxu0 0.0
        %2401 = vmatprep.subr.mxu0 0.0
        %2402 = vmatpush1.xpose.msra.mxu0 0.0
        %2403 = vmatprep.subr.mxu0 0.0
        %2404 = vmatpush1.xpose.msra.mxu0 0.0
        %2405 = vmatprep.subr.mxu0 0.0
        %2406 = vmatpush1.xpose.msra.mxu0 0.0
        %2407 = vmatprep.subr.mxu0 0.0
        %2408 = vmatpush1.xpose.msra.mxu0 0.0
        %2409 = vmatprep.subr.mxu0 0.0
        %2410 = vmatpush1.xpose.msra.mxu0 0.0
        %2411 = vmatprep.subr.mxu0 0.0
        %2412 = vmatpush1.xpose.msra.mxu0 0.0
        %2413 = vmatprep.subr.mxu0 0.0
        %2414 = vmatpush1.xpose.msra.mxu0 0.0
        %2415 = vmatprep.subr.mxu0 0.0
        %2416 = vmatpush1.xpose.msra.mxu0 0.0
        %2417 = vmatprep.subr.mxu0 0.0
        %2418 = vmatpush1.xpose.msra.mxu0 0.0
        %2419 = vmatprep.subr.mxu0 0.0
        %2420 = vmatpush1.xpose.msra.mxu0 0.0
        %2421 = vmatprep.subr.mxu0 0.0
        %2422 = vmatpush1.xpose.msra.mxu0 0.0
        %2423 = vmatprep.subr.mxu0 0.0
        %2424 = vmatpush1.xpose.msra.mxu0 0.0
        %2425 = vmatprep.subr.mxu0 0.0
        %2426 = vmatpush1.xpose.msra.mxu0 0.0
        %2427 = vmatprep.subr.mxu0 0.0
        %2428 = vmatpush1.xpose.msra.mxu0 0.0
        %2429 = vmatprep.mubr.f32.mxu0 0.0
        %2430 = vmatmul.mubr.f32.gmra.mrb[0].mxu0 %v2361
        %v2431 = vpop.f32.mrb[0].mxu0
        %v2432 = vadd.f32 0.0, %v2431
        %v2433 = vpop.f32.mrb[0].mxu0
        %2434 = vdwg.mxu0
        %2435 = vrot.lane.b32.xlu0 %v573, 120
        %v2436 = vpop.permute.xlu0 %2435
        %2437 = vrot.lane.b32.xlu0 %v573, 88
        %v2438 = vpop.permute.xlu0 %2437
        %v2439 = vsel %vm579, %v2436, 0
        %v2441 = vsel %vm579, %v2438, 0
        %2443 = vmatprep.subr.mxu0 0.0
        %2444 = vmatpush1.xpose.msra.mxu0 %v2441
        %2445 = vmatprep.subr.mxu0 0.0
        %2446 = vmatpush1.xpose.msra.mxu0 0.0
        %2447 = vmatprep.subr.mxu0 0.0
        %2448 = vmatpush1.xpose.msra.mxu0 0.0
        %2449 = vmatprep.subr.mxu0 0.0
        %2450 = vmatpush1.xpose.msra.mxu0 0.0
        %2451 = vmatprep.subr.mxu0 0.0
        %2452 = vmatpush1.xpose.msra.mxu0 0.0
        %2453 = vmatprep.subr.mxu0 0.0
        %2454 = vmatpush1.xpose.msra.mxu0 0.0
        %2455 = vmatprep.subr.mxu0 0.0
        %2456 = vmatpush1.xpose.msra.mxu0 0.0
        %2457 = vmatprep.subr.mxu0 0.0
        %2458 = vmatpush1.xpose.msra.mxu0 0.0
        %2459 = vmatprep.subr.mxu0 0.0
        %2460 = vmatpush1.xpose.msra.mxu0 0.0
        %2461 = vmatprep.subr.mxu0 0.0
        %2462 = vmatpush1.xpose.msra.mxu0 0.0
        %2463 = vmatprep.subr.mxu0 0.0
        %2464 = vmatpush1.xpose.msra.mxu0 0.0
        %2465 = vmatprep.subr.mxu0 0.0
        %2466 = vmatpush1.xpose.msra.mxu0 0.0
        %2467 = vmatprep.subr.mxu0 0.0
        %2468 = vmatpush1.xpose.msra.mxu0 0.0
        %2469 = vmatprep.subr.mxu0 0.0
        %2470 = vmatpush1.xpose.msra.mxu0 0.0
        %2471 = vmatprep.subr.mxu0 0.0
        %2472 = vmatpush1.xpose.msra.mxu0 0.0
        %2473 = vmatprep.subr.mxu0 0.0
        %2474 = vmatpush1.xpose.msra.mxu0 0.0
        %2475 = vmatprep.subr.mxu0 0.0
        %2476 = vmatpush1.xpose.msra.mxu0 0.0
        %2477 = vmatprep.subr.mxu0 0.0
        %2478 = vmatpush1.xpose.msra.mxu0 0.0
        %2479 = vmatprep.subr.mxu0 0.0
        %2480 = vmatpush1.xpose.msra.mxu0 0.0
        %2481 = vmatprep.subr.mxu0 0.0
        %2482 = vmatpush1.xpose.msra.mxu0 0.0
        %2483 = vmatprep.subr.mxu0 0.0
        %2484 = vmatpush1.xpose.msra.mxu0 0.0
        %2485 = vmatprep.subr.mxu0 0.0
        %2486 = vmatpush1.xpose.msra.mxu0 0.0
        %2487 = vmatprep.subr.mxu0 0.0
        %2488 = vmatpush1.xpose.msra.mxu0 0.0
        %2489 = vmatprep.subr.mxu0 0.0
        %2490 = vmatpush1.xpose.msra.mxu0 0.0
        %2491 = vmatprep.subr.mxu0 0.0
        %2492 = vmatpush1.xpose.msra.mxu0 0.0
        %2493 = vmatprep.subr.mxu0 0.0
        %2494 = vmatpush1.xpose.msra.mxu0 0.0
        %2495 = vmatprep.subr.mxu0 0.0
        %2496 = vmatpush1.xpose.msra.mxu0 0.0
        %2497 = vmatprep.subr.mxu0 0.0
        %2498 = vmatpush1.xpose.msra.mxu0 0.0
        %2499 = vmatprep.subr.mxu0 0.0
        %2500 = vmatpush1.xpose.msra.mxu0 0.0
        %2501 = vmatprep.subr.mxu0 0.0
        %2502 = vmatpush1.xpose.msra.mxu0 0.0
        %2503 = vmatprep.subr.mxu0 0.0
        %2504 = vmatpush1.xpose.msra.mxu0 0.0
        %2505 = vmatprep.subr.mxu0 0.0
        %2506 = vmatpush1.xpose.msra.mxu0 0.0
        %2507 = vmatprep.mubr.f32.mxu0 0.0
        %2508 = vmatmul.mubr.f32.gmra.mrb[0].mxu0 %v2439
        %v2509 = vpop.f32.mrb[0].mxu0
        %v2510 = vadd.f32 0.0, %v2509
        %v2511 = vpop.f32.mrb[0].mxu0
        %2512 = vdwg.mxu0
        %v2513 = vsel %vm579, %v1964, -inf
        %2514 = vmax.xlane.f32.xlu0 %v2513
        %v2515 = vpop.xlane.xlu0 %2514
        %v2516 = vsel %vm579, %v2042, -inf
        %2517 = vmax.xlane.f32.xlu0 %v2516
        %v2518 = vpop.xlane.xlu0 %2517
        %v2519 = vsel %vm579, %v2120, -inf
        %2520 = vmax.xlane.f32.xlu0 %v2519
        %v2521 = vpop.xlane.xlu0 %2520
        %v2522 = vsel %vm579, %v2198, -inf
        %2523 = vmax.xlane.f32.xlu0 %v2522
        %v2524 = vpop.xlane.xlu0 %2523
        %v2525 = vsel %vm579, %v2276, -inf
        %2526 = vmax.xlane.f32.xlu0 %v2525
        %v2527 = vpop.xlane.xlu0 %2526
        %v2528 = vsel %vm579, %v2354, -inf
        %2529 = vmax.xlane.f32.xlu0 %v2528
        %v2530 = vpop.xlane.xlu0 %2529
        %v2531 = vsel %vm579, %v2432, -inf
        %2532 = vmax.xlane.f32.xlu0 %v2531
        %v2533 = vpop.xlane.xlu0 %2532
        %v2534 = vsel %vm579, %v2510, -inf
        %2535 = vmax.xlane.f32.xlu0 %v2534
        %v2536 = vpop.xlane.xlu0 %2535
        %v2537 = vsub.f32 %v1964, %v2515
        %v2538 = vsub.f32 %v2042, %v2518
        %v2539 = vsub.f32 %v2120, %v2521
        %v2540 = vsub.f32 %v2198, %v2524
        %v2541 = vsub.f32 %v2276, %v2527
        %v2542 = vsub.f32 %v2354, %v2530
        %v2543 = vsub.f32 %v2432, %v2533
        %v2544 = vsub.f32 %v2510, %v2536
        %v2545 = vmul.f32 %v2537, 1.442695
        %v2546 = vpow.pop %v2545
        %v2547 = vmul.f32 %v2538, 1.442695
        %v2548 = vpow.pop %v2547
        %v2549 = vmul.f32 %v2539, 1.442695
        %v2550 = vpow.pop %v2549
        %v2551 = vmul.f32 %v2540, 1.442695
        %v2552 = vpow.pop %v2551
        %v2553 = vmul.f32 %v2541, 1.442695
        %v2554 = vpow.pop %v2553
        %v2555 = vmul.f32 %v2542, 1.442695
        %v2556 = vpow.pop %v2555
        %v2557 = vmul.f32 %v2543, 1.442695
        %v2558 = vpow.pop %v2557
        %v2559 = vmul.f32 %v2544, 1.442695
        %v2560 = vpow.pop %v2559
        %v2561 = vsel %vm579, %v2546, 0.0
        %2562 = vadd.xlane.f32.xlu0 %v2561
        %v2563 = vpop.xlane.xlu0 %2562
        %v2564 = vsel %vm579, %v2548, 0.0
        %2565 = vadd.xlane.f32.xlu0 %v2564
        %v2566 = vpop.xlane.xlu0 %2565
        %v2567 = vsel %vm579, %v2550, 0.0
        %2568 = vadd.xlane.f32.xlu0 %v2567
        %v2569 = vpop.xlane.xlu0 %2568
        %v2570 = vsel %vm579, %v2552, 0.0
        %2571 = vadd.xlane.f32.xlu0 %v2570
        %v2572 = vpop.xlane.xlu0 %2571
        %v2573 = vsel %vm579, %v2554, 0.0
        %2574 = vadd.xlane.f32.xlu0 %v2573
        %v2575 = vpop.xlane.xlu0 %2574
        %v2576 = vsel %vm579, %v2556, 0.0
        %2577 = vadd.xlane.f32.xlu0 %v2576
        %v2578 = vpop.xlane.xlu0 %2577
        %v2579 = vsel %vm579, %v2558, 0.0
        %2580 = vadd.xlane.f32.xlu0 %v2579
        %v2581 = vpop.xlane.xlu0 %2580
        %v2582 = vsel %vm579, %v2560, 0.0
        %2583 = vadd.xlane.f32.xlu0 %v2582
        %v2584 = vpop.xlane.xlu0 %2583
        %v2585 = vrcp.pop %v2563
        %v2586 = vrcp.pop %v2566
        %v2587 = vrcp.pop %v2569
        %v2588 = vrcp.pop %v2572
        %v2589 = vrcp.pop %v2575
        %v2590 = vrcp.pop %v2578
        %v2591 = vrcp.pop %v2581
        %v2592 = vrcp.pop %v2584
        %v2593 = vmul.f32 %v2546, %v2585
        %v2594 = vmul.f32 %v2548, %v2586
        %v2595 = vmul.f32 %v2550, %v2587
        %v2596 = vmul.f32 %v2552, %v2588
        %v2597 = vmul.f32 %v2554, %v2589
        %v2598 = vmul.f32 %v2556, %v2590
        %v2599 = vmul.f32 %v2558, %v2591
        %v2600 = vmul.f32 %v2560, %v2592
        %2601 = vrot.lane.b32.xlu0 %v538, 56
        %v2602 = vpop.permute.xlu0 %2601
        %v2605 = vsel %vm579, %v2593, 0
        %2607 = vmatprep.subr.mxu0 0.0
        %2608 = vmatpush1.msra.mxu0 %v2602
        %2609 = vmatprep.subr.mxu0 0.0
        %2610 = vmatpush1.msra.mxu0 0.0
        %2611 = vmatprep.subr.mxu0 0.0
        %2612 = vmatpush1.msra.mxu0 0.0
        %2613 = vmatprep.subr.mxu0 0.0
        %2614 = vmatpush1.msra.mxu0 0.0
        %2615 = vmatprep.subr.mxu0 0.0
        %2616 = vmatpush1.msra.mxu0 0.0
        %2617 = vmatprep.subr.mxu0 0.0
        %2618 = vmatpush1.msra.mxu0 0.0
        %2619 = vmatprep.subr.mxu0 0.0
        %2620 = vmatpush1.msra.mxu0 0.0
        %2621 = vmatprep.subr.mxu0 0.0
        %2622 = vmatpush1.msra.mxu0 0.0
        %2623 = vmatprep.subr.mxu0 0.0
        %2624 = vmatpush1.msra.mxu0 0.0
        %2625 = vmatprep.subr.mxu0 0.0
        %2626 = vmatpush1.msra.mxu0 0.0
        %2627 = vmatprep.subr.mxu0 0.0
        %2628 = vmatpush1.msra.mxu0 0.0
        %2629 = vmatprep.subr.mxu0 0.0
        %2630 = vmatpush1.msra.mxu0 0.0
        %2631 = vmatprep.subr.mxu0 0.0
        %2632 = vmatpush1.msra.mxu0 0.0
        %2633 = vmatprep.subr.mxu0 0.0
        %2634 = vmatpush1.msra.mxu0 0.0
        %2635 = vmatprep.subr.mxu0 0.0
        %2636 = vmatpush1.msra.mxu0 0.0
        %2637 = vmatprep.subr.mxu0 0.0
        %2638 = vmatpush1.msra.mxu0 0.0
        %2639 = vmatprep.subr.mxu0 0.0
        %2640 = vmatpush1.msra.mxu0 0.0
        %2641 = vmatprep.subr.mxu0 0.0
        %2642 = vmatpush1.msra.mxu0 0.0
        %2643 = vmatprep.subr.mxu0 0.0
        %2644 = vmatpush1.msra.mxu0 0.0
        %2645 = vmatprep.subr.mxu0 0.0
        %2646 = vmatpush1.msra.mxu0 0.0
        %2647 = vmatprep.subr.mxu0 0.0
        %2648 = vmatpush1.msra.mxu0 0.0
        %2649 = vmatprep.subr.mxu0 0.0
        %2650 = vmatpush1.msra.mxu0 0.0
        %2651 = vmatprep.subr.mxu0 0.0
        %2652 = vmatpush1.msra.mxu0 0.0
        %2653 = vmatprep.subr.mxu0 0.0
        %2654 = vmatpush1.msra.mxu0 0.0
        %2655 = vmatprep.subr.mxu0 0.0
        %2656 = vmatpush1.msra.mxu0 0.0
        %2657 = vmatprep.subr.mxu0 0.0
        %2658 = vmatpush1.msra.mxu0 0.0
        %2659 = vmatprep.subr.mxu0 0.0
        %2660 = vmatpush1.msra.mxu0 0.0
        %2661 = vmatprep.subr.mxu0 0.0
        %2662 = vmatpush1.msra.mxu0 0.0
        %2663 = vmatprep.subr.mxu0 0.0
        %2664 = vmatpush1.msra.mxu0 0.0
        %2665 = vmatprep.subr.mxu0 0.0
        %2666 = vmatpush1.msra.mxu0 0.0
        %2667 = vmatprep.subr.mxu0 0.0
        %2668 = vmatpush1.msra.mxu0 0.0
        %2669 = vmatprep.subr.mxu0 0.0
        %2670 = vmatpush1.msra.mxu0 0.0
        %2671 = vmatprep.mubr.f32.mxu0 0.0
        %2672 = vmatmul.mubr.f32.gmra.mrb[0].mxu0 %v2605
        %v2673 = vpop.f32.mrb[0].mxu0
        %v2674 = vadd.f32 0.0, %v2673
        %v2675 = vpop.f32.mrb[0].mxu0
        %2676 = vdwg.mxu0
        %2677 = vrot.lane.b32.xlu0 %v543, 56
        %v2678 = vpop.permute.xlu0 %2677
        %v2681 = vsel %vm579, %v2594, 0
        %2683 = vmatprep.subr.mxu0 0.0
        %2684 = vmatpush1.msra.mxu0 %v2678
        %2685 = vmatprep.subr.mxu0 0.0
        %2686 = vmatpush1.msra.mxu0 0.0
        %2687 = vmatprep.subr.mxu0 0.0
        %2688 = vmatpush1.msra.mxu0 0.0
        %2689 = vmatprep.subr.mxu0 0.0
        %2690 = vmatpush1.msra.mxu0 0.0
        %2691 = vmatprep.subr.mxu0 0.0
        %2692 = vmatpush1.msra.mxu0 0.0
        %2693 = vmatprep.subr.mxu0 0.0
        %2694 = vmatpush1.msra.mxu0 0.0
        %2695 = vmatprep.subr.mxu0 0.0
        %2696 = vmatpush1.msra.mxu0 0.0
        %2697 = vmatprep.subr.mxu0 0.0
        %2698 = vmatpush1.msra.mxu0 0.0
        %2699 = vmatprep.subr.mxu0 0.0
        %2700 = vmatpush1.msra.mxu0 0.0
        %2701 = vmatprep.subr.mxu0 0.0
        %2702 = vmatpush1.msra.mxu0 0.0
        %2703 = vmatprep.subr.mxu0 0.0
        %2704 = vmatpush1.msra.mxu0 0.0
        %2705 = vmatprep.subr.mxu0 0.0
        %2706 = vmatpush1.msra.mxu0 0.0
        %2707 = vmatprep.subr.mxu0 0.0
        %2708 = vmatpush1.msra.mxu0 0.0
        %2709 = vmatprep.subr.mxu0 0.0
        %2710 = vmatpush1.msra.mxu0 0.0
        %2711 = vmatprep.subr.mxu0 0.0
        %2712 = vmatpush1.msra.mxu0 0.0
        %2713 = vmatprep.subr.mxu0 0.0
        %2714 = vmatpush1.msra.mxu0 0.0
        %2715 = vmatprep.subr.mxu0 0.0
        %2716 = vmatpush1.msra.mxu0 0.0
        %2717 = vmatprep.subr.mxu0 0.0
        %2718 = vmatpush1.msra.mxu0 0.0
        %2719 = vmatprep.subr.mxu0 0.0
        %2720 = vmatpush1.msra.mxu0 0.0
        %2721 = vmatprep.subr.mxu0 0.0
        %2722 = vmatpush1.msra.mxu0 0.0
        %2723 = vmatprep.subr.mxu0 0.0
        %2724 = vmatpush1.msra.mxu0 0.0
        %2725 = vmatprep.subr.mxu0 0.0
        %2726 = vmatpush1.msra.mxu0 0.0
        %2727 = vmatprep.subr.mxu0 0.0
        %2728 = vmatpush1.msra.mxu0 0.0
        %2729 = vmatprep.subr.mxu0 0.0
        %2730 = vmatpush1.msra.mxu0 0.0
        %2731 = vmatprep.subr.mxu0 0.0
        %2732 = vmatpush1.msra.mxu0 0.0
        %2733 = vmatprep.subr.mxu0 0.0
        %2734 = vmatpush1.msra.mxu0 0.0
        %2735 = vmatprep.subr.mxu0 0.0
        %2736 = vmatpush1.msra.mxu0 0.0
        %2737 = vmatprep.subr.mxu0 0.0
        %2738 = vmatpush1.msra.mxu0 0.0
        %2739 = vmatprep.subr.mxu0 0.0
        %2740 = vmatpush1.msra.mxu0 0.0
        %2741 = vmatprep.subr.mxu0 0.0
        %2742 = vmatpush1.msra.mxu0 0.0
        %2743 = vmatprep.subr.mxu0 0.0
        %2744 = vmatpush1.msra.mxu0 0.0
        %2745 = vmatprep.subr.mxu0 0.0
        %2746 = vmatpush1.msra.mxu0 0.0
        %2747 = vmatprep.mubr.f32.mxu0 0.0
        %2748 = vmatmul.mubr.f32.gmra.mrb[0].mxu0 %v2681
        %v2749 = vpop.f32.mrb[0].mxu0
        %v2750 = vadd.f32 0.0, %v2749
        %v2751 = vpop.f32.mrb[0].mxu0
        %2752 = vdwg.mxu0
        %2753 = vrot.lane.b32.xlu0 %v548, 56
        %v2754 = vpop.permute.xlu0 %2753
        %v2757 = vsel %vm579, %v2595, 0
        %2759 = vmatprep.subr.mxu0 0.0
        %2760 = vmatpush1.msra.mxu0 %v2754
        %2761 = vmatprep.subr.mxu0 0.0
        %2762 = vmatpush1.msra.mxu0 0.0
        %2763 = vmatprep.subr.mxu0 0.0
        %2764 = vmatpush1.msra.mxu0 0.0
        %2765 = vmatprep.subr.mxu0 0.0
        %2766 = vmatpush1.msra.mxu0 0.0
        %2767 = vmatprep.subr.mxu0 0.0
        %2768 = vmatpush1.msra.mxu0 0.0
        %2769 = vmatprep.subr.mxu0 0.0
        %2770 = vmatpush1.msra.mxu0 0.0
        %2771 = vmatprep.subr.mxu0 0.0
        %2772 = vmatpush1.msra.mxu0 0.0
        %2773 = vmatprep.subr.mxu0 0.0
        %2774 = vmatpush1.msra.mxu0 0.0
        %2775 = vmatprep.subr.mxu0 0.0
        %2776 = vmatpush1.msra.mxu0 0.0
        %2777 = vmatprep.subr.mxu0 0.0
        %2778 = vmatpush1.msra.mxu0 0.0
        %2779 = vmatprep.subr.mxu0 0.0
        %2780 = vmatpush1.msra.mxu0 0.0
        %2781 = vmatprep.subr.mxu0 0.0
        %2782 = vmatpush1.msra.mxu0 0.0
        %2783 = vmatprep.subr.mxu0 0.0
        %2784 = vmatpush1.msra.mxu0 0.0
        %2785 = vmatprep.subr.mxu0 0.0
        %2786 = vmatpush1.msra.mxu0 0.0
        %2787 = vmatprep.subr.mxu0 0.0
        %2788 = vmatpush1.msra.mxu0 0.0
        %2789 = vmatprep.subr.mxu0 0.0
        %2790 = vmatpush1.msra.mxu0 0.0
        %2791 = vmatprep.subr.mxu0 0.0
        %2792 = vmatpush1.msra.mxu0 0.0
        %2793 = vmatprep.subr.mxu0 0.0
        %2794 = vmatpush1.msra.mxu0 0.0
        %2795 = vmatprep.subr.mxu0 0.0
        %2796 = vmatpush1.msra.mxu0 0.0
        %2797 = vmatprep.subr.mxu0 0.0
        %2798 = vmatpush1.msra.mxu0 0.0
        %2799 = vmatprep.subr.mxu0 0.0
        %2800 = vmatpush1.msra.mxu0 0.0
        %2801 = vmatprep.subr.mxu0 0.0
        %2802 = vmatpush1.msra.mxu0 0.0
        %2803 = vmatprep.subr.mxu0 0.0
        %2804 = vmatpush1.msra.mxu0 0.0
        %2805 = vmatprep.subr.mxu0 0.0
        %2806 = vmatpush1.msra.mxu0 0.0
        %2807 = vmatprep.subr.mxu0 0.0
        %2808 = vmatpush1.msra.mxu0 0.0
        %2809 = vmatprep.subr.mxu0 0.0
        %2810 = vmatpush1.msra.mxu0 0.0
        %2811 = vmatprep.subr.mxu0 0.0
        %2812 = vmatpush1.msra.mxu0 0.0
        %2813 = vmatprep.subr.mxu0 0.0
        %2814 = vmatpush1.msra.mxu0 0.0
        %2815 = vmatprep.subr.mxu0 0.0
        %2816 = vmatpush1.msra.mxu0 0.0
        %2817 = vmatprep.subr.mxu0 0.0
        %2818 = vmatpush1.msra.mxu0 0.0
        %2819 = vmatprep.subr.mxu0 0.0
        %2820 = vmatpush1.msra.mxu0 0.0
        %2821 = vmatprep.subr.mxu0 0.0
        %2822 = vmatpush1.msra.mxu0 0.0
        %2823 = vmatprep.mubr.f32.mxu0 0.0
        %2824 = vmatmul.mubr.f32.gmra.mrb[0].mxu0 %v2757
        %v2825 = vpop.f32.mrb[0].mxu0
        %v2826 = vadd.f32 0.0, %v2825
        %v2827 = vpop.f32.mrb[0].mxu0
        %2828 = vdwg.mxu0
        %2829 = vrot.lane.b32.xlu0 %v553, 56
        %v2830 = vpop.permute.xlu0 %2829
        %v2833 = vsel %vm579, %v2596, 0
        %2835 = vmatprep.subr.mxu0 0.0
        %2836 = vmatpush1.msra.mxu0 %v2830
        %2837 = vmatprep.subr.mxu0 0.0
        %2838 = vmatpush1.msra.mxu0 0.0
        %2839 = vmatprep.subr.mxu0 0.0
        %2840 = vmatpush1.msra.mxu0 0.0
        %2841 = vmatprep.subr.mxu0 0.0
        %2842 = vmatpush1.msra.mxu0 0.0
        %2843 = vmatprep.subr.mxu0 0.0
        %2844 = vmatpush1.msra.mxu0 0.0
        %2845 = vmatprep.subr.mxu0 0.0
        %2846 = vmatpush1.msra.mxu0 0.0
        %2847 = vmatprep.subr.mxu0 0.0
        %2848 = vmatpush1.msra.mxu0 0.0
        %2849 = vmatprep.subr.mxu0 0.0
        %2850 = vmatpush1.msra.mxu0 0.0
        %2851 = vmatprep.subr.mxu0 0.0
        %2852 = vmatpush1.msra.mxu0 0.0
        %2853 = vmatprep.subr.mxu0 0.0
        %2854 = vmatpush1.msra.mxu0 0.0
        %2855 = vmatprep.subr.mxu0 0.0
        %2856 = vmatpush1.msra.mxu0 0.0
        %2857 = vmatprep.subr.mxu0 0.0
        %2858 = vmatpush1.msra.mxu0 0.0
        %2859 = vmatprep.subr.mxu0 0.0
        %2860 = vmatpush1.msra.mxu0 0.0
        %2861 = vmatprep.subr.mxu0 0.0
        %2862 = vmatpush1.msra.mxu0 0.0
        %2863 = vmatprep.subr.mxu0 0.0
        %2864 = vmatpush1.msra.mxu0 0.0
        %2865 = vmatprep.subr.mxu0 0.0
        %2866 = vmatpush1.msra.mxu0 0.0
        %2867 = vmatprep.subr.mxu0 0.0
        %2868 = vmatpush1.msra.mxu0 0.0
        %2869 = vmatprep.subr.mxu0 0.0
        %2870 = vmatpush1.msra.mxu0 0.0
        %2871 = vmatprep.subr.mxu0 0.0
        %2872 = vmatpush1.msra.mxu0 0.0
        %2873 = vmatprep.subr.mxu0 0.0
        %2874 = vmatpush1.msra.mxu0 0.0
        %2875 = vmatprep.subr.mxu0 0.0
        %2876 = vmatpush1.msra.mxu0 0.0
        %2877 = vmatprep.subr.mxu0 0.0
        %2878 = vmatpush1.msra.mxu0 0.0
        %2879 = vmatprep.subr.mxu0 0.0
        %2880 = vmatpush1.msra.mxu0 0.0
        %2881 = vmatprep.subr.mxu0 0.0
        %2882 = vmatpush1.msra.mxu0 0.0
        %2883 = vmatprep.subr.mxu0 0.0
        %2884 = vmatpush1.msra.mxu0 0.0
        %2885 = vmatprep.subr.mxu0 0.0
        %2886 = vmatpush1.msra.mxu0 0.0
        %2887 = vmatprep.subr.mxu0 0.0
        %2888 = vmatpush1.msra.mxu0 0.0
        %2889 = vmatprep.subr.mxu0 0.0
        %2890 = vmatpush1.msra.mxu0 0.0
        %2891 = vmatprep.subr.mxu0 0.0
        %2892 = vmatpush1.msra.mxu0 0.0
        %2893 = vmatprep.subr.mxu0 0.0
        %2894 = vmatpush1.msra.mxu0 0.0
        %2895 = vmatprep.subr.mxu0 0.0
        %2896 = vmatpush1.msra.mxu0 0.0
        %2897 = vmatprep.subr.mxu0 0.0
        %2898 = vmatpush1.msra.mxu0 0.0
        %2899 = vmatprep.mubr.f32.mxu0 0.0
        %2900 = vmatmul.mubr.f32.gmra.mrb[0].mxu0 %v2833
        %v2901 = vpop.f32.mrb[0].mxu0
        %v2902 = vadd.f32 0.0, %v2901
        %v2903 = vpop.f32.mrb[0].mxu0
        %2904 = vdwg.mxu0
        %2905 = vrot.lane.b32.xlu0 %v558, 56
        %v2906 = vpop.permute.xlu0 %2905
        %v2909 = vsel %vm579, %v2597, 0
        %2911 = vmatprep.subr.mxu0 0.0
        %2912 = vmatpush1.msra.mxu0 %v2906
        %2913 = vmatprep.subr.mxu0 0.0
        %2914 = vmatpush1.msra.mxu0 0.0
        %2915 = vmatprep.subr.mxu0 0.0
        %2916 = vmatpush1.msra.mxu0 0.0
        %2917 = vmatprep.subr.mxu0 0.0
        %2918 = vmatpush1.msra.mxu0 0.0
        %2919 = vmatprep.subr.mxu0 0.0
        %2920 = vmatpush1.msra.mxu0 0.0
        %2921 = vmatprep.subr.mxu0 0.0
        %2922 = vmatpush1.msra.mxu0 0.0
        %2923 = vmatprep.subr.mxu0 0.0
        %2924 = vmatpush1.msra.mxu0 0.0
        %2925 = vmatprep.subr.mxu0 0.0
        %2926 = vmatpush1.msra.mxu0 0.0
        %2927 = vmatprep.subr.mxu0 0.0
        %2928 = vmatpush1.msra.mxu0 0.0
        %2929 = vmatprep.subr.mxu0 0.0
        %2930 = vmatpush1.msra.mxu0 0.0
        %2931 = vmatprep.subr.mxu0 0.0
        %2932 = vmatpush1.msra.mxu0 0.0
        %2933 = vmatprep.subr.mxu0 0.0
        %2934 = vmatpush1.msra.mxu0 0.0
        %2935 = vmatprep.subr.mxu0 0.0
        %2936 = vmatpush1.msra.mxu0 0.0
        %2937 = vmatprep.subr.mxu0 0.0
        %2938 = vmatpush1.msra.mxu0 0.0
        %2939 = vmatprep.subr.mxu0 0.0
        %2940 = vmatpush1.msra.mxu0 0.0
        %2941 = vmatprep.subr.mxu0 0.0
        %2942 = vmatpush1.msra.mxu0 0.0
        %2943 = vmatprep.subr.mxu0 0.0
        %2944 = vmatpush1.msra.mxu0 0.0
        %2945 = vmatprep.subr.mxu0 0.0
        %2946 = vmatpush1.msra.mxu0 0.0
        %2947 = vmatprep.subr.mxu0 0.0
        %2948 = vmatpush1.msra.mxu0 0.0
        %2949 = vmatprep.subr.mxu0 0.0
        %2950 = vmatpush1.msra.mxu0 0.0
        %2951 = vmatprep.subr.mxu0 0.0
        %2952 = vmatpush1.msra.mxu0 0.0
        %2953 = vmatprep.subr.mxu0 0.0
        %2954 = vmatpush1.msra.mxu0 0.0
        %2955 = vmatprep.subr.mxu0 0.0
        %2956 = vmatpush1.msra.mxu0 0.0
        %2957 = vmatprep.subr.mxu0 0.0
        %2958 = vmatpush1.msra.mxu0 0.0
        %2959 = vmatprep.subr.mxu0 0.0
        %2960 = vmatpush1.msra.mxu0 0.0
        %2961 = vmatprep.subr.mxu0 0.0
        %2962 = vmatpush1.msra.mxu0 0.0
        %2963 = vmatprep.subr.mxu0 0.0
        %2964 = vmatpush1.msra.mxu0 0.0
        %2965 = vmatprep.subr.mxu0 0.0
        %2966 = vmatpush1.msra.mxu0 0.0
        %2967 = vmatprep.subr.mxu0 0.0
        %2968 = vmatpush1.msra.mxu0 0.0
        %2969 = vmatprep.subr.mxu0 0.0
        %2970 = vmatpush1.msra.mxu0 0.0
        %2971 = vmatprep.subr.mxu0 0.0
        %2972 = vmatpush1.msra.mxu0 0.0
        %2973 = vmatprep.subr.mxu0 0.0
        %2974 = vmatpush1.msra.mxu0 0.0
        %2975 = vmatprep.mubr.f32.mxu0 0.0
        %2976 = vmatmul.mubr.f32.gmra.mrb[0].mxu0 %v2909
        %v2977 = vpop.f32.mrb[0].mxu0
        %v2978 = vadd.f32 0.0, %v2977
        %v2979 = vpop.f32.mrb[0].mxu0
        %2980 = vdwg.mxu0
        %2981 = vrot.lane.b32.xlu0 %v563, 56
        %v2982 = vpop.permute.xlu0 %2981
        %v2985 = vsel %vm579, %v2598, 0
        %2987 = vmatprep.subr.mxu0 0.0
        %2988 = vmatpush1.msra.mxu0 %v2982
        %2989 = vmatprep.subr.mxu0 0.0
        %2990 = vmatpush1.msra.mxu0 0.0
        %2991 = vmatprep.subr.mxu0 0.0
        %2992 = vmatpush1.msra.mxu0 0.0
        %2993 = vmatprep.subr.mxu0 0.0
        %2994 = vmatpush1.msra.mxu0 0.0
        %2995 = vmatprep.subr.mxu0 0.0
        %2996 = vmatpush1.msra.mxu0 0.0
        %2997 = vmatprep.subr.mxu0 0.0
        %2998 = vmatpush1.msra.mxu0 0.0
        %2999 = vmatprep.subr.mxu0 0.0
        %3000 = vmatpush1.msra.mxu0 0.0
        %3001 = vmatprep.subr.mxu0 0.0
        %3002 = vmatpush1.msra.mxu0 0.0
        %3003 = vmatprep.subr.mxu0 0.0
        %3004 = vmatpush1.msra.mxu0 0.0
        %3005 = vmatprep.subr.mxu0 0.0
        %3006 = vmatpush1.msra.mxu0 0.0
        %3007 = vmatprep.subr.mxu0 0.0
        %3008 = vmatpush1.msra.mxu0 0.0
        %3009 = vmatprep.subr.mxu0 0.0
        %3010 = vmatpush1.msra.mxu0 0.0
        %3011 = vmatprep.subr.mxu0 0.0
        %3012 = vmatpush1.msra.mxu0 0.0
        %3013 = vmatprep.subr.mxu0 0.0
        %3014 = vmatpush1.msra.mxu0 0.0
        %3015 = vmatprep.subr.mxu0 0.0
        %3016 = vmatpush1.msra.mxu0 0.0
        %3017 = vmatprep.subr.mxu0 0.0
        %3018 = vmatpush1.msra.mxu0 0.0
        %3019 = vmatprep.subr.mxu0 0.0
        %3020 = vmatpush1.msra.mxu0 0.0
        %3021 = vmatprep.subr.mxu0 0.0
        %3022 = vmatpush1.msra.mxu0 0.0
        %3023 = vmatprep.subr.mxu0 0.0
        %3024 = vmatpush1.msra.mxu0 0.0
        %3025 = vmatprep.subr.mxu0 0.0
        %3026 = vmatpush1.msra.mxu0 0.0
        %3027 = vmatprep.subr.mxu0 0.0
        %3028 = vmatpush1.msra.mxu0 0.0
        %3029 = vmatprep.subr.mxu0 0.0
        %3030 = vmatpush1.msra.mxu0 0.0
        %3031 = vmatprep.subr.mxu0 0.0
        %3032 = vmatpush1.msra.mxu0 0.0
        %3033 = vmatprep.subr.mxu0 0.0
        %3034 = vmatpush1.msra.mxu0 0.0
        %3035 = vmatprep.subr.mxu0 0.0
        %3036 = vmatpush1.msra.mxu0 0.0
        %3037 = vmatprep.subr.mxu0 0.0
        %3038 = vmatpush1.msra.mxu0 0.0
        %3039 = vmatprep.subr.mxu0 0.0
        %3040 = vmatpush1.msra.mxu0 0.0
        %3041 = vmatprep.subr.mxu0 0.0
        %3042 = vmatpush1.msra.mxu0 0.0
        %3043 = vmatprep.subr.mxu0 0.0
        %3044 = vmatpush1.msra.mxu0 0.0
        %3045 = vmatprep.subr.mxu0 0.0
        %3046 = vmatpush1.msra.mxu0 0.0
        %3047 = vmatprep.subr.mxu0 0.0
        %3048 = vmatpush1.msra.mxu0 0.0
        %3049 = vmatprep.subr.mxu0 0.0
        %3050 = vmatpush1.msra.mxu0 0.0
        %3051 = vmatprep.mubr.f32.mxu0 0.0
        %3052 = vmatmul.mubr.f32.gmra.mrb[0].mxu0 %v2985
        %v3053 = vpop.f32.mrb[0].mxu0
        %v3054 = vadd.f32 0.0, %v3053
        %v3055 = vpop.f32.mrb[0].mxu0
        %3056 = vdwg.mxu0
        %3057 = vrot.lane.b32.xlu0 %v568, 56
        %v3058 = vpop.permute.xlu0 %3057
        %v3061 = vsel %vm579, %v2599, 0
        %3063 = vmatprep.subr.mxu0 0.0
        %3064 = vmatpush1.msra.mxu0 %v3058
        %3065 = vmatprep.subr.mxu0 0.0
        %3066 = vmatpush1.msra.mxu0 0.0
        %3067 = vmatprep.subr.mxu0 0.0
        %3068 = vmatpush1.msra.mxu0 0.0
        %3069 = vmatprep.subr.mxu0 0.0
        %3070 = vmatpush1.msra.mxu0 0.0
        %3071 = vmatprep.subr.mxu0 0.0
        %3072 = vmatpush1.msra.mxu0 0.0
        %3073 = vmatprep.subr.mxu0 0.0
        %3074 = vmatpush1.msra.mxu0 0.0
        %3075 = vmatprep.subr.mxu0 0.0
        %3076 = vmatpush1.msra.mxu0 0.0
        %3077 = vmatprep.subr.mxu0 0.0
        %3078 = vmatpush1.msra.mxu0 0.0
        %3079 = vmatprep.subr.mxu0 0.0
        %3080 = vmatpush1.msra.mxu0 0.0
        %3081 = vmatprep.subr.mxu0 0.0
        %3082 = vmatpush1.msra.mxu0 0.0
        %3083 = vmatprep.subr.mxu0 0.0
        %3084 = vmatpush1.msra.mxu0 0.0
        %3085 = vmatprep.subr.mxu0 0.0
        %3086 = vmatpush1.msra.mxu0 0.0
        %3087 = vmatprep.subr.mxu0 0.0
        %3088 = vmatpush1.msra.mxu0 0.0
        %3089 = vmatprep.subr.mxu0 0.0
        %3090 = vmatpush1.msra.mxu0 0.0
        %3091 = vmatprep.subr.mxu0 0.0
        %3092 = vmatpush1.msra.mxu0 0.0
        %3093 = vmatprep.subr.mxu0 0.0
        %3094 = vmatpush1.msra.mxu0 0.0
        %3095 = vmatprep.subr.mxu0 0.0
        %3096 = vmatpush1.msra.mxu0 0.0
        %3097 = vmatprep.subr.mxu0 0.0
        %3098 = vmatpush1.msra.mxu0 0.0
        %3099 = vmatprep.subr.mxu0 0.0
        %3100 = vmatpush1.msra.mxu0 0.0
        %3101 = vmatprep.subr.mxu0 0.0
        %3102 = vmatpush1.msra.mxu0 0.0
        %3103 = vmatprep.subr.mxu0 0.0
        %3104 = vmatpush1.msra.mxu0 0.0
        %3105 = vmatprep.subr.mxu0 0.0
        %3106 = vmatpush1.msra.mxu0 0.0
        %3107 = vmatprep.subr.mxu0 0.0
        %3108 = vmatpush1.msra.mxu0 0.0
        %3109 = vmatprep.subr.mxu0 0.0
        %3110 = vmatpush1.msra.mxu0 0.0
        %3111 = vmatprep.subr.mxu0 0.0
        %3112 = vmatpush1.msra.mxu0 0.0
        %3113 = vmatprep.subr.mxu0 0.0
        %3114 = vmatpush1.msra.mxu0 0.0
        %3115 = vmatprep.subr.mxu0 0.0
        %3116 = vmatpush1.msra.mxu0 0.0
        %3117 = vmatprep.subr.mxu0 0.0
        %3118 = vmatpush1.msra.mxu0 0.0
        %3119 = vmatprep.subr.mxu0 0.0
        %3120 = vmatpush1.msra.mxu0 0.0
        %3121 = vmatprep.subr.mxu0 0.0
        %3122 = vmatpush1.msra.mxu0 0.0
        %3123 = vmatprep.subr.mxu0 0.0
        %3124 = vmatpush1.msra.mxu0 0.0
        %3125 = vmatprep.subr.mxu0 0.0
        %3126 = vmatpush1.msra.mxu0 0.0
        %3127 = vmatprep.mubr.f32.mxu0 0.0
        %3128 = vmatmul.mubr.f32.gmra.mrb[0].mxu0 %v3061
        %v3129 = vpop.f32.mrb[0].mxu0
        %v3130 = vadd.f32 0.0, %v3129
        %v3131 = vpop.f32.mrb[0].mxu0
        %3132 = vdwg.mxu0
        %3133 = vrot.lane.b32.xlu0 %v573, 56
        %v3134 = vpop.permute.xlu0 %3133
        %v3137 = vsel %vm579, %v2600, 0
        %3139 = vmatprep.subr.mxu0 0.0
        %3140 = vmatpush1.msra.mxu0 %v3134
        %3141 = vmatprep.subr.mxu0 0.0
        %3142 = vmatpush1.msra.mxu0 0.0
        %3143 = vmatprep.subr.mxu0 0.0
        %3144 = vmatpush1.msra.mxu0 0.0
        %3145 = vmatprep.subr.mxu0 0.0
        %3146 = vmatpush1.msra.mxu0 0.0
        %3147 = vmatprep.subr.mxu0 0.0
        %3148 = vmatpush1.msra.mxu0 0.0
        %3149 = vmatprep.subr.mxu0 0.0
        %3150 = vmatpush1.msra.mxu0 0.0
        %3151 = vmatprep.subr.mxu0 0.0
        %3152 = vmatpush1.msra.mxu0 0.0
        %3153 = vmatprep.subr.mxu0 0.0
        %3154 = vmatpush1.msra.mxu0 0.0
        %3155 = vmatprep.subr.mxu0 0.0
        %3156 = vmatpush1.msra.mxu0 0.0
        %3157 = vmatprep.subr.mxu0 0.0
        %3158 = vmatpush1.msra.mxu0 0.0
        %3159 = vmatprep.subr.mxu0 0.0
        %3160 = vmatpush1.msra.mxu0 0.0
        %3161 = vmatprep.subr.mxu0 0.0
        %3162 = vmatpush1.msra.mxu0 0.0
        %3163 = vmatprep.subr.mxu0 0.0
        %3164 = vmatpush1.msra.mxu0 0.0
        %3165 = vmatprep.subr.mxu0 0.0
        %3166 = vmatpush1.msra.mxu0 0.0
        %3167 = vmatprep.subr.mxu0 0.0
        %3168 = vmatpush1.msra.mxu0 0.0
        %3169 = vmatprep.subr.mxu0 0.0
        %3170 = vmatpush1.msra.mxu0 0.0
        %3171 = vmatprep.subr.mxu0 0.0
        %3172 = vmatpush1.msra.mxu0 0.0
        %3173 = vmatprep.subr.mxu0 0.0
        %3174 = vmatpush1.msra.mxu0 0.0
        %3175 = vmatprep.subr.mxu0 0.0
        %3176 = vmatpush1.msra.mxu0 0.0
        %3177 = vmatprep.subr.mxu0 0.0
        %3178 = vmatpush1.msra.mxu0 0.0
        %3179 = vmatprep.subr.mxu0 0.0
        %3180 = vmatpush1.msra.mxu0 0.0
        %3181 = vmatprep.subr.mxu0 0.0
        %3182 = vmatpush1.msra.mxu0 0.0
        %3183 = vmatprep.subr.mxu0 0.0
        %3184 = vmatpush1.msra.mxu0 0.0
        %3185 = vmatprep.subr.mxu0 0.0
        %3186 = vmatpush1.msra.mxu0 0.0
        %3187 = vmatprep.subr.mxu0 0.0
        %3188 = vmatpush1.msra.mxu0 0.0
        %3189 = vmatprep.subr.mxu0 0.0
        %3190 = vmatpush1.msra.mxu0 0.0
        %3191 = vmatprep.subr.mxu0 0.0
        %3192 = vmatpush1.msra.mxu0 0.0
        %3193 = vmatprep.subr.mxu0 0.0
        %3194 = vmatpush1.msra.mxu0 0.0
        %3195 = vmatprep.subr.mxu0 0.0
        %3196 = vmatpush1.msra.mxu0 0.0
        %3197 = vmatprep.subr.mxu0 0.0
        %3198 = vmatpush1.msra.mxu0 0.0
        %3199 = vmatprep.subr.mxu0 0.0
        %3200 = vmatpush1.msra.mxu0 0.0
        %3201 = vmatprep.subr.mxu0 0.0
        %3202 = vmatpush1.msra.mxu0 0.0
        %3203 = vmatprep.mubr.f32.mxu0 0.0
        %3204 = vmatmul.mubr.f32.gmra.mrb[0].mxu0 %v3137
        %v3205 = vpop.f32.mrb[0].mxu0
        %v3206 = vadd.f32 0.0, %v3205
        %v3207 = vpop.f32.mrb[0].mxu0
        %3208 = vdwg.mxu0
        %3209 = vrot.lane.b32.xlu0 %v538, 112
        %v3210 = vpop.permute.xlu0 %3209
        %3211 = vrot.lane.b32.xlu0 %v538, 80
        %v3212 = vpop.permute.xlu0 %3211
        %v3213 = vsel %vm579, %v3210, 0
        %v3215 = vsel %vm579, %v3212, 0
        %3217 = vmatprep.subr.mxu0 0.0
        %3218 = vmatpush1.xpose.msra.mxu0 %v3215
        %3219 = vmatprep.subr.mxu0 0.0
        %3220 = vmatpush1.xpose.msra.mxu0 0.0
        %3221 = vmatprep.subr.mxu0 0.0
        %3222 = vmatpush1.xpose.msra.mxu0 0.0
        %3223 = vmatprep.subr.mxu0 0.0
        %3224 = vmatpush1.xpose.msra.mxu0 0.0
        %3225 = vmatprep.subr.mxu0 0.0
        %3226 = vmatpush1.xpose.msra.mxu0 0.0
        %3227 = vmatprep.subr.mxu0 0.0
        %3228 = vmatpush1.xpose.msra.mxu0 0.0
        %3229 = vmatprep.subr.mxu0 0.0
        %3230 = vmatpush1.xpose.msra.mxu0 0.0
        %3231 = vmatprep.subr.mxu0 0.0
        %3232 = vmatpush1.xpose.msra.mxu0 0.0
        %3233 = vmatprep.subr.mxu0 0.0
        %3234 = vmatpush1.xpose.msra.mxu0 0.0
        %3235 = vmatprep.subr.mxu0 0.0
        %3236 = vmatpush1.xpose.msra.mxu0 0.0
        %3237 = vmatprep.subr.mxu0 0.0
        %3238 = vmatpush1.xpose.msra.mxu0 0.0
        %3239 = vmatprep.subr.mxu0 0.0
        %3240 = vmatpush1.xpose.msra.mxu0 0.0
        %3241 = vmatprep.subr.mxu0 0.0
        %3242 = vmatpush1.xpose.msra.mxu0 0.0
        %3243 = vmatprep.subr.mxu0 0.0
        %3244 = vmatpush1.xpose.msra.mxu0 0.0
        %3245 = vmatprep.subr.mxu0 0.0
        %3246 = vmatpush1.xpose.msra.mxu0 0.0
        %3247 = vmatprep.subr.mxu0 0.0
        %3248 = vmatpush1.xpose.msra.mxu0 0.0
        %3249 = vmatprep.subr.mxu0 0.0
        %3250 = vmatpush1.xpose.msra.mxu0 0.0
        %3251 = vmatprep.subr.mxu0 0.0
        %3252 = vmatpush1.xpose.msra.mxu0 0.0
        %3253 = vmatprep.subr.mxu0 0.0
        %3254 = vmatpush1.xpose.msra.mxu0 0.0
        %3255 = vmatprep.subr.mxu0 0.0
        %3256 = vmatpush1.xpose.msra.mxu0 0.0
        %3257 = vmatprep.subr.mxu0 0.0
        %3258 = vmatpush1.xpose.msra.mxu0 0.0
        %3259 = vmatprep.subr.mxu0 0.0
        %3260 = vmatpush1.xpose.msra.mxu0 0.0
        %3261 = vmatprep.subr.mxu0 0.0
        %3262 = vmatpush1.xpose.msra.mxu0 0.0
        %3263 = vmatprep.subr.mxu0 0.0
        %3264 = vmatpush1.xpose.msra.mxu0 0.0
        %3265 = vmatprep.subr.mxu0 0.0
        %3266 = vmatpush1.xpose.msra.mxu0 0.0
        %3267 = vmatprep.subr.mxu0 0.0
        %3268 = vmatpush1.xpose.msra.mxu0 0.0
        %3269 = vmatprep.subr.mxu0 0.0
        %3270 = vmatpush1.xpose.msra.mxu0 0.0
        %3271 = vmatprep.subr.mxu0 0.0
        %3272 = vmatpush1.xpose.msra.mxu0 0.0
        %3273 = vmatprep.subr.mxu0 0.0
        %3274 = vmatpush1.xpose.msra.mxu0 0.0
        %3275 = vmatprep.subr.mxu0 0.0
        %3276 = vmatpush1.xpose.msra.mxu0 0.0
        %3277 = vmatprep.subr.mxu0 0.0
        %3278 = vmatpush1.xpose.msra.mxu0 0.0
        %3279 = vmatprep.subr.mxu0 0.0
        %3280 = vmatpush1.xpose.msra.mxu0 0.0
        %3281 = vmatprep.mubr.f32.mxu0 0.0
        %3282 = vmatmul.mubr.f32.gmra.mrb[0].mxu0 %v3213
        %v3283 = vpop.f32.mrb[0].mxu0
        %v3284 = vadd.f32 0.0, %v3283
        %v3285 = vpop.f32.mrb[0].mxu0
        %3286 = vdwg.mxu0
        %3287 = vrot.lane.b32.xlu0 %v543, 112
        %v3288 = vpop.permute.xlu0 %3287
        %3289 = vrot.lane.b32.xlu0 %v543, 80
        %v3290 = vpop.permute.xlu0 %3289
        %v3291 = vsel %vm579, %v3288, 0
        %v3293 = vsel %vm579, %v3290, 0
        %3295 = vmatprep.subr.mxu0 0.0
        %3296 = vmatpush1.xpose.msra.mxu0 %v3293
        %3297 = vmatprep.subr.mxu0 0.0
        %3298 = vmatpush1.xpose.msra.mxu0 0.0
        %3299 = vmatprep.subr.mxu0 0.0
        %3300 = vmatpush1.xpose.msra.mxu0 0.0
        %3301 = vmatprep.subr.mxu0 0.0
        %3302 = vmatpush1.xpose.msra.mxu0 0.0
        %3303 = vmatprep.subr.mxu0 0.0
        %3304 = vmatpush1.xpose.msra.mxu0 0.0
        %3305 = vmatprep.subr.mxu0 0.0
        %3306 = vmatpush1.xpose.msra.mxu0 0.0
        %3307 = vmatprep.subr.mxu0 0.0
        %3308 = vmatpush1.xpose.msra.mxu0 0.0
        %3309 = vmatprep.subr.mxu0 0.0
        %3310 = vmatpush1.xpose.msra.mxu0 0.0
        %3311 = vmatprep.subr.mxu0 0.0
        %3312 = vmatpush1.xpose.msra.mxu0 0.0
        %3313 = vmatprep.subr.mxu0 0.0
        %3314 = vmatpush1.xpose.msra.mxu0 0.0
        %3315 = vmatprep.subr.mxu0 0.0
        %3316 = vmatpush1.xpose.msra.mxu0 0.0
        %3317 = vmatprep.subr.mxu0 0.0
        %3318 = vmatpush1.xpose.msra.mxu0 0.0
        %3319 = vmatprep.subr.mxu0 0.0
        %3320 = vmatpush1.xpose.msra.mxu0 0.0
        %3321 = vmatprep.subr.mxu0 0.0
        %3322 = vmatpush1.xpose.msra.mxu0 0.0
        %3323 = vmatprep.subr.mxu0 0.0
        %3324 = vmatpush1.xpose.msra.mxu0 0.0
        %3325 = vmatprep.subr.mxu0 0.0
        %3326 = vmatpush1.xpose.msra.mxu0 0.0
        %3327 = vmatprep.subr.mxu0 0.0
        %3328 = vmatpush1.xpose.msra.mxu0 0.0
        %3329 = vmatprep.subr.mxu0 0.0
        %3330 = vmatpush1.xpose.msra.mxu0 0.0
        %3331 = vmatprep.subr.mxu0 0.0
        %3332 = vmatpush1.xpose.msra.mxu0 0.0
        %3333 = vmatprep.subr.mxu0 0.0
        %3334 = vmatpush1.xpose.msra.mxu0 0.0
        %3335 = vmatprep.subr.mxu0 0.0
        %3336 = vmatpush1.xpose.msra.mxu0 0.0
        %3337 = vmatprep.subr.mxu0 0.0
        %3338 = vmatpush1.xpose.msra.mxu0 0.0
        %3339 = vmatprep.subr.mxu0 0.0
        %3340 = vmatpush1.xpose.msra.mxu0 0.0
        %3341 = vmatprep.subr.mxu0 0.0
        %3342 = vmatpush1.xpose.msra.mxu0 0.0
        %3343 = vmatprep.subr.mxu0 0.0
        %3344 = vmatpush1.xpose.msra.mxu0 0.0
        %3345 = vmatprep.subr.mxu0 0.0
        %3346 = vmatpush1.xpose.msra.mxu0 0.0
        %3347 = vmatprep.subr.mxu0 0.0
        %3348 = vmatpush1.xpose.msra.mxu0 0.0
        %3349 = vmatprep.subr.mxu0 0.0
        %3350 = vmatpush1.xpose.msra.mxu0 0.0
        %3351 = vmatprep.subr.mxu0 0.0
        %3352 = vmatpush1.xpose.msra.mxu0 0.0
        %3353 = vmatprep.subr.mxu0 0.0
        %3354 = vmatpush1.xpose.msra.mxu0 0.0
        %3355 = vmatprep.subr.mxu0 0.0
        %3356 = vmatpush1.xpose.msra.mxu0 0.0
        %3357 = vmatprep.subr.mxu0 0.0
        %3358 = vmatpush1.xpose.msra.mxu0 0.0
        %3359 = vmatprep.mubr.f32.mxu0 0.0
        %3360 = vmatmul.mubr.f32.gmra.mrb[0].mxu0 %v3291
        %v3361 = vpop.f32.mrb[0].mxu0
        %v3362 = vadd.f32 0.0, %v3361
        %v3363 = vpop.f32.mrb[0].mxu0
        %3364 = vdwg.mxu0
        %3365 = vrot.lane.b32.xlu0 %v548, 112
        %v3366 = vpop.permute.xlu0 %3365
        %3367 = vrot.lane.b32.xlu0 %v548, 80
        %v3368 = vpop.permute.xlu0 %3367
        %v3369 = vsel %vm579, %v3366, 0
        %v3371 = vsel %vm579, %v3368, 0
        %3373 = vmatprep.subr.mxu0 0.0
        %3374 = vmatpush1.xpose.msra.mxu0 %v3371
        %3375 = vmatprep.subr.mxu0 0.0
        %3376 = vmatpush1.xpose.msra.mxu0 0.0
        %3377 = vmatprep.subr.mxu0 0.0
        %3378 = vmatpush1.xpose.msra.mxu0 0.0
        %3379 = vmatprep.subr.mxu0 0.0
        %3380 = vmatpush1.xpose.msra.mxu0 0.0
        %3381 = vmatprep.subr.mxu0 0.0
        %3382 = vmatpush1.xpose.msra.mxu0 0.0
        %3383 = vmatprep.subr.mxu0 0.0
        %3384 = vmatpush1.xpose.msra.mxu0 0.0
        %3385 = vmatprep.subr.mxu0 0.0
        %3386 = vmatpush1.xpose.msra.mxu0 0.0
        %3387 = vmatprep.subr.mxu0 0.0
        %3388 = vmatpush1.xpose.msra.mxu0 0.0
        %3389 = vmatprep.subr.mxu0 0.0
        %3390 = vmatpush1.xpose.msra.mxu0 0.0
        %3391 = vmatprep.subr.mxu0 0.0
        %3392 = vmatpush1.xpose.msra.mxu0 0.0
        %3393 = vmatprep.subr.mxu0 0.0
        %3394 = vmatpush1.xpose.msra.mxu0 0.0
        %3395 = vmatprep.subr.mxu0 0.0
        %3396 = vmatpush1.xpose.msra.mxu0 0.0
        %3397 = vmatprep.subr.mxu0 0.0
        %3398 = vmatpush1.xpose.msra.mxu0 0.0
        %3399 = vmatprep.subr.mxu0 0.0
        %3400 = vmatpush1.xpose.msra.mxu0 0.0
        %3401 = vmatprep.subr.mxu0 0.0
        %3402 = vmatpush1.xpose.msra.mxu0 0.0
        %3403 = vmatprep.subr.mxu0 0.0
        %3404 = vmatpush1.xpose.msra.mxu0 0.0
        %3405 = vmatprep.subr.mxu0 0.0
        %3406 = vmatpush1.xpose.msra.mxu0 0.0
        %3407 = vmatprep.subr.mxu0 0.0
        %3408 = vmatpush1.xpose.msra.mxu0 0.0
        %3409 = vmatprep.subr.mxu0 0.0
        %3410 = vmatpush1.xpose.msra.mxu0 0.0
        %3411 = vmatprep.subr.mxu0 0.0
        %3412 = vmatpush1.xpose.msra.mxu0 0.0
        %3413 = vmatprep.subr.mxu0 0.0
        %3414 = vmatpush1.xpose.msra.mxu0 0.0
        %3415 = vmatprep.subr.mxu0 0.0
        %3416 = vmatpush1.xpose.msra.mxu0 0.0
        %3417 = vmatprep.subr.mxu0 0.0
        %3418 = vmatpush1.xpose.msra.mxu0 0.0
        %3419 = vmatprep.subr.mxu0 0.0
        %3420 = vmatpush1.xpose.msra.mxu0 0.0
        %3421 = vmatprep.subr.mxu0 0.0
        %3422 = vmatpush1.xpose.msra.mxu0 0.0
        %3423 = vmatprep.subr.mxu0 0.0
        %3424 = vmatpush1.xpose.msra.mxu0 0.0
        %3425 = vmatprep.subr.mxu0 0.0
        %3426 = vmatpush1.xpose.msra.mxu0 0.0
        %3427 = vmatprep.subr.mxu0 0.0
        %3428 = vmatpush1.xpose.msra.mxu0 0.0
        %3429 = vmatprep.subr.mxu0 0.0
        %3430 = vmatpush1.xpose.msra.mxu0 0.0
        %3431 = vmatprep.subr.mxu0 0.0
        %3432 = vmatpush1.xpose.msra.mxu0 0.0
        %3433 = vmatprep.subr.mxu0 0.0
        %3434 = vmatpush1.xpose.msra.mxu0 0.0
        %3435 = vmatprep.subr.mxu0 0.0
        %3436 = vmatpush1.xpose.msra.mxu0 0.0
        %3437 = vmatprep.mubr.f32.mxu0 0.0
        %3438 = vmatmul.mubr.f32.gmra.mrb[0].mxu0 %v3369
        %v3439 = vpop.f32.mrb[0].mxu0
        %v3440 = vadd.f32 0.0, %v3439
        %v3441 = vpop.f32.mrb[0].mxu0
        %3442 = vdwg.mxu0
        %3443 = vrot.lane.b32.xlu0 %v553, 112
        %v3444 = vpop.permute.xlu0 %3443
        %3445 = vrot.lane.b32.xlu0 %v553, 80
        %v3446 = vpop.permute.xlu0 %3445
        %v3447 = vsel %vm579, %v3444, 0
        %v3449 = vsel %vm579, %v3446, 0
        %3451 = vmatprep.subr.mxu0 0.0
        %3452 = vmatpush1.xpose.msra.mxu0 %v3449
        %3453 = vmatprep.subr.mxu0 0.0
        %3454 = vmatpush1.xpose.msra.mxu0 0.0
        %3455 = vmatprep.subr.mxu0 0.0
        %3456 = vmatpush1.xpose.msra.mxu0 0.0
        %3457 = vmatprep.subr.mxu0 0.0
        %3458 = vmatpush1.xpose.msra.mxu0 0.0
        %3459 = vmatprep.subr.mxu0 0.0
        %3460 = vmatpush1.xpose.msra.mxu0 0.0
        %3461 = vmatprep.subr.mxu0 0.0
        %3462 = vmatpush1.xpose.msra.mxu0 0.0
        %3463 = vmatprep.subr.mxu0 0.0
        %3464 = vmatpush1.xpose.msra.mxu0 0.0
        %3465 = vmatprep.subr.mxu0 0.0
        %3466 = vmatpush1.xpose.msra.mxu0 0.0
        %3467 = vmatprep.subr.mxu0 0.0
        %3468 = vmatpush1.xpose.msra.mxu0 0.0
        %3469 = vmatprep.subr.mxu0 0.0
        %3470 = vmatpush1.xpose.msra.mxu0 0.0
        %3471 = vmatprep.subr.mxu0 0.0
        %3472 = vmatpush1.xpose.msra.mxu0 0.0
        %3473 = vmatprep.subr.mxu0 0.0
        %3474 = vmatpush1.xpose.msra.mxu0 0.0
        %3475 = vmatprep.subr.mxu0 0.0
        %3476 = vmatpush1.xpose.msra.mxu0 0.0
        %3477 = vmatprep.subr.mxu0 0.0
        %3478 = vmatpush1.xpose.msra.mxu0 0.0
        %3479 = vmatprep.subr.mxu0 0.0
        %3480 = vmatpush1.xpose.msra.mxu0 0.0
        %3481 = vmatprep.subr.mxu0 0.0
        %3482 = vmatpush1.xpose.msra.mxu0 0.0
        %3483 = vmatprep.subr.mxu0 0.0
        %3484 = vmatpush1.xpose.msra.mxu0 0.0
        %3485 = vmatprep.subr.mxu0 0.0
        %3486 = vmatpush1.xpose.msra.mxu0 0.0
        %3487 = vmatprep.subr.mxu0 0.0
        %3488 = vmatpush1.xpose.msra.mxu0 0.0
        %3489 = vmatprep.subr.mxu0 0.0
        %3490 = vmatpush1.xpose.msra.mxu0 0.0
        %3491 = vmatprep.subr.mxu0 0.0
        %3492 = vmatpush1.xpose.msra.mxu0 0.0
        %3493 = vmatprep.subr.mxu0 0.0
        %3494 = vmatpush1.xpose.msra.mxu0 0.0
        %3495 = vmatprep.subr.mxu0 0.0
        %3496 = vmatpush1.xpose.msra.mxu0 0.0
        %3497 = vmatprep.subr.mxu0 0.0
        %3498 = vmatpush1.xpose.msra.mxu0 0.0
        %3499 = vmatprep.subr.mxu0 0.0
        %3500 = vmatpush1.xpose.msra.mxu0 0.0
        %3501 = vmatprep.subr.mxu0 0.0
        %3502 = vmatpush1.xpose.msra.mxu0 0.0
        %3503 = vmatprep.subr.mxu0 0.0
        %3504 = vmatpush1.xpose.msra.mxu0 0.0
        %3505 = vmatprep.subr.mxu0 0.0
        %3506 = vmatpush1.xpose.msra.mxu0 0.0
        %3507 = vmatprep.subr.mxu0 0.0
        %3508 = vmatpush1.xpose.msra.mxu0 0.0
        %3509 = vmatprep.subr.mxu0 0.0
        %3510 = vmatpush1.xpose.msra.mxu0 0.0
        %3511 = vmatprep.subr.mxu0 0.0
        %3512 = vmatpush1.xpose.msra.mxu0 0.0
        %3513 = vmatprep.subr.mxu0 0.0
        %3514 = vmatpush1.xpose.msra.mxu0 0.0
        %3515 = vmatprep.mubr.f32.mxu0 0.0
        %3516 = vmatmul.mubr.f32.gmra.mrb[0].mxu0 %v3447
        %v3517 = vpop.f32.mrb[0].mxu0
        %v3518 = vadd.f32 0.0, %v3517
        %v3519 = vpop.f32.mrb[0].mxu0
        %3520 = vdwg.mxu0
        %3521 = vrot.lane.b32.xlu0 %v558, 112
        %v3522 = vpop.permute.xlu0 %3521
        %3523 = vrot.lane.b32.xlu0 %v558, 80
        %v3524 = vpop.permute.xlu0 %3523
        %v3525 = vsel %vm579, %v3522, 0
        %v3527 = vsel %vm579, %v3524, 0
        %3529 = vmatprep.subr.mxu0 0.0
        %3530 = vmatpush1.xpose.msra.mxu0 %v3527
        %3531 = vmatprep.subr.mxu0 0.0
        %3532 = vmatpush1.xpose.msra.mxu0 0.0
        %3533 = vmatprep.subr.mxu0 0.0
        %3534 = vmatpush1.xpose.msra.mxu0 0.0
        %3535 = vmatprep.subr.mxu0 0.0
        %3536 = vmatpush1.xpose.msra.mxu0 0.0
        %3537 = vmatprep.subr.mxu0 0.0
        %3538 = vmatpush1.xpose.msra.mxu0 0.0
        %3539 = vmatprep.subr.mxu0 0.0
        %3540 = vmatpush1.xpose.msra.mxu0 0.0
        %3541 = vmatprep.subr.mxu0 0.0
        %3542 = vmatpush1.xpose.msra.mxu0 0.0
        %3543 = vmatprep.subr.mxu0 0.0
        %3544 = vmatpush1.xpose.msra.mxu0 0.0
        %3545 = vmatprep.subr.mxu0 0.0
        %3546 = vmatpush1.xpose.msra.mxu0 0.0
        %3547 = vmatprep.subr.mxu0 0.0
        %3548 = vmatpush1.xpose.msra.mxu0 0.0
        %3549 = vmatprep.subr.mxu0 0.0
        %3550 = vmatpush1.xpose.msra.mxu0 0.0
        %3551 = vmatprep.subr.mxu0 0.0
        %3552 = vmatpush1.xpose.msra.mxu0 0.0
        %3553 = vmatprep.subr.mxu0 0.0
        %3554 = vmatpush1.xpose.msra.mxu0 0.0
        %3555 = vmatprep.subr.mxu0 0.0
        %3556 = vmatpush1.xpose.msra.mxu0 0.0
        %3557 = vmatprep.subr.mxu0 0.0
        %3558 = vmatpush1.xpose.msra.mxu0 0.0
        %3559 = vmatprep.subr.mxu0 0.0
        %3560 = vmatpush1.xpose.msra.mxu0 0.0
        %3561 = vmatprep.subr.mxu0 0.0
        %3562 = vmatpush1.xpose.msra.mxu0 0.0
        %3563 = vmatprep.subr.mxu0 0.0
        %3564 = vmatpush1.xpose.msra.mxu0 0.0
        %3565 = vmatprep.subr.mxu0 0.0
        %3566 = vmatpush1.xpose.msra.mxu0 0.0
        %3567 = vmatprep.subr.mxu0 0.0
        %3568 = vmatpush1.xpose.msra.mxu0 0.0
        %3569 = vmatprep.subr.mxu0 0.0
        %3570 = vmatpush1.xpose.msra.mxu0 0.0
        %3571 = vmatprep.subr.mxu0 0.0
        %3572 = vmatpush1.xpose.msra.mxu0 0.0
        %3573 = vmatprep.subr.mxu0 0.0
        %3574 = vmatpush1.xpose.msra.mxu0 0.0
        %3575 = vmatprep.subr.mxu0 0.0
        %3576 = vmatpush1.xpose.msra.mxu0 0.0
        %3577 = vmatprep.subr.mxu0 0.0
        %3578 = vmatpush1.xpose.msra.mxu0 0.0
        %3579 = vmatprep.subr.mxu0 0.0
        %3580 = vmatpush1.xpose.msra.mxu0 0.0
        %3581 = vmatprep.subr.mxu0 0.0
        %3582 = vmatpush1.xpose.msra.mxu0 0.0
        %3583 = vmatprep.subr.mxu0 0.0
        %3584 = vmatpush1.xpose.msra.mxu0 0.0
        %3585 = vmatprep.subr.mxu0 0.0
        %3586 = vmatpush1.xpose.msra.mxu0 0.0
        %3587 = vmatprep.subr.mxu0 0.0
        %3588 = vmatpush1.xpose.msra.mxu0 0.0
        %3589 = vmatprep.subr.mxu0 0.0
        %3590 = vmatpush1.xpose.msra.mxu0 0.0
        %3591 = vmatprep.subr.mxu0 0.0
        %3592 = vmatpush1.xpose.msra.mxu0 0.0
        %3593 = vmatprep.mubr.f32.mxu0 0.0
        %3594 = vmatmul.mubr.f32.gmra.mrb[0].mxu0 %v3525
        %v3595 = vpop.f32.mrb[0].mxu0
        %v3596 = vadd.f32 0.0, %v3595
        %v3597 = vpop.f32.mrb[0].mxu0
        %3598 = vdwg.mxu0
        %3599 = vrot.lane.b32.xlu0 %v563, 112
        %v3600 = vpop.permute.xlu0 %3599
        %3601 = vrot.lane.b32.xlu0 %v563, 80
        %v3602 = vpop.permute.xlu0 %3601
        %v3603 = vsel %vm579, %v3600, 0
        %v3605 = vsel %vm579, %v3602, 0
        %3607 = vmatprep.subr.mxu0 0.0
        %3608 = vmatpush1.xpose.msra.mxu0 %v3605
        %3609 = vmatprep.subr.mxu0 0.0
        %3610 = vmatpush1.xpose.msra.mxu0 0.0
        %3611 = vmatprep.subr.mxu0 0.0
        %3612 = vmatpush1.xpose.msra.mxu0 0.0
        %3613 = vmatprep.subr.mxu0 0.0
        %3614 = vmatpush1.xpose.msra.mxu0 0.0
        %3615 = vmatprep.subr.mxu0 0.0
        %3616 = vmatpush1.xpose.msra.mxu0 0.0
        %3617 = vmatprep.subr.mxu0 0.0
        %3618 = vmatpush1.xpose.msra.mxu0 0.0
        %3619 = vmatprep.subr.mxu0 0.0
        %3620 = vmatpush1.xpose.msra.mxu0 0.0
        %3621 = vmatprep.subr.mxu0 0.0
        %3622 = vmatpush1.xpose.msra.mxu0 0.0
        %3623 = vmatprep.subr.mxu0 0.0
        %3624 = vmatpush1.xpose.msra.mxu0 0.0
        %3625 = vmatprep.subr.mxu0 0.0
        %3626 = vmatpush1.xpose.msra.mxu0 0.0
        %3627 = vmatprep.subr.mxu0 0.0
        %3628 = vmatpush1.xpose.msra.mxu0 0.0
        %3629 = vmatprep.subr.mxu0 0.0
        %3630 = vmatpush1.xpose.msra.mxu0 0.0
        %3631 = vmatprep.subr.mxu0 0.0
        %3632 = vmatpush1.xpose.msra.mxu0 0.0
        %3633 = vmatprep.subr.mxu0 0.0
        %3634 = vmatpush1.xpose.msra.mxu0 0.0
        %3635 = vmatprep.subr.mxu0 0.0
        %3636 = vmatpush1.xpose.msra.mxu0 0.0
        %3637 = vmatprep.subr.mxu0 0.0
        %3638 = vmatpush1.xpose.msra.mxu0 0.0
        %3639 = vmatprep.subr.mxu0 0.0
        %3640 = vmatpush1.xpose.msra.mxu0 0.0
        %3641 = vmatprep.subr.mxu0 0.0
        %3642 = vmatpush1.xpose.msra.mxu0 0.0
        %3643 = vmatprep.subr.mxu0 0.0
        %3644 = vmatpush1.xpose.msra.mxu0 0.0
        %3645 = vmatprep.subr.mxu0 0.0
        %3646 = vmatpush1.xpose.msra.mxu0 0.0
        %3647 = vmatprep.subr.mxu0 0.0
        %3648 = vmatpush1.xpose.msra.mxu0 0.0
        %3649 = vmatprep.subr.mxu0 0.0
        %3650 = vmatpush1.xpose.msra.mxu0 0.0
        %3651 = vmatprep.subr.mxu0 0.0
        %3652 = vmatpush1.xpose.msra.mxu0 0.0
        %3653 = vmatprep.subr.mxu0 0.0
        %3654 = vmatpush1.xpose.msra.mxu0 0.0
        %3655 = vmatprep.subr.mxu0 0.0
        %3656 = vmatpush1.xpose.msra.mxu0 0.0
        %3657 = vmatprep.subr.mxu0 0.0
        %3658 = vmatpush1.xpose.msra.mxu0 0.0
        %3659 = vmatprep.subr.mxu0 0.0
        %3660 = vmatpush1.xpose.msra.mxu0 0.0
        %3661 = vmatprep.subr.mxu0 0.0
        %3662 = vmatpush1.xpose.msra.mxu0 0.0
        %3663 = vmatprep.subr.mxu0 0.0
        %3664 = vmatpush1.xpose.msra.mxu0 0.0
        %3665 = vmatprep.subr.mxu0 0.0
        %3666 = vmatpush1.xpose.msra.mxu0 0.0
        %3667 = vmatprep.subr.mxu0 0.0
        %3668 = vmatpush1.xpose.msra.mxu0 0.0
        %3669 = vmatprep.subr.mxu0 0.0
        %3670 = vmatpush1.xpose.msra.mxu0 0.0
        %3671 = vmatprep.mubr.f32.mxu0 0.0
        %3672 = vmatmul.mubr.f32.gmra.mrb[0].mxu0 %v3603
        %v3673 = vpop.f32.mrb[0].mxu0
        %v3674 = vadd.f32 0.0, %v3673
        %v3675 = vpop.f32.mrb[0].mxu0
        %3676 = vdwg.mxu0
        %3677 = vrot.lane.b32.xlu0 %v568, 112
        %v3678 = vpop.permute.xlu0 %3677
        %3679 = vrot.lane.b32.xlu0 %v568, 80
        %v3680 = vpop.permute.xlu0 %3679
        %v3681 = vsel %vm579, %v3678, 0
        %v3683 = vsel %vm579, %v3680, 0
        %3685 = vmatprep.subr.mxu0 0.0
        %3686 = vmatpush1.xpose.msra.mxu0 %v3683
        %3687 = vmatprep.subr.mxu0 0.0
        %3688 = vmatpush1.xpose.msra.mxu0 0.0
        %3689 = vmatprep.subr.mxu0 0.0
        %3690 = vmatpush1.xpose.msra.mxu0 0.0
        %3691 = vmatprep.subr.mxu0 0.0
        %3692 = vmatpush1.xpose.msra.mxu0 0.0
        %3693 = vmatprep.subr.mxu0 0.0
        %3694 = vmatpush1.xpose.msra.mxu0 0.0
        %3695 = vmatprep.subr.mxu0 0.0
        %3696 = vmatpush1.xpose.msra.mxu0 0.0
        %3697 = vmatprep.subr.mxu0 0.0
        %3698 = vmatpush1.xpose.msra.mxu0 0.0
        %3699 = vmatprep.subr.mxu0 0.0
        %3700 = vmatpush1.xpose.msra.mxu0 0.0
        %3701 = vmatprep.subr.mxu0 0.0
        %3702 = vmatpush1.xpose.msra.mxu0 0.0
        %3703 = vmatprep.subr.mxu0 0.0
        %3704 = vmatpush1.xpose.msra.mxu0 0.0
        %3705 = vmatprep.subr.mxu0 0.0
        %3706 = vmatpush1.xpose.msra.mxu0 0.0
        %3707 = vmatprep.subr.mxu0 0.0
        %3708 = vmatpush1.xpose.msra.mxu0 0.0
        %3709 = vmatprep.subr.mxu0 0.0
        %3710 = vmatpush1.xpose.msra.mxu0 0.0
        %3711 = vmatprep.subr.mxu0 0.0
        %3712 = vmatpush1.xpose.msra.mxu0 0.0
        %3713 = vmatprep.subr.mxu0 0.0
        %3714 = vmatpush1.xpose.msra.mxu0 0.0
        %3715 = vmatprep.subr.mxu0 0.0
        %3716 = vmatpush1.xpose.msra.mxu0 0.0
        %3717 = vmatprep.subr.mxu0 0.0
        %3718 = vmatpush1.xpose.msra.mxu0 0.0
        %3719 = vmatprep.subr.mxu0 0.0
        %3720 = vmatpush1.xpose.msra.mxu0 0.0
        %3721 = vmatprep.subr.mxu0 0.0
        %3722 = vmatpush1.xpose.msra.mxu0 0.0
        %3723 = vmatprep.subr.mxu0 0.0
        %3724 = vmatpush1.xpose.msra.mxu0 0.0
        %3725 = vmatprep.subr.mxu0 0.0
        %3726 = vmatpush1.xpose.msra.mxu0 0.0
        %3727 = vmatprep.subr.mxu0 0.0
        %3728 = vmatpush1.xpose.msra.mxu0 0.0
        %3729 = vmatprep.subr.mxu0 0.0
        %3730 = vmatpush1.xpose.msra.mxu0 0.0
        %3731 = vmatprep.subr.mxu0 0.0
        %3732 = vmatpush1.xpose.msra.mxu0 0.0
        %3733 = vmatprep.subr.mxu0 0.0
        %3734 = vmatpush1.xpose.msra.mxu0 0.0
        %3735 = vmatprep.subr.mxu0 0.0
        %3736 = vmatpush1.xpose.msra.mxu0 0.0
        %3737 = vmatprep.subr.mxu0 0.0
        %3738 = vmatpush1.xpose.msra.mxu0 0.0
        %3739 = vmatprep.subr.mxu0 0.0
        %3740 = vmatpush1.xpose.msra.mxu0 0.0
        %3741 = vmatprep.subr.mxu0 0.0
        %3742 = vmatpush1.xpose.msra.mxu0 0.0
        %3743 = vmatprep.subr.mxu0 0.0
        %3744 = vmatpush1.xpose.msra.mxu0 0.0
        %3745 = vmatprep.subr.mxu0 0.0
        %3746 = vmatpush1.xpose.msra.mxu0 0.0
        %3747 = vmatprep.subr.mxu0 0.0
        %3748 = vmatpush1.xpose.msra.mxu0 0.0
        %3749 = vmatprep.mubr.f32.mxu0 0.0
        %3750 = vmatmul.mubr.f32.gmra.mrb[0].mxu0 %v3681
        %v3751 = vpop.f32.mrb[0].mxu0
        %v3752 = vadd.f32 0.0, %v3751
        %v3753 = vpop.f32.mrb[0].mxu0
        %3754 = vdwg.mxu0
        %3755 = vrot.lane.b32.xlu0 %v573, 112
        %v3756 = vpop.permute.xlu0 %3755
        %3757 = vrot.lane.b32.xlu0 %v573, 80
        %v3758 = vpop.permute.xlu0 %3757
        %v3759 = vsel %vm579, %v3756, 0
        %v3761 = vsel %vm579, %v3758, 0
        %3763 = vmatprep.subr.mxu0 0.0
        %3764 = vmatpush1.xpose.msra.mxu0 %v3761
        %3765 = vmatprep.subr.mxu0 0.0
        %3766 = vmatpush1.xpose.msra.mxu0 0.0
        %3767 = vmatprep.subr.mxu0 0.0
        %3768 = vmatpush1.xpose.msra.mxu0 0.0
        %3769 = vmatprep.subr.mxu0 0.0
        %3770 = vmatpush1.xpose.msra.mxu0 0.0
        %3771 = vmatprep.subr.mxu0 0.0
        %3772 = vmatpush1.xpose.msra.mxu0 0.0
        %3773 = vmatprep.subr.mxu0 0.0
        %3774 = vmatpush1.xpose.msra.mxu0 0.0
        %3775 = vmatprep.subr.mxu0 0.0
        %3776 = vmatpush1.xpose.msra.mxu0 0.0
        %3777 = vmatprep.subr.mxu0 0.0
        %3778 = vmatpush1.xpose.msra.mxu0 0.0
        %3779 = vmatprep.subr.mxu0 0.0
        %3780 = vmatpush1.xpose.msra.mxu0 0.0
        %3781 = vmatprep.subr.mxu0 0.0
        %3782 = vmatpush1.xpose.msra.mxu0 0.0
        %3783 = vmatprep.subr.mxu0 0.0
        %3784 = vmatpush1.xpose.msra.mxu0 0.0
        %3785 = vmatprep.subr.mxu0 0.0
        %3786 = vmatpush1.xpose.msra.mxu0 0.0
        %3787 = vmatprep.subr.mxu0 0.0
        %3788 = vmatpush1.xpose.msra.mxu0 0.0
        %3789 = vmatprep.subr.mxu0 0.0
        %3790 = vmatpush1.xpose.msra.mxu0 0.0
        %3791 = vmatprep.subr.mxu0 0.0
        %3792 = vmatpush1.xpose.msra.mxu0 0.0
        %3793 = vmatprep.subr.mxu0 0.0
        %3794 = vmatpush1.xpose.msra.mxu0 0.0
        %3795 = vmatprep.subr.mxu0 0.0
        %3796 = vmatpush1.xpose.msra.mxu0 0.0
        %3797 = vmatprep.subr.mxu0 0.0
        %3798 = vmatpush1.xpose.msra.mxu0 0.0
        %3799 = vmatprep.subr.mxu0 0.0
        %3800 = vmatpush1.xpose.msra.mxu0 0.0
        %3801 = vmatprep.subr.mxu0 0.0
        %3802 = vmatpush1.xpose.msra.mxu0 0.0
        %3803 = vmatprep.subr.mxu0 0.0
        %3804 = vmatpush1.xpose.msra.mxu0 0.0
        %3805 = vmatprep.subr.mxu0 0.0
        %3806 = vmatpush1.xpose.msra.mxu0 0.0
        %3807 = vmatprep.subr.mxu0 0.0
        %3808 = vmatpush1.xpose.msra.mxu0 0.0
        %3809 = vmatprep.subr.mxu0 0.0
        %3810 = vmatpush1.xpose.msra.mxu0 0.0
        %3811 = vmatprep.subr.mxu0 0.0
        %3812 = vmatpush1.xpose.msra.mxu0 0.0
        %3813 = vmatprep.subr.mxu0 0.0
        %3814 = vmatpush1.xpose.msra.mxu0 0.0
        %3815 = vmatprep.subr.mxu0 0.0
        %3816 = vmatpush1.xpose.msra.mxu0 0.0
        %3817 = vmatprep.subr.mxu0 0.0
        %3818 = vmatpush1.xpose.msra.mxu0 0.0
        %3819 = vmatprep.subr.mxu0 0.0
        %3820 = vmatpush1.xpose.msra.mxu0 0.0
        %3821 = vmatprep.subr.mxu0 0.0
        %3822 = vmatpush1.xpose.msra.mxu0 0.0
        %3823 = vmatprep.subr.mxu0 0.0
        %3824 = vmatpush1.xpose.msra.mxu0 0.0
        %3825 = vmatprep.subr.mxu0 0.0
        %3826 = vmatpush1.xpose.msra.mxu0 0.0
        %3827 = vmatprep.mubr.f32.mxu0 0.0
        %3828 = vmatmul.mubr.f32.gmra.mrb[0].mxu0 %v3759
        %v3829 = vpop.f32.mrb[0].mxu0
        %v3830 = vadd.f32 0.0, %v3829
        %v3831 = vpop.f32.mrb[0].mxu0
        %3832 = vdwg.mxu0
        %v3833 = vsel %vm579, %v3284, -inf
        %3834 = vmax.xlane.f32.xlu0 %v3833
        %v3835 = vpop.xlane.xlu0 %3834
        %v3836 = vsel %vm579, %v3362, -inf
        %3837 = vmax.xlane.f32.xlu0 %v3836
        %v3838 = vpop.xlane.xlu0 %3837
        %v3839 = vsel %vm579, %v3440, -inf
        %3840 = vmax.xlane.f32.xlu0 %v3839
        %v3841 = vpop.xlane.xlu0 %3840
        %v3842 = vsel %vm579, %v3518, -inf
        %3843 = vmax.xlane.f32.xlu0 %v3842
        %v3844 = vpop.xlane.xlu0 %3843
        %v3845 = vsel %vm579, %v3596, -inf
        %3846 = vmax.xlane.f32.xlu0 %v3845
        %v3847 = vpop.xlane.xlu0 %3846
        %v3848 = vsel %vm579, %v3674, -inf
        %3849 = vmax.xlane.f32.xlu0 %v3848
        %v3850 = vpop.xlane.xlu0 %3849
        %v3851 = vsel %vm579, %v3752, -inf
        %3852 = vmax.xlane.f32.xlu0 %v3851
        %v3853 = vpop.xlane.xlu0 %3852
        %v3854 = vsel %vm579, %v3830, -inf
        %3855 = vmax.xlane.f32.xlu0 %v3854
        %v3856 = vpop.xlane.xlu0 %3855
        %v3857 = vsub.f32 %v3284, %v3835
        %v3858 = vsub.f32 %v3362, %v3838
        %v3859 = vsub.f32 %v3440, %v3841
        %v3860 = vsub.f32 %v3518, %v3844
        %v3861 = vsub.f32 %v3596, %v3847
        %v3862 = vsub.f32 %v3674, %v3850
        %v3863 = vsub.f32 %v3752, %v3853
        %v3864 = vsub.f32 %v3830, %v3856
        %v3865 = vmul.f32 %v3857, 1.442695
        %v3866 = vpow.pop %v3865
        %v3867 = vmul.f32 %v3858, 1.442695
        %v3868 = vpow.pop %v3867
        %v3869 = vmul.f32 %v3859, 1.442695
        %v3870 = vpow.pop %v3869
        %v3871 = vmul.f32 %v3860, 1.442695
        %v3872 = vpow.pop %v3871
        %v3873 = vmul.f32 %v3861, 1.442695
        %v3874 = vpow.pop %v3873
        %v3875 = vmul.f32 %v3862, 1.442695
        %v3876 = vpow.pop %v3875
        %v3877 = vmul.f32 %v3863, 1.442695
        %v3878 = vpow.pop %v3877
        %v3879 = vmul.f32 %v3864, 1.442695
        %v3880 = vpow.pop %v3879
        %v3881 = vsel %vm579, %v3866, 0.0
        %3882 = vadd.xlane.f32.xlu0 %v3881
        %v3883 = vpop.xlane.xlu0 %3882
        %v3884 = vsel %vm579, %v3868, 0.0
        %3885 = vadd.xlane.f32.xlu0 %v3884
        %v3886 = vpop.xlane.xlu0 %3885
        %v3887 = vsel %vm579, %v3870, 0.0
        %3888 = vadd.xlane.f32.xlu0 %v3887
        %v3889 = vpop.xlane.xlu0 %3888
        %v3890 = vsel %vm579, %v3872, 0.0
        %3891 = vadd.xlane.f32.xlu0 %v3890
        %v3892 = vpop.xlane.xlu0 %3891
        %v3893 = vsel %vm579, %v3874, 0.0
        %3894 = vadd.xlane.f32.xlu0 %v3893
        %v3895 = vpop.xlane.xlu0 %3894
        %v3896 = vsel %vm579, %v3876, 0.0
        %3897 = vadd.xlane.f32.xlu0 %v3896
        %v3898 = vpop.xlane.xlu0 %3897
        %v3899 = vsel %vm579, %v3878, 0.0
        %3900 = vadd.xlane.f32.xlu0 %v3899
        %v3901 = vpop.xlane.xlu0 %3900
        %v3902 = vsel %vm579, %v3880, 0.0
        %3903 = vadd.xlane.f32.xlu0 %v3902
        %v3904 = vpop.xlane.xlu0 %3903
        %v3905 = vrcp.pop %v3883
        %v3906 = vrcp.pop %v3886
        %v3907 = vrcp.pop %v3889
        %v3908 = vrcp.pop %v3892
        %v3909 = vrcp.pop %v3895
        %v3910 = vrcp.pop %v3898
        %v3911 = vrcp.pop %v3901
        %v3912 = vrcp.pop %v3904
        %v3913 = vmul.f32 %v3866, %v3905
        %v3914 = vmul.f32 %v3868, %v3906
        %v3915 = vmul.f32 %v3870, %v3907
        %v3916 = vmul.f32 %v3872, %v3908
        %v3917 = vmul.f32 %v3874, %v3909
        %v3918 = vmul.f32 %v3876, %v3910
        %v3919 = vmul.f32 %v3878, %v3911
        %v3920 = vmul.f32 %v3880, %v3912
        %3921 = vrot.lane.b32.xlu0 %v538, 48
        %v3922 = vpop.permute.xlu0 %3921
        %v3925 = vsel %vm579, %v3913, 0
        %3927 = vmatprep.subr.mxu0 0.0
        %3928 = vmatpush1.msra.mxu0 %v3922
        %3929 = vmatprep.subr.mxu0 0.0
        %3930 = vmatpush1.msra.mxu0 0.0
        %3931 = vmatprep.subr.mxu0 0.0
        %3932 = vmatpush1.msra.mxu0 0.0
        %3933 = vmatprep.subr.mxu0 0.0
        %3934 = vmatpush1.msra.mxu0 0.0
        %3935 = vmatprep.subr.mxu0 0.0
        %3936 = vmatpush1.msra.mxu0 0.0
        %3937 = vmatprep.subr.mxu0 0.0
        %3938 = vmatpush1.msra.mxu0 0.0
        %3939 = vmatprep.subr.mxu0 0.0
        %3940 = vmatpush1.msra.mxu0 0.0
        %3941 = vmatprep.subr.mxu0 0.0
        %3942 = vmatpush1.msra.mxu0 0.0
        %3943 = vmatprep.subr.mxu0 0.0
        %3944 = vmatpush1.msra.mxu0 0.0
        %3945 = vmatprep.subr.mxu0 0.0
        %3946 = vmatpush1.msra.mxu0 0.0
        %3947 = vmatprep.subr.mxu0 0.0
        %3948 = vmatpush1.msra.mxu0 0.0
        %3949 = vmatprep.subr.mxu0 0.0
        %3950 = vmatpush1.msra.mxu0 0.0
        %3951 = vmatprep.subr.mxu0 0.0
        %3952 = vmatpush1.msra.mxu0 0.0
        %3953 = vmatprep.subr.mxu0 0.0
        %3954 = vmatpush1.msra.mxu0 0.0
        %3955 = vmatprep.subr.mxu0 0.0
        %3956 = vmatpush1.msra.mxu0 0.0
        %3957 = vmatprep.subr.mxu0 0.0
        %3958 = vmatpush1.msra.mxu0 0.0
        %3959 = vmatprep.subr.mxu0 0.0
        %3960 = vmatpush1.msra.mxu0 0.0
        %3961 = vmatprep.subr.mxu0 0.0
        %3962 = vmatpush1.msra.mxu0 0.0
        %3963 = vmatprep.subr.mxu0 0.0
        %3964 = vmatpush1.msra.mxu0 0.0
        %3965 = vmatprep.subr.mxu0 0.0
        %3966 = vmatpush1.msra.mxu0 0.0
        %3967 = vmatprep.subr.mxu0 0.0
        %3968 = vmatpush1.msra.mxu0 0.0
        %3969 = vmatprep.subr.mxu0 0.0
        %3970 = vmatpush1.msra.mxu0 0.0
        %3971 = vmatprep.subr.mxu0 0.0
        %3972 = vmatpush1.msra.mxu0 0.0
        %3973 = vmatprep.subr.mxu0 0.0
        %3974 = vmatpush1.msra.mxu0 0.0
        %3975 = vmatprep.subr.mxu0 0.0
        %3976 = vmatpush1.msra.mxu0 0.0
        %3977 = vmatprep.subr.mxu0 0.0
        %3978 = vmatpush1.msra.mxu0 0.0
        %3979 = vmatprep.subr.mxu0 0.0
        %3980 = vmatpush1.msra.mxu0 0.0
        %3981 = vmatprep.subr.mxu0 0.0
        %3982 = vmatpush1.msra.mxu0 0.0
        %3983 = vmatprep.subr.mxu0 0.0
        %3984 = vmatpush1.msra.mxu0 0.0
        %3985 = vmatprep.subr.mxu0 0.0
        %3986 = vmatpush1.msra.mxu0 0.0
        %3987 = vmatprep.subr.mxu0 0.0
        %3988 = vmatpush1.msra.mxu0 0.0
        %3989 = vmatprep.subr.mxu0 0.0
        %3990 = vmatpush1.msra.mxu0 0.0
        %3991 = vmatprep.mubr.f32.mxu0 0.0
        %3992 = vmatmul.mubr.f32.gmra.mrb[0].mxu0 %v3925
        %v3993 = vpop.f32.mrb[0].mxu0
        %v3994 = vadd.f32 0.0, %v3993
        %v3995 = vpop.f32.mrb[0].mxu0
        %3996 = vdwg.mxu0
        %3997 = vrot.lane.b32.xlu0 %v543, 48
        %v3998 = vpop.permute.xlu0 %3997
        %v4001 = vsel %vm579, %v3914, 0
        %4003 = vmatprep.subr.mxu0 0.0
        %4004 = vmatpush1.msra.mxu0 %v3998
        %4005 = vmatprep.subr.mxu0 0.0
        %4006 = vmatpush1.msra.mxu0 0.0
        %4007 = vmatprep.subr.mxu0 0.0
        %4008 = vmatpush1.msra.mxu0 0.0
        %4009 = vmatprep.subr.mxu0 0.0
        %4010 = vmatpush1.msra.mxu0 0.0
        %4011 = vmatprep.subr.mxu0 0.0
        %4012 = vmatpush1.msra.mxu0 0.0
        %4013 = vmatprep.subr.mxu0 0.0
        %4014 = vmatpush1.msra.mxu0 0.0
        %4015 = vmatprep.subr.mxu0 0.0
        %4016 = vmatpush1.msra.mxu0 0.0
        %4017 = vmatprep.subr.mxu0 0.0
        %4018 = vmatpush1.msra.mxu0 0.0
        %4019 = vmatprep.subr.mxu0 0.0
        %4020 = vmatpush1.msra.mxu0 0.0
        %4021 = vmatprep.subr.mxu0 0.0
        %4022 = vmatpush1.msra.mxu0 0.0
        %4023 = vmatprep.subr.mxu0 0.0
        %4024 = vmatpush1.msra.mxu0 0.0
        %4025 = vmatprep.subr.mxu0 0.0
        %4026 = vmatpush1.msra.mxu0 0.0
        %4027 = vmatprep.subr.mxu0 0.0
        %4028 = vmatpush1.msra.mxu0 0.0
        %4029 = vmatprep.subr.mxu0 0.0
        %4030 = vmatpush1.msra.mxu0 0.0
        %4031 = vmatprep.subr.mxu0 0.0
        %4032 = vmatpush1.msra.mxu0 0.0
        %4033 = vmatprep.subr.mxu0 0.0
        %4034 = vmatpush1.msra.mxu0 0.0
        %4035 = vmatprep.subr.mxu0 0.0
        %4036 = vmatpush1.msra.mxu0 0.0
        %4037 = vmatprep.subr.mxu0 0.0
        %4038 = vmatpush1.msra.mxu0 0.0
        %4039 = vmatprep.subr.mxu0 0.0
        %4040 = vmatpush1.msra.mxu0 0.0
        %4041 = vmatprep.subr.mxu0 0.0
        %4042 = vmatpush1.msra.mxu0 0.0
        %4043 = vmatprep.subr.mxu0 0.0
        %4044 = vmatpush1.msra.mxu0 0.0
        %4045 = vmatprep.subr.mxu0 0.0
        %4046 = vmatpush1.msra.mxu0 0.0
        %4047 = vmatprep.subr.mxu0 0.0
        %4048 = vmatpush1.msra.mxu0 0.0
        %4049 = vmatprep.subr.mxu0 0.0
        %4050 = vmatpush1.msra.mxu0 0.0
        %4051 = vmatprep.subr.mxu0 0.0
        %4052 = vmatpush1.msra.mxu0 0.0
        %4053 = vmatprep.subr.mxu0 0.0
        %4054 = vmatpush1.msra.mxu0 0.0
        %4055 = vmatprep.subr.mxu0 0.0
        %4056 = vmatpush1.msra.mxu0 0.0
        %4057 = vmatprep.subr.mxu0 0.0
        %4058 = vmatpush1.msra.mxu0 0.0
        %4059 = vmatprep.subr.mxu0 0.0
        %4060 = vmatpush1.msra.mxu0 0.0
        %4061 = vmatprep.subr.mxu0 0.0
        %4062 = vmatpush1.msra.mxu0 0.0
        %4063 = vmatprep.subr.mxu0 0.0
        %4064 = vmatpush1.msra.mxu0 0.0
        %4065 = vmatprep.subr.mxu0 0.0
        %4066 = vmatpush1.msra.mxu0 0.0
        %4067 = vmatprep.mubr.f32.mxu0 0.0
        %4068 = vmatmul.mubr.f32.gmra.mrb[0].mxu0 %v4001
        %v4069 = vpop.f32.mrb[0].mxu0
        %v4070 = vadd.f32 0.0, %v4069
        %v4071 = vpop.f32.mrb[0].mxu0
        %4072 = vdwg.mxu0
        %4073 = vrot.lane.b32.xlu0 %v548, 48
        %v4074 = vpop.permute.xlu0 %4073
        %v4077 = vsel %vm579, %v3915, 0
        %4079 = vmatprep.subr.mxu0 0.0
        %4080 = vmatpush1.msra.mxu0 %v4074
        %4081 = vmatprep.subr.mxu0 0.0
        %4082 = vmatpush1.msra.mxu0 0.0
        %4083 = vmatprep.subr.mxu0 0.0
        %4084 = vmatpush1.msra.mxu0 0.0
        %4085 = vmatprep.subr.mxu0 0.0
        %4086 = vmatpush1.msra.mxu0 0.0
        %4087 = vmatprep.subr.mxu0 0.0
        %4088 = vmatpush1.msra.mxu0 0.0
        %4089 = vmatprep.subr.mxu0 0.0
        %4090 = vmatpush1.msra.mxu0 0.0
        %4091 = vmatprep.subr.mxu0 0.0
        %4092 = vmatpush1.msra.mxu0 0.0
        %4093 = vmatprep.subr.mxu0 0.0
        %4094 = vmatpush1.msra.mxu0 0.0
        %4095 = vmatprep.subr.mxu0 0.0
        %4096 = vmatpush1.msra.mxu0 0.0
        %4097 = vmatprep.subr.mxu0 0.0
        %4098 = vmatpush1.msra.mxu0 0.0
        %4099 = vmatprep.subr.mxu0 0.0
        %4100 = vmatpush1.msra.mxu0 0.0
        %4101 = vmatprep.subr.mxu0 0.0
        %4102 = vmatpush1.msra.mxu0 0.0
        %4103 = vmatprep.subr.mxu0 0.0
        %4104 = vmatpush1.msra.mxu0 0.0
        %4105 = vmatprep.subr.mxu0 0.0
        %4106 = vmatpush1.msra.mxu0 0.0
        %4107 = vmatprep.subr.mxu0 0.0
        %4108 = vmatpush1.msra.mxu0 0.0
        %4109 = vmatprep.subr.mxu0 0.0
        %4110 = vmatpush1.msra.mxu0 0.0
        %4111 = vmatprep.subr.mxu0 0.0
        %4112 = vmatpush1.msra.mxu0 0.0
        %4113 = vmatprep.subr.mxu0 0.0
        %4114 = vmatpush1.msra.mxu0 0.0
        %4115 = vmatprep.subr.mxu0 0.0
        %4116 = vmatpush1.msra.mxu0 0.0
        %4117 = vmatprep.subr.mxu0 0.0
        %4118 = vmatpush1.msra.mxu0 0.0
        %4119 = vmatprep.subr.mxu0 0.0
        %4120 = vmatpush1.msra.mxu0 0.0
        %4121 = vmatprep.subr.mxu0 0.0
        %4122 = vmatpush1.msra.mxu0 0.0
        %4123 = vmatprep.subr.mxu0 0.0
        %4124 = vmatpush1.msra.mxu0 0.0
        %4125 = vmatprep.subr.mxu0 0.0
        %4126 = vmatpush1.msra.mxu0 0.0
        %4127 = vmatprep.subr.mxu0 0.0
        %4128 = vmatpush1.msra.mxu0 0.0
        %4129 = vmatprep.subr.mxu0 0.0
        %4130 = vmatpush1.msra.mxu0 0.0
        %4131 = vmatprep.subr.mxu0 0.0
        %4132 = vmatpush1.msra.mxu0 0.0
        %4133 = vmatprep.subr.mxu0 0.0
        %4134 = vmatpush1.msra.mxu0 0.0
        %4135 = vmatprep.subr.mxu0 0.0
        %4136 = vmatpush1.msra.mxu0 0.0
        %4137 = vmatprep.subr.mxu0 0.0
        %4138 = vmatpush1.msra.mxu0 0.0
        %4139 = vmatprep.subr.mxu0 0.0
        %4140 = vmatpush1.msra.mxu0 0.0
        %4141 = vmatprep.subr.mxu0 0.0
        %4142 = vmatpush1.msra.mxu0 0.0
        %4143 = vmatprep.mubr.f32.mxu0 0.0
        %4144 = vmatmul.mubr.f32.gmra.mrb[0].mxu0 %v4077
        %v4145 = vpop.f32.mrb[0].mxu0
        %v4146 = vadd.f32 0.0, %v4145
        %v4147 = vpop.f32.mrb[0].mxu0
        %4148 = vdwg.mxu0
        %4149 = vrot.lane.b32.xlu0 %v553, 48
        %v4150 = vpop.permute.xlu0 %4149
        %v4153 = vsel %vm579, %v3916, 0
        %4155 = vmatprep.subr.mxu0 0.0
        %4156 = vmatpush1.msra.mxu0 %v4150
        %4157 = vmatprep.subr.mxu0 0.0
        %4158 = vmatpush1.msra.mxu0 0.0
        %4159 = vmatprep.subr.mxu0 0.0
        %4160 = vmatpush1.msra.mxu0 0.0
        %4161 = vmatprep.subr.mxu0 0.0
        %4162 = vmatpush1.msra.mxu0 0.0
        %4163 = vmatprep.subr.mxu0 0.0
        %4164 = vmatpush1.msra.mxu0 0.0
        %4165 = vmatprep.subr.mxu0 0.0
        %4166 = vmatpush1.msra.mxu0 0.0
        %4167 = vmatprep.subr.mxu0 0.0
        %4168 = vmatpush1.msra.mxu0 0.0
        %4169 = vmatprep.subr.mxu0 0.0
        %4170 = vmatpush1.msra.mxu0 0.0
        %4171 = vmatprep.subr.mxu0 0.0
        %4172 = vmatpush1.msra.mxu0 0.0
        %4173 = vmatprep.subr.mxu0 0.0
        %4174 = vmatpush1.msra.mxu0 0.0
        %4175 = vmatprep.subr.mxu0 0.0
        %4176 = vmatpush1.msra.mxu0 0.0
        %4177 = vmatprep.subr.mxu0 0.0
        %4178 = vmatpush1.msra.mxu0 0.0
        %4179 = vmatprep.subr.mxu0 0.0
        %4180 = vmatpush1.msra.mxu0 0.0
        %4181 = vmatprep.subr.mxu0 0.0
        %4182 = vmatpush1.msra.mxu0 0.0
        %4183 = vmatprep.subr.mxu0 0.0
        %4184 = vmatpush1.msra.mxu0 0.0
        %4185 = vmatprep.subr.mxu0 0.0
        %4186 = vmatpush1.msra.mxu0 0.0
        %4187 = vmatprep.subr.mxu0 0.0
        %4188 = vmatpush1.msra.mxu0 0.0
        %4189 = vmatprep.subr.mxu0 0.0
        %4190 = vmatpush1.msra.mxu0 0.0
        %4191 = vmatprep.subr.mxu0 0.0
        %4192 = vmatpush1.msra.mxu0 0.0
        %4193 = vmatprep.subr.mxu0 0.0
        %4194 = vmatpush1.msra.mxu0 0.0
        %4195 = vmatprep.subr.mxu0 0.0
        %4196 = vmatpush1.msra.mxu0 0.0
        %4197 = vmatprep.subr.mxu0 0.0
        %4198 = vmatpush1.msra.mxu0 0.0
        %4199 = vmatprep.subr.mxu0 0.0
        %4200 = vmatpush1.msra.mxu0 0.0
        %4201 = vmatprep.subr.mxu0 0.0
        %4202 = vmatpush1.msra.mxu0 0.0
        %4203 = vmatprep.subr.mxu0 0.0
        %4204 = vmatpush1.msra.mxu0 0.0
        %4205 = vmatprep.subr.mxu0 0.0
        %4206 = vmatpush1.msra.mxu0 0.0
        %4207 = vmatprep.subr.mxu0 0.0
        %4208 = vmatpush1.msra.mxu0 0.0
        %4209 = vmatprep.subr.mxu0 0.0
        %4210 = vmatpush1.msra.mxu0 0.0
        %4211 = vmatprep.subr.mxu0 0.0
        %4212 = vmatpush1.msra.mxu0 0.0
        %4213 = vmatprep.subr.mxu0 0.0
        %4214 = vmatpush1.msra.mxu0 0.0
        %4215 = vmatprep.subr.mxu0 0.0
        %4216 = vmatpush1.msra.mxu0 0.0
        %4217 = vmatprep.subr.mxu0 0.0
        %4218 = vmatpush1.msra.mxu0 0.0
        %4219 = vmatprep.mubr.f32.mxu0 0.0
        %4220 = vmatmul.mubr.f32.gmra.mrb[0].mxu0 %v4153
        %v4221 = vpop.f32.mrb[0].mxu0
        %v4222 = vadd.f32 0.0, %v4221
        %v4223 = vpop.f32.mrb[0].mxu0
        %4224 = vdwg.mxu0
        %4225 = vrot.lane.b32.xlu0 %v558, 48
        %v4226 = vpop.permute.xlu0 %4225
        %v4229 = vsel %vm579, %v3917, 0
        %4231 = vmatprep.subr.mxu0 0.0
        %4232 = vmatpush1.msra.mxu0 %v4226
        %4233 = vmatprep.subr.mxu0 0.0
        %4234 = vmatpush1.msra.mxu0 0.0
        %4235 = vmatprep.subr.mxu0 0.0
        %4236 = vmatpush1.msra.mxu0 0.0
        %4237 = vmatprep.subr.mxu0 0.0
        %4238 = vmatpush1.msra.mxu0 0.0
        %4239 = vmatprep.subr.mxu0 0.0
        %4240 = vmatpush1.msra.mxu0 0.0
        %4241 = vmatprep.subr.mxu0 0.0
        %4242 = vmatpush1.msra.mxu0 0.0
        %4243 = vmatprep.subr.mxu0 0.0
        %4244 = vmatpush1.msra.mxu0 0.0
        %4245 = vmatprep.subr.mxu0 0.0
        %4246 = vmatpush1.msra.mxu0 0.0
        %4247 = vmatprep.subr.mxu0 0.0
        %4248 = vmatpush1.msra.mxu0 0.0
        %4249 = vmatprep.subr.mxu0 0.0
        %4250 = vmatpush1.msra.mxu0 0.0
        %4251 = vmatprep.subr.mxu0 0.0
        %4252 = vmatpush1.msra.mxu0 0.0
        %4253 = vmatprep.subr.mxu0 0.0
        %4254 = vmatpush1.msra.mxu0 0.0
        %4255 = vmatprep.subr.mxu0 0.0
        %4256 = vmatpush1.msra.mxu0 0.0
        %4257 = vmatprep.subr.mxu0 0.0
        %4258 = vmatpush1.msra.mxu0 0.0
        %4259 = vmatprep.subr.mxu0 0.0
        %4260 = vmatpush1.msra.mxu0 0.0
        %4261 = vmatprep.subr.mxu0 0.0
        %4262 = vmatpush1.msra.mxu0 0.0
        %4263 = vmatprep.subr.mxu0 0.0
        %4264 = vmatpush1.msra.mxu0 0.0
        %4265 = vmatprep.subr.mxu0 0.0
        %4266 = vmatpush1.msra.mxu0 0.0
        %4267 = vmatprep.subr.mxu0 0.0
        %4268 = vmatpush1.msra.mxu0 0.0
        %4269 = vmatprep.subr.mxu0 0.0
        %4270 = vmatpush1.msra.mxu0 0.0
        %4271 = vmatprep.subr.mxu0 0.0
        %4272 = vmatpush1.msra.mxu0 0.0
        %4273 = vmatprep.subr.mxu0 0.0
        %4274 = vmatpush1.msra.mxu0 0.0
        %4275 = vmatprep.subr.mxu0 0.0
        %4276 = vmatpush1.msra.mxu0 0.0
        %4277 = vmatprep.subr.mxu0 0.0
        %4278 = vmatpush1.msra.mxu0 0.0
        %4279 = vmatprep.subr.mxu0 0.0
        %4280 = vmatpush1.msra.mxu0 0.0
        %4281 = vmatprep.subr.mxu0 0.0
        %4282 = vmatpush1.msra.mxu0 0.0
        %4283 = vmatprep.subr.mxu0 0.0
        %4284 = vmatpush1.msra.mxu0 0.0
        %4285 = vmatprep.subr.mxu0 0.0
        %4286 = vmatpush1.msra.mxu0 0.0
        %4287 = vmatprep.subr.mxu0 0.0
        %4288 = vmatpush1.msra.mxu0 0.0
        %4289 = vmatprep.subr.mxu0 0.0
        %4290 = vmatpush1.msra.mxu0 0.0
        %4291 = vmatprep.subr.mxu0 0.0
        %4292 = vmatpush1.msra.mxu0 0.0
        %4293 = vmatprep.subr.mxu0 0.0
        %4294 = vmatpush1.msra.mxu0 0.0
        %4295 = vmatprep.mubr.f32.mxu0 0.0
        %4296 = vmatmul.mubr.f32.gmra.mrb[0].mxu0 %v4229
        %v4297 = vpop.f32.mrb[0].mxu0
        %v4298 = vadd.f32 0.0, %v4297
        %v4299 = vpop.f32.mrb[0].mxu0
        %4300 = vdwg.mxu0
        %4301 = vrot.lane.b32.xlu0 %v563, 48
        %v4302 = vpop.permute.xlu0 %4301
        %v4305 = vsel %vm579, %v3918, 0
        %4307 = vmatprep.subr.mxu0 0.0
        %4308 = vmatpush1.msra.mxu0 %v4302
        %4309 = vmatprep.subr.mxu0 0.0
        %4310 = vmatpush1.msra.mxu0 0.0
        %4311 = vmatprep.subr.mxu0 0.0
        %4312 = vmatpush1.msra.mxu0 0.0
        %4313 = vmatprep.subr.mxu0 0.0
        %4314 = vmatpush1.msra.mxu0 0.0
        %4315 = vmatprep.subr.mxu0 0.0
        %4316 = vmatpush1.msra.mxu0 0.0
        %4317 = vmatprep.subr.mxu0 0.0
        %4318 = vmatpush1.msra.mxu0 0.0
        %4319 = vmatprep.subr.mxu0 0.0
        %4320 = vmatpush1.msra.mxu0 0.0
        %4321 = vmatprep.subr.mxu0 0.0
        %4322 = vmatpush1.msra.mxu0 0.0
        %4323 = vmatprep.subr.mxu0 0.0
        %4324 = vmatpush1.msra.mxu0 0.0
        %4325 = vmatprep.subr.mxu0 0.0
        %4326 = vmatpush1.msra.mxu0 0.0
        %4327 = vmatprep.subr.mxu0 0.0
        %4328 = vmatpush1.msra.mxu0 0.0
        %4329 = vmatprep.subr.mxu0 0.0
        %4330 = vmatpush1.msra.mxu0 0.0
        %4331 = vmatprep.subr.mxu0 0.0
        %4332 = vmatpush1.msra.mxu0 0.0
        %4333 = vmatprep.subr.mxu0 0.0
        %4334 = vmatpush1.msra.mxu0 0.0
        %4335 = vmatprep.subr.mxu0 0.0
        %4336 = vmatpush1.msra.mxu0 0.0
        %4337 = vmatprep.subr.mxu0 0.0
        %4338 = vmatpush1.msra.mxu0 0.0
        %4339 = vmatprep.subr.mxu0 0.0
        %4340 = vmatpush1.msra.mxu0 0.0
        %4341 = vmatprep.subr.mxu0 0.0
        %4342 = vmatpush1.msra.mxu0 0.0
        %4343 = vmatprep.subr.mxu0 0.0
        %4344 = vmatpush1.msra.mxu0 0.0
        %4345 = vmatprep.subr.mxu0 0.0
        %4346 = vmatpush1.msra.mxu0 0.0
        %4347 = vmatprep.subr.mxu0 0.0
        %4348 = vmatpush1.msra.mxu0 0.0
        %4349 = vmatprep.subr.mxu0 0.0
        %4350 = vmatpush1.msra.mxu0 0.0
        %4351 = vmatprep.subr.mxu0 0.0
        %4352 = vmatpush1.msra.mxu0 0.0
        %4353 = vmatprep.subr.mxu0 0.0
        %4354 = vmatpush1.msra.mxu0 0.0
        %4355 = vmatprep.subr.mxu0 0.0
        %4356 = vmatpush1.msra.mxu0 0.0
        %4357 = vmatprep.subr.mxu0 0.0
        %4358 = vmatpush1.msra.mxu0 0.0
        %4359 = vmatprep.subr.mxu0 0.0
        %4360 = vmatpush1.msra.mxu0 0.0
        %4361 = vmatprep.subr.mxu0 0.0
        %4362 = vmatpush1.msra.mxu0 0.0
        %4363 = vmatprep.subr.mxu0 0.0
        %4364 = vmatpush1.msra.mxu0 0.0
        %4365 = vmatprep.subr.mxu0 0.0
        %4366 = vmatpush1.msra.mxu0 0.0
        %4367 = vmatprep.subr.mxu0 0.0
        %4368 = vmatpush1.msra.mxu0 0.0
        %4369 = vmatprep.subr.mxu0 0.0
        %4370 = vmatpush1.msra.mxu0 0.0
        %4371 = vmatprep.mubr.f32.mxu0 0.0
        %4372 = vmatmul.mubr.f32.gmra.mrb[0].mxu0 %v4305
        %v4373 = vpop.f32.mrb[0].mxu0
        %v4374 = vadd.f32 0.0, %v4373
        %v4375 = vpop.f32.mrb[0].mxu0
        %4376 = vdwg.mxu0
        %4377 = vrot.lane.b32.xlu0 %v568, 48
        %v4378 = vpop.permute.xlu0 %4377
        %v4381 = vsel %vm579, %v3919, 0
        %4383 = vmatprep.subr.mxu0 0.0
        %4384 = vmatpush1.msra.mxu0 %v4378
        %4385 = vmatprep.subr.mxu0 0.0
        %4386 = vmatpush1.msra.mxu0 0.0
        %4387 = vmatprep.subr.mxu0 0.0
        %4388 = vmatpush1.msra.mxu0 0.0
        %4389 = vmatprep.subr.mxu0 0.0
        %4390 = vmatpush1.msra.mxu0 0.0
        %4391 = vmatprep.subr.mxu0 0.0
        %4392 = vmatpush1.msra.mxu0 0.0
        %4393 = vmatprep.subr.mxu0 0.0
        %4394 = vmatpush1.msra.mxu0 0.0
        %4395 = vmatprep.subr.mxu0 0.0
        %4396 = vmatpush1.msra.mxu0 0.0
        %4397 = vmatprep.subr.mxu0 0.0
        %4398 = vmatpush1.msra.mxu0 0.0
        %4399 = vmatprep.subr.mxu0 0.0
        %4400 = vmatpush1.msra.mxu0 0.0
        %4401 = vmatprep.subr.mxu0 0.0
        %4402 = vmatpush1.msra.mxu0 0.0
        %4403 = vmatprep.subr.mxu0 0.0
        %4404 = vmatpush1.msra.mxu0 0.0
        %4405 = vmatprep.subr.mxu0 0.0
        %4406 = vmatpush1.msra.mxu0 0.0
        %4407 = vmatprep.subr.mxu0 0.0
        %4408 = vmatpush1.msra.mxu0 0.0
        %4409 = vmatprep.subr.mxu0 0.0
        %4410 = vmatpush1.msra.mxu0 0.0
        %4411 = vmatprep.subr.mxu0 0.0
        %4412 = vmatpush1.msra.mxu0 0.0
        %4413 = vmatprep.subr.mxu0 0.0
        %4414 = vmatpush1.msra.mxu0 0.0
        %4415 = vmatprep.subr.mxu0 0.0
        %4416 = vmatpush1.msra.mxu0 0.0
        %4417 = vmatprep.subr.mxu0 0.0
        %4418 = vmatpush1.msra.mxu0 0.0
        %4419 = vmatprep.subr.mxu0 0.0
        %4420 = vmatpush1.msra.mxu0 0.0
        %4421 = vmatprep.subr.mxu0 0.0
        %4422 = vmatpush1.msra.mxu0 0.0
        %4423 = vmatprep.subr.mxu0 0.0
        %4424 = vmatpush1.msra.mxu0 0.0
        %4425 = vmatprep.subr.mxu0 0.0
        %4426 = vmatpush1.msra.mxu0 0.0
        %4427 = vmatprep.subr.mxu0 0.0
        %4428 = vmatpush1.msra.mxu0 0.0
        %4429 = vmatprep.subr.mxu0 0.0
        %4430 = vmatpush1.msra.mxu0 0.0
        %4431 = vmatprep.subr.mxu0 0.0
        %4432 = vmatpush1.msra.mxu0 0.0
        %4433 = vmatprep.subr.mxu0 0.0
        %4434 = vmatpush1.msra.mxu0 0.0
        %4435 = vmatprep.subr.mxu0 0.0
        %4436 = vmatpush1.msra.mxu0 0.0
        %4437 = vmatprep.subr.mxu0 0.0
        %4438 = vmatpush1.msra.mxu0 0.0
        %4439 = vmatprep.subr.mxu0 0.0
        %4440 = vmatpush1.msra.mxu0 0.0
        %4441 = vmatprep.subr.mxu0 0.0
        %4442 = vmatpush1.msra.mxu0 0.0
        %4443 = vmatprep.subr.mxu0 0.0
        %4444 = vmatpush1.msra.mxu0 0.0
        %4445 = vmatprep.subr.mxu0 0.0
        %4446 = vmatpush1.msra.mxu0 0.0
        %4447 = vmatprep.mubr.f32.mxu0 0.0
        %4448 = vmatmul.mubr.f32.gmra.mrb[0].mxu0 %v4381
        %v4449 = vpop.f32.mrb[0].mxu0
        %v4450 = vadd.f32 0.0, %v4449
        %v4451 = vpop.f32.mrb[0].mxu0
        %4452 = vdwg.mxu0
        %4453 = vrot.lane.b32.xlu0 %v573, 48
        %v4454 = vpop.permute.xlu0 %4453
        %v4457 = vsel %vm579, %v3920, 0
        %4459 = vmatprep.subr.mxu0 0.0
        %4460 = vmatpush1.msra.mxu0 %v4454
        %4461 = vmatprep.subr.mxu0 0.0
        %4462 = vmatpush1.msra.mxu0 0.0
        %4463 = vmatprep.subr.mxu0 0.0
        %4464 = vmatpush1.msra.mxu0 0.0
        %4465 = vmatprep.subr.mxu0 0.0
        %4466 = vmatpush1.msra.mxu0 0.0
        %4467 = vmatprep.subr.mxu0 0.0
        %4468 = vmatpush1.msra.mxu0 0.0
        %4469 = vmatprep.subr.mxu0 0.0
        %4470 = vmatpush1.msra.mxu0 0.0
        %4471 = vmatprep.subr.mxu0 0.0
        %4472 = vmatpush1.msra.mxu0 0.0
        %4473 = vmatprep.subr.mxu0 0.0
        %4474 = vmatpush1.msra.mxu0 0.0
        %4475 = vmatprep.subr.mxu0 0.0
        %4476 = vmatpush1.msra.mxu0 0.0
        %4477 = vmatprep.subr.mxu0 0.0
        %4478 = vmatpush1.msra.mxu0 0.0
        %4479 = vmatprep.subr.mxu0 0.0
        %4480 = vmatpush1.msra.mxu0 0.0
        %4481 = vmatprep.subr.mxu0 0.0
        %4482 = vmatpush1.msra.mxu0 0.0
        %4483 = vmatprep.subr.mxu0 0.0
        %4484 = vmatpush1.msra.mxu0 0.0
        %4485 = vmatprep.subr.mxu0 0.0
        %4486 = vmatpush1.msra.mxu0 0.0
        %4487 = vmatprep.subr.mxu0 0.0
        %4488 = vmatpush1.msra.mxu0 0.0
        %4489 = vmatprep.subr.mxu0 0.0
        %4490 = vmatpush1.msra.mxu0 0.0
        %4491 = vmatprep.subr.mxu0 0.0
        %4492 = vmatpush1.msra.mxu0 0.0
        %4493 = vmatprep.subr.mxu0 0.0
        %4494 = vmatpush1.msra.mxu0 0.0
        %4495 = vmatprep.subr.mxu0 0.0
        %4496 = vmatpush1.msra.mxu0 0.0
        %4497 = vmatprep.subr.mxu0 0.0
        %4498 = vmatpush1.msra.mxu0 0.0
        %4499 = vmatprep.subr.mxu0 0.0
        %4500 = vmatpush1.msra.mxu0 0.0
        %4501 = vmatprep.subr.mxu0 0.0
        %4502 = vmatpush1.msra.mxu0 0.0
        %4503 = vmatprep.subr.mxu0 0.0
        %4504 = vmatpush1.msra.mxu0 0.0
        %4505 = vmatprep.subr.mxu0 0.0
        %4506 = vmatpush1.msra.mxu0 0.0
        %4507 = vmatprep.subr.mxu0 0.0
        %4508 = vmatpush1.msra.mxu0 0.0
        %4509 = vmatprep.subr.mxu0 0.0
        %4510 = vmatpush1.msra.mxu0 0.0
        %4511 = vmatprep.subr.mxu0 0.0
        %4512 = vmatpush1.msra.mxu0 0.0
        %4513 = vmatprep.subr.mxu0 0.0
        %4514 = vmatpush1.msra.mxu0 0.0
        %4515 = vmatprep.subr.mxu0 0.0
        %4516 = vmatpush1.msra.mxu0 0.0
        %4517 = vmatprep.subr.mxu0 0.0
        %4518 = vmatpush1.msra.mxu0 0.0
        %4519 = vmatprep.subr.mxu0 0.0
        %4520 = vmatpush1.msra.mxu0 0.0
        %4521 = vmatprep.subr.mxu0 0.0
        %4522 = vmatpush1.msra.mxu0 0.0
        %4523 = vmatprep.mubr.f32.mxu0 0.0
        %4524 = vmatmul.mubr.f32.gmra.mrb[0].mxu0 %v4457
        %v4525 = vpop.f32.mrb[0].mxu0
        %v4526 = vadd.f32 0.0, %v4525
        %v4527 = vpop.f32.mrb[0].mxu0
        %4528 = vdwg.mxu0
        %4529 = vrot.lane.b32.xlu0 %v538, 104
        %v4530 = vpop.permute.xlu0 %4529
        %4531 = vrot.lane.b32.xlu0 %v538, 72
        %v4532 = vpop.permute.xlu0 %4531
        %v4533 = vsel %vm579, %v4530, 0
        %v4535 = vsel %vm579, %v4532, 0
        %4537 = vmatprep.subr.mxu0 0.0
        %4538 = vmatpush1.xpose.msra.mxu0 %v4535
        %4539 = vmatprep.subr.mxu0 0.0
        %4540 = vmatpush1.xpose.msra.mxu0 0.0
        %4541 = vmatprep.subr.mxu0 0.0
        %4542 = vmatpush1.xpose.msra.mxu0 0.0
        %4543 = vmatprep.subr.mxu0 0.0
        %4544 = vmatpush1.xpose.msra.mxu0 0.0
        %4545 = vmatprep.subr.mxu0 0.0
        %4546 = vmatpush1.xpose.msra.mxu0 0.0
        %4547 = vmatprep.subr.mxu0 0.0
        %4548 = vmatpush1.xpose.msra.mxu0 0.0
        %4549 = vmatprep.subr.mxu0 0.0
        %4550 = vmatpush1.xpose.msra.mxu0 0.0
        %4551 = vmatprep.subr.mxu0 0.0
        %4552 = vmatpush1.xpose.msra.mxu0 0.0
        %4553 = vmatprep.subr.mxu0 0.0
        %4554 = vmatpush1.xpose.msra.mxu0 0.0
        %4555 = vmatprep.subr.mxu0 0.0
        %4556 = vmatpush1.xpose.msra.mxu0 0.0
        %4557 = vmatprep.subr.mxu0 0.0
        %4558 = vmatpush1.xpose.msra.mxu0 0.0
        %4559 = vmatprep.subr.mxu0 0.0
        %4560 = vmatpush1.xpose.msra.mxu0 0.0
        %4561 = vmatprep.subr.mxu0 0.0
        %4562 = vmatpush1.xpose.msra.mxu0 0.0
        %4563 = vmatprep.subr.mxu0 0.0
        %4564 = vmatpush1.xpose.msra.mxu0 0.0
        %4565 = vmatprep.subr.mxu0 0.0
        %4566 = vmatpush1.xpose.msra.mxu0 0.0
        %4567 = vmatprep.subr.mxu0 0.0
        %4568 = vmatpush1.xpose.msra.mxu0 0.0
        %4569 = vmatprep.subr.mxu0 0.0
        %4570 = vmatpush1.xpose.msra.mxu0 0.0
        %4571 = vmatprep.subr.mxu0 0.0
        %4572 = vmatpush1.xpose.msra.mxu0 0.0
        %4573 = vmatprep.subr.mxu0 0.0
        %4574 = vmatpush1.xpose.msra.mxu0 0.0
        %4575 = vmatprep.subr.mxu0 0.0
        %4576 = vmatpush1.xpose.msra.mxu0 0.0
        %4577 = vmatprep.subr.mxu0 0.0
        %4578 = vmatpush1.xpose.msra.mxu0 0.0
        %4579 = vmatprep.subr.mxu0 0.0
        %4580 = vmatpush1.xpose.msra.mxu0 0.0
        %4581 = vmatprep.subr.mxu0 0.0
        %4582 = vmatpush1.xpose.msra.mxu0 0.0
        %4583 = vmatprep.subr.mxu0 0.0
        %4584 = vmatpush1.xpose.msra.mxu0 0.0
        %4585 = vmatprep.subr.mxu0 0.0
        %4586 = vmatpush1.xpose.msra.mxu0 0.0
        %4587 = vmatprep.subr.mxu0 0.0
        %4588 = vmatpush1.xpose.msra.mxu0 0.0
        %4589 = vmatprep.subr.mxu0 0.0
        %4590 = vmatpush1.xpose.msra.mxu0 0.0
        %4591 = vmatprep.subr.mxu0 0.0
        %4592 = vmatpush1.xpose.msra.mxu0 0.0
        %4593 = vmatprep.subr.mxu0 0.0
        %4594 = vmatpush1.xpose.msra.mxu0 0.0
        %4595 = vmatprep.subr.mxu0 0.0
        %4596 = vmatpush1.xpose.msra.mxu0 0.0
        %4597 = vmatprep.subr.mxu0 0.0
        %4598 = vmatpush1.xpose.msra.mxu0 0.0
        %4599 = vmatprep.subr.mxu0 0.0
        %4600 = vmatpush1.xpose.msra.mxu0 0.0
        %4601 = vmatprep.mubr.f32.mxu0 0.0
        %4602 = vmatmul.mubr.f32.gmra.mrb[0].mxu0 %v4533
        %v4603 = vpop.f32.mrb[0].mxu0
        %v4604 = vadd.f32 0.0, %v4603
        %v4605 = vpop.f32.mrb[0].mxu0
        %4606 = vdwg.mxu0
        %4607 = vrot.lane.b32.xlu0 %v543, 104
        %v4608 = vpop.permute.xlu0 %4607
        %4609 = vrot.lane.b32.xlu0 %v543, 72
        %v4610 = vpop.permute.xlu0 %4609
        %v4611 = vsel %vm579, %v4608, 0
        %v4613 = vsel %vm579, %v4610, 0
        %4615 = vmatprep.subr.mxu0 0.0
        %4616 = vmatpush1.xpose.msra.mxu0 %v4613
        %4617 = vmatprep.subr.mxu0 0.0
        %4618 = vmatpush1.xpose.msra.mxu0 0.0
        %4619 = vmatprep.subr.mxu0 0.0
        %4620 = vmatpush1.xpose.msra.mxu0 0.0
        %4621 = vmatprep.subr.mxu0 0.0
        %4622 = vmatpush1.xpose.msra.mxu0 0.0
        %4623 = vmatprep.subr.mxu0 0.0
        %4624 = vmatpush1.xpose.msra.mxu0 0.0
        %4625 = vmatprep.subr.mxu0 0.0
        %4626 = vmatpush1.xpose.msra.mxu0 0.0
        %4627 = vmatprep.subr.mxu0 0.0
        %4628 = vmatpush1.xpose.msra.mxu0 0.0
        %4629 = vmatprep.subr.mxu0 0.0
        %4630 = vmatpush1.xpose.msra.mxu0 0.0
        %4631 = vmatprep.subr.mxu0 0.0
        %4632 = vmatpush1.xpose.msra.mxu0 0.0
        %4633 = vmatprep.subr.mxu0 0.0
        %4634 = vmatpush1.xpose.msra.mxu0 0.0
        %4635 = vmatprep.subr.mxu0 0.0
        %4636 = vmatpush1.xpose.msra.mxu0 0.0
        %4637 = vmatprep.subr.mxu0 0.0
        %4638 = vmatpush1.xpose.msra.mxu0 0.0
        %4639 = vmatprep.subr.mxu0 0.0
        %4640 = vmatpush1.xpose.msra.mxu0 0.0
        %4641 = vmatprep.subr.mxu0 0.0
        %4642 = vmatpush1.xpose.msra.mxu0 0.0
        %4643 = vmatprep.subr.mxu0 0.0
        %4644 = vmatpush1.xpose.msra.mxu0 0.0
        %4645 = vmatprep.subr.mxu0 0.0
        %4646 = vmatpush1.xpose.msra.mxu0 0.0
        %4647 = vmatprep.subr.mxu0 0.0
        %4648 = vmatpush1.xpose.msra.mxu0 0.0
        %4649 = vmatprep.subr.mxu0 0.0
        %4650 = vmatpush1.xpose.msra.mxu0 0.0
        %4651 = vmatprep.subr.mxu0 0.0
        %4652 = vmatpush1.xpose.msra.mxu0 0.0
        %4653 = vmatprep.subr.mxu0 0.0
        %4654 = vmatpush1.xpose.msra.mxu0 0.0
        %4655 = vmatprep.subr.mxu0 0.0
        %4656 = vmatpush1.xpose.msra.mxu0 0.0
        %4657 = vmatprep.subr.mxu0 0.0
        %4658 = vmatpush1.xpose.msra.mxu0 0.0
        %4659 = vmatprep.subr.mxu0 0.0
        %4660 = vmatpush1.xpose.msra.mxu0 0.0
        %4661 = vmatprep.subr.mxu0 0.0
        %4662 = vmatpush1.xpose.msra.mxu0 0.0
        %4663 = vmatprep.subr.mxu0 0.0
        %4664 = vmatpush1.xpose.msra.mxu0 0.0
        %4665 = vmatprep.subr.mxu0 0.0
        %4666 = vmatpush1.xpose.msra.mxu0 0.0
        %4667 = vmatprep.subr.mxu0 0.0
        %4668 = vmatpush1.xpose.msra.mxu0 0.0
        %4669 = vmatprep.subr.mxu0 0.0
        %4670 = vmatpush1.xpose.msra.mxu0 0.0
        %4671 = vmatprep.subr.mxu0 0.0
        %4672 = vmatpush1.xpose.msra.mxu0 0.0
        %4673 = vmatprep.subr.mxu0 0.0
        %4674 = vmatpush1.xpose.msra.mxu0 0.0
        %4675 = vmatprep.subr.mxu0 0.0
        %4676 = vmatpush1.xpose.msra.mxu0 0.0
        %4677 = vmatprep.subr.mxu0 0.0
        %4678 = vmatpush1.xpose.msra.mxu0 0.0
        %4679 = vmatprep.mubr.f32.mxu0 0.0
        %4680 = vmatmul.mubr.f32.gmra.mrb[0].mxu0 %v4611
        %v4681 = vpop.f32.mrb[0].mxu0
        %v4682 = vadd.f32 0.0, %v4681
        %v4683 = vpop.f32.mrb[0].mxu0
        %4684 = vdwg.mxu0
        %4685 = vrot.lane.b32.xlu0 %v548, 104
        %v4686 = vpop.permute.xlu0 %4685
        %4687 = vrot.lane.b32.xlu0 %v548, 72
        %v4688 = vpop.permute.xlu0 %4687
        %v4689 = vsel %vm579, %v4686, 0
        %v4691 = vsel %vm579, %v4688, 0
        %4693 = vmatprep.subr.mxu0 0.0
        %4694 = vmatpush1.xpose.msra.mxu0 %v4691
        %4695 = vmatprep.subr.mxu0 0.0
        %4696 = vmatpush1.xpose.msra.mxu0 0.0
        %4697 = vmatprep.subr.mxu0 0.0
        %4698 = vmatpush1.xpose.msra.mxu0 0.0
        %4699 = vmatprep.subr.mxu0 0.0
        %4700 = vmatpush1.xpose.msra.mxu0 0.0
        %4701 = vmatprep.subr.mxu0 0.0
        %4702 = vmatpush1.xpose.msra.mxu0 0.0
        %4703 = vmatprep.subr.mxu0 0.0
        %4704 = vmatpush1.xpose.msra.mxu0 0.0
        %4705 = vmatprep.subr.mxu0 0.0
        %4706 = vmatpush1.xpose.msra.mxu0 0.0
        %4707 = vmatprep.subr.mxu0 0.0
        %4708 = vmatpush1.xpose.msra.mxu0 0.0
        %4709 = vmatprep.subr.mxu0 0.0
        %4710 = vmatpush1.xpose.msra.mxu0 0.0
        %4711 = vmatprep.subr.mxu0 0.0
        %4712 = vmatpush1.xpose.msra.mxu0 0.0
        %4713 = vmatprep.subr.mxu0 0.0
        %4714 = vmatpush1.xpose.msra.mxu0 0.0
        %4715 = vmatprep.subr.mxu0 0.0
        %4716 = vmatpush1.xpose.msra.mxu0 0.0
        %4717 = vmatprep.subr.mxu0 0.0
        %4718 = vmatpush1.xpose.msra.mxu0 0.0
        %4719 = vmatprep.subr.mxu0 0.0
        %4720 = vmatpush1.xpose.msra.mxu0 0.0
        %4721 = vmatprep.subr.mxu0 0.0
        %4722 = vmatpush1.xpose.msra.mxu0 0.0
        %4723 = vmatprep.subr.mxu0 0.0
        %4724 = vmatpush1.xpose.msra.mxu0 0.0
        %4725 = vmatprep.subr.mxu0 0.0
        %4726 = vmatpush1.xpose.msra.mxu0 0.0
        %4727 = vmatprep.subr.mxu0 0.0
        %4728 = vmatpush1.xpose.msra.mxu0 0.0
        %4729 = vmatprep.subr.mxu0 0.0
        %4730 = vmatpush1.xpose.msra.mxu0 0.0
        %4731 = vmatprep.subr.mxu0 0.0
        %4732 = vmatpush1.xpose.msra.mxu0 0.0
        %4733 = vmatprep.subr.mxu0 0.0
        %4734 = vmatpush1.xpose.msra.mxu0 0.0
        %4735 = vmatprep.subr.mxu0 0.0
        %4736 = vmatpush1.xpose.msra.mxu0 0.0
        %4737 = vmatprep.subr.mxu0 0.0
        %4738 = vmatpush1.xpose.msra.mxu0 0.0
        %4739 = vmatprep.subr.mxu0 0.0
        %4740 = vmatpush1.xpose.msra.mxu0 0.0
        %4741 = vmatprep.subr.mxu0 0.0
        %4742 = vmatpush1.xpose.msra.mxu0 0.0
        %4743 = vmatprep.subr.mxu0 0.0
        %4744 = vmatpush1.xpose.msra.mxu0 0.0
        %4745 = vmatprep.subr.mxu0 0.0
        %4746 = vmatpush1.xpose.msra.mxu0 0.0
        %4747 = vmatprep.subr.mxu0 0.0
        %4748 = vmatpush1.xpose.msra.mxu0 0.0
        %4749 = vmatprep.subr.mxu0 0.0
        %4750 = vmatpush1.xpose.msra.mxu0 0.0
        %4751 = vmatprep.subr.mxu0 0.0
        %4752 = vmatpush1.xpose.msra.mxu0 0.0
        %4753 = vmatprep.subr.mxu0 0.0
        %4754 = vmatpush1.xpose.msra.mxu0 0.0
        %4755 = vmatprep.subr.mxu0 0.0
        %4756 = vmatpush1.xpose.msra.mxu0 0.0
        %4757 = vmatprep.mubr.f32.mxu0 0.0
        %4758 = vmatmul.mubr.f32.gmra.mrb[0].mxu0 %v4689
        %v4759 = vpop.f32.mrb[0].mxu0
        %v4760 = vadd.f32 0.0, %v4759
        %v4761 = vpop.f32.mrb[0].mxu0
        %4762 = vdwg.mxu0
        %4763 = vrot.lane.b32.xlu0 %v553, 104
        %v4764 = vpop.permute.xlu0 %4763
        %4765 = vrot.lane.b32.xlu0 %v553, 72
        %v4766 = vpop.permute.xlu0 %4765
        %v4767 = vsel %vm579, %v4764, 0
        %v4769 = vsel %vm579, %v4766, 0
        %4771 = vmatprep.subr.mxu0 0.0
        %4772 = vmatpush1.xpose.msra.mxu0 %v4769
        %4773 = vmatprep.subr.mxu0 0.0
        %4774 = vmatpush1.xpose.msra.mxu0 0.0
        %4775 = vmatprep.subr.mxu0 0.0
        %4776 = vmatpush1.xpose.msra.mxu0 0.0
        %4777 = vmatprep.subr.mxu0 0.0
        %4778 = vmatpush1.xpose.msra.mxu0 0.0
        %4779 = vmatprep.subr.mxu0 0.0
        %4780 = vmatpush1.xpose.msra.mxu0 0.0
        %4781 = vmatprep.subr.mxu0 0.0
        %4782 = vmatpush1.xpose.msra.mxu0 0.0
        %4783 = vmatprep.subr.mxu0 0.0
        %4784 = vmatpush1.xpose.msra.mxu0 0.0
        %4785 = vmatprep.subr.mxu0 0.0
        %4786 = vmatpush1.xpose.msra.mxu0 0.0
        %4787 = vmatprep.subr.mxu0 0.0
        %4788 = vmatpush1.xpose.msra.mxu0 0.0
        %4789 = vmatprep.subr.mxu0 0.0
        %4790 = vmatpush1.xpose.msra.mxu0 0.0
        %4791 = vmatprep.subr.mxu0 0.0
        %4792 = vmatpush1.xpose.msra.mxu0 0.0
        %4793 = vmatprep.subr.mxu0 0.0
        %4794 = vmatpush1.xpose.msra.mxu0 0.0
        %4795 = vmatprep.subr.mxu0 0.0
        %4796 = vmatpush1.xpose.msra.mxu0 0.0
        %4797 = vmatprep.subr.mxu0 0.0
        %4798 = vmatpush1.xpose.msra.mxu0 0.0
        %4799 = vmatprep.subr.mxu0 0.0
        %4800 = vmatpush1.xpose.msra.mxu0 0.0
        %4801 = vmatprep.subr.mxu0 0.0
        %4802 = vmatpush1.xpose.msra.mxu0 0.0
        %4803 = vmatprep.subr.mxu0 0.0
        %4804 = vmatpush1.xpose.msra.mxu0 0.0
        %4805 = vmatprep.subr.mxu0 0.0
        %4806 = vmatpush1.xpose.msra.mxu0 0.0
        %4807 = vmatprep.subr.mxu0 0.0
        %4808 = vmatpush1.xpose.msra.mxu0 0.0
        %4809 = vmatprep.subr.mxu0 0.0
        %4810 = vmatpush1.xpose.msra.mxu0 0.0
        %4811 = vmatprep.subr.mxu0 0.0
        %4812 = vmatpush1.xpose.msra.mxu0 0.0
        %4813 = vmatprep.subr.mxu0 0.0
        %4814 = vmatpush1.xpose.msra.mxu0 0.0
        %4815 = vmatprep.subr.mxu0 0.0
        %4816 = vmatpush1.xpose.msra.mxu0 0.0
        %4817 = vmatprep.subr.mxu0 0.0
        %4818 = vmatpush1.xpose.msra.mxu0 0.0
        %4819 = vmatprep.subr.mxu0 0.0
        %4820 = vmatpush1.xpose.msra.mxu0 0.0
        %4821 = vmatprep.subr.mxu0 0.0
        %4822 = vmatpush1.xpose.msra.mxu0 0.0
        %4823 = vmatprep.subr.mxu0 0.0
        %4824 = vmatpush1.xpose.msra.mxu0 0.0
        %4825 = vmatprep.subr.mxu0 0.0
        %4826 = vmatpush1.xpose.msra.mxu0 0.0
        %4827 = vmatprep.subr.mxu0 0.0
        %4828 = vmatpush1.xpose.msra.mxu0 0.0
        %4829 = vmatprep.subr.mxu0 0.0
        %4830 = vmatpush1.xpose.msra.mxu0 0.0
        %4831 = vmatprep.subr.mxu0 0.0
        %4832 = vmatpush1.xpose.msra.mxu0 0.0
        %4833 = vmatprep.subr.mxu0 0.0
        %4834 = vmatpush1.xpose.msra.mxu0 0.0
        %4835 = vmatprep.mubr.f32.mxu0 0.0
        %4836 = vmatmul.mubr.f32.gmra.mrb[0].mxu0 %v4767
        %v4837 = vpop.f32.mrb[0].mxu0
        %v4838 = vadd.f32 0.0, %v4837
        %v4839 = vpop.f32.mrb[0].mxu0
        %4840 = vdwg.mxu0
        %4841 = vrot.lane.b32.xlu0 %v558, 104
        %v4842 = vpop.permute.xlu0 %4841
        %4843 = vrot.lane.b32.xlu0 %v558, 72
        %v4844 = vpop.permute.xlu0 %4843
        %v4845 = vsel %vm579, %v4842, 0
        %v4847 = vsel %vm579, %v4844, 0
        %4849 = vmatprep.subr.mxu0 0.0
        %4850 = vmatpush1.xpose.msra.mxu0 %v4847
        %4851 = vmatprep.subr.mxu0 0.0
        %4852 = vmatpush1.xpose.msra.mxu0 0.0
        %4853 = vmatprep.subr.mxu0 0.0
        %4854 = vmatpush1.xpose.msra.mxu0 0.0
        %4855 = vmatprep.subr.mxu0 0.0
        %4856 = vmatpush1.xpose.msra.mxu0 0.0
        %4857 = vmatprep.subr.mxu0 0.0
        %4858 = vmatpush1.xpose.msra.mxu0 0.0
        %4859 = vmatprep.subr.mxu0 0.0
        %4860 = vmatpush1.xpose.msra.mxu0 0.0
        %4861 = vmatprep.subr.mxu0 0.0
        %4862 = vmatpush1.xpose.msra.mxu0 0.0
        %4863 = vmatprep.subr.mxu0 0.0
        %4864 = vmatpush1.xpose.msra.mxu0 0.0
        %4865 = vmatprep.subr.mxu0 0.0
        %4866 = vmatpush1.xpose.msra.mxu0 0.0
        %4867 = vmatprep.subr.mxu0 0.0
        %4868 = vmatpush1.xpose.msra.mxu0 0.0
        %4869 = vmatprep.subr.mxu0 0.0
        %4870 = vmatpush1.xpose.msra.mxu0 0.0
        %4871 = vmatprep.subr.mxu0 0.0
        %4872 = vmatpush1.xpose.msra.mxu0 0.0
        %4873 = vmatprep.subr.mxu0 0.0
        %4874 = vmatpush1.xpose.msra.mxu0 0.0
        %4875 = vmatprep.subr.mxu0 0.0
        %4876 = vmatpush1.xpose.msra.mxu0 0.0
        %4877 = vmatprep.subr.mxu0 0.0
        %4878 = vmatpush1.xpose.msra.mxu0 0.0
        %4879 = vmatprep.subr.mxu0 0.0
        %4880 = vmatpush1.xpose.msra.mxu0 0.0
        %4881 = vmatprep.subr.mxu0 0.0
        %4882 = vmatpush1.xpose.msra.mxu0 0.0
        %4883 = vmatprep.subr.mxu0 0.0
        %4884 = vmatpush1.xpose.msra.mxu0 0.0
        %4885 = vmatprep.subr.mxu0 0.0
        %4886 = vmatpush1.xpose.msra.mxu0 0.0
        %4887 = vmatprep.subr.mxu0 0.0
        %4888 = vmatpush1.xpose.msra.mxu0 0.0
        %4889 = vmatprep.subr.mxu0 0.0
        %4890 = vmatpush1.xpose.msra.mxu0 0.0
        %4891 = vmatprep.subr.mxu0 0.0
        %4892 = vmatpush1.xpose.msra.mxu0 0.0
        %4893 = vmatprep.subr.mxu0 0.0
        %4894 = vmatpush1.xpose.msra.mxu0 0.0
        %4895 = vmatprep.subr.mxu0 0.0
        %4896 = vmatpush1.xpose.msra.mxu0 0.0
        %4897 = vmatprep.subr.mxu0 0.0
        %4898 = vmatpush1.xpose.msra.mxu0 0.0
        %4899 = vmatprep.subr.mxu0 0.0
        %4900 = vmatpush1.xpose.msra.mxu0 0.0
        %4901 = vmatprep.subr.mxu0 0.0
        %4902 = vmatpush1.xpose.msra.mxu0 0.0
        %4903 = vmatprep.subr.mxu0 0.0
        %4904 = vmatpush1.xpose.msra.mxu0 0.0
        %4905 = vmatprep.subr.mxu0 0.0
        %4906 = vmatpush1.xpose.msra.mxu0 0.0
        %4907 = vmatprep.subr.mxu0 0.0
        %4908 = vmatpush1.xpose.msra.mxu0 0.0
        %4909 = vmatprep.subr.mxu0 0.0
        %4910 = vmatpush1.xpose.msra.mxu0 0.0
        %4911 = vmatprep.subr.mxu0 0.0
        %4912 = vmatpush1.xpose.msra.mxu0 0.0
        %4913 = vmatprep.mubr.f32.mxu0 0.0
        %4914 = vmatmul.mubr.f32.gmra.mrb[0].mxu0 %v4845
        %v4915 = vpop.f32.mrb[0].mxu0
        %v4916 = vadd.f32 0.0, %v4915
        %v4917 = vpop.f32.mrb[0].mxu0
        %4918 = vdwg.mxu0
        %4919 = vrot.lane.b32.xlu0 %v563, 104
        %v4920 = vpop.permute.xlu0 %4919
        %4921 = vrot.lane.b32.xlu0 %v563, 72
        %v4922 = vpop.permute.xlu0 %4921
        %v4923 = vsel %vm579, %v4920, 0
        %v4925 = vsel %vm579, %v4922, 0
        %4927 = vmatprep.subr.mxu0 0.0
        %4928 = vmatpush1.xpose.msra.mxu0 %v4925
        %4929 = vmatprep.subr.mxu0 0.0
        %4930 = vmatpush1.xpose.msra.mxu0 0.0
        %4931 = vmatprep.subr.mxu0 0.0
        %4932 = vmatpush1.xpose.msra.mxu0 0.0
        %4933 = vmatprep.subr.mxu0 0.0
        %4934 = vmatpush1.xpose.msra.mxu0 0.0
        %4935 = vmatprep.subr.mxu0 0.0
        %4936 = vmatpush1.xpose.msra.mxu0 0.0
        %4937 = vmatprep.subr.mxu0 0.0
        %4938 = vmatpush1.xpose.msra.mxu0 0.0
        %4939 = vmatprep.subr.mxu0 0.0
        %4940 = vmatpush1.xpose.msra.mxu0 0.0
        %4941 = vmatprep.subr.mxu0 0.0
        %4942 = vmatpush1.xpose.msra.mxu0 0.0
        %4943 = vmatprep.subr.mxu0 0.0
        %4944 = vmatpush1.xpose.msra.mxu0 0.0
        %4945 = vmatprep.subr.mxu0 0.0
        %4946 = vmatpush1.xpose.msra.mxu0 0.0
        %4947 = vmatprep.subr.mxu0 0.0
        %4948 = vmatpush1.xpose.msra.mxu0 0.0
        %4949 = vmatprep.subr.mxu0 0.0
        %4950 = vmatpush1.xpose.msra.mxu0 0.0
        %4951 = vmatprep.subr.mxu0 0.0
        %4952 = vmatpush1.xpose.msra.mxu0 0.0
        %4953 = vmatprep.subr.mxu0 0.0
        %4954 = vmatpush1.xpose.msra.mxu0 0.0
        %4955 = vmatprep.subr.mxu0 0.0
        %4956 = vmatpush1.xpose.msra.mxu0 0.0
        %4957 = vmatprep.subr.mxu0 0.0
        %4958 = vmatpush1.xpose.msra.mxu0 0.0
        %4959 = vmatprep.subr.mxu0 0.0
        %4960 = vmatpush1.xpose.msra.mxu0 0.0
        %4961 = vmatprep.subr.mxu0 0.0
        %4962 = vmatpush1.xpose.msra.mxu0 0.0
        %4963 = vmatprep.subr.mxu0 0.0
        %4964 = vmatpush1.xpose.msra.mxu0 0.0
        %4965 = vmatprep.subr.mxu0 0.0
        %4966 = vmatpush1.xpose.msra.mxu0 0.0
        %4967 = vmatprep.subr.mxu0 0.0
        %4968 = vmatpush1.xpose.msra.mxu0 0.0
        %4969 = vmatprep.subr.mxu0 0.0
        %4970 = vmatpush1.xpose.msra.mxu0 0.0
        %4971 = vmatprep.subr.mxu0 0.0
        %4972 = vmatpush1.xpose.msra.mxu0 0.0
        %4973 = vmatprep.subr.mxu0 0.0
        %4974 = vmatpush1.xpose.msra.mxu0 0.0
        %4975 = vmatprep.subr.mxu0 0.0
        %4976 = vmatpush1.xpose.msra.mxu0 0.0
        %4977 = vmatprep.subr.mxu0 0.0
        %4978 = vmatpush1.xpose.msra.mxu0 0.0
        %4979 = vmatprep.subr.mxu0 0.0
        %4980 = vmatpush1.xpose.msra.mxu0 0.0
        %4981 = vmatprep.subr.mxu0 0.0
        %4982 = vmatpush1.xpose.msra.mxu0 0.0
        %4983 = vmatprep.subr.mxu0 0.0
        %4984 = vmatpush1.xpose.msra.mxu0 0.0
        %4985 = vmatprep.subr.mxu0 0.0
        %4986 = vmatpush1.xpose.msra.mxu0 0.0
        %4987 = vmatprep.subr.mxu0 0.0
        %4988 = vmatpush1.xpose.msra.mxu0 0.0
        %4989 = vmatprep.subr.mxu0 0.0
        %4990 = vmatpush1.xpose.msra.mxu0 0.0
        %4991 = vmatprep.mubr.f32.mxu0 0.0
        %4992 = vmatmul.mubr.f32.gmra.mrb[0].mxu0 %v4923
        %v4993 = vpop.f32.mrb[0].mxu0
        %v4994 = vadd.f32 0.0, %v4993
        %v4995 = vpop.f32.mrb[0].mxu0
        %4996 = vdwg.mxu0
        %4997 = vrot.lane.b32.xlu0 %v568, 104
        %v4998 = vpop.permute.xlu0 %4997
        %4999 = vrot.lane.b32.xlu0 %v568, 72
        %v5000 = vpop.permute.xlu0 %4999
        %v5001 = vsel %vm579, %v4998, 0
        %v5003 = vsel %vm579, %v5000, 0
        %5005 = vmatprep.subr.mxu0 0.0
        %5006 = vmatpush1.xpose.msra.mxu0 %v5003
        %5007 = vmatprep.subr.mxu0 0.0
        %5008 = vmatpush1.xpose.msra.mxu0 0.0
        %5009 = vmatprep.subr.mxu0 0.0
        %5010 = vmatpush1.xpose.msra.mxu0 0.0
        %5011 = vmatprep.subr.mxu0 0.0
        %5012 = vmatpush1.xpose.msra.mxu0 0.0
        %5013 = vmatprep.subr.mxu0 0.0
        %5014 = vmatpush1.xpose.msra.mxu0 0.0
        %5015 = vmatprep.subr.mxu0 0.0
        %5016 = vmatpush1.xpose.msra.mxu0 0.0
        %5017 = vmatprep.subr.mxu0 0.0
        %5018 = vmatpush1.xpose.msra.mxu0 0.0
        %5019 = vmatprep.subr.mxu0 0.0
        %5020 = vmatpush1.xpose.msra.mxu0 0.0
        %5021 = vmatprep.subr.mxu0 0.0
        %5022 = vmatpush1.xpose.msra.mxu0 0.0
        %5023 = vmatprep.subr.mxu0 0.0
        %5024 = vmatpush1.xpose.msra.mxu0 0.0
        %5025 = vmatprep.subr.mxu0 0.0
        %5026 = vmatpush1.xpose.msra.mxu0 0.0
        %5027 = vmatprep.subr.mxu0 0.0
        %5028 = vmatpush1.xpose.msra.mxu0 0.0
        %5029 = vmatprep.subr.mxu0 0.0
        %5030 = vmatpush1.xpose.msra.mxu0 0.0
        %5031 = vmatprep.subr.mxu0 0.0
        %5032 = vmatpush1.xpose.msra.mxu0 0.0
        %5033 = vmatprep.subr.mxu0 0.0
        %5034 = vmatpush1.xpose.msra.mxu0 0.0
        %5035 = vmatprep.subr.mxu0 0.0
        %5036 = vmatpush1.xpose.msra.mxu0 0.0
        %5037 = vmatprep.subr.mxu0 0.0
        %5038 = vmatpush1.xpose.msra.mxu0 0.0
        %5039 = vmatprep.subr.mxu0 0.0
        %5040 = vmatpush1.xpose.msra.mxu0 0.0
        %5041 = vmatprep.subr.mxu0 0.0
        %5042 = vmatpush1.xpose.msra.mxu0 0.0
        %5043 = vmatprep.subr.mxu0 0.0
        %5044 = vmatpush1.xpose.msra.mxu0 0.0
        %5045 = vmatprep.subr.mxu0 0.0
        %5046 = vmatpush1.xpose.msra.mxu0 0.0
        %5047 = vmatprep.subr.mxu0 0.0
        %5048 = vmatpush1.xpose.msra.mxu0 0.0
        %5049 = vmatprep.subr.mxu0 0.0
        %5050 = vmatpush1.xpose.msra.mxu0 0.0
        %5051 = vmatprep.subr.mxu0 0.0
        %5052 = vmatpush1.xpose.msra.mxu0 0.0
        %5053 = vmatprep.subr.mxu0 0.0
        %5054 = vmatpush1.xpose.msra.mxu0 0.0
        %5055 = vmatprep.subr.mxu0 0.0
        %5056 = vmatpush1.xpose.msra.mxu0 0.0
        %5057 = vmatprep.subr.mxu0 0.0
        %5058 = vmatpush1.xpose.msra.mxu0 0.0
        %5059 = vmatprep.subr.mxu0 0.0
        %5060 = vmatpush1.xpose.msra.mxu0 0.0
        %5061 = vmatprep.subr.mxu0 0.0
        %5062 = vmatpush1.xpose.msra.mxu0 0.0
        %5063 = vmatprep.subr.mxu0 0.0
        %5064 = vmatpush1.xpose.msra.mxu0 0.0
        %5065 = vmatprep.subr.mxu0 0.0
        %5066 = vmatpush1.xpose.msra.mxu0 0.0
        %5067 = vmatprep.subr.mxu0 0.0
        %5068 = vmatpush1.xpose.msra.mxu0 0.0
        %5069 = vmatprep.mubr.f32.mxu0 0.0
        %5070 = vmatmul.mubr.f32.gmra.mrb[0].mxu0 %v5001
        %v5071 = vpop.f32.mrb[0].mxu0
        %v5072 = vadd.f32 0.0, %v5071
        %v5073 = vpop.f32.mrb[0].mxu0
        %5074 = vdwg.mxu0
        %5075 = vrot.lane.b32.xlu0 %v573, 104
        %v5076 = vpop.permute.xlu0 %5075
        %5077 = vrot.lane.b32.xlu0 %v573, 72
        %v5078 = vpop.permute.xlu0 %5077
        %v5079 = vsel %vm579, %v5076, 0
        %v5081 = vsel %vm579, %v5078, 0
        %5083 = vmatprep.subr.mxu0 0.0
        %5084 = vmatpush1.xpose.msra.mxu0 %v5081
        %5085 = vmatprep.subr.mxu0 0.0
        %5086 = vmatpush1.xpose.msra.mxu0 0.0
        %5087 = vmatprep.subr.mxu0 0.0
        %5088 = vmatpush1.xpose.msra.mxu0 0.0
        %5089 = vmatprep.subr.mxu0 0.0
        %5090 = vmatpush1.xpose.msra.mxu0 0.0
        %5091 = vmatprep.subr.mxu0 0.0
        %5092 = vmatpush1.xpose.msra.mxu0 0.0
        %5093 = vmatprep.subr.mxu0 0.0
        %5094 = vmatpush1.xpose.msra.mxu0 0.0
        %5095 = vmatprep.subr.mxu0 0.0
        %5096 = vmatpush1.xpose.msra.mxu0 0.0
        %5097 = vmatprep.subr.mxu0 0.0
        %5098 = vmatpush1.xpose.msra.mxu0 0.0
        %5099 = vmatprep.subr.mxu0 0.0
        %5100 = vmatpush1.xpose.msra.mxu0 0.0
        %5101 = vmatprep.subr.mxu0 0.0
        %5102 = vmatpush1.xpose.msra.mxu0 0.0
        %5103 = vmatprep.subr.mxu0 0.0
        %5104 = vmatpush1.xpose.msra.mxu0 0.0
        %5105 = vmatprep.subr.mxu0 0.0
        %5106 = vmatpush1.xpose.msra.mxu0 0.0
        %5107 = vmatprep.subr.mxu0 0.0
        %5108 = vmatpush1.xpose.msra.mxu0 0.0
        %5109 = vmatprep.subr.mxu0 0.0
        %5110 = vmatpush1.xpose.msra.mxu0 0.0
        %5111 = vmatprep.subr.mxu0 0.0
        %5112 = vmatpush1.xpose.msra.mxu0 0.0
        %5113 = vmatprep.subr.mxu0 0.0
        %5114 = vmatpush1.xpose.msra.mxu0 0.0
        %5115 = vmatprep.subr.mxu0 0.0
        %5116 = vmatpush1.xpose.msra.mxu0 0.0
        %5117 = vmatprep.subr.mxu0 0.0
        %5118 = vmatpush1.xpose.msra.mxu0 0.0
        %5119 = vmatprep.subr.mxu0 0.0
        %5120 = vmatpush1.xpose.msra.mxu0 0.0
        %5121 = vmatprep.subr.mxu0 0.0
        %5122 = vmatpush1.xpose.msra.mxu0 0.0
        %5123 = vmatprep.subr.mxu0 0.0
        %5124 = vmatpush1.xpose.msra.mxu0 0.0
        %5125 = vmatprep.subr.mxu0 0.0
        %5126 = vmatpush1.xpose.msra.mxu0 0.0
        %5127 = vmatprep.subr.mxu0 0.0
        %5128 = vmatpush1.xpose.msra.mxu0 0.0
        %5129 = vmatprep.subr.mxu0 0.0
        %5130 = vmatpush1.xpose.msra.mxu0 0.0
        %5131 = vmatprep.subr.mxu0 0.0
        %5132 = vmatpush1.xpose.msra.mxu0 0.0
        %5133 = vmatprep.subr.mxu0 0.0
        %5134 = vmatpush1.xpose.msra.mxu0 0.0
        %5135 = vmatprep.subr.mxu0 0.0
        %5136 = vmatpush1.xpose.msra.mxu0 0.0
        %5137 = vmatprep.subr.mxu0 0.0
        %5138 = vmatpush1.xpose.msra.mxu0 0.0
        %5139 = vmatprep.subr.mxu0 0.0
        %5140 = vmatpush1.xpose.msra.mxu0 0.0
        %5141 = vmatprep.subr.mxu0 0.0
        %5142 = vmatpush1.xpose.msra.mxu0 0.0
        %5143 = vmatprep.subr.mxu0 0.0
        %5144 = vmatpush1.xpose.msra.mxu0 0.0
        %5145 = vmatprep.subr.mxu0 0.0
        %5146 = vmatpush1.xpose.msra.mxu0 0.0
        %5147 = vmatprep.mubr.f32.mxu0 0.0
        %5148 = vmatmul.mubr.f32.gmra.mrb[0].mxu0 %v5079
        %v5149 = vpop.f32.mrb[0].mxu0
        %v5150 = vadd.f32 0.0, %v5149
        %v5151 = vpop.f32.mrb[0].mxu0
        %5152 = vdwg.mxu0
        %v5153 = vsel %vm579, %v4604, -inf
        %5154 = vmax.xlane.f32.xlu0 %v5153
        %v5155 = vpop.xlane.xlu0 %5154
        %v5156 = vsel %vm579, %v4682, -inf
        %5157 = vmax.xlane.f32.xlu0 %v5156
        %v5158 = vpop.xlane.xlu0 %5157
        %v5159 = vsel %vm579, %v4760, -inf
        %5160 = vmax.xlane.f32.xlu0 %v5159
        %v5161 = vpop.xlane.xlu0 %5160
        %v5162 = vsel %vm579, %v4838, -inf
        %5163 = vmax.xlane.f32.xlu0 %v5162
        %v5164 = vpop.xlane.xlu0 %5163
        %v5165 = vsel %vm579, %v4916, -inf
        %5166 = vmax.xlane.f32.xlu0 %v5165
        %v5167 = vpop.xlane.xlu0 %5166
        %v5168 = vsel %vm579, %v4994, -inf
        %5169 = vmax.xlane.f32.xlu0 %v5168
        %v5170 = vpop.xlane.xlu0 %5169
        %v5171 = vsel %vm579, %v5072, -inf
        %5172 = vmax.xlane.f32.xlu0 %v5171
        %v5173 = vpop.xlane.xlu0 %5172
        %v5174 = vsel %vm579, %v5150, -inf
        %5175 = vmax.xlane.f32.xlu0 %v5174
        %v5176 = vpop.xlane.xlu0 %5175
        %v5177 = vsub.f32 %v4604, %v5155
        %v5178 = vsub.f32 %v4682, %v5158
        %v5179 = vsub.f32 %v4760, %v5161
        %v5180 = vsub.f32 %v4838, %v5164
        %v5181 = vsub.f32 %v4916, %v5167
        %v5182 = vsub.f32 %v4994, %v5170
        %v5183 = vsub.f32 %v5072, %v5173
        %v5184 = vsub.f32 %v5150, %v5176
        %v5185 = vmul.f32 %v5177, 1.442695
        %v5186 = vpow.pop %v5185
        %v5187 = vmul.f32 %v5178, 1.442695
        %v5188 = vpow.pop %v5187
        %v5189 = vmul.f32 %v5179, 1.442695
        %v5190 = vpow.pop %v5189
        %v5191 = vmul.f32 %v5180, 1.442695
        %v5192 = vpow.pop %v5191
        %v5193 = vmul.f32 %v5181, 1.442695
        %v5194 = vpow.pop %v5193
        %v5195 = vmul.f32 %v5182, 1.442695
        %v5196 = vpow.pop %v5195
        %v5197 = vmul.f32 %v5183, 1.442695
        %v5198 = vpow.pop %v5197
        %v5199 = vmul.f32 %v5184, 1.442695
        %v5200 = vpow.pop %v5199
        %v5201 = vsel %vm579, %v5186, 0.0
        %5202 = vadd.xlane.f32.xlu0 %v5201
        %v5203 = vpop.xlane.xlu0 %5202
        %v5204 = vsel %vm579, %v5188, 0.0
        %5205 = vadd.xlane.f32.xlu0 %v5204
        %v5206 = vpop.xlane.xlu0 %5205
        %v5207 = vsel %vm579, %v5190, 0.0
        %5208 = vadd.xlane.f32.xlu0 %v5207
        %v5209 = vpop.xlane.xlu0 %5208
        %v5210 = vsel %vm579, %v5192, 0.0
        %5211 = vadd.xlane.f32.xlu0 %v5210
        %v5212 = vpop.xlane.xlu0 %5211
        %v5213 = vsel %vm579, %v5194, 0.0
        %5214 = vadd.xlane.f32.xlu0 %v5213
        %v5215 = vpop.xlane.xlu0 %5214
        %v5216 = vsel %vm579, %v5196, 0.0
        %5217 = vadd.xlane.f32.xlu0 %v5216
        %v5218 = vpop.xlane.xlu0 %5217
        %v5219 = vsel %vm579, %v5198, 0.0
        %5220 = vadd.xlane.f32.xlu0 %v5219
        %v5221 = vpop.xlane.xlu0 %5220
        %v5222 = vsel %vm579, %v5200, 0.0
        %5223 = vadd.xlane.f32.xlu0 %v5222
        %v5224 = vpop.xlane.xlu0 %5223
        %v5225 = vrcp.pop %v5203
        %v5226 = vrcp.pop %v5206
        %v5227 = vrcp.pop %v5209
        %v5228 = vrcp.pop %v5212
        %v5229 = vrcp.pop %v5215
        %v5230 = vrcp.pop %v5218
        %v5231 = vrcp.pop %v5221
        %v5232 = vrcp.pop %v5224
        %v5233 = vmul.f32 %v5186, %v5225
        %v5234 = vmul.f32 %v5188, %v5226
        %v5235 = vmul.f32 %v5190, %v5227
        %v5236 = vmul.f32 %v5192, %v5228
        %v5237 = vmul.f32 %v5194, %v5229
        %v5238 = vmul.f32 %v5196, %v5230
        %v5239 = vmul.f32 %v5198, %v5231
        %v5240 = vmul.f32 %v5200, %v5232
        %5241 = vrot.lane.b32.xlu0 %v538, 40
        %v5242 = vpop.permute.xlu0 %5241
        %v5245 = vsel %vm579, %v5233, 0
        %5247 = vmatprep.subr.mxu0 0.0
        %5248 = vmatpush1.msra.mxu0 %v5242
        %5249 = vmatprep.subr.mxu0 0.0
        %5250 = vmatpush1.msra.mxu0 0.0
        %5251 = vmatprep.subr.mxu0 0.0
        %5252 = vmatpush1.msra.mxu0 0.0
        %5253 = vmatprep.subr.mxu0 0.0
        %5254 = vmatpush1.msra.mxu0 0.0
        %5255 = vmatprep.subr.mxu0 0.0
        %5256 = vmatpush1.msra.mxu0 0.0
        %5257 = vmatprep.subr.mxu0 0.0
        %5258 = vmatpush1.msra.mxu0 0.0
        %5259 = vmatprep.subr.mxu0 0.0
        %5260 = vmatpush1.msra.mxu0 0.0
        %5261 = vmatprep.subr.mxu0 0.0
        %5262 = vmatpush1.msra.mxu0 0.0
        %5263 = vmatprep.subr.mxu0 0.0
        %5264 = vmatpush1.msra.mxu0 0.0
        %5265 = vmatprep.subr.mxu0 0.0
        %5266 = vmatpush1.msra.mxu0 0.0
        %5267 = vmatprep.subr.mxu0 0.0
        %5268 = vmatpush1.msra.mxu0 0.0
        %5269 = vmatprep.subr.mxu0 0.0
        %5270 = vmatpush1.msra.mxu0 0.0
        %5271 = vmatprep.subr.mxu0 0.0
        %5272 = vmatpush1.msra.mxu0 0.0
        %5273 = vmatprep.subr.mxu0 0.0
        %5274 = vmatpush1.msra.mxu0 0.0
        %5275 = vmatprep.subr.mxu0 0.0
        %5276 = vmatpush1.msra.mxu0 0.0
        %5277 = vmatprep.subr.mxu0 0.0
        %5278 = vmatpush1.msra.mxu0 0.0
        %5279 = vmatprep.subr.mxu0 0.0
        %5280 = vmatpush1.msra.mxu0 0.0
        %5281 = vmatprep.subr.mxu0 0.0
        %5282 = vmatpush1.msra.mxu0 0.0
        %5283 = vmatprep.subr.mxu0 0.0
        %5284 = vmatpush1.msra.mxu0 0.0
        %5285 = vmatprep.subr.mxu0 0.0
        %5286 = vmatpush1.msra.mxu0 0.0
        %5287 = vmatprep.subr.mxu0 0.0
        %5288 = vmatpush1.msra.mxu0 0.0
        %5289 = vmatprep.subr.mxu0 0.0
        %5290 = vmatpush1.msra.mxu0 0.0
        %5291 = vmatprep.subr.mxu0 0.0
        %5292 = vmatpush1.msra.mxu0 0.0
        %5293 = vmatprep.subr.mxu0 0.0
        %5294 = vmatpush1.msra.mxu0 0.0
        %5295 = vmatprep.subr.mxu0 0.0
        %5296 = vmatpush1.msra.mxu0 0.0
        %5297 = vmatprep.subr.mxu0 0.0
        %5298 = vmatpush1.msra.mxu0 0.0
        %5299 = vmatprep.subr.mxu0 0.0
        %5300 = vmatpush1.msra.mxu0 0.0
        %5301 = vmatprep.subr.mxu0 0.0
        %5302 = vmatpush1.msra.mxu0 0.0
        %5303 = vmatprep.subr.mxu0 0.0
        %5304 = vmatpush1.msra.mxu0 0.0
        %5305 = vmatprep.subr.mxu0 0.0
        %5306 = vmatpush1.msra.mxu0 0.0
        %5307 = vmatprep.subr.mxu0 0.0
        %5308 = vmatpush1.msra.mxu0 0.0
        %5309 = vmatprep.subr.mxu0 0.0
        %5310 = vmatpush1.msra.mxu0 0.0
        %5311 = vmatprep.mubr.f32.mxu0 0.0
        %5312 = vmatmul.mubr.f32.gmra.mrb[0].mxu0 %v5245
        %v5313 = vpop.f32.mrb[0].mxu0
        %v5314 = vadd.f32 0.0, %v5313
        %v5315 = vpop.f32.mrb[0].mxu0
        %5316 = vdwg.mxu0
        %5317 = vrot.lane.b32.xlu0 %v543, 40
        %v5318 = vpop.permute.xlu0 %5317
        %v5321 = vsel %vm579, %v5234, 0
        %5323 = vmatprep.subr.mxu0 0.0
        %5324 = vmatpush1.msra.mxu0 %v5318
        %5325 = vmatprep.subr.mxu0 0.0
        %5326 = vmatpush1.msra.mxu0 0.0
        %5327 = vmatprep.subr.mxu0 0.0
        %5328 = vmatpush1.msra.mxu0 0.0
        %5329 = vmatprep.subr.mxu0 0.0
        %5330 = vmatpush1.msra.mxu0 0.0
        %5331 = vmatprep.subr.mxu0 0.0
        %5332 = vmatpush1.msra.mxu0 0.0
        %5333 = vmatprep.subr.mxu0 0.0
        %5334 = vmatpush1.msra.mxu0 0.0
        %5335 = vmatprep.subr.mxu0 0.0
        %5336 = vmatpush1.msra.mxu0 0.0
        %5337 = vmatprep.subr.mxu0 0.0
        %5338 = vmatpush1.msra.mxu0 0.0
        %5339 = vmatprep.subr.mxu0 0.0
        %5340 = vmatpush1.msra.mxu0 0.0
        %5341 = vmatprep.subr.mxu0 0.0
        %5342 = vmatpush1.msra.mxu0 0.0
        %5343 = vmatprep.subr.mxu0 0.0
        %5344 = vmatpush1.msra.mxu0 0.0
        %5345 = vmatprep.subr.mxu0 0.0
        %5346 = vmatpush1.msra.mxu0 0.0
        %5347 = vmatprep.subr.mxu0 0.0
        %5348 = vmatpush1.msra.mxu0 0.0
        %5349 = vmatprep.subr.mxu0 0.0
        %5350 = vmatpush1.msra.mxu0 0.0
        %5351 = vmatprep.subr.mxu0 0.0
        %5352 = vmatpush1.msra.mxu0 0.0
        %5353 = vmatprep.subr.mxu0 0.0
        %5354 = vmatpush1.msra.mxu0 0.0
        %5355 = vmatprep.subr.mxu0 0.0
        %5356 = vmatpush1.msra.mxu0 0.0
        %5357 = vmatprep.subr.mxu0 0.0
        %5358 = vmatpush1.msra.mxu0 0.0
        %5359 = vmatprep.subr.mxu0 0.0
        %5360 = vmatpush1.msra.mxu0 0.0
        %5361 = vmatprep.subr.mxu0 0.0
        %5362 = vmatpush1.msra.mxu0 0.0
        %5363 = vmatprep.subr.mxu0 0.0
        %5364 = vmatpush1.msra.mxu0 0.0
        %5365 = vmatprep.subr.mxu0 0.0
        %5366 = vmatpush1.msra.mxu0 0.0
        %5367 = vmatprep.subr.mxu0 0.0
        %5368 = vmatpush1.msra.mxu0 0.0
        %5369 = vmatprep.subr.mxu0 0.0
        %5370 = vmatpush1.msra.mxu0 0.0
        %5371 = vmatprep.subr.mxu0 0.0
        %5372 = vmatpush1.msra.mxu0 0.0
        %5373 = vmatprep.subr.mxu0 0.0
        %5374 = vmatpush1.msra.mxu0 0.0
        %5375 = vmatprep.subr.mxu0 0.0
        %5376 = vmatpush1.msra.mxu0 0.0
        %5377 = vmatprep.subr.mxu0 0.0
        %5378 = vmatpush1.msra.mxu0 0.0
        %5379 = vmatprep.subr.mxu0 0.0
        %5380 = vmatpush1.msra.mxu0 0.0
        %5381 = vmatprep.subr.mxu0 0.0
        %5382 = vmatpush1.msra.mxu0 0.0
        %5383 = vmatprep.subr.mxu0 0.0
        %5384 = vmatpush1.msra.mxu0 0.0
        %5385 = vmatprep.subr.mxu0 0.0
        %5386 = vmatpush1.msra.mxu0 0.0
        %5387 = vmatprep.mubr.f32.mxu0 0.0
        %5388 = vmatmul.mubr.f32.gmra.mrb[0].mxu0 %v5321
        %v5389 = vpop.f32.mrb[0].mxu0
        %v5390 = vadd.f32 0.0, %v5389
        %v5391 = vpop.f32.mrb[0].mxu0
        %5392 = vdwg.mxu0
        %5393 = vrot.lane.b32.xlu0 %v548, 40
        %v5394 = vpop.permute.xlu0 %5393
        %v5397 = vsel %vm579, %v5235, 0
        %5399 = vmatprep.subr.mxu0 0.0
        %5400 = vmatpush1.msra.mxu0 %v5394
        %5401 = vmatprep.subr.mxu0 0.0
        %5402 = vmatpush1.msra.mxu0 0.0
        %5403 = vmatprep.subr.mxu0 0.0
        %5404 = vmatpush1.msra.mxu0 0.0
        %5405 = vmatprep.subr.mxu0 0.0
        %5406 = vmatpush1.msra.mxu0 0.0
        %5407 = vmatprep.subr.mxu0 0.0
        %5408 = vmatpush1.msra.mxu0 0.0
        %5409 = vmatprep.subr.mxu0 0.0
        %5410 = vmatpush1.msra.mxu0 0.0
        %5411 = vmatprep.subr.mxu0 0.0
        %5412 = vmatpush1.msra.mxu0 0.0
        %5413 = vmatprep.subr.mxu0 0.0
        %5414 = vmatpush1.msra.mxu0 0.0
        %5415 = vmatprep.subr.mxu0 0.0
        %5416 = vmatpush1.msra.mxu0 0.0
        %5417 = vmatprep.subr.mxu0 0.0
        %5418 = vmatpush1.msra.mxu0 0.0
        %5419 = vmatprep.subr.mxu0 0.0
        %5420 = vmatpush1.msra.mxu0 0.0
        %5421 = vmatprep.subr.mxu0 0.0
        %5422 = vmatpush1.msra.mxu0 0.0
        %5423 = vmatprep.subr.mxu0 0.0
        %5424 = vmatpush1.msra.mxu0 0.0
        %5425 = vmatprep.subr.mxu0 0.0
        %5426 = vmatpush1.msra.mxu0 0.0
        %5427 = vmatprep.subr.mxu0 0.0
        %5428 = vmatpush1.msra.mxu0 0.0
        %5429 = vmatprep.subr.mxu0 0.0
        %5430 = vmatpush1.msra.mxu0 0.0
        %5431 = vmatprep.subr.mxu0 0.0
        %5432 = vmatpush1.msra.mxu0 0.0
        %5433 = vmatprep.subr.mxu0 0.0
        %5434 = vmatpush1.msra.mxu0 0.0
        %5435 = vmatprep.subr.mxu0 0.0
        %5436 = vmatpush1.msra.mxu0 0.0
        %5437 = vmatprep.subr.mxu0 0.0
        %5438 = vmatpush1.msra.mxu0 0.0
        %5439 = vmatprep.subr.mxu0 0.0
        %5440 = vmatpush1.msra.mxu0 0.0
        %5441 = vmatprep.subr.mxu0 0.0
        %5442 = vmatpush1.msra.mxu0 0.0
        %5443 = vmatprep.subr.mxu0 0.0
        %5444 = vmatpush1.msra.mxu0 0.0
        %5445 = vmatprep.subr.mxu0 0.0
        %5446 = vmatpush1.msra.mxu0 0.0
        %5447 = vmatprep.subr.mxu0 0.0
        %5448 = vmatpush1.msra.mxu0 0.0
        %5449 = vmatprep.subr.mxu0 0.0
        %5450 = vmatpush1.msra.mxu0 0.0
        %5451 = vmatprep.subr.mxu0 0.0
        %5452 = vmatpush1.msra.mxu0 0.0
        %5453 = vmatprep.subr.mxu0 0.0
        %5454 = vmatpush1.msra.mxu0 0.0
        %5455 = vmatprep.subr.mxu0 0.0
        %5456 = vmatpush1.msra.mxu0 0.0
        %5457 = vmatprep.subr.mxu0 0.0
        %5458 = vmatpush1.msra.mxu0 0.0
        %5459 = vmatprep.subr.mxu0 0.0
        %5460 = vmatpush1.msra.mxu0 0.0
        %5461 = vmatprep.subr.mxu0 0.0
        %5462 = vmatpush1.msra.mxu0 0.0
        %5463 = vmatprep.mubr.f32.mxu0 0.0
        %5464 = vmatmul.mubr.f32.gmra.mrb[0].mxu0 %v5397
        %v5465 = vpop.f32.mrb[0].mxu0
        %v5466 = vadd.f32 0.0, %v5465
        %v5467 = vpop.f32.mrb[0].mxu0
        %5468 = vdwg.mxu0
        %5469 = vrot.lane.b32.xlu0 %v553, 40
        %v5470 = vpop.permute.xlu0 %5469
        %v5473 = vsel %vm579, %v5236, 0
        %5475 = vmatprep.subr.mxu0 0.0
        %5476 = vmatpush1.msra.mxu0 %v5470
        %5477 = vmatprep.subr.mxu0 0.0
        %5478 = vmatpush1.msra.mxu0 0.0
        %5479 = vmatprep.subr.mxu0 0.0
        %5480 = vmatpush1.msra.mxu0 0.0
        %5481 = vmatprep.subr.mxu0 0.0
        %5482 = vmatpush1.msra.mxu0 0.0
        %5483 = vmatprep.subr.mxu0 0.0
        %5484 = vmatpush1.msra.mxu0 0.0
        %5485 = vmatprep.subr.mxu0 0.0
        %5486 = vmatpush1.msra.mxu0 0.0
        %5487 = vmatprep.subr.mxu0 0.0
        %5488 = vmatpush1.msra.mxu0 0.0
        %5489 = vmatprep.subr.mxu0 0.0
        %5490 = vmatpush1.msra.mxu0 0.0
        %5491 = vmatprep.subr.mxu0 0.0
        %5492 = vmatpush1.msra.mxu0 0.0
        %5493 = vmatprep.subr.mxu0 0.0
        %5494 = vmatpush1.msra.mxu0 0.0
        %5495 = vmatprep.subr.mxu0 0.0
        %5496 = vmatpush1.msra.mxu0 0.0
        %5497 = vmatprep.subr.mxu0 0.0
        %5498 = vmatpush1.msra.mxu0 0.0
        %5499 = vmatprep.subr.mxu0 0.0
        %5500 = vmatpush1.msra.mxu0 0.0
        %5501 = vmatprep.subr.mxu0 0.0
        %5502 = vmatpush1.msra.mxu0 0.0
        %5503 = vmatprep.subr.mxu0 0.0
        %5504 = vmatpush1.msra.mxu0 0.0
        %5505 = vmatprep.subr.mxu0 0.0
        %5506 = vmatpush1.msra.mxu0 0.0
        %5507 = vmatprep.subr.mxu0 0.0
        %5508 = vmatpush1.msra.mxu0 0.0
        %5509 = vmatprep.subr.mxu0 0.0
        %5510 = vmatpush1.msra.mxu0 0.0
        %5511 = vmatprep.subr.mxu0 0.0
        %5512 = vmatpush1.msra.mxu0 0.0
        %5513 = vmatprep.subr.mxu0 0.0
        %5514 = vmatpush1.msra.mxu0 0.0
        %5515 = vmatprep.subr.mxu0 0.0
        %5516 = vmatpush1.msra.mxu0 0.0
        %5517 = vmatprep.subr.mxu0 0.0
        %5518 = vmatpush1.msra.mxu0 0.0
        %5519 = vmatprep.subr.mxu0 0.0
        %5520 = vmatpush1.msra.mxu0 0.0
        %5521 = vmatprep.subr.mxu0 0.0
        %5522 = vmatpush1.msra.mxu0 0.0
        %5523 = vmatprep.subr.mxu0 0.0
        %5524 = vmatpush1.msra.mxu0 0.0
        %5525 = vmatprep.subr.mxu0 0.0
        %5526 = vmatpush1.msra.mxu0 0.0
        %5527 = vmatprep.subr.mxu0 0.0
        %5528 = vmatpush1.msra.mxu0 0.0
        %5529 = vmatprep.subr.mxu0 0.0
        %5530 = vmatpush1.msra.mxu0 0.0
        %5531 = vmatprep.subr.mxu0 0.0
        %5532 = vmatpush1.msra.mxu0 0.0
        %5533 = vmatprep.subr.mxu0 0.0
        %5534 = vmatpush1.msra.mxu0 0.0
        %5535 = vmatprep.subr.mxu0 0.0
        %5536 = vmatpush1.msra.mxu0 0.0
        %5537 = vmatprep.subr.mxu0 0.0
        %5538 = vmatpush1.msra.mxu0 0.0
        %5539 = vmatprep.mubr.f32.mxu0 0.0
        %5540 = vmatmul.mubr.f32.gmra.mrb[0].mxu0 %v5473
        %v5541 = vpop.f32.mrb[0].mxu0
        %v5542 = vadd.f32 0.0, %v5541
        %v5543 = vpop.f32.mrb[0].mxu0
        %5544 = vdwg.mxu0
        %5545 = vrot.lane.b32.xlu0 %v558, 40
        %v5546 = vpop.permute.xlu0 %5545
        %v5549 = vsel %vm579, %v5237, 0
        %5551 = vmatprep.subr.mxu0 0.0
        %5552 = vmatpush1.msra.mxu0 %v5546
        %5553 = vmatprep.subr.mxu0 0.0
        %5554 = vmatpush1.msra.mxu0 0.0
        %5555 = vmatprep.subr.mxu0 0.0
        %5556 = vmatpush1.msra.mxu0 0.0
        %5557 = vmatprep.subr.mxu0 0.0
        %5558 = vmatpush1.msra.mxu0 0.0
        %5559 = vmatprep.subr.mxu0 0.0
        %5560 = vmatpush1.msra.mxu0 0.0
        %5561 = vmatprep.subr.mxu0 0.0
        %5562 = vmatpush1.msra.mxu0 0.0
        %5563 = vmatprep.subr.mxu0 0.0
        %5564 = vmatpush1.msra.mxu0 0.0
        %5565 = vmatprep.subr.mxu0 0.0
        %5566 = vmatpush1.msra.mxu0 0.0
        %5567 = vmatprep.subr.mxu0 0.0
        %5568 = vmatpush1.msra.mxu0 0.0
        %5569 = vmatprep.subr.mxu0 0.0
        %5570 = vmatpush1.msra.mxu0 0.0
        %5571 = vmatprep.subr.mxu0 0.0
        %5572 = vmatpush1.msra.mxu0 0.0
        %5573 = vmatprep.subr.mxu0 0.0
        %5574 = vmatpush1.msra.mxu0 0.0
        %5575 = vmatprep.subr.mxu0 0.0
        %5576 = vmatpush1.msra.mxu0 0.0
        %5577 = vmatprep.subr.mxu0 0.0
        %5578 = vmatpush1.msra.mxu0 0.0
        %5579 = vmatprep.subr.mxu0 0.0
        %5580 = vmatpush1.msra.mxu0 0.0
        %5581 = vmatprep.subr.mxu0 0.0
        %5582 = vmatpush1.msra.mxu0 0.0
        %5583 = vmatprep.subr.mxu0 0.0
        %5584 = vmatpush1.msra.mxu0 0.0
        %5585 = vmatprep.subr.mxu0 0.0
        %5586 = vmatpush1.msra.mxu0 0.0
        %5587 = vmatprep.subr.mxu0 0.0
        %5588 = vmatpush1.msra.mxu0 0.0
        %5589 = vmatprep.subr.mxu0 0.0
        %5590 = vmatpush1.msra.mxu0 0.0
        %5591 = vmatprep.subr.mxu0 0.0
        %5592 = vmatpush1.msra.mxu0 0.0
        %5593 = vmatprep.subr.mxu0 0.0
        %5594 = vmatpush1.msra.mxu0 0.0
        %5595 = vmatprep.subr.mxu0 0.0
        %5596 = vmatpush1.msra.mxu0 0.0
        %5597 = vmatprep.subr.mxu0 0.0
        %5598 = vmatpush1.msra.mxu0 0.0
        %5599 = vmatprep.subr.mxu0 0.0
        %5600 = vmatpush1.msra.mxu0 0.0
        %5601 = vmatprep.subr.mxu0 0.0
        %5602 = vmatpush1.msra.mxu0 0.0
        %5603 = vmatprep.subr.mxu0 0.0
        %5604 = vmatpush1.msra.mxu0 0.0
        %5605 = vmatprep.subr.mxu0 0.0
        %5606 = vmatpush1.msra.mxu0 0.0
        %5607 = vmatprep.subr.mxu0 0.0
        %5608 = vmatpush1.msra.mxu0 0.0
        %5609 = vmatprep.subr.mxu0 0.0
        %5610 = vmatpush1.msra.mxu0 0.0
        %5611 = vmatprep.subr.mxu0 0.0
        %5612 = vmatpush1.msra.mxu0 0.0
        %5613 = vmatprep.subr.mxu0 0.0
        %5614 = vmatpush1.msra.mxu0 0.0
        %5615 = vmatprep.mubr.f32.mxu0 0.0
        %5616 = vmatmul.mubr.f32.gmra.mrb[0].mxu0 %v5549
        %v5617 = vpop.f32.mrb[0].mxu0
        %v5618 = vadd.f32 0.0, %v5617
        %v5619 = vpop.f32.mrb[0].mxu0
        %5620 = vdwg.mxu0
        %5621 = vrot.lane.b32.xlu0 %v563, 40
        %v5622 = vpop.permute.xlu0 %5621
        %v5625 = vsel %vm579, %v5238, 0
        %5627 = vmatprep.subr.mxu0 0.0
        %5628 = vmatpush1.msra.mxu0 %v5622
        %5629 = vmatprep.subr.mxu0 0.0
        %5630 = vmatpush1.msra.mxu0 0.0
        %5631 = vmatprep.subr.mxu0 0.0
        %5632 = vmatpush1.msra.mxu0 0.0
        %5633 = vmatprep.subr.mxu0 0.0
        %5634 = vmatpush1.msra.mxu0 0.0
        %5635 = vmatprep.subr.mxu0 0.0
        %5636 = vmatpush1.msra.mxu0 0.0
        %5637 = vmatprep.subr.mxu0 0.0
        %5638 = vmatpush1.msra.mxu0 0.0
        %5639 = vmatprep.subr.mxu0 0.0
        %5640 = vmatpush1.msra.mxu0 0.0
        %5641 = vmatprep.subr.mxu0 0.0
        %5642 = vmatpush1.msra.mxu0 0.0
        %5643 = vmatprep.subr.mxu0 0.0
        %5644 = vmatpush1.msra.mxu0 0.0
        %5645 = vmatprep.subr.mxu0 0.0
        %5646 = vmatpush1.msra.mxu0 0.0
        %5647 = vmatprep.subr.mxu0 0.0
        %5648 = vmatpush1.msra.mxu0 0.0
        %5649 = vmatprep.subr.mxu0 0.0
        %5650 = vmatpush1.msra.mxu0 0.0
        %5651 = vmatprep.subr.mxu0 0.0
        %5652 = vmatpush1.msra.mxu0 0.0
        %5653 = vmatprep.subr.mxu0 0.0
        %5654 = vmatpush1.msra.mxu0 0.0
        %5655 = vmatprep.subr.mxu0 0.0
        %5656 = vmatpush1.msra.mxu0 0.0
        %5657 = vmatprep.subr.mxu0 0.0
        %5658 = vmatpush1.msra.mxu0 0.0
        %5659 = vmatprep.subr.mxu0 0.0
        %5660 = vmatpush1.msra.mxu0 0.0
        %5661 = vmatprep.subr.mxu0 0.0
        %5662 = vmatpush1.msra.mxu0 0.0
        %5663 = vmatprep.subr.mxu0 0.0
        %5664 = vmatpush1.msra.mxu0 0.0
        %5665 = vmatprep.subr.mxu0 0.0
        %5666 = vmatpush1.msra.mxu0 0.0
        %5667 = vmatprep.subr.mxu0 0.0
        %5668 = vmatpush1.msra.mxu0 0.0
        %5669 = vmatprep.subr.mxu0 0.0
        %5670 = vmatpush1.msra.mxu0 0.0
        %5671 = vmatprep.subr.mxu0 0.0
        %5672 = vmatpush1.msra.mxu0 0.0
        %5673 = vmatprep.subr.mxu0 0.0
        %5674 = vmatpush1.msra.mxu0 0.0
        %5675 = vmatprep.subr.mxu0 0.0
        %5676 = vmatpush1.msra.mxu0 0.0
        %5677 = vmatprep.subr.mxu0 0.0
        %5678 = vmatpush1.msra.mxu0 0.0
        %5679 = vmatprep.subr.mxu0 0.0
        %5680 = vmatpush1.msra.mxu0 0.0
        %5681 = vmatprep.subr.mxu0 0.0
        %5682 = vmatpush1.msra.mxu0 0.0
        %5683 = vmatprep.subr.mxu0 0.0
        %5684 = vmatpush1.msra.mxu0 0.0
        %5685 = vmatprep.subr.mxu0 0.0
        %5686 = vmatpush1.msra.mxu0 0.0
        %5687 = vmatprep.subr.mxu0 0.0
        %5688 = vmatpush1.msra.mxu0 0.0
        %5689 = vmatprep.subr.mxu0 0.0
        %5690 = vmatpush1.msra.mxu0 0.0
        %5691 = vmatprep.mubr.f32.mxu0 0.0
        %5692 = vmatmul.mubr.f32.gmra.mrb[0].mxu0 %v5625
        %v5693 = vpop.f32.mrb[0].mxu0
        %v5694 = vadd.f32 0.0, %v5693
        %v5695 = vpop.f32.mrb[0].mxu0
        %5696 = vdwg.mxu0
        %5697 = vrot.lane.b32.xlu0 %v568, 40
        %v5698 = vpop.permute.xlu0 %5697
        %v5701 = vsel %vm579, %v5239, 0
        %5703 = vmatprep.subr.mxu0 0.0
        %5704 = vmatpush1.msra.mxu0 %v5698
        %5705 = vmatprep.subr.mxu0 0.0
        %5706 = vmatpush1.msra.mxu0 0.0
        %5707 = vmatprep.subr.mxu0 0.0
        %5708 = vmatpush1.msra.mxu0 0.0
        %5709 = vmatprep.subr.mxu0 0.0
        %5710 = vmatpush1.msra.mxu0 0.0
        %5711 = vmatprep.subr.mxu0 0.0
        %5712 = vmatpush1.msra.mxu0 0.0
        %5713 = vmatprep.subr.mxu0 0.0
        %5714 = vmatpush1.msra.mxu0 0.0
        %5715 = vmatprep.subr.mxu0 0.0
        %5716 = vmatpush1.msra.mxu0 0.0
        %5717 = vmatprep.subr.mxu0 0.0
        %5718 = vmatpush1.msra.mxu0 0.0
        %5719 = vmatprep.subr.mxu0 0.0
        %5720 = vmatpush1.msra.mxu0 0.0
        %5721 = vmatprep.subr.mxu0 0.0
        %5722 = vmatpush1.msra.mxu0 0.0
        %5723 = vmatprep.subr.mxu0 0.0
        %5724 = vmatpush1.msra.mxu0 0.0
        %5725 = vmatprep.subr.mxu0 0.0
        %5726 = vmatpush1.msra.mxu0 0.0
        %5727 = vmatprep.subr.mxu0 0.0
        %5728 = vmatpush1.msra.mxu0 0.0
        %5729 = vmatprep.subr.mxu0 0.0
        %5730 = vmatpush1.msra.mxu0 0.0
        %5731 = vmatprep.subr.mxu0 0.0
        %5732 = vmatpush1.msra.mxu0 0.0
        %5733 = vmatprep.subr.mxu0 0.0
        %5734 = vmatpush1.msra.mxu0 0.0
        %5735 = vmatprep.subr.mxu0 0.0
        %5736 = vmatpush1.msra.mxu0 0.0
        %5737 = vmatprep.subr.mxu0 0.0
        %5738 = vmatpush1.msra.mxu0 0.0
        %5739 = vmatprep.subr.mxu0 0.0
        %5740 = vmatpush1.msra.mxu0 0.0
        %5741 = vmatprep.subr.mxu0 0.0
        %5742 = vmatpush1.msra.mxu0 0.0
        %5743 = vmatprep.subr.mxu0 0.0
        %5744 = vmatpush1.msra.mxu0 0.0
        %5745 = vmatprep.subr.mxu0 0.0
        %5746 = vmatpush1.msra.mxu0 0.0
        %5747 = vmatprep.subr.mxu0 0.0
        %5748 = vmatpush1.msra.mxu0 0.0
        %5749 = vmatprep.subr.mxu0 0.0
        %5750 = vmatpush1.msra.mxu0 0.0
        %5751 = vmatprep.subr.mxu0 0.0
        %5752 = vmatpush1.msra.mxu0 0.0
        %5753 = vmatprep.subr.mxu0 0.0
        %5754 = vmatpush1.msra.mxu0 0.0
        %5755 = vmatprep.subr.mxu0 0.0
        %5756 = vmatpush1.msra.mxu0 0.0
        %5757 = vmatprep.subr.mxu0 0.0
        %5758 = vmatpush1.msra.mxu0 0.0
        %5759 = vmatprep.subr.mxu0 0.0
        %5760 = vmatpush1.msra.mxu0 0.0
        %5761 = vmatprep.subr.mxu0 0.0
        %5762 = vmatpush1.msra.mxu0 0.0
        %5763 = vmatprep.subr.mxu0 0.0
        %5764 = vmatpush1.msra.mxu0 0.0
        %5765 = vmatprep.subr.mxu0 0.0
        %5766 = vmatpush1.msra.mxu0 0.0
        %5767 = vmatprep.mubr.f32.mxu0 0.0
        %5768 = vmatmul.mubr.f32.gmra.mrb[0].mxu0 %v5701
        %v5769 = vpop.f32.mrb[0].mxu0
        %v5770 = vadd.f32 0.0, %v5769
        %v5771 = vpop.f32.mrb[0].mxu0
        %5772 = vdwg.mxu0
        %5773 = vrot.lane.b32.xlu0 %v573, 40
        %v5774 = vpop.permute.xlu0 %5773
        %v5777 = vsel %vm579, %v5240, 0
        %5779 = vmatprep.subr.mxu0 0.0
        %5780 = vmatpush1.msra.mxu0 %v5774
        %5781 = vmatprep.subr.mxu0 0.0
        %5782 = vmatpush1.msra.mxu0 0.0
        %5783 = vmatprep.subr.mxu0 0.0
        %5784 = vmatpush1.msra.mxu0 0.0
        %5785 = vmatprep.subr.mxu0 0.0
        %5786 = vmatpush1.msra.mxu0 0.0
        %5787 = vmatprep.subr.mxu0 0.0
        %5788 = vmatpush1.msra.mxu0 0.0
        %5789 = vmatprep.subr.mxu0 0.0
        %5790 = vmatpush1.msra.mxu0 0.0
        %5791 = vmatprep.subr.mxu0 0.0
        %5792 = vmatpush1.msra.mxu0 0.0
        %5793 = vmatprep.subr.mxu0 0.0
        %5794 = vmatpush1.msra.mxu0 0.0
        %5795 = vmatprep.subr.mxu0 0.0
        %5796 = vmatpush1.msra.mxu0 0.0
        %5797 = vmatprep.subr.mxu0 0.0
        %5798 = vmatpush1.msra.mxu0 0.0
        %5799 = vmatprep.subr.mxu0 0.0
        %5800 = vmatpush1.msra.mxu0 0.0
        %5801 = vmatprep.subr.mxu0 0.0
        %5802 = vmatpush1.msra.mxu0 0.0
        %5803 = vmatprep.subr.mxu0 0.0
        %5804 = vmatpush1.msra.mxu0 0.0
        %5805 = vmatprep.subr.mxu0 0.0
        %5806 = vmatpush1.msra.mxu0 0.0
        %5807 = vmatprep.subr.mxu0 0.0
        %5808 = vmatpush1.msra.mxu0 0.0
        %5809 = vmatprep.subr.mxu0 0.0
        %5810 = vmatpush1.msra.mxu0 0.0
        %5811 = vmatprep.subr.mxu0 0.0
        %5812 = vmatpush1.msra.mxu0 0.0
        %5813 = vmatprep.subr.mxu0 0.0
        %5814 = vmatpush1.msra.mxu0 0.0
        %5815 = vmatprep.subr.mxu0 0.0
        %5816 = vmatpush1.msra.mxu0 0.0
        %5817 = vmatprep.subr.mxu0 0.0
        %5818 = vmatpush1.msra.mxu0 0.0
        %5819 = vmatprep.subr.mxu0 0.0
        %5820 = vmatpush1.msra.mxu0 0.0
        %5821 = vmatprep.subr.mxu0 0.0
        %5822 = vmatpush1.msra.mxu0 0.0
        %5823 = vmatprep.subr.mxu0 0.0
        %5824 = vmatpush1.msra.mxu0 0.0
        %5825 = vmatprep.subr.mxu0 0.0
        %5826 = vmatpush1.msra.mxu0 0.0
        %5827 = vmatprep.subr.mxu0 0.0
        %5828 = vmatpush1.msra.mxu0 0.0
        %5829 = vmatprep.subr.mxu0 0.0
        %5830 = vmatpush1.msra.mxu0 0.0
        %5831 = vmatprep.subr.mxu0 0.0
        %5832 = vmatpush1.msra.mxu0 0.0
        %5833 = vmatprep.subr.mxu0 0.0
        %5834 = vmatpush1.msra.mxu0 0.0
        %5835 = vmatprep.subr.mxu0 0.0
        %5836 = vmatpush1.msra.mxu0 0.0
        %5837 = vmatprep.subr.mxu0 0.0
        %5838 = vmatpush1.msra.mxu0 0.0
        %5839 = vmatprep.subr.mxu0 0.0
        %5840 = vmatpush1.msra.mxu0 0.0
        %5841 = vmatprep.subr.mxu0 0.0
        %5842 = vmatpush1.msra.mxu0 0.0
        %5843 = vmatprep.mubr.f32.mxu0 0.0
        %5844 = vmatmul.mubr.f32.gmra.mrb[0].mxu0 %v5777
        %v5845 = vpop.f32.mrb[0].mxu0
        %v5846 = vadd.f32 0.0, %v5845
        %v5847 = vpop.f32.mrb[0].mxu0
        %5848 = vdwg.mxu0
        %5857 = vrot.lane.b32.xlu0 %v2674, 8
        %v5858 = vpop.permute.xlu0 %5857
        %5859 = vrot.lane.b32.xlu0 %v2750, 8
        %v5860 = vpop.permute.xlu0 %5859
        %5861 = vrot.lane.b32.xlu0 %v2826, 8
        %v5862 = vpop.permute.xlu0 %5861
        %5863 = vrot.lane.b32.xlu0 %v2902, 8
        %v5864 = vpop.permute.xlu0 %5863
        %5865 = vrot.lane.b32.xlu0 %v2978, 8
        %v5866 = vpop.permute.xlu0 %5865
        %5867 = vrot.lane.b32.xlu0 %v3054, 8
        %v5868 = vpop.permute.xlu0 %5867
        %5869 = vrot.lane.b32.xlu0 %v3130, 8
        %v5870 = vpop.permute.xlu0 %5869
        %5871 = vrot.lane.b32.xlu0 %v3206, 8
        %v5872 = vpop.permute.xlu0 %5871
        %5889 = vrot.lane.b32.xlu0 %v3994, 16
        %v5890 = vpop.permute.xlu0 %5889
        %5891 = vrot.lane.b32.xlu0 %v4070, 16
        %v5892 = vpop.permute.xlu0 %5891
        %5893 = vrot.lane.b32.xlu0 %v4146, 16
        %v5894 = vpop.permute.xlu0 %5893
        %5895 = vrot.lane.b32.xlu0 %v4222, 16
        %v5896 = vpop.permute.xlu0 %5895
        %5897 = vrot.lane.b32.xlu0 %v4298, 16
        %v5898 = vpop.permute.xlu0 %5897
        %5899 = vrot.lane.b32.xlu0 %v4374, 16
        %v5900 = vpop.permute.xlu0 %5899
        %5901 = vrot.lane.b32.xlu0 %v4450, 16
        %v5902 = vpop.permute.xlu0 %5901
        %5903 = vrot.lane.b32.xlu0 %v4526, 16
        %v5904 = vpop.permute.xlu0 %5903
        %5921 = vrot.lane.b32.xlu0 %v5314, 24
        %v5922 = vpop.permute.xlu0 %5921
        %5923 = vrot.lane.b32.xlu0 %v5390, 24
        %v5924 = vpop.permute.xlu0 %5923
        %5925 = vrot.lane.b32.xlu0 %v5466, 24
        %v5926 = vpop.permute.xlu0 %5925
        %5927 = vrot.lane.b32.xlu0 %v5542, 24
        %v5928 = vpop.permute.xlu0 %5927
        %5929 = vrot.lane.b32.xlu0 %v5618, 24
        %v5930 = vpop.permute.xlu0 %5929
        %5931 = vrot.lane.b32.xlu0 %v5694, 24
        %v5932 = vpop.permute.xlu0 %5931
        %5933 = vrot.lane.b32.xlu0 %v5770, 24
        %v5934 = vpop.permute.xlu0 %5933
        %5935 = vrot.lane.b32.xlu0 %v5846, 24
        %v5936 = vpop.permute.xlu0 %5935
        %v5945 = vsel %vm579, %v1354, %v5858
        %v5946 = vsel %vm579, %v1430, %v5860
        %v5947 = vsel %vm579, %v1506, %v5862
        %v5948 = vsel %vm579, %v1582, %v5864
        %v5949 = vsel %vm579, %v1658, %v5866
        %v5950 = vsel %vm579, %v1734, %v5868
        %v5951 = vsel %vm579, %v1810, %v5870
        %v5952 = vsel %vm579, %v1886, %v5872
        %vm5953 = vcmask 130048
        %v5954 = vsel %vm5953, %v5945, %v5890
        %v5955 = vsel %vm5953, %v5946, %v5892
        %v5956 = vsel %vm5953, %v5947, %v5894
        %v5957 = vsel %vm5953, %v5948, %v5896
        %v5958 = vsel %vm5953, %v5949, %v5898
        %v5959 = vsel %vm5953, %v5950, %v5900
        %v5960 = vsel %vm5953, %v5951, %v5902
        %v5961 = vsel %vm5953, %v5952, %v5904
        %vm5962 = vcmask 195584
        %v5963 = vsel %vm5962, %v5954, %v5922
        %v5964 = vsel %vm5962, %v5955, %v5924
        %v5965 = vsel %vm5962, %v5956, %v5926
        %v5966 = vsel %vm5962, %v5957, %v5928
        %v5967 = vsel %vm5962, %v5958, %v5930
        %v5968 = vsel %vm5962, %v5959, %v5932
        %v5969 = vsel %vm5962, %v5960, %v5934
        %v5970 = vsel %vm5962, %v5961, %v5936
        %v5971 = vld [vmem:[%s2] sm:$0xff]
        %v5972 = vld [vmem:[%s2 + $0x8] sm:$0xff]
        %v5973 = vld [vmem:[%s2 + $0x10] sm:$0xff]
        %v5974 = vld [vmem:[%s2 + $0x18] sm:$0xff]
        %v5975 = vld [vmem:[%s3] sm:$0x1]
        %v5977 = vlaneseq
        %v5978 = vshrl.u32 %v5977, 7
        %v5979 = vsub.s32 0, %v5978
        %v5980 = vrot.slane %v5975, %v5979
        %v5983 = vsel %vm446, %v5963, 0
        %v5986 = vsel %vm446, %v5964, 0
        %v5989 = vsel %vm446, %v5965, 0
        %v5992 = vsel %vm446, %v5966, 0
        %v5995 = vsel %vm446, %v5967, 0
        %v5998 = vsel %vm446, %v5968, 0
        %v6001 = vsel %vm446, %v5969, 0
        %v6004 = vsel %vm446, %v5970, 0
        %6006 = vmatprep.subr.mxu0 0.0
        %6007 = vmatpush1.msra.mxu0 %v5971
        %6008 = vmatprep.subr.mxu0 0.0
        %6009 = vmatpush1.msra.mxu0 %v5972
        %6010 = vmatprep.subr.mxu0 0.0
        %6011 = vmatpush1.msra.mxu0 %v5973
        %6012 = vmatprep.subr.mxu0 0.0
        %6013 = vmatpush1.msra.mxu0 %v5974
        %6014 = vmatprep.subr.mxu0 0.0
        %6015 = vmatpush1.msra.mxu0 0.0
        %6016 = vmatprep.subr.mxu0 0.0
        %6017 = vmatpush1.msra.mxu0 0.0
        %6018 = vmatprep.subr.mxu0 0.0
        %6019 = vmatpush1.msra.mxu0 0.0
        %6020 = vmatprep.subr.mxu0 0.0
        %6021 = vmatpush1.msra.mxu0 0.0
        %6022 = vmatprep.subr.mxu0 0.0
        %6023 = vmatpush1.msra.mxu0 0.0
        %6024 = vmatprep.subr.mxu0 0.0
        %6025 = vmatpush1.msra.mxu0 0.0
        %6026 = vmatprep.subr.mxu0 0.0
        %6027 = vmatpush1.msra.mxu0 0.0
        %6028 = vmatprep.subr.mxu0 0.0
        %6029 = vmatpush1.msra.mxu0 0.0
        %6030 = vmatprep.subr.mxu0 0.0
        %6031 = vmatpush1.msra.mxu0 0.0
        %6032 = vmatprep.subr.mxu0 0.0
        %6033 = vmatpush1.msra.mxu0 0.0
        %6034 = vmatprep.subr.mxu0 0.0
        %6035 = vmatpush1.msra.mxu0 0.0
        %6036 = vmatprep.subr.mxu0 0.0
        %6037 = vmatpush1.msra.mxu0 0.0
        %6038 = vmatprep.subr.mxu0 0.0
        %6039 = vmatpush1.msra.mxu0 0.0
        %6040 = vmatprep.subr.mxu0 0.0
        %6041 = vmatpush1.msra.mxu0 0.0
        %6042 = vmatprep.subr.mxu0 0.0
        %6043 = vmatpush1.msra.mxu0 0.0
        %6044 = vmatprep.subr.mxu0 0.0
        %6045 = vmatpush1.msra.mxu0 0.0
        %6046 = vmatprep.subr.mxu0 0.0
        %6047 = vmatpush1.msra.mxu0 0.0
        %6048 = vmatprep.subr.mxu0 0.0
        %6049 = vmatpush1.msra.mxu0 0.0
        %6050 = vmatprep.subr.mxu0 0.0
        %6051 = vmatpush1.msra.mxu0 0.0
        %6052 = vmatprep.subr.mxu0 0.0
        %6053 = vmatpush1.msra.mxu0 0.0
        %6054 = vmatprep.subr.mxu0 0.0
        %6055 = vmatpush1.msra.mxu0 0.0
        %6056 = vmatprep.subr.mxu0 0.0
        %6057 = vmatpush1.msra.mxu0 0.0
        %6058 = vmatprep.subr.mxu0 0.0
        %6059 = vmatpush1.msra.mxu0 0.0
        %6060 = vmatprep.subr.mxu0 0.0
        %6061 = vmatpush1.msra.mxu0 0.0
        %6062 = vmatprep.subr.mxu0 0.0
        %6063 = vmatpush1.msra.mxu0 0.0
        %6064 = vmatprep.subr.mxu0 0.0
        %6065 = vmatpush1.msra.mxu0 0.0
        %6066 = vmatprep.subr.mxu0 0.0
        %6067 = vmatpush1.msra.mxu0 0.0
        %6068 = vmatprep.subr.mxu0 0.0
        %6069 = vmatpush1.msra.mxu0 0.0
        %6070 = vmatprep.mubr.f32.mxu0 0.0
        %6071 = vmatmul.mubr.f32.gmra.mrb[0].mxu0 %v5983
        %v6072 = vpop.f32.mrb[0].mxu0
        %v6073 = vadd.f32 %v5980, %v6072
        %v6074 = vpop.f32.mrb[0].mxu0
        %6075 = vmatprep.mubr.f32.mxu0 0.0
        %6076 = vmatmul.mubr.f32.gmra.mrb[0].mxu0 %v5986
        %v6077 = vpop.f32.mrb[0].mxu0
        %v6078 = vadd.f32 %v5980, %v6077
        %v6079 = vpop.f32.mrb[0].mxu0
        %6080 = vmatprep.mubr.f32.mxu0 0.0
        %6081 = vmatmul.mubr.f32.gmra.mrb[0].mxu0 %v5989
        %v6082 = vpop.f32.mrb[0].mxu0
        %v6083 = vadd.f32 %v5980, %v6082
        %v6084 = vpop.f32.mrb[0].mxu0
        %6085 = vmatprep.mubr.f32.mxu0 0.0
        %6086 = vmatmul.mubr.f32.gmra.mrb[0].mxu0 %v5992
        %v6087 = vpop.f32.mrb[0].mxu0
        %v6088 = vadd.f32 %v5980, %v6087
        %v6089 = vpop.f32.mrb[0].mxu0
        %6090 = vmatprep.mubr.f32.mxu0 0.0
        %6091 = vmatmul.mubr.f32.gmra.mrb[0].mxu0 %v5995
        %v6092 = vpop.f32.mrb[0].mxu0
        %v6093 = vadd.f32 %v5980, %v6092
        %v6094 = vpop.f32.mrb[0].mxu0
        %6095 = vmatprep.mubr.f32.mxu0 0.0
        %6096 = vmatmul.mubr.f32.gmra.mrb[0].mxu0 %v5998
        %v6097 = vpop.f32.mrb[0].mxu0
        %v6098 = vadd.f32 %v5980, %v6097
        %v6099 = vpop.f32.mrb[0].mxu0
        %6100 = vmatprep.mubr.f32.mxu0 0.0
        %6101 = vmatmul.mubr.f32.gmra.mrb[0].mxu0 %v6001
        %v6102 = vpop.f32.mrb[0].mxu0
        %v6103 = vadd.f32 %v5980, %v6102
        %v6104 = vpop.f32.mrb[0].mxu0
        %6105 = vmatprep.mubr.f32.mxu0 0.0
        %6106 = vmatmul.mubr.f32.gmra.mrb[0].mxu0 %v6004
        %v6107 = vpop.f32.mrb[0].mxu0
        %v6108 = vadd.f32 %v5980, %v6107
        %v6109 = vpop.f32.mrb[0].mxu0
        %6110 = vdwg.mxu0
        %v6111 = vadd.f32 %v434, %v6073
        %v6112 = vadd.f32 %v435, %v6078
        %v6113 = vadd.f32 %v436, %v6083
        %v6114 = vadd.f32 %v437, %v6088
        %v6115 = vadd.f32 %v438, %v6093
        %v6116 = vadd.f32 %v439, %v6098
        %v6117 = vadd.f32 %v440, %v6103
        %v6118 = vadd.f32 %v441, %v6108
        %v6119 = vld [vmem:[%s8] sm:$0x1]
        %v6120 = vld [vmem:[%s9] sm:$0x1]
        %v6121 = vsel %vm446, %v6111, 0.0
        %6122 = vadd.xlane.f32.xlu0 %v6121
        %v6123 = vpop.xlane.xlu0 %6122
        %v6124 = vsel %vm446, %v6112, 0.0
        %6125 = vadd.xlane.f32.xlu0 %v6124
        %v6126 = vpop.xlane.xlu0 %6125
        %v6127 = vsel %vm446, %v6113, 0.0
        %6128 = vadd.xlane.f32.xlu0 %v6127
        %v6129 = vpop.xlane.xlu0 %6128
        %v6130 = vsel %vm446, %v6114, 0.0
        %6131 = vadd.xlane.f32.xlu0 %v6130
        %v6132 = vpop.xlane.xlu0 %6131
        %v6133 = vsel %vm446, %v6115, 0.0
        %6134 = vadd.xlane.f32.xlu0 %v6133
        %v6135 = vpop.xlane.xlu0 %6134
        %v6136 = vsel %vm446, %v6116, 0.0
        %6137 = vadd.xlane.f32.xlu0 %v6136
        %v6138 = vpop.xlane.xlu0 %6137
        %v6139 = vsel %vm446, %v6117, 0.0
        %6140 = vadd.xlane.f32.xlu0 %v6139
        %v6141 = vpop.xlane.xlu0 %6140
        %v6142 = vsel %vm446, %v6118, 0.0
        %6143 = vadd.xlane.f32.xlu0 %v6142
        %v6144 = vpop.xlane.xlu0 %6143
        %v6145 = vrcp.pop 32.0
        %v6146 = vmul.f32 %v6123, %v6145
        %v6147 = vmul.f32 %v6126, %v6145
        %v6148 = vmul.f32 %v6129, %v6145
        %v6149 = vmul.f32 %v6132, %v6145
        %v6150 = vmul.f32 %v6135, %v6145
        %v6151 = vmul.f32 %v6138, %v6145
        %v6152 = vmul.f32 %v6141, %v6145
        %v6153 = vmul.f32 %v6144, %v6145
        %v6154 = vsub.f32 %v6111, %v6146
        %v6155 = vsub.f32 %v6112, %v6147
        %v6156 = vsub.f32 %v6113, %v6148
        %v6157 = vsub.f32 %v6114, %v6149
        %v6158 = vsub.f32 %v6115, %v6150
        %v6159 = vsub.f32 %v6116, %v6151
        %v6160 = vsub.f32 %v6117, %v6152
        %v6161 = vsub.f32 %v6118, %v6153
        %v6162 = vmul.f32 %v6154, %v6154
        %v6163 = vmul.f32 %v6155, %v6155
        %v6164 = vmul.f32 %v6156, %v6156
        %v6165 = vmul.f32 %v6157, %v6157
        %v6166 = vmul.f32 %v6158, %v6158
        %v6167 = vmul.f32 %v6159, %v6159
        %v6168 = vmul.f32 %v6160, %v6160
        %v6169 = vmul.f32 %v6161, %v6161
        %v6170 = vsel %vm446, %v6162, 0.0
        %6171 = vadd.xlane.f32.xlu0 %v6170
        %v6172 = vpop.xlane.xlu0 %6171
        %v6173 = vsel %vm446, %v6163, 0.0
        %6174 = vadd.xlane.f32.xlu0 %v6173
        %v6175 = vpop.xlane.xlu0 %6174
        %v6176 = vsel %vm446, %v6164, 0.0
        %6177 = vadd.xlane.f32.xlu0 %v6176
        %v6178 = vpop.xlane.xlu0 %6177
        %v6179 = vsel %vm446, %v6165, 0.0
        %6180 = vadd.xlane.f32.xlu0 %v6179
        %v6181 = vpop.xlane.xlu0 %6180
        %v6182 = vsel %vm446, %v6166, 0.0
        %6183 = vadd.xlane.f32.xlu0 %v6182
        %v6184 = vpop.xlane.xlu0 %6183
        %v6185 = vsel %vm446, %v6167, 0.0
        %6186 = vadd.xlane.f32.xlu0 %v6185
        %v6187 = vpop.xlane.xlu0 %6186
        %v6188 = vsel %vm446, %v6168, 0.0
        %6189 = vadd.xlane.f32.xlu0 %v6188
        %v6190 = vpop.xlane.xlu0 %6189
        %v6191 = vsel %vm446, %v6169, 0.0
        %6192 = vadd.xlane.f32.xlu0 %v6191
        %v6193 = vpop.xlane.xlu0 %6192
        %v6194 = vmul.f32 %v6172, %v6145
        %v6195 = vmul.f32 %v6175, %v6145
        %v6196 = vmul.f32 %v6178, %v6145
        %v6197 = vmul.f32 %v6181, %v6145
        %v6198 = vmul.f32 %v6184, %v6145
        %v6199 = vmul.f32 %v6187, %v6145
        %v6200 = vmul.f32 %v6190, %v6145
        %v6201 = vmul.f32 %v6193, %v6145
        %v6202 = vadd.f32 %v6194, 1e-06
        %v6203 = vadd.f32 %v6195, 1e-06
        %v6204 = vadd.f32 %v6196, 1e-06
        %v6205 = vadd.f32 %v6197, 1e-06
        %v6206 = vadd.f32 %v6198, 1e-06
        %v6207 = vadd.f32 %v6199, 1e-06
        %v6208 = vadd.f32 %v6200, 1e-06
        %v6209 = vadd.f32 %v6201, 1e-06
        %v6210 = vrsqrt.pop %v6202
        %v6211 = vrsqrt.pop %v6203
        %v6212 = vrsqrt.pop %v6204
        %v6213 = vrsqrt.pop %v6205
        %v6214 = vrsqrt.pop %v6206
        %v6215 = vrsqrt.pop %v6207
        %v6216 = vrsqrt.pop %v6208
        %v6217 = vrsqrt.pop %v6209
        %v6218 = vmul.f32 %v6154, %v6210
        %v6219 = vmul.f32 %v6155, %v6211
        %v6220 = vmul.f32 %v6156, %v6212
        %v6221 = vmul.f32 %v6157, %v6213
        %v6222 = vmul.f32 %v6158, %v6214
        %v6223 = vmul.f32 %v6159, %v6215
        %v6224 = vmul.f32 %v6160, %v6216
        %v6225 = vmul.f32 %v6161, %v6217
        %v6227 = vlaneseq
        %v6228 = vshrl.u32 %v6227, 7
        %v6229 = vsub.s32 0, %v6228
        %v6230 = vrot.slane %v6119, %v6229
        %v6232 = vmul.f32 %v6218, %v6230
        %v6233 = vmul.f32 %v6219, %v6230
        %v6234 = vmul.f32 %v6220, %v6230
        %v6235 = vmul.f32 %v6221, %v6230
        %v6236 = vmul.f32 %v6222, %v6230
        %v6237 = vmul.f32 %v6223, %v6230
        %v6238 = vmul.f32 %v6224, %v6230
        %v6239 = vmul.f32 %v6225, %v6230
        %v6241 = vlaneseq
        %v6242 = vshrl.u32 %v6241, 7
        %v6243 = vsub.s32 0, %v6242
        %v6244 = vrot.slane %v6120, %v6243
        %v6246 = vadd.f32 %v6232, %v6244
        %v6247 = vadd.f32 %v6233, %v6244
        %v6248 = vadd.f32 %v6234, %v6244
        %v6249 = vadd.f32 %v6235, %v6244
        %v6250 = vadd.f32 %v6236, %v6244
        %v6251 = vadd.f32 %v6237, %v6244
        %v6252 = vadd.f32 %v6238, %v6244
        %v6253 = vadd.f32 %v6239, %v6244
        %v6254 = vld [vmem:[%s4] sm:$0xff]
        %v6255 = vld [vmem:[%s4 + $0x8] sm:$0xff]
        %v6256 = vld [vmem:[%s4 + $0x10] sm:$0xff]
        %v6257 = vld [vmem:[%s4 + $0x18] sm:$0xff]
        %v6258 = vld [vmem:[%s5] sm:$0x1]
        %v6260 = vlaneseq
        %v6261 = vshrl.u32 %v6260, 7
        %v6262 = vsub.s32 0, %v6261
        %v6263 = vrot.slane %v6258, %v6262
        %v6266 = vsel %vm446, %v6246, 0
        %v6269 = vsel %vm446, %v6247, 0
        %v6272 = vsel %vm446, %v6248, 0
        %v6275 = vsel %vm446, %v6249, 0
        %v6278 = vsel %vm446, %v6250, 0
        %v6281 = vsel %vm446, %v6251, 0
        %v6284 = vsel %vm446, %v6252, 0
        %v6287 = vsel %vm446, %v6253, 0
        %6289 = vmatprep.subr.mxu0 0.0
        %6290 = vmatpush1.msra.mxu0 %v6254
        %6291 = vmatprep.subr.mxu0 0.0
        %6292 = vmatpush1.msra.mxu0 %v6255
        %6293 = vmatprep.subr.mxu0 0.0
        %6294 = vmatpush1.msra.mxu0 %v6256
        %6295 = vmatprep.subr.mxu0 0.0
        %6296 = vmatpush1.msra.mxu0 %v6257
        %6297 = vmatprep.subr.mxu0 0.0
        %6298 = vmatpush1.msra.mxu0 0.0
        %6299 = vmatprep.subr.mxu0 0.0
        %6300 = vmatpush1.msra.mxu0 0.0
        %6301 = vmatprep.subr.mxu0 0.0
        %6302 = vmatpush1.msra.mxu0 0.0
        %6303 = vmatprep.subr.mxu0 0.0
        %6304 = vmatpush1.msra.mxu0 0.0
        %6305 = vmatprep.subr.mxu0 0.0
        %6306 = vmatpush1.msra.mxu0 0.0
        %6307 = vmatprep.subr.mxu0 0.0
        %6308 = vmatpush1.msra.mxu0 0.0
        %6309 = vmatprep.subr.mxu0 0.0
        %6310 = vmatpush1.msra.mxu0 0.0
        %6311 = vmatprep.subr.mxu0 0.0
        %6312 = vmatpush1.msra.mxu0 0.0
        %6313 = vmatprep.subr.mxu0 0.0
        %6314 = vmatpush1.msra.mxu0 0.0
        %6315 = vmatprep.subr.mxu0 0.0
        %6316 = vmatpush1.msra.mxu0 0.0
        %6317 = vmatprep.subr.mxu0 0.0
        %6318 = vmatpush1.msra.mxu0 0.0
        %6319 = vmatprep.subr.mxu0 0.0
        %6320 = vmatpush1.msra.mxu0 0.0
        %6321 = vmatprep.subr.mxu0 0.0
        %6322 = vmatpush1.msra.mxu0 0.0
        %6323 = vmatprep.subr.mxu0 0.0
        %6324 = vmatpush1.msra.mxu0 0.0
        %6325 = vmatprep.subr.mxu0 0.0
        %6326 = vmatpush1.msra.mxu0 0.0
        %6327 = vmatprep.subr.mxu0 0.0
        %6328 = vmatpush1.msra.mxu0 0.0
        %6329 = vmatprep.subr.mxu0 0.0
        %6330 = vmatpush1.msra.mxu0 0.0
        %6331 = vmatprep.subr.mxu0 0.0
        %6332 = vmatpush1.msra.mxu0 0.0
        %6333 = vmatprep.subr.mxu0 0.0
        %6334 = vmatpush1.msra.mxu0 0.0
        %6335 = vmatprep.subr.mxu0 0.0
        %6336 = vmatpush1.msra.mxu0 0.0
        %6337 = vmatprep.subr.mxu0 0.0
        %6338 = vmatpush1.msra.mxu0 0.0
        %6339 = vmatprep.subr.mxu0 0.0
        %6340 = vmatpush1.msra.mxu0 0.0
        %6341 = vmatprep.subr.mxu0 0.0
        %6342 = vmatpush1.msra.mxu0 0.0
        %6343 = vmatprep.subr.mxu0 0.0
        %6344 = vmatpush1.msra.mxu0 0.0
        %6345 = vmatprep.subr.mxu0 0.0
        %6346 = vmatpush1.msra.mxu0 0.0
        %6347 = vmatprep.subr.mxu0 0.0
        %6348 = vmatpush1.msra.mxu0 0.0
        %6349 = vmatprep.subr.mxu0 0.0
        %6350 = vmatpush1.msra.mxu0 0.0
        %6351 = vmatprep.subr.mxu0 0.0
        %6352 = vmatpush1.msra.mxu0 0.0
        %6353 = vmatprep.mubr.f32.mxu0 0.0
        %6354 = vmatmul.mubr.f32.gmra.mrb[0].mxu0 %v6266
        %v6355 = vpop.f32.mrb[0].mxu0
        %v6356 = vadd.f32 %v6263, %v6355
        %v6357 = vpop.f32.mrb[0].mxu0
        %6358 = vmatprep.mubr.f32.mxu0 0.0
        %6359 = vmatmul.mubr.f32.gmra.mrb[0].mxu0 %v6269
        %v6360 = vpop.f32.mrb[0].mxu0
        %v6361 = vadd.f32 %v6263, %v6360
        %v6362 = vpop.f32.mrb[0].mxu0
        %6363 = vmatprep.mubr.f32.mxu0 0.0
        %6364 = vmatmul.mubr.f32.gmra.mrb[0].mxu0 %v6272
        %v6365 = vpop.f32.mrb[0].mxu0
        %v6366 = vadd.f32 %v6263, %v6365
        %v6367 = vpop.f32.mrb[0].mxu0
        %6368 = vmatprep.mubr.f32.mxu0 0.0
        %6369 = vmatmul.mubr.f32.gmra.mrb[0].mxu0 %v6275
        %v6370 = vpop.f32.mrb[0].mxu0
        %v6371 = vadd.f32 %v6263, %v6370
        %v6372 = vpop.f32.mrb[0].mxu0
        %6373 = vmatprep.mubr.f32.mxu0 0.0
        %6374 = vmatmul.mubr.f32.gmra.mrb[0].mxu0 %v6278
        %v6375 = vpop.f32.mrb[0].mxu0
        %v6376 = vadd.f32 %v6263, %v6375
        %v6377 = vpop.f32.mrb[0].mxu0
        %6378 = vmatprep.mubr.f32.mxu0 0.0
        %6379 = vmatmul.mubr.f32.gmra.mrb[0].mxu0 %v6281
        %v6380 = vpop.f32.mrb[0].mxu0
        %v6381 = vadd.f32 %v6263, %v6380
        %v6382 = vpop.f32.mrb[0].mxu0
        %6383 = vmatprep.mubr.f32.mxu0 0.0
        %6384 = vmatmul.mubr.f32.gmra.mrb[0].mxu0 %v6284
        %v6385 = vpop.f32.mrb[0].mxu0
        %v6386 = vadd.f32 %v6263, %v6385
        %v6387 = vpop.f32.mrb[0].mxu0
        %6388 = vmatprep.mubr.f32.mxu0 0.0
        %6389 = vmatmul.mubr.f32.gmra.mrb[0].mxu0 %v6287
        %v6390 = vpop.f32.mrb[0].mxu0
        %v6391 = vadd.f32 %v6263, %v6390
        %v6392 = vpop.f32.mrb[0].mxu0
        %6393 = vdwg.mxu0
        %v6394 = vmax.f32 %v6356, 0.0
        %v6395 = vmax.f32 %v6361, 0.0
        %v6396 = vmax.f32 %v6366, 0.0
        %v6397 = vmax.f32 %v6371, 0.0
        %v6398 = vmax.f32 %v6376, 0.0
        %v6399 = vmax.f32 %v6381, 0.0
        %v6400 = vmax.f32 %v6386, 0.0
        %v6401 = vmax.f32 %v6391, 0.0
        %v6402 = vld [vmem:[%s6] sm:$0xff]
        %v6403 = vld [vmem:[%s6 + $0x8] sm:$0xff]
        %v6404 = vld [vmem:[%s6 + $0x10] sm:$0xff]
        %v6405 = vld [vmem:[%s6 + $0x18] sm:$0xff]
        %v6406 = vld [vmem:[%s6 + $0x20] sm:$0xff]
        %v6407 = vld [vmem:[%s6 + $0x28] sm:$0xff]
        %v6408 = vld [vmem:[%s6 + $0x30] sm:$0xff]
        %v6409 = vld [vmem:[%s6 + $0x38] sm:$0xff]
        %v6410 = vld [vmem:[%s7] sm:$0x1]
        %v6412 = vlaneseq
        %v6413 = vshrl.u32 %v6412, 7
        %v6414 = vsub.s32 0, %v6413
        %v6415 = vrot.slane %v6410, %v6414
        %vm6417 = vcmask 523264
        %v6419 = vsel %vm6417, %v6394, 0
        %v6422 = vsel %vm6417, %v6395, 0
        %v6425 = vsel %vm6417, %v6396, 0
        %v6428 = vsel %vm6417, %v6397, 0
        %v6431 = vsel %vm6417, %v6398, 0
        %v6434 = vsel %vm6417, %v6399, 0
        %v6437 = vsel %vm6417, %v6400, 0
        %v6440 = vsel %vm6417, %v6401, 0
        %6442 = vmatprep.subr.mxu0 0.0
        %6443 = vmatpush1.msra.mxu0 %v6402
        %6444 = vmatprep.subr.mxu0 0.0
        %6445 = vmatpush1.msra.mxu0 %v6403
        %6446 = vmatprep.subr.mxu0 0.0
        %6447 = vmatpush1.msra.mxu0 %v6404
        %6448 = vmatprep.subr.mxu0 0.0
        %6449 = vmatpush1.msra.mxu0 %v6405
        %6450 = vmatprep.subr.mxu0 0.0
        %6451 = vmatpush1.msra.mxu0 %v6406
        %6452 = vmatprep.subr.mxu0 0.0
        %6453 = vmatpush1.msra.mxu0 %v6407
        %6454 = vmatprep.subr.mxu0 0.0
        %6455 = vmatpush1.msra.mxu0 %v6408
        %6456 = vmatprep.subr.mxu0 0.0
        %6457 = vmatpush1.msra.mxu0 %v6409
        %6458 = vmatprep.subr.mxu0 0.0
        %6459 = vmatpush1.msra.mxu0 0.0
        %6460 = vmatprep.subr.mxu0 0.0
        %6461 = vmatpush1.msra.mxu0 0.0
        %6462 = vmatprep.subr.mxu0 0.0
        %6463 = vmatpush1.msra.mxu0 0.0
        %6464 = vmatprep.subr.mxu0 0.0
        %6465 = vmatpush1.msra.mxu0 0.0
        %6466 = vmatprep.subr.mxu0 0.0
        %6467 = vmatpush1.msra.mxu0 0.0
        %6468 = vmatprep.subr.mxu0 0.0
        %6469 = vmatpush1.msra.mxu0 0.0
        %6470 = vmatprep.subr.mxu0 0.0
        %6471 = vmatpush1.msra.mxu0 0.0
        %6472 = vmatprep.subr.mxu0 0.0
        %6473 = vmatpush1.msra.mxu0 0.0
        %6474 = vmatprep.subr.mxu0 0.0
        %6475 = vmatpush1.msra.mxu0 0.0
        %6476 = vmatprep.subr.mxu0 0.0
        %6477 = vmatpush1.msra.mxu0 0.0
        %6478 = vmatprep.subr.mxu0 0.0
        %6479 = vmatpush1.msra.mxu0 0.0
        %6480 = vmatprep.subr.mxu0 0.0
        %6481 = vmatpush1.msra.mxu0 0.0
        %6482 = vmatprep.subr.mxu0 0.0
        %6483 = vmatpush1.msra.mxu0 0.0
        %6484 = vmatprep.subr.mxu0 0.0
        %6485 = vmatpush1.msra.mxu0 0.0
        %6486 = vmatprep.subr.mxu0 0.0
        %6487 = vmatpush1.msra.mxu0 0.0
        %6488 = vmatprep.subr.mxu0 0.0
        %6489 = vmatpush1.msra.mxu0 0.0
        %6490 = vmatprep.subr.mxu0 0.0
        %6491 = vmatpush1.msra.mxu0 0.0
        %6492 = vmatprep.subr.mxu0 0.0
        %6493 = vmatpush1.msra.mxu0 0.0
        %6494 = vmatprep.subr.mxu0 0.0
        %6495 = vmatpush1.msra.mxu0 0.0
        %6496 = vmatprep.subr.mxu0 0.0
        %6497 = vmatpush1.msra.mxu0 0.0
        %6498 = vmatprep.subr.mxu0 0.0
        %6499 = vmatpush1.msra.mxu0 0.0
        %6500 = vmatprep.subr.mxu0 0.0
        %6501 = vmatpush1.msra.mxu0 0.0
        %6502 = vmatprep.subr.mxu0 0.0
        %6503 = vmatpush1.msra.mxu0 0.0
        %6504 = vmatprep.subr.mxu0 0.0
        %6505 = vmatpush1.msra.mxu0 0.0
        %6506 = vmatprep.mubr.f32.mxu0 0.0
        %6507 = vmatmul.mubr.f32.gmra.mrb[0].mxu0 %v6419
        %v6508 = vpop.f32.mrb[0].mxu0
        %v6509 = vadd.f32 %v6415, %v6508
        %v6510 = vpop.f32.mrb[0].mxu0
        %6511 = vmatprep.mubr.f32.mxu0 0.0
        %6512 = vmatmul.mubr.f32.gmra.mrb[0].mxu0 %v6422
        %v6513 = vpop.f32.mrb[0].mxu0
        %v6514 = vadd.f32 %v6415, %v6513
        %v6515 = vpop.f32.mrb[0].mxu0
        %6516 = vmatprep.mubr.f32.mxu0 0.0
        %6517 = vmatmul.mubr.f32.gmra.mrb[0].mxu0 %v6425
        %v6518 = vpop.f32.mrb[0].mxu0
        %v6519 = vadd.f32 %v6415, %v6518
        %v6520 = vpop.f32.mrb[0].mxu0
        %6521 = vmatprep.mubr.f32.mxu0 0.0
        %6522 = vmatmul.mubr.f32.gmra.mrb[0].mxu0 %v6428
        %v6523 = vpop.f32.mrb[0].mxu0
        %v6524 = vadd.f32 %v6415, %v6523
        %v6525 = vpop.f32.mrb[0].mxu0
        %6526 = vmatprep.mubr.f32.mxu0 0.0
        %6527 = vmatmul.mubr.f32.gmra.mrb[0].mxu0 %v6431
        %v6528 = vpop.f32.mrb[0].mxu0
        %v6529 = vadd.f32 %v6415, %v6528
        %v6530 = vpop.f32.mrb[0].mxu0
        %6531 = vmatprep.mubr.f32.mxu0 0.0
        %6532 = vmatmul.mubr.f32.gmra.mrb[0].mxu0 %v6434
        %v6533 = vpop.f32.mrb[0].mxu0
        %v6534 = vadd.f32 %v6415, %v6533
        %v6535 = vpop.f32.mrb[0].mxu0
        %6536 = vmatprep.mubr.f32.mxu0 0.0
        %6537 = vmatmul.mubr.f32.gmra.mrb[0].mxu0 %v6437
        %v6538 = vpop.f32.mrb[0].mxu0
        %v6539 = vadd.f32 %v6415, %v6538
        %v6540 = vpop.f32.mrb[0].mxu0
        %6541 = vmatprep.mubr.f32.mxu0 0.0
        %6542 = vmatmul.mubr.f32.gmra.mrb[0].mxu0 %v6440
        %v6543 = vpop.f32.mrb[0].mxu0
        %v6544 = vadd.f32 %v6415, %v6543
        %v6545 = vpop.f32.mrb[0].mxu0
        %6546 = vdwg.mxu0
        %v6547 = vadd.f32 %v6246, %v6509
        %v6548 = vadd.f32 %v6247, %v6514
        %v6549 = vadd.f32 %v6248, %v6519
        %v6550 = vadd.f32 %v6249, %v6524
        %v6551 = vadd.f32 %v6250, %v6529
        %v6552 = vadd.f32 %v6251, %v6534
        %v6553 = vadd.f32 %v6252, %v6539
        %v6554 = vadd.f32 %v6253, %v6544
        %v6555 = vld [vmem:[%s10] sm:$0x1]
        %v6556 = vld [vmem:[%s11] sm:$0x1]
        %v6557 = vsel %vm446, %v6547, 0.0
        %6558 = vadd.xlane.f32.xlu0 %v6557
        %v6559 = vpop.xlane.xlu0 %6558
        %v6560 = vsel %vm446, %v6548, 0.0
        %6561 = vadd.xlane.f32.xlu0 %v6560
        %v6562 = vpop.xlane.xlu0 %6561
        %v6563 = vsel %vm446, %v6549, 0.0
        %6564 = vadd.xlane.f32.xlu0 %v6563
        %v6565 = vpop.xlane.xlu0 %6564
        %v6566 = vsel %vm446, %v6550, 0.0
        %6567 = vadd.xlane.f32.xlu0 %v6566
        %v6568 = vpop.xlane.xlu0 %6567
        %v6569 = vsel %vm446, %v6551, 0.0
        %6570 = vadd.xlane.f32.xlu0 %v6569
        %v6571 = vpop.xlane.xlu0 %6570
        %v6572 = vsel %vm446, %v6552, 0.0
        %6573 = vadd.xlane.f32.xlu0 %v6572
        %v6574 = vpop.xlane.xlu0 %6573
        %v6575 = vsel %vm446, %v6553, 0.0
        %6576 = vadd.xlane.f32.xlu0 %v6575
        %v6577 = vpop.xlane.xlu0 %6576
        %v6578 = vsel %vm446, %v6554, 0.0
        %6579 = vadd.xlane.f32.xlu0 %v6578
        %v6580 = vpop.xlane.xlu0 %6579
        %v6581 = vmul.f32 %v6559, %v6145
        %v6582 = vmul.f32 %v6562, %v6145
        %v6583 = vmul.f32 %v6565, %v6145
        %v6584 = vmul.f32 %v6568, %v6145
        %v6585 = vmul.f32 %v6571, %v6145
        %v6586 = vmul.f32 %v6574, %v6145
        %v6587 = vmul.f32 %v6577, %v6145
        %v6588 = vmul.f32 %v6580, %v6145
        %v6589 = vsub.f32 %v6547, %v6581
        %v6590 = vsub.f32 %v6548, %v6582
        %v6591 = vsub.f32 %v6549, %v6583
        %v6592 = vsub.f32 %v6550, %v6584
        %v6593 = vsub.f32 %v6551, %v6585
        %v6594 = vsub.f32 %v6552, %v6586
        %v6595 = vsub.f32 %v6553, %v6587
        %v6596 = vsub.f32 %v6554, %v6588
        %v6597 = vmul.f32 %v6589, %v6589
        %v6598 = vmul.f32 %v6590, %v6590
        %v6599 = vmul.f32 %v6591, %v6591
        %v6600 = vmul.f32 %v6592, %v6592
        %v6601 = vmul.f32 %v6593, %v6593
        %v6602 = vmul.f32 %v6594, %v6594
        %v6603 = vmul.f32 %v6595, %v6595
        %v6604 = vmul.f32 %v6596, %v6596
        %v6605 = vsel %vm446, %v6597, 0.0
        %6606 = vadd.xlane.f32.xlu0 %v6605
        %v6607 = vpop.xlane.xlu0 %6606
        %v6608 = vsel %vm446, %v6598, 0.0
        %6609 = vadd.xlane.f32.xlu0 %v6608
        %v6610 = vpop.xlane.xlu0 %6609
        %v6611 = vsel %vm446, %v6599, 0.0
        %6612 = vadd.xlane.f32.xlu0 %v6611
        %v6613 = vpop.xlane.xlu0 %6612
        %v6614 = vsel %vm446, %v6600, 0.0
        %6615 = vadd.xlane.f32.xlu0 %v6614
        %v6616 = vpop.xlane.xlu0 %6615
        %v6617 = vsel %vm446, %v6601, 0.0
        %6618 = vadd.xlane.f32.xlu0 %v6617
        %v6619 = vpop.xlane.xlu0 %6618
        %v6620 = vsel %vm446, %v6602, 0.0
        %6621 = vadd.xlane.f32.xlu0 %v6620
        %v6622 = vpop.xlane.xlu0 %6621
        %v6623 = vsel %vm446, %v6603, 0.0
        %6624 = vadd.xlane.f32.xlu0 %v6623
        %v6625 = vpop.xlane.xlu0 %6624
        %v6626 = vsel %vm446, %v6604, 0.0
        %6627 = vadd.xlane.f32.xlu0 %v6626
        %v6628 = vpop.xlane.xlu0 %6627
        %v6629 = vmul.f32 %v6607, %v6145
        %v6630 = vmul.f32 %v6610, %v6145
        %v6631 = vmul.f32 %v6613, %v6145
        %v6632 = vmul.f32 %v6616, %v6145
        %v6633 = vmul.f32 %v6619, %v6145
        %v6634 = vmul.f32 %v6622, %v6145
        %v6635 = vmul.f32 %v6625, %v6145
        %v6636 = vmul.f32 %v6628, %v6145
        %v6637 = vadd.f32 %v6629, 1e-06
        %v6638 = vadd.f32 %v6630, 1e-06
        %v6639 = vadd.f32 %v6631, 1e-06
        %v6640 = vadd.f32 %v6632, 1e-06
        %v6641 = vadd.f32 %v6633, 1e-06
        %v6642 = vadd.f32 %v6634, 1e-06
        %v6643 = vadd.f32 %v6635, 1e-06
        %v6644 = vadd.f32 %v6636, 1e-06
        %v6645 = vrsqrt.pop %v6637
        %v6646 = vrsqrt.pop %v6638
        %v6647 = vrsqrt.pop %v6639
        %v6648 = vrsqrt.pop %v6640
        %v6649 = vrsqrt.pop %v6641
        %v6650 = vrsqrt.pop %v6642
        %v6651 = vrsqrt.pop %v6643
        %v6652 = vrsqrt.pop %v6644
        %v6653 = vmul.f32 %v6589, %v6645
        %v6654 = vmul.f32 %v6590, %v6646
        %v6655 = vmul.f32 %v6591, %v6647
        %v6656 = vmul.f32 %v6592, %v6648
        %v6657 = vmul.f32 %v6593, %v6649
        %v6658 = vmul.f32 %v6594, %v6650
        %v6659 = vmul.f32 %v6595, %v6651
        %v6660 = vmul.f32 %v6596, %v6652
        %v6662 = vlaneseq
        %v6663 = vshrl.u32 %v6662, 7
        %v6664 = vsub.s32 0, %v6663
        %v6665 = vrot.slane %v6555, %v6664
        %v6667 = vmul.f32 %v6653, %v6665
        %v6668 = vmul.f32 %v6654, %v6665
        %v6669 = vmul.f32 %v6655, %v6665
        %v6670 = vmul.f32 %v6656, %v6665
        %v6671 = vmul.f32 %v6657, %v6665
        %v6672 = vmul.f32 %v6658, %v6665
        %v6673 = vmul.f32 %v6659, %v6665
        %v6674 = vmul.f32 %v6660, %v6665
        %v6676 = vlaneseq
        %v6677 = vshrl.u32 %v6676, 7
        %v6678 = vsub.s32 0, %v6677
        %v6679 = vrot.slane %v6556, %v6678
        %v6681 = vadd.f32 %v6667, %v6679
        %v6682 = vadd.f32 %v6668, %v6679
        %v6683 = vadd.f32 %v6669, %v6679
        %v6684 = vadd.f32 %v6670, %v6679
        %v6685 = vadd.f32 %v6671, %v6679
        %v6686 = vadd.f32 %v6672, %v6679
        %v6687 = vadd.f32 %v6673, %v6679
        %v6688 = vadd.f32 %v6674, %v6679
        %6689 = vst.msk [vmem:[%s431] sm:$0xff] %vm446, %v6681
        %6690 = vst.msk [vmem:[%s431 + $0x8] sm:$0xff] %vm446, %v6682
        %6691 = vst.msk [vmem:[%s431 + $0x10] sm:$0xff] %vm446, %v6683
        %6692 = vst.msk [vmem:[%s431 + $0x18] sm:$0xff] %vm446, %v6684
        %6693 = vst.msk [vmem:[%s431 + $0x20] sm:$0xff] %vm446, %v6685
        %6694 = vst.msk [vmem:[%s431 + $0x28] sm:$0xff] %vm446, %v6686
        %6695 = vst.msk [vmem:[%s431 + $0x30] sm:$0xff] %vm446, %v6687
        %6696 = vst.msk [vmem:[%s431 + $0x38] sm:$0xff] %vm446, %v6688
        %s6697 = sand.u32 %s294, 1
        %s6698 = scalar_lea.sflag [#allocation4], %s6697
        %s6699 = sand.u32 %s294, 1
        %s6700 = smul.addr %s6699, 64
        %s6701 = scalar_lea.vmem [#allocation5], %s6700
        // Predicated region
        $region73: #{tpu_custom_call.1} parent=67 // pred_check
          %p6702 = pneg %p304
        $region74: #{tpu_custom_call.1} parent=67 // pred_check_branch
          %6704 = sbr.rel (%p6702) target = $region76
        $region75: #{tpu_custom_call.1} parent=67 // pred_region
          %s6705 = smul.u32 8, %s29
          %s6707 = ssub.s32 1024, 1024
          %6708 = vsyncadd %s6698, %s6707
          %s6709 = smul.addr %s6705, 128
          %s6710 = scalar_lea.hbm %s12, %s6709
          %s6711 = sshll.u32 %s6701, 4
          %s6712 = int_to_ptr.vmem [resolvable:$true] %s6711
          %6717 = dma.vmem_to_hbm [thread:$0]  %s6712, 1024, %s6710, %s6698, 128, 128, 8
        $region76: #{tpu_custom_call.1} parent=67 // pred_fallthru
          _
      $region68: #{tpu_custom_call.1} parent=5 // pred_fallthru
        _
      %p6718 = scmp.le.s32.totalorder 2, %s24
      // Predicated region
      $region77: #{tpu_custom_call.1} parent=5 // pred_check
        %p6719 = pneg %p6718
      $region78: #{tpu_custom_call.1} parent=5 // pred_check_branch
        %6721 = sbr.rel (%p6719) target = $region80
      $region79: #{tpu_custom_call.1} parent=5 // pred_region
        %s6722 = ssub.s32 %s24, 2
        // Predicated region
        $region81: #{tpu_custom_call.1} parent=79 // pred_check
          %p6723 = pneg %p310
        $region82: #{tpu_custom_call.1} parent=79 // pred_check_branch
          %6725 = sbr.rel (%p6723) target = $region84
        $region83: #{tpu_custom_call.1} parent=79 // pred_region
          %s6726 = sand.u32 %s295, 1
          %s6727 = scalar_lea.sflag [#allocation4], %s6726
          %s6728 = sand.u32 %s295, 1
          %s6729 = smul.addr %s6728, 64
          %s6730 = scalar_lea.vmem [#allocation5], %s6729
          %6731 = dma.done %s6727, 1024
        $region84: #{tpu_custom_call.1} parent=79 // pred_fallthru
          _
      $region80: #{tpu_custom_call.1} parent=5 // pred_fallthru
        _
    $region6: #{tpu_custom_call.1} parent=1 // loop_footer
      %s28 = sadd.s32 1, %s24
    $region7: #{tpu_custom_call.1} parent=1 // loop_footer_branch
      %23 = sbr.rel target = $region3
    $region8: #{tpu_custom_call.1} parent=1 // loop_exit
      _
    %6732 = vsyncpa [#allocation3], 1
    %s6733 = scalar_lea.sflag [#allocation3], 1
    %6734 = vsyncpa %s6733, 1
    %6735 = vsyncpa [#allocation4], 1
    %s6736 = scalar_lea.sflag [#allocation4], 1
    %6737 = vsyncpa %s6736, 1

</llo_original>
